<compile_context>
chip_gen: v7x
topology: tpu7x:2x2x1
jax: 0.10.0
libtpu: 0.0.40
codegen_flags: <defaults>
</compile_context>

<pallas_src>
import math
import functools

import jax
import jax.numpy as jnp
from jax.experimental import pallas as pl
from jax.experimental.pallas import tpu as pltpu


# ---------------------------- fused forward kernel ---------------------------

def _dlformer_fused_kernel(*refs, d_model, n_heads, e_layers, d_layers,
                           pred_len, activation):
    xe_ref, last_ref, xd3_ref, xmark_ref, pe_ref = refs[:5]
    o_ref = refs[-1]
    w_iter = iter(refs[5:-1])

    def nx():
        return next(w_iter)[...]

    D = d_model
    H = n_heads
    E = D // H
    scale = 1.0 / math.sqrt(E)

    def mm(a, b):
        return jnp.dot(a, b, preferred_element_type=jnp.float32)

    def ln(x, g, b, eps=1e-5):
        mu = jnp.mean(x, axis=-1, keepdims=True)
        xc = x - mu
        var = jnp.mean(xc * xc, axis=-1, keepdims=True)
        return xc * jax.lax.rsqrt(var + eps) * g + b

    def act(y):
        if activation == "relu":
            return jnp.maximum(y, 0.0)
        # TODO(synk): exact erf GELU replaced with tanh approximation.
        return jax.nn.gelu(y, approximate=True)

    def attend(q, k, v, wo, bo, causal):
        Lq, Lk = q.shape[0], k.shape[0]
        if causal:  # built once, outside the per-head loop
            ri = jax.lax.broadcasted_iota(jnp.int32, (Lq, Lk), 0)
            ci = jax.lax.broadcasted_iota(jnp.int32, (Lq, Lk), 1)
            neg = jnp.where(ci > ri, -jnp.inf, 0.0).astype(jnp.float32)
        out = None
        for h in range(H):                       # static unroll, H is small
            lo, hi = h * E, (h + 1) * E
            qh, kh, vh = q[:, lo:hi], k[:, lo:hi], v[:, lo:hi]
            s = jax.lax.dot_general(qh, kh, (((1,), (1,)), ((), ())),
                                    preferred_element_type=jnp.float32) * scale
            if causal:
                s = s + neg
            m = jnp.max(s, axis=-1, keepdims=True)
            p = jnp.exp(s - m)
            p = p * pl.reciprocal(jnp.sum(p, axis=-1, keepdims=True), approx=True)
            oh = mm(p, vh)                       # [Lq, E]
            contrib = mm(oh, wo[lo:hi, :])       # fold output projection per head
            out = contrib if out is None else out + contrib
        return out + bo

    # -------------------------------- encoder --------------------------------
    dl_w, dl_b = nx(), nx()
    enc = mm(xe_ref[...], dl_w) + dl_b           # [enc_in, D]  (variable-as-token)

    for _ in range(e_layers):
        wqkv, bqkv, wo, bo = nx(), nx(), nx(), nx()
        w1, b1, w2, b2 = nx(), nx(), nx(), nx()
        g1, be1, g2, be2 = nx(), nx(), nx(), nx()
        qkv = mm(enc, wqkv) + bqkv
        a = attend(qkv[:, :D], qkv[:, D:2 * D], qkv[:, 2 * D:], wo, bo, False)
        x1 = ln(enc + a, g1, be1)
        y = mm(act(mm(x1, w1) + b1), w2) + b2
        enc = ln(x1 + y, g2, be2)

    g, b = nx(), nx()
    enc = ln(enc, g, b)

    # -------------------------------- decoder --------------------------------
    tok_w, temporal_w = nx(), nx()
    dec = mm(xd3_ref[...], tok_w) + mm(xmark_ref[...], temporal_w) + pe_ref[...]

    for _ in range(d_layers):
        s_wqkv, s_bqkv, s_wo, s_bo = nx(), nx(), nx(), nx()
        c_wq, c_bq, c_wkv, c_bkv, c_wo, c_bo = nx(), nx(), nx(), nx(), nx(), nx()
        w1, b1, w2, b2 = nx(), nx(), nx(), nx()
        g1, be1, g2, be2, g3, be3 = nx(), nx(), nx(), nx(), nx(), nx()

        qkv = mm(dec, s_wqkv) + s_bqkv
        a = attend(qkv[:, :D], qkv[:, D:2 * D], qkv[:, 2 * D:], s_wo, s_bo, True)
        dec = ln(dec + a, g1, be1)

        qc = mm(dec, c_wq) + c_bq
        kvc = mm(enc, c_wkv) + c_bkv
        a = attend(qc, kvc[:, :D], kvc[:, D:], c_wo, c_bo, False)
        x2 = ln(dec + a, g2, be2)

        y = mm(act(mm(x2, w1) + b1), w2) + b2
        dec = ln(x2 + y, g3, be3)

    g, b = nx(), nx()
    dec = ln(dec, g, b)

    proj_w, proj_b = nx(), nx()
    out = mm(dec, proj_w) + proj_b               # [dec_len, c_out]
    out = out + last_ref[...]                    # de-norm: + x_enc[b,-1,-1] (bcast [1,1])
    o_ref[...] = out[out.shape[0] - pred_len:, :]


# --------------------------------- wrapper -----------------------------------

def positional_embedding(L, d_model):
    pos = jnp.arange(L, dtype=jnp.float32)[:, None]
    div = jnp.exp(jnp.arange(0, d_model, 2, dtype=jnp.float32)
                  * (-math.log(10000.0) / d_model))
    pe = jnp.zeros((L, d_model), jnp.float32)
    pe = pe.at[:, 0::2].set(jnp.sin(pos * div))
    pe = pe.at[:, 1::2].set(jnp.cos(pos * div))
    return pe


def _flatten_params(p):
    """Flat ordered weight list; MUST match the kernel's consumption order."""
    w = [p["enc_emb"]["dl_w"], p["enc_emb"]["dl_b"]]
    for lp in p["enc_layers"]:
        a = lp["attn"]
        w += [a["wqkv"], a["bqkv"], a["wo"], a["bo"],
              lp["ffn_w1"], lp["ffn_b1"], lp["ffn_w2"], lp["ffn_b2"],
              lp["norm1_g"], lp["norm1_b"], lp["norm2_g"], lp["norm2_b"]]
    w += [p["enc_norm"]["g"], p["enc_norm"]["b"]]
    w += [p["dec_emb"]["token_w"], p["dec_emb"]["temporal_w"]]
    for lp in p["dec_layers"]:
        s, c = lp["self_attn"], lp["cross_attn"]
        w += [s["wqkv"], s["bqkv"], s["wo"], s["bo"],
              c["wq"], c["bq"], c["wkv"], c["bkv"], c["wo"], c["bo"],
              lp["ffn_w1"], lp["ffn_b1"], lp["ffn_w2"], lp["ffn_b2"],
              lp["norm1_g"], lp["norm1_b"], lp["norm2_g"], lp["norm2_b"],
              lp["norm3_g"], lp["norm3_b"]]
    w += [p["dec_norm"]["g"], p["dec_norm"]["b"], p["proj_w"], p["proj_b"]]
    return w


def make_forward(cfg):
    d_model = cfg["d_model"]
    pred_len = cfg["pred_len"]
    c_out = cfg["c_out"]

    kernel = functools.partial(
        _dlformer_fused_kernel,
        d_model=d_model, n_heads=cfg["n_heads"],
        e_layers=cfg["e_layers"], d_layers=cfg["d_layers"],
        pred_len=pred_len, activation=cfg["activation"])

    def forward(params, x_enc, x_mark_enc, x_dec, x_mark_dec):
        # TODO(synk): x_mark_enc is unused — DataEmbedding_DL source was not
        # provided; it is modeled as the distributed-lag (variable-as-token)
        # embedding Linear(seq_len, d_model) without temporal marks.
        del x_mark_enc
        x_enc = x_enc.astype(jnp.float32)
        x_dec = x_dec.astype(jnp.float32)
        x_mark_dec = x_mark_dec.astype(jnp.float32)

        B = x_enc.shape[0]
        dec_len = x_dec.shape[1]

        # Tiny one-time input preprocessing kept in XLA so the fused kernel only
        # does dense, layout-friendly math (no in-kernel transposes/rolls):
        seq_last = x_enc[:, -1:, :]                          # [B,1,enc_in]
        xe_t = jnp.transpose(x_enc - seq_last, (0, 2, 1))    # [B,enc_in,seq_len]
        last_val = seq_last[:, :, -1:]                       # [B,1,1]
        # circular Conv1d(k=3) token embedding -> roll+concat then 1 matmul
        x_dec3 = jnp.concatenate(
            [jnp.roll(x_dec, 1, axis=1), x_dec, jnp.roll(x_dec, -1, axis=1)],
            axis=-1)                                         # [B,dec_len,3*dec_in]
        pe = positional_embedding(dec_len, d_model)          # [dec_len,d_model]

        acts = [xe_t, last_val, x_dec3, x_mark_dec, pe]
        weights = _flatten_params(params)

        def batch_spec(a):
            nd = a.ndim
            return pl.BlockSpec((None,) + a.shape[1:],
                                lambda b: (b,) + (0,) * (nd - 1))

        def full_spec(a):
            nd = a.ndim
            return pl.BlockSpec(a.shape, lambda b: (0,) * nd)

        in_specs = ([batch_spec(xe_t), batch_spec(last_val), batch_spec(x_dec3),
                     batch_spec(x_mark_dec), full_spec(pe)]
                    + [full_spec(w) for w in weights])

        return pl.pallas_call(
            kernel,
            grid=(B,),
            out_shape=jax.ShapeDtypeStruct((B, pred_len, c_out), jnp.float32),
            in_specs=in_specs,
            out_specs=pl.BlockSpec((None, pred_len, c_out), lambda b: (b, 0, 0)),
            compiler_params=pltpu.CompilerParams(
                dimension_semantics=("parallel",)),
        )(*acts, *weights)

    return jax.jit(forward)


# -------------------------------- parameters ---------------------------------

def init_params(cfg, key):
    d_model, d_ff = cfg["d_model"], cfg["d_ff"]
    keys = iter(jax.random.split(key, 512))

    def nrm(shape, scale=0.05):
        return scale * jax.random.normal(next(keys), shape, dtype=jnp.float32)

    def row(n):          # bias row, already [1, n] float32
        return nrm((1, n))

    def ones_row(n):
        return jnp.ones((1, n), jnp.float32)

    def zeros_row(n):
        return jnp.zeros((1, n), jnp.float32)

    def self_attn():     # fused QKV
        return dict(wqkv=nrm((d_model, 3 * d_model)), bqkv=row(3 * d_model),
                    wo=nrm((d_model, d_model)), bo=row(d_model))

    def cross_attn():    # fused KV
        return dict(wq=nrm((d_model, d_model)), bq=row(d_model),
                    wkv=nrm((d_model, 2 * d_model)), bkv=row(2 * d_model),
                    wo=nrm((d_model, d_model)), bo=row(d_model))

    p = {}
    p["enc_emb"] = dict(dl_w=nrm((cfg["seq_len"], d_model)), dl_b=row(d_model))
    p["enc_layers"] = [dict(attn=self_attn(),
                            ffn_w1=nrm((d_model, d_ff)), ffn_b1=row(d_ff),
                            ffn_w2=nrm((d_ff, d_model)), ffn_b2=row(d_model),
                            norm1_g=ones_row(d_model), norm1_b=zeros_row(d_model),
                            norm2_g=ones_row(d_model), norm2_b=zeros_row(d_model))
                       for _ in range(cfg["e_layers"])]
    p["enc_norm"] = dict(g=ones_row(d_model), b=zeros_row(d_model))
    p["dec_emb"] = dict(token_w=nrm((3 * cfg["dec_in"], d_model)),   # Conv1d k=3 flattened
                        temporal_w=nrm((cfg["mark_dim"], d_model)))  # timeF linear
    p["dec_layers"] = [dict(self_attn=self_attn(), cross_attn=cross_attn(),
                            ffn_w1=nrm((d_model, d_ff)), ffn_b1=row(d_ff),
                            ffn_w2=nrm((d_ff, d_model)), ffn_b2=row(d_model),
                            norm1_g=ones_row(d_model), norm1_b=zeros_row(d_model),
                            norm2_g=ones_row(d_model), norm2_b=zeros_row(d_model),
                            norm3_g=ones_row(d_model), norm3_b=zeros_row(d_model))
                       for _ in range(cfg["d_layers"])]
    p["dec_norm"] = dict(g=ones_row(d_model), b=zeros_row(d_model))
    p["proj_w"] = nrm((d_model, cfg["c_out"]))
    p["proj_b"] = row(cfg["c_out"])
    return p


# ----------------------------------- main -------------------------------------

if __name__ == "__main__":
    cfg = dict(pred_len=8, seq_len=16, label_len=8,
               enc_in=4, dec_in=4, c_in=4, c_out=4,
               d_model=32, d_ff=64, n_heads=4,
               e_layers=1, d_layers=1, mark_dim=4,       # freq='h' -> 4 timeF features
               activation="relu", output_attention=False)

    key = jax.random.PRNGKey(0)
    kp, k1, k2, k3, k4 = jax.random.split(key, 5)
    params = init_params(cfg, kp)
    forward = make_forward(cfg)

    B = 2
    dec_len = cfg["label_len"] + cfg["pred_len"]
    x_enc = jax.random.normal(k1, (B, cfg["seq_len"], cfg["enc_in"]), jnp.float32)
    x_mark_enc = jax.random.normal(k2, (B, cfg["seq_len"], cfg["mark_dim"]), jnp.float32)
    x_dec = jax.random.normal(k3, (B, dec_len, cfg["dec_in"]), jnp.float32)
    x_mark_dec = jax.random.normal(k4, (B, dec_len, cfg["mark_dim"]), jnp.float32)

    out = forward(params, x_enc, x_mark_enc, x_dec, x_mark_dec)
    out = jax.block_until_ready(out)
    assert out.shape == (B, cfg["pred_len"], cfg["c_out"]), out.shape
    assert bool(jnp.all(jnp.isfinite(out)))
    print("KERNEL_OK")
</pallas_src>

<mosaic_0001>
module attributes {stable_mosaic.version = 11 : i64} {
  func.func @_dlformer_fused_kernel(%arg0: i32, %arg1: memref<1x4x16xf32, #tpu.memory_space<vmem>>, %arg2: memref<1x1x1xf32, #tpu.memory_space<vmem>>, %arg3: memref<1x16x12xf32, #tpu.memory_space<vmem>>, %arg4: memref<1x16x4xf32, #tpu.memory_space<vmem>>, %arg5: memref<16x32xf32, #tpu.memory_space<vmem>>, %arg6: memref<16x32xf32, #tpu.memory_space<vmem>>, %arg7: memref<1x32xf32, #tpu.memory_space<vmem>>, %arg8: memref<32x96xf32, #tpu.memory_space<vmem>>, %arg9: memref<1x96xf32, #tpu.memory_space<vmem>>, %arg10: memref<32x32xf32, #tpu.memory_space<vmem>>, %arg11: memref<1x32xf32, #tpu.memory_space<vmem>>, %arg12: memref<32x64xf32, #tpu.memory_space<vmem>>, %arg13: memref<1x64xf32, #tpu.memory_space<vmem>>, %arg14: memref<64x32xf32, #tpu.memory_space<vmem>>, %arg15: memref<1x32xf32, #tpu.memory_space<vmem>>, %arg16: memref<1x32xf32, #tpu.memory_space<vmem>>, %arg17: memref<1x32xf32, #tpu.memory_space<vmem>>, %arg18: memref<1x32xf32, #tpu.memory_space<vmem>>, %arg19: memref<1x32xf32, #tpu.memory_space<vmem>>, %arg20: memref<1x32xf32, #tpu.memory_space<vmem>>, %arg21: memref<1x32xf32, #tpu.memory_space<vmem>>, %arg22: memref<12x32xf32, #tpu.memory_space<vmem>>, %arg23: memref<4x32xf32, #tpu.memory_space<vmem>>, %arg24: memref<32x96xf32, #tpu.memory_space<vmem>>, %arg25: memref<1x96xf32, #tpu.memory_space<vmem>>, %arg26: memref<32x32xf32, #tpu.memory_space<vmem>>, %arg27: memref<1x32xf32, #tpu.memory_space<vmem>>, %arg28: memref<32x32xf32, #tpu.memory_space<vmem>>, %arg29: memref<1x32xf32, #tpu.memory_space<vmem>>, %arg30: memref<32x64xf32, #tpu.memory_space<vmem>>, %arg31: memref<1x64xf32, #tpu.memory_space<vmem>>, %arg32: memref<32x32xf32, #tpu.memory_space<vmem>>, %arg33: memref<1x32xf32, #tpu.memory_space<vmem>>, %arg34: memref<32x64xf32, #tpu.memory_space<vmem>>, %arg35: memref<1x64xf32, #tpu.memory_space<vmem>>, %arg36: memref<64x32xf32, #tpu.memory_space<vmem>>, %arg37: memref<1x32xf32, #tpu.memory_space<vmem>>, %arg38: memref<1x32xf32, #tpu.memory_space<vmem>>, %arg39: memref<1x32xf32, #tpu.memory_space<vmem>>, %arg40: memref<1x32xf32, #tpu.memory_space<vmem>>, %arg41: memref<1x32xf32, #tpu.memory_space<vmem>>, %arg42: memref<1x32xf32, #tpu.memory_space<vmem>>, %arg43: memref<1x32xf32, #tpu.memory_space<vmem>>, %arg44: memref<1x32xf32, #tpu.memory_space<vmem>>, %arg45: memref<1x32xf32, #tpu.memory_space<vmem>>, %arg46: memref<32x4xf32, #tpu.memory_space<vmem>>, %arg47: memref<1x4xf32, #tpu.memory_space<vmem>>, %arg48: memref<1x8x4xf32, #tpu.memory_space<vmem>>) attributes {dimension_semantics = [#tpu.dimension_semantics<parallel>], iteration_bounds = array<i64: 2>, scalar_prefetch = 0 : i64, scratch_operands = 0 : i64, tpu.core_type = #tpu.core_type<tc>, window_params = [{transform_indices = @transform_0, window_bounds = array<i64: 1, 4, 16>}, {transform_indices = @transform_1, window_bounds = array<i64: 1, 1, 1>}, {transform_indices = @transform_2, window_bounds = array<i64: 1, 16, 12>}, {transform_indices = @transform_3, window_bounds = array<i64: 1, 16, 4>}, {pipeline_mode = #tpu.pipeline_mode<synchronous>, transform_indices = @transform_4, window_bounds = array<i64: 16, 32>}, {pipeline_mode = #tpu.pipeline_mode<synchronous>, transform_indices = @transform_5, window_bounds = array<i64: 16, 32>}, {pipeline_mode = #tpu.pipeline_mode<synchronous>, transform_indices = @transform_6, window_bounds = array<i64: 1, 32>}, {pipeline_mode = #tpu.pipeline_mode<synchronous>, transform_indices = @transform_7, window_bounds = array<i64: 32, 96>}, {pipeline_mode = #tpu.pipeline_mode<synchronous>, transform_indices = @transform_8, window_bounds = array<i64: 1, 96>}, {pipeline_mode = #tpu.pipeline_mode<synchronous>, transform_indices = @transform_9, window_bounds = array<i64: 32, 32>}, {pipeline_mode = #tpu.pipeline_mode<synchronous>, transform_indices = @transform_10, window_bounds = array<i64: 1, 32>}, {pipeline_mode = #tpu.pipeline_mode<synchronous>, transform_indices = @transform_11, window_bounds = array<i64: 32, 64>}, {pipeline_mode = #tpu.pipeline_mode<synchronous>, transform_indices = @transform_12, window_bounds = array<i64: 1, 64>}, {pipeline_mode = #tpu.pipeline_mode<synchronous>, transform_indices = @transform_13, window_bounds = array<i64: 64, 32>}, {pipeline_mode = #tpu.pipeline_mode<synchronous>, transform_indices = @transform_14, window_bounds = array<i64: 1, 32>}, {pipeline_mode = #tpu.pipeline_mode<synchronous>, transform_indices = @transform_15, window_bounds = array<i64: 1, 32>}, {pipeline_mode = #tpu.pipeline_mode<synchronous>, transform_indices = @transform_16, window_bounds = array<i64: 1, 32>}, {pipeline_mode = #tpu.pipeline_mode<synchronous>, transform_indices = @transform_17, window_bounds = array<i64: 1, 32>}, {pipeline_mode = #tpu.pipeline_mode<synchronous>, transform_indices = @transform_18, window_bounds = array<i64: 1, 32>}, {pipeline_mode = #tpu.pipeline_mode<synchronous>, transform_indices = @transform_19, window_bounds = array<i64: 1, 32>}, {pipeline_mode = #tpu.pipeline_mode<synchronous>, transform_indices = @transform_20, window_bounds = array<i64: 1, 32>}, {pipeline_mode = #tpu.pipeline_mode<synchronous>, transform_indices = @transform_21, window_bounds = array<i64: 12, 32>}, {pipeline_mode = #tpu.pipeline_mode<synchronous>, transform_indices = @transform_22, window_bounds = array<i64: 4, 32>}, {pipeline_mode = #tpu.pipeline_mode<synchronous>, transform_indices = @transform_23, window_bounds = array<i64: 32, 96>}, {pipeline_mode = #tpu.pipeline_mode<synchronous>, transform_indices = @transform_24, window_bounds = array<i64: 1, 96>}, {pipeline_mode = #tpu.pipeline_mode<synchronous>, transform_indices = @transform_25, window_bounds = array<i64: 32, 32>}, {pipeline_mode = #tpu.pipeline_mode<synchronous>, transform_indices = @transform_26, window_bounds = array<i64: 1, 32>}, {pipeline_mode = #tpu.pipeline_mode<synchronous>, transform_indices = @transform_27, window_bounds = array<i64: 32, 32>}, {pipeline_mode = #tpu.pipeline_mode<synchronous>, transform_indices = @transform_28, window_bounds = array<i64: 1, 32>}, {pipeline_mode = #tpu.pipeline_mode<synchronous>, transform_indices = @transform_29, window_bounds = array<i64: 32, 64>}, {pipeline_mode = #tpu.pipeline_mode<synchronous>, transform_indices = @transform_30, window_bounds = array<i64: 1, 64>}, {pipeline_mode = #tpu.pipeline_mode<synchronous>, transform_indices = @transform_31, window_bounds = array<i64: 32, 32>}, {pipeline_mode = #tpu.pipeline_mode<synchronous>, transform_indices = @transform_32, window_bounds = array<i64: 1, 32>}, {pipeline_mode = #tpu.pipeline_mode<synchronous>, transform_indices = @transform_33, window_bounds = array<i64: 32, 64>}, {pipeline_mode = #tpu.pipeline_mode<synchronous>, transform_indices = @transform_34, window_bounds = array<i64: 1, 64>}, {pipeline_mode = #tpu.pipeline_mode<synchronous>, transform_indices = @transform_35, window_bounds = array<i64: 64, 32>}, {pipeline_mode = #tpu.pipeline_mode<synchronous>, transform_indices = @transform_36, window_bounds = array<i64: 1, 32>}, {pipeline_mode = #tpu.pipeline_mode<synchronous>, transform_indices = @transform_37, window_bounds = array<i64: 1, 32>}, {pipeline_mode = #tpu.pipeline_mode<synchronous>, transform_indices = @transform_38, window_bounds = array<i64: 1, 32>}, {pipeline_mode = #tpu.pipeline_mode<synchronous>, transform_indices = @transform_39, window_bounds = array<i64: 1, 32>}, {pipeline_mode = #tpu.pipeline_mode<synchronous>, transform_indices = @transform_40, window_bounds = array<i64: 1, 32>}, {pipeline_mode = #tpu.pipeline_mode<synchronous>, transform_indices = @transform_41, window_bounds = array<i64: 1, 32>}, {pipeline_mode = #tpu.pipeline_mode<synchronous>, transform_indices = @transform_42, window_bounds = array<i64: 1, 32>}, {pipeline_mode = #tpu.pipeline_mode<synchronous>, transform_indices = @transform_43, window_bounds = array<i64: 1, 32>}, {pipeline_mode = #tpu.pipeline_mode<synchronous>, transform_indices = @transform_44, window_bounds = array<i64: 1, 32>}, {pipeline_mode = #tpu.pipeline_mode<synchronous>, transform_indices = @transform_45, window_bounds = array<i64: 32, 4>}, {pipeline_mode = #tpu.pipeline_mode<synchronous>, transform_indices = @transform_46, window_bounds = array<i64: 1, 4>}, {transform_indices = @transform_47, window_bounds = array<i64: 1, 8, 4>}]} {
    %c0 = arith.constant 0 : index
    %c0_0 = arith.constant 0 : index
    %0 = vector.load %arg6[%c0, %c0_0] : memref<16x32xf32, #tpu.memory_space<vmem>>, vector<16x32xf32>
    %c0_1 = arith.constant 0 : index
    %c0_2 = arith.constant 0 : index
    %1 = vector.load %arg7[%c0_1, %c0_2] : memref<1x32xf32, #tpu.memory_space<vmem>>, vector<1x32xf32>
    %c0_3 = arith.constant 0 : index
    %c0_4 = arith.constant 0 : index
    %c0_5 = arith.constant 0 : index
    %2 = vector.load %arg1[%c0_3, %c0_4, %c0_5] : memref<1x4x16xf32, #tpu.memory_space<vmem>>, vector<1x4x16xf32>
    %3 = vector.shape_cast %2 : vector<1x4x16xf32> to vector<4x16xf32>
    %cst = arith.constant dense<0.000000e+00> : vector<4x32xf32>
    %4 = tpu.matmul %3, %0, %cst {dimension_numbers = #tpu.dot_dimension_numbers<[1], [0], [0], [1], [0, 0, 1, 1], [], []>} : vector<4x16xf32>, vector<16x32xf32>, vector<4x32xf32> -> vector<4x32xf32>
    %5 = vector.broadcast %1 : vector<1x32xf32> to vector<4x32xf32>
    %6 = arith.addf %4, %5 : vector<4x32xf32>
    %c0_6 = arith.constant 0 : index
    %c0_7 = arith.constant 0 : index
    %7 = vector.load %arg8[%c0_6, %c0_7] : memref<32x96xf32, #tpu.memory_space<vmem>>, vector<32x96xf32>
    %c0_8 = arith.constant 0 : index
    %c0_9 = arith.constant 0 : index
    %8 = vector.load %arg9[%c0_8, %c0_9] : memref<1x96xf32, #tpu.memory_space<vmem>>, vector<1x96xf32>
    %c0_10 = arith.constant 0 : index
    %c0_11 = arith.constant 0 : index
    %9 = vector.load %arg10[%c0_10, %c0_11] : memref<32x32xf32, #tpu.memory_space<vmem>>, vector<32x32xf32>
    %c0_12 = arith.constant 0 : index
    %c0_13 = arith.constant 0 : index
    %10 = vector.load %arg11[%c0_12, %c0_13] : memref<1x32xf32, #tpu.memory_space<vmem>>, vector<1x32xf32>
    %c0_14 = arith.constant 0 : index
    %c0_15 = arith.constant 0 : index
    %11 = vector.load %arg12[%c0_14, %c0_15] : memref<32x64xf32, #tpu.memory_space<vmem>>, vector<32x64xf32>
    %c0_16 = arith.constant 0 : index
    %c0_17 = arith.constant 0 : index
    %12 = vector.load %arg13[%c0_16, %c0_17] : memref<1x64xf32, #tpu.memory_space<vmem>>, vector<1x64xf32>
    %c0_18 = arith.constant 0 : index
    %c0_19 = arith.constant 0 : index
    %13 = vector.load %arg14[%c0_18, %c0_19] : memref<64x32xf32, #tpu.memory_space<vmem>>, vector<64x32xf32>
    %c0_20 = arith.constant 0 : index
    %c0_21 = arith.constant 0 : index
    %14 = vector.load %arg15[%c0_20, %c0_21] : memref<1x32xf32, #tpu.memory_space<vmem>>, vector<1x32xf32>
    %c0_22 = arith.constant 0 : index
    %c0_23 = arith.constant 0 : index
    %15 = vector.load %arg16[%c0_22, %c0_23] : memref<1x32xf32, #tpu.memory_space<vmem>>, vector<1x32xf32>
    %c0_24 = arith.constant 0 : index
    %c0_25 = arith.constant 0 : index
    %16 = vector.load %arg17[%c0_24, %c0_25] : memref<1x32xf32, #tpu.memory_space<vmem>>, vector<1x32xf32>
    %c0_26 = arith.constant 0 : index
    %c0_27 = arith.constant 0 : index
    %17 = vector.load %arg18[%c0_26, %c0_27] : memref<1x32xf32, #tpu.memory_space<vmem>>, vector<1x32xf32>
    %c0_28 = arith.constant 0 : index
    %c0_29 = arith.constant 0 : index
    %18 = vector.load %arg19[%c0_28, %c0_29] : memref<1x32xf32, #tpu.memory_space<vmem>>, vector<1x32xf32>
    %cst_30 = arith.constant dense<0.000000e+00> : vector<4x96xf32>
    %19 = tpu.matmul %6, %7, %cst_30 {dimension_numbers = #tpu.dot_dimension_numbers<[1], [0], [0], [1], [0, 0, 1, 1], [], []>} : vector<4x32xf32>, vector<32x96xf32>, vector<4x96xf32> -> vector<4x96xf32>
    %20 = vector.broadcast %8 : vector<1x96xf32> to vector<4x96xf32>
    %21 = arith.addf %19, %20 : vector<4x96xf32>
    %22 = vector.extract_strided_slice %21 {offsets = [0, 0], sizes = [4, 32], strides = [1, 1]} : vector<4x96xf32> to vector<4x32xf32>
    %23 = vector.extract_strided_slice %21 {offsets = [0, 32], sizes = [4, 32], strides = [1, 1]} : vector<4x96xf32> to vector<4x32xf32>
    %24 = vector.extract_strided_slice %21 {offsets = [0, 64], sizes = [4, 32], strides = [1, 1]} : vector<4x96xf32> to vector<4x32xf32>
    %25 = vector.extract_strided_slice %22 {offsets = [0, 0], sizes = [4, 8], strides = [1, 1]} : vector<4x32xf32> to vector<4x8xf32>
    %26 = vector.extract_strided_slice %23 {offsets = [0, 0], sizes = [4, 8], strides = [1, 1]} : vector<4x32xf32> to vector<4x8xf32>
    %27 = vector.extract_strided_slice %24 {offsets = [0, 0], sizes = [4, 8], strides = [1, 1]} : vector<4x32xf32> to vector<4x8xf32>
    %cst_31 = arith.constant dense<0.000000e+00> : vector<4x4xf32>
    %28 = tpu.matmul %25, %26, %cst_31 {dimension_numbers = #tpu.dot_dimension_numbers<[1], [1], [0], [0], [0, 0, 1, 0], [], []>} : vector<4x8xf32>, vector<4x8xf32>, vector<4x4xf32> -> vector<4x4xf32>
    %cst_32 = arith.constant 0.353553385 : f32
    %29 = vector.broadcast %cst_32 : f32 to vector<4x4xf32>
    %30 = arith.mulf %28, %29 : vector<4x4xf32>
    %cst_33 = arith.constant dense<0xFF800000> : vector<4xf32>
    %31 = vector.multi_reduction <maximumf>, %30, %cst_33 [1] : vector<4x4xf32> to vector<4xf32>
    %32 = vector.shape_cast %31 : vector<4xf32> to vector<4x1xf32>
    %33 = vector.broadcast %32 : vector<4x1xf32> to vector<4x4xf32>
    %34 = arith.subf %30, %33 : vector<4x4xf32>
    %35 = math.exp %34 : vector<4x4xf32>
    %cst_34 = arith.constant dense<0.000000e+00> : vector<4xf32>
    %36 = vector.multi_reduction <add>, %35, %cst_34 [1] : vector<4x4xf32> to vector<4xf32>
    %37 = vector.shape_cast %36 : vector<4xf32> to vector<4x1xf32>
    %38 = tpu.reciprocal %37 {approx = true} : vector<4x1xf32> -> vector<4x1xf32>
    %39 = vector.broadcast %38 : vector<4x1xf32> to vector<4x4xf32>
    %40 = arith.mulf %35, %39 : vector<4x4xf32>
    %cst_35 = arith.constant dense<0.000000e+00> : vector<4x8xf32>
    %41 = tpu.matmul %40, %27, %cst_35 {dimension_numbers = #tpu.dot_dimension_numbers<[1], [0], [0], [1], [0, 0, 1, 1], [], []>} : vector<4x4xf32>, vector<4x8xf32>, vector<4x8xf32> -> vector<4x8xf32>
    %42 = vector.extract_strided_slice %9 {offsets = [0, 0], sizes = [8, 32], strides = [1, 1]} : vector<32x32xf32> to vector<8x32xf32>
    %cst_36 = arith.constant dense<0.000000e+00> : vector<4x32xf32>
    %43 = tpu.matmul %41, %42, %cst_36 {dimension_numbers = #tpu.dot_dimension_numbers<[1], [0], [0], [1], [0, 0, 1, 1], [], []>} : vector<4x8xf32>, vector<8x32xf32>, vector<4x32xf32> -> vector<4x32xf32>
    %44 = vector.extract_strided_slice %22 {offsets = [0, 8], sizes = [4, 8], strides = [1, 1]} : vector<4x32xf32> to vector<4x8xf32>
    %45 = vector.extract_strided_slice %23 {offsets = [0, 8], sizes = [4, 8], strides = [1, 1]} : vector<4x32xf32> to vector<4x8xf32>
    %46 = vector.extract_strided_slice %24 {offsets = [0, 8], sizes = [4, 8], strides = [1, 1]} : vector<4x32xf32> to vector<4x8xf32>
    %cst_37 = arith.constant dense<0.000000e+00> : vector<4x4xf32>
    %47 = tpu.matmul %44, %45, %cst_37 {dimension_numbers = #tpu.dot_dimension_numbers<[1], [1], [0], [0], [0, 0, 1, 0], [], []>} : vector<4x8xf32>, vector<4x8xf32>, vector<4x4xf32> -> vector<4x4xf32>
    %cst_38 = arith.constant 0.353553385 : f32
    %48 = vector.broadcast %cst_38 : f32 to vector<4x4xf32>
    %49 = arith.mulf %47, %48 : vector<4x4xf32>
    %cst_39 = arith.constant dense<0xFF800000> : vector<4xf32>
    %50 = vector.multi_reduction <maximumf>, %49, %cst_39 [1] : vector<4x4xf32> to vector<4xf32>
    %51 = vector.shape_cast %50 : vector<4xf32> to vector<4x1xf32>
    %52 = vector.broadcast %51 : vector<4x1xf32> to vector<4x4xf32>
    %53 = arith.subf %49, %52 : vector<4x4xf32>
    %54 = math.exp %53 : vector<4x4xf32>
    %cst_40 = arith.constant dense<0.000000e+00> : vector<4xf32>
    %55 = vector.multi_reduction <add>, %54, %cst_40 [1] : vector<4x4xf32> to vector<4xf32>
    %56 = vector.shape_cast %55 : vector<4xf32> to vector<4x1xf32>
    %57 = tpu.reciprocal %56 {approx = true} : vector<4x1xf32> -> vector<4x1xf32>
    %58 = vector.broadcast %57 : vector<4x1xf32> to vector<4x4xf32>
    %59 = arith.mulf %54, %58 : vector<4x4xf32>
    %cst_41 = arith.constant dense<0.000000e+00> : vector<4x8xf32>
    %60 = tpu.matmul %59, %46, %cst_41 {dimension_numbers = #tpu.dot_dimension_numbers<[1], [0], [0], [1], [0, 0, 1, 1], [], []>} : vector<4x4xf32>, vector<4x8xf32>, vector<4x8xf32> -> vector<4x8xf32>
    %61 = vector.extract_strided_slice %9 {offsets = [8, 0], sizes = [8, 32], strides = [1, 1]} : vector<32x32xf32> to vector<8x32xf32>
    %cst_42 = arith.constant dense<0.000000e+00> : vector<4x32xf32>
    %62 = tpu.matmul %60, %61, %cst_42 {dimension_numbers = #tpu.dot_dimension_numbers<[1], [0], [0], [1], [0, 0, 1, 1], [], []>} : vector<4x8xf32>, vector<8x32xf32>, vector<4x32xf32> -> vector<4x32xf32>
    %63 = arith.addf %43, %62 : vector<4x32xf32>
    %64 = vector.extract_strided_slice %22 {offsets = [0, 16], sizes = [4, 8], strides = [1, 1]} : vector<4x32xf32> to vector<4x8xf32>
    %65 = vector.extract_strided_slice %23 {offsets = [0, 16], sizes = [4, 8], strides = [1, 1]} : vector<4x32xf32> to vector<4x8xf32>
    %66 = vector.extract_strided_slice %24 {offsets = [0, 16], sizes = [4, 8], strides = [1, 1]} : vector<4x32xf32> to vector<4x8xf32>
    %cst_43 = arith.constant dense<0.000000e+00> : vector<4x4xf32>
    %67 = tpu.matmul %64, %65, %cst_43 {dimension_numbers = #tpu.dot_dimension_numbers<[1], [1], [0], [0], [0, 0, 1, 0], [], []>} : vector<4x8xf32>, vector<4x8xf32>, vector<4x4xf32> -> vector<4x4xf32>
    %cst_44 = arith.constant 0.353553385 : f32
    %68 = vector.broadcast %cst_44 : f32 to vector<4x4xf32>
    %69 = arith.mulf %67, %68 : vector<4x4xf32>
    %cst_45 = arith.constant dense<0xFF800000> : vector<4xf32>
    %70 = vector.multi_reduction <maximumf>, %69, %cst_45 [1] : vector<4x4xf32> to vector<4xf32>
    %71 = vector.shape_cast %70 : vector<4xf32> to vector<4x1xf32>
    %72 = vector.broadcast %71 : vector<4x1xf32> to vector<4x4xf32>
    %73 = arith.subf %69, %72 : vector<4x4xf32>
    %74 = math.exp %73 : vector<4x4xf32>
    %cst_46 = arith.constant dense<0.000000e+00> : vector<4xf32>
    %75 = vector.multi_reduction <add>, %74, %cst_46 [1] : vector<4x4xf32> to vector<4xf32>
    %76 = vector.shape_cast %75 : vector<4xf32> to vector<4x1xf32>
    %77 = tpu.reciprocal %76 {approx = true} : vector<4x1xf32> -> vector<4x1xf32>
    %78 = vector.broadcast %77 : vector<4x1xf32> to vector<4x4xf32>
    %79 = arith.mulf %74, %78 : vector<4x4xf32>
    %cst_47 = arith.constant dense<0.000000e+00> : vector<4x8xf32>
    %80 = tpu.matmul %79, %66, %cst_47 {dimension_numbers = #tpu.dot_dimension_numbers<[1], [0], [0], [1], [0, 0, 1, 1], [], []>} : vector<4x4xf32>, vector<4x8xf32>, vector<4x8xf32> -> vector<4x8xf32>
    %81 = vector.extract_strided_slice %9 {offsets = [16, 0], sizes = [8, 32], strides = [1, 1]} : vector<32x32xf32> to vector<8x32xf32>
    %cst_48 = arith.constant dense<0.000000e+00> : vector<4x32xf32>
    %82 = tpu.matmul %80, %81, %cst_48 {dimension_numbers = #tpu.dot_dimension_numbers<[1], [0], [0], [1], [0, 0, 1, 1], [], []>} : vector<4x8xf32>, vector<8x32xf32>, vector<4x32xf32> -> vector<4x32xf32>
    %83 = arith.addf %63, %82 : vector<4x32xf32>
    %84 = vector.extract_strided_slice %22 {offsets = [0, 24], sizes = [4, 8], strides = [1, 1]} : vector<4x32xf32> to vector<4x8xf32>
    %85 = vector.extract_strided_slice %23 {offsets = [0, 24], sizes = [4, 8], strides = [1, 1]} : vector<4x32xf32> to vector<4x8xf32>
    %86 = vector.extract_strided_slice %24 {offsets = [0, 24], sizes = [4, 8], strides = [1, 1]} : vector<4x32xf32> to vector<4x8xf32>
    %cst_49 = arith.constant dense<0.000000e+00> : vector<4x4xf32>
    %87 = tpu.matmul %84, %85, %cst_49 {dimension_numbers = #tpu.dot_dimension_numbers<[1], [1], [0], [0], [0, 0, 1, 0], [], []>} : vector<4x8xf32>, vector<4x8xf32>, vector<4x4xf32> -> vector<4x4xf32>
    %cst_50 = arith.constant 0.353553385 : f32
    %88 = vector.broadcast %cst_50 : f32 to vector<4x4xf32>
    %89 = arith.mulf %87, %88 : vector<4x4xf32>
    %cst_51 = arith.constant dense<0xFF800000> : vector<4xf32>
    %90 = vector.multi_reduction <maximumf>, %89, %cst_51 [1] : vector<4x4xf32> to vector<4xf32>
    %91 = vector.shape_cast %90 : vector<4xf32> to vector<4x1xf32>
    %92 = vector.broadcast %91 : vector<4x1xf32> to vector<4x4xf32>
    %93 = arith.subf %89, %92 : vector<4x4xf32>
    %94 = math.exp %93 : vector<4x4xf32>
    %cst_52 = arith.constant dense<0.000000e+00> : vector<4xf32>
    %95 = vector.multi_reduction <add>, %94, %cst_52 [1] : vector<4x4xf32> to vector<4xf32>
    %96 = vector.shape_cast %95 : vector<4xf32> to vector<4x1xf32>
    %97 = tpu.reciprocal %96 {approx = true} : vector<4x1xf32> -> vector<4x1xf32>
    %98 = vector.broadcast %97 : vector<4x1xf32> to vector<4x4xf32>
    %99 = arith.mulf %94, %98 : vector<4x4xf32>
    %cst_53 = arith.constant dense<0.000000e+00> : vector<4x8xf32>
    %100 = tpu.matmul %99, %86, %cst_53 {dimension_numbers = #tpu.dot_dimension_numbers<[1], [0], [0], [1], [0, 0, 1, 1], [], []>} : vector<4x4xf32>, vector<4x8xf32>, vector<4x8xf32> -> vector<4x8xf32>
    %101 = vector.extract_strided_slice %9 {offsets = [24, 0], sizes = [8, 32], strides = [1, 1]} : vector<32x32xf32> to vector<8x32xf32>
    %cst_54 = arith.constant dense<0.000000e+00> : vector<4x32xf32>
    %102 = tpu.matmul %100, %101, %cst_54 {dimension_numbers = #tpu.dot_dimension_numbers<[1], [0], [0], [1], [0, 0, 1, 1], [], []>} : vector<4x8xf32>, vector<8x32xf32>, vector<4x32xf32> -> vector<4x32xf32>
    %103 = arith.addf %83, %102 : vector<4x32xf32>
    %104 = vector.broadcast %10 : vector<1x32xf32> to vector<4x32xf32>
    %105 = arith.addf %103, %104 : vector<4x32xf32>
    %106 = arith.addf %6, %105 : vector<4x32xf32>
    %cst_55 = arith.constant dense<0.000000e+00> : vector<4xf32>
    %107 = vector.multi_reduction <add>, %106, %cst_55 [1] : vector<4x32xf32> to vector<4xf32>
    %108 = vector.shape_cast %107 : vector<4xf32> to vector<4x1xf32>
    %cst_56 = arith.constant 3.200000e+01 : f32
    %109 = vector.broadcast %cst_56 : f32 to vector<4x1xf32>
    %110 = arith.divf %108, %109 : vector<4x1xf32>
    %111 = vector.broadcast %110 : vector<4x1xf32> to vector<4x32xf32>
    %112 = arith.subf %106, %111 : vector<4x32xf32>
    %113 = arith.mulf %112, %112 : vector<4x32xf32>
    %cst_57 = arith.constant dense<0.000000e+00> : vector<4xf32>
    %114 = vector.multi_reduction <add>, %113, %cst_57 [1] : vector<4x32xf32> to vector<4xf32>
    %115 = vector.shape_cast %114 : vector<4xf32> to vector<4x1xf32>
    %cst_58 = arith.constant 3.200000e+01 : f32
    %116 = vector.broadcast %cst_58 : f32 to vector<4x1xf32>
    %117 = arith.divf %115, %116 : vector<4x1xf32>
    %cst_59 = arith.constant 9.99999974E-6 : f32
    %118 = vector.broadcast %cst_59 : f32 to vector<4x1xf32>
    %119 = arith.addf %117, %118 : vector<4x1xf32>
    %120 = math.rsqrt %119 : vector<4x1xf32>
    %121 = vector.broadcast %120 : vector<4x1xf32> to vector<4x32xf32>
    %122 = arith.mulf %112, %121 : vector<4x32xf32>
    %123 = vector.broadcast %15 : vector<1x32xf32> to vector<4x32xf32>
    %124 = arith.mulf %122, %123 : vector<4x32xf32>
    %125 = vector.broadcast %16 : vector<1x32xf32> to vector<4x32xf32>
    %126 = arith.addf %124, %125 : vector<4x32xf32>
    %cst_60 = arith.constant dense<0.000000e+00> : vector<4x64xf32>
    %127 = tpu.matmul %126, %11, %cst_60 {dimension_numbers = #tpu.dot_dimension_numbers<[1], [0], [0], [1], [0, 0, 1, 1], [], []>} : vector<4x32xf32>, vector<32x64xf32>, vector<4x64xf32> -> vector<4x64xf32>
    %128 = vector.broadcast %12 : vector<1x64xf32> to vector<4x64xf32>
    %129 = arith.addf %127, %128 : vector<4x64xf32>
    %cst_61 = arith.constant 0.000000e+00 : f32
    %130 = vector.broadcast %cst_61 : f32 to vector<4x64xf32>
    %131 = arith.maximumf %129, %130 : vector<4x64xf32>
    %cst_62 = arith.constant dense<0.000000e+00> : vector<4x32xf32>
    %132 = tpu.matmul %131, %13, %cst_62 {dimension_numbers = #tpu.dot_dimension_numbers<[1], [0], [0], [1], [0, 0, 1, 1], [], []>} : vector<4x64xf32>, vector<64x32xf32>, vector<4x32xf32> -> vector<4x32xf32>
    %133 = vector.broadcast %14 : vector<1x32xf32> to vector<4x32xf32>
    %134 = arith.addf %132, %133 : vector<4x32xf32>
    %135 = arith.addf %126, %134 : vector<4x32xf32>
    %cst_63 = arith.constant dense<0.000000e+00> : vector<4xf32>
    %136 = vector.multi_reduction <add>, %135, %cst_63 [1] : vector<4x32xf32> to vector<4xf32>
    %137 = vector.shape_cast %136 : vector<4xf32> to vector<4x1xf32>
    %cst_64 = arith.constant 3.200000e+01 : f32
    %138 = vector.broadcast %cst_64 : f32 to vector<4x1xf32>
    %139 = arith.divf %137, %138 : vector<4x1xf32>
    %140 = vector.broadcast %139 : vector<4x1xf32> to vector<4x32xf32>
    %141 = arith.subf %135, %140 : vector<4x32xf32>
    %142 = arith.mulf %141, %141 : vector<4x32xf32>
    %cst_65 = arith.constant dense<0.000000e+00> : vector<4xf32>
    %143 = vector.multi_reduction <add>, %142, %cst_65 [1] : vector<4x32xf32> to vector<4xf32>
    %144 = vector.shape_cast %143 : vector<4xf32> to vector<4x1xf32>
    %cst_66 = arith.constant 3.200000e+01 : f32
    %145 = vector.broadcast %cst_66 : f32 to vector<4x1xf32>
    %146 = arith.divf %144, %145 : vector<4x1xf32>
    %cst_67 = arith.constant 9.99999974E-6 : f32
    %147 = vector.broadcast %cst_67 : f32 to vector<4x1xf32>
    %148 = arith.addf %146, %147 : vector<4x1xf32>
    %149 = math.rsqrt %148 : vector<4x1xf32>
    %150 = vector.broadcast %149 : vector<4x1xf32> to vector<4x32xf32>
    %151 = arith.mulf %141, %150 : vector<4x32xf32>
    %152 = vector.broadcast %17 : vector<1x32xf32> to vector<4x32xf32>
    %153 = arith.mulf %151, %152 : vector<4x32xf32>
    %154 = vector.broadcast %18 : vector<1x32xf32> to vector<4x32xf32>
    %155 = arith.addf %153, %154 : vector<4x32xf32>
    %c0_68 = arith.constant 0 : index
    %c0_69 = arith.constant 0 : index
    %156 = vector.load %arg20[%c0_68, %c0_69] : memref<1x32xf32, #tpu.memory_space<vmem>>, vector<1x32xf32>
    %c0_70 = arith.constant 0 : index
    %c0_71 = arith.constant 0 : index
    %157 = vector.load %arg21[%c0_70, %c0_71] : memref<1x32xf32, #tpu.memory_space<vmem>>, vector<1x32xf32>
    %cst_72 = arith.constant dense<0.000000e+00> : vector<4xf32>
    %158 = vector.multi_reduction <add>, %155, %cst_72 [1] : vector<4x32xf32> to vector<4xf32>
    %159 = vector.shape_cast %158 : vector<4xf32> to vector<4x1xf32>
    %cst_73 = arith.constant 3.200000e+01 : f32
    %160 = vector.broadcast %cst_73 : f32 to vector<4x1xf32>
    %161 = arith.divf %159, %160 : vector<4x1xf32>
    %162 = vector.broadcast %161 : vector<4x1xf32> to vector<4x32xf32>
    %163 = arith.subf %155, %162 : vector<4x32xf32>
    %164 = arith.mulf %163, %163 : vector<4x32xf32>
    %cst_74 = arith.constant dense<0.000000e+00> : vector<4xf32>
    %165 = vector.multi_reduction <add>, %164, %cst_74 [1] : vector<4x32xf32> to vector<4xf32>
    %166 = vector.shape_cast %165 : vector<4xf32> to vector<4x1xf32>
    %cst_75 = arith.constant 3.200000e+01 : f32
    %167 = vector.broadcast %cst_75 : f32 to vector<4x1xf32>
    %168 = arith.divf %166, %167 : vector<4x1xf32>
    %cst_76 = arith.constant 9.99999974E-6 : f32
    %169 = vector.broadcast %cst_76 : f32 to vector<4x1xf32>
    %170 = arith.addf %168, %169 : vector<4x1xf32>
    %171 = math.rsqrt %170 : vector<4x1xf32>
    %172 = vector.broadcast %171 : vector<4x1xf32> to vector<4x32xf32>
    %173 = arith.mulf %163, %172 : vector<4x32xf32>
    %174 = vector.broadcast %156 : vector<1x32xf32> to vector<4x32xf32>
    %175 = arith.mulf %173, %174 : vector<4x32xf32>
    %176 = vector.broadcast %157 : vector<1x32xf32> to vector<4x32xf32>
    %177 = arith.addf %175, %176 : vector<4x32xf32>
    %c0_77 = arith.constant 0 : index
    %c0_78 = arith.constant 0 : index
    %178 = vector.load %arg22[%c0_77, %c0_78] : memref<12x32xf32, #tpu.memory_space<vmem>>, vector<12x32xf32>
    %c0_79 = arith.constant 0 : index
    %c0_80 = arith.constant 0 : index
    %179 = vector.load %arg23[%c0_79, %c0_80] : memref<4x32xf32, #tpu.memory_space<vmem>>, vector<4x32xf32>
    %c0_81 = arith.constant 0 : index
    %c0_82 = arith.constant 0 : index
    %c0_83 = arith.constant 0 : index
    %180 = vector.load %arg3[%c0_81, %c0_82, %c0_83] : memref<1x16x12xf32, #tpu.memory_space<vmem>>, vector<1x16x12xf32>
    %181 = vector.shape_cast %180 : vector<1x16x12xf32> to vector<16x12xf32>
    %cst_84 = arith.constant dense<0.000000e+00> : vector<16x32xf32>
    %182 = tpu.matmul %181, %178, %cst_84 {dimension_numbers = #tpu.dot_dimension_numbers<[1], [0], [0], [1], [0, 0, 1, 1], [], []>} : vector<16x12xf32>, vector<12x32xf32>, vector<16x32xf32> -> vector<16x32xf32>
    %c0_85 = arith.constant 0 : index
    %c0_86 = arith.constant 0 : index
    %c0_87 = arith.constant 0 : index
    %183 = vector.load %arg4[%c0_85, %c0_86, %c0_87] : memref<1x16x4xf32, #tpu.memory_space<vmem>>, vector<1x16x4xf32>
    %184 = vector.shape_cast %183 : vector<1x16x4xf32> to vector<16x4xf32>
    %cst_88 = arith.constant dense<0.000000e+00> : vector<16x32xf32>
    %185 = tpu.matmul %184, %179, %cst_88 {dimension_numbers = #tpu.dot_dimension_numbers<[1], [0], [0], [1], [0, 0, 1, 1], [], []>} : vector<16x4xf32>, vector<4x32xf32>, vector<16x32xf32> -> vector<16x32xf32>
    %186 = arith.addf %182, %185 : vector<16x32xf32>
    %c0_89 = arith.constant 0 : index
    %c0_90 = arith.constant 0 : index
    %187 = vector.load %arg5[%c0_89, %c0_90] : memref<16x32xf32, #tpu.memory_space<vmem>>, vector<16x32xf32>
    %188 = arith.addf %186, %187 : vector<16x32xf32>
    %c0_91 = arith.constant 0 : index
    %c0_92 = arith.constant 0 : index
    %189 = vector.load %arg24[%c0_91, %c0_92] : memref<32x96xf32, #tpu.memory_space<vmem>>, vector<32x96xf32>
    %c0_93 = arith.constant 0 : index
    %c0_94 = arith.constant 0 : index
    %190 = vector.load %arg25[%c0_93, %c0_94] : memref<1x96xf32, #tpu.memory_space<vmem>>, vector<1x96xf32>
    %c0_95 = arith.constant 0 : index
    %c0_96 = arith.constant 0 : index
    %191 = vector.load %arg26[%c0_95, %c0_96] : memref<32x32xf32, #tpu.memory_space<vmem>>, vector<32x32xf32>
    %c0_97 = arith.constant 0 : index
    %c0_98 = arith.constant 0 : index
    %192 = vector.load %arg27[%c0_97, %c0_98] : memref<1x32xf32, #tpu.memory_space<vmem>>, vector<1x32xf32>
    %c0_99 = arith.constant 0 : index
    %c0_100 = arith.constant 0 : index
    %193 = vector.load %arg28[%c0_99, %c0_100] : memref<32x32xf32, #tpu.memory_space<vmem>>, vector<32x32xf32>
    %c0_101 = arith.constant 0 : index
    %c0_102 = arith.constant 0 : index
    %194 = vector.load %arg29[%c0_101, %c0_102] : memref<1x32xf32, #tpu.memory_space<vmem>>, vector<1x32xf32>
    %c0_103 = arith.constant 0 : index
    %c0_104 = arith.constant 0 : index
    %195 = vector.load %arg30[%c0_103, %c0_104] : memref<32x64xf32, #tpu.memory_space<vmem>>, vector<32x64xf32>
    %c0_105 = arith.constant 0 : index
    %c0_106 = arith.constant 0 : index
    %196 = vector.load %arg31[%c0_105, %c0_106] : memref<1x64xf32, #tpu.memory_space<vmem>>, vector<1x64xf32>
    %c0_107 = arith.constant 0 : index
    %c0_108 = arith.constant 0 : index
    %197 = vector.load %arg32[%c0_107, %c0_108] : memref<32x32xf32, #tpu.memory_space<vmem>>, vector<32x32xf32>
    %c0_109 = arith.constant 0 : index
    %c0_110 = arith.constant 0 : index
    %198 = vector.load %arg33[%c0_109, %c0_110] : memref<1x32xf32, #tpu.memory_space<vmem>>, vector<1x32xf32>
    %c0_111 = arith.constant 0 : index
    %c0_112 = arith.constant 0 : index
    %199 = vector.load %arg34[%c0_111, %c0_112] : memref<32x64xf32, #tpu.memory_space<vmem>>, vector<32x64xf32>
    %c0_113 = arith.constant 0 : index
    %c0_114 = arith.constant 0 : index
    %200 = vector.load %arg35[%c0_113, %c0_114] : memref<1x64xf32, #tpu.memory_space<vmem>>, vector<1x64xf32>
    %c0_115 = arith.constant 0 : index
    %c0_116 = arith.constant 0 : index
    %201 = vector.load %arg36[%c0_115, %c0_116] : memref<64x32xf32, #tpu.memory_space<vmem>>, vector<64x32xf32>
    %c0_117 = arith.constant 0 : index
    %c0_118 = arith.constant 0 : index
    %202 = vector.load %arg37[%c0_117, %c0_118] : memref<1x32xf32, #tpu.memory_space<vmem>>, vector<1x32xf32>
    %c0_119 = arith.constant 0 : index
    %c0_120 = arith.constant 0 : index
    %203 = vector.load %arg38[%c0_119, %c0_120] : memref<1x32xf32, #tpu.memory_space<vmem>>, vector<1x32xf32>
    %c0_121 = arith.constant 0 : index
    %c0_122 = arith.constant 0 : index
    %204 = vector.load %arg39[%c0_121, %c0_122] : memref<1x32xf32, #tpu.memory_space<vmem>>, vector<1x32xf32>
    %c0_123 = arith.constant 0 : index
    %c0_124 = arith.constant 0 : index
    %205 = vector.load %arg40[%c0_123, %c0_124] : memref<1x32xf32, #tpu.memory_space<vmem>>, vector<1x32xf32>
    %c0_125 = arith.constant 0 : index
    %c0_126 = arith.constant 0 : index
    %206 = vector.load %arg41[%c0_125, %c0_126] : memref<1x32xf32, #tpu.memory_space<vmem>>, vector<1x32xf32>
    %c0_127 = arith.constant 0 : index
    %c0_128 = arith.constant 0 : index
    %207 = vector.load %arg42[%c0_127, %c0_128] : memref<1x32xf32, #tpu.memory_space<vmem>>, vector<1x32xf32>
    %c0_129 = arith.constant 0 : index
    %c0_130 = arith.constant 0 : index
    %208 = vector.load %arg43[%c0_129, %c0_130] : memref<1x32xf32, #tpu.memory_space<vmem>>, vector<1x32xf32>
    %cst_131 = arith.constant dense<0.000000e+00> : vector<16x96xf32>
    %209 = tpu.matmul %188, %189, %cst_131 {dimension_numbers = #tpu.dot_dimension_numbers<[1], [0], [0], [1], [0, 0, 1, 1], [], []>} : vector<16x32xf32>, vector<32x96xf32>, vector<16x96xf32> -> vector<16x96xf32>
    %210 = vector.broadcast %190 : vector<1x96xf32> to vector<16x96xf32>
    %211 = arith.addf %209, %210 : vector<16x96xf32>
    %212 = vector.extract_strided_slice %211 {offsets = [0, 0], sizes = [16, 32], strides = [1, 1]} : vector<16x96xf32> to vector<16x32xf32>
    %213 = vector.extract_strided_slice %211 {offsets = [0, 32], sizes = [16, 32], strides = [1, 1]} : vector<16x96xf32> to vector<16x32xf32>
    %214 = vector.extract_strided_slice %211 {offsets = [0, 64], sizes = [16, 32], strides = [1, 1]} : vector<16x96xf32> to vector<16x32xf32>
    %215 = tpu.iota {dimensions = array<i32: 0>} : vector<16x16xi32>
    %216 = tpu.iota {dimensions = array<i32: 1>} : vector<16x16xi32>
    %217 = arith.cmpi sgt, %216, %215 : vector<16x16xi32>
    %cst_132 = arith.constant 0xFF800000 : f32
    %cst_133 = arith.constant 0.000000e+00 : f32
    %218 = vector.broadcast %cst_132 : f32 to vector<16x16xf32>
    %219 = vector.broadcast %cst_133 : f32 to vector<16x16xf32>
    %220 = arith.select %217, %218, %219 : vector<16x16xi1>, vector<16x16xf32>
    %221 = vector.extract_strided_slice %212 {offsets = [0, 0], sizes = [16, 8], strides = [1, 1]} : vector<16x32xf32> to vector<16x8xf32>
    %222 = vector.extract_strided_slice %213 {offsets = [0, 0], sizes = [16, 8], strides = [1, 1]} : vector<16x32xf32> to vector<16x8xf32>
    %223 = vector.extract_strided_slice %214 {offsets = [0, 0], sizes = [16, 8], strides = [1, 1]} : vector<16x32xf32> to vector<16x8xf32>
    %cst_134 = arith.constant dense<0.000000e+00> : vector<16x16xf32>
    %224 = tpu.matmul %221, %222, %cst_134 {dimension_numbers = #tpu.dot_dimension_numbers<[1], [1], [0], [0], [0, 0, 1, 0], [], []>} : vector<16x8xf32>, vector<16x8xf32>, vector<16x16xf32> -> vector<16x16xf32>
    %cst_135 = arith.constant 0.353553385 : f32
    %225 = vector.broadcast %cst_135 : f32 to vector<16x16xf32>
    %226 = arith.mulf %224, %225 : vector<16x16xf32>
    %227 = arith.addf %226, %220 : vector<16x16xf32>
    %cst_136 = arith.constant dense<0xFF800000> : vector<16xf32>
    %228 = vector.multi_reduction <maximumf>, %227, %cst_136 [1] : vector<16x16xf32> to vector<16xf32>
    %229 = vector.shape_cast %228 : vector<16xf32> to vector<16x1xf32>
    %230 = vector.broadcast %229 : vector<16x1xf32> to vector<16x16xf32>
    %231 = arith.subf %227, %230 : vector<16x16xf32>
    %232 = math.exp %231 : vector<16x16xf32>
    %cst_137 = arith.constant dense<0.000000e+00> : vector<16xf32>
    %233 = vector.multi_reduction <add>, %232, %cst_137 [1] : vector<16x16xf32> to vector<16xf32>
    %234 = vector.shape_cast %233 : vector<16xf32> to vector<16x1xf32>
    %235 = tpu.reciprocal %234 {approx = true} : vector<16x1xf32> -> vector<16x1xf32>
    %236 = vector.broadcast %235 : vector<16x1xf32> to vector<16x16xf32>
    %237 = arith.mulf %232, %236 : vector<16x16xf32>
    %cst_138 = arith.constant dense<0.000000e+00> : vector<16x8xf32>
    %238 = tpu.matmul %237, %223, %cst_138 {dimension_numbers = #tpu.dot_dimension_numbers<[1], [0], [0], [1], [0, 0, 1, 1], [], []>} : vector<16x16xf32>, vector<16x8xf32>, vector<16x8xf32> -> vector<16x8xf32>
    %239 = vector.extract_strided_slice %191 {offsets = [0, 0], sizes = [8, 32], strides = [1, 1]} : vector<32x32xf32> to vector<8x32xf32>
    %cst_139 = arith.constant dense<0.000000e+00> : vector<16x32xf32>
    %240 = tpu.matmul %238, %239, %cst_139 {dimension_numbers = #tpu.dot_dimension_numbers<[1], [0], [0], [1], [0, 0, 1, 1], [], []>} : vector<16x8xf32>, vector<8x32xf32>, vector<16x32xf32> -> vector<16x32xf32>
    %241 = vector.extract_strided_slice %212 {offsets = [0, 8], sizes = [16, 8], strides = [1, 1]} : vector<16x32xf32> to vector<16x8xf32>
    %242 = vector.extract_strided_slice %213 {offsets = [0, 8], sizes = [16, 8], strides = [1, 1]} : vector<16x32xf32> to vector<16x8xf32>
    %243 = vector.extract_strided_slice %214 {offsets = [0, 8], sizes = [16, 8], strides = [1, 1]} : vector<16x32xf32> to vector<16x8xf32>
    %cst_140 = arith.constant dense<0.000000e+00> : vector<16x16xf32>
    %244 = tpu.matmul %241, %242, %cst_140 {dimension_numbers = #tpu.dot_dimension_numbers<[1], [1], [0], [0], [0, 0, 1, 0], [], []>} : vector<16x8xf32>, vector<16x8xf32>, vector<16x16xf32> -> vector<16x16xf32>
    %cst_141 = arith.constant 0.353553385 : f32
    %245 = vector.broadcast %cst_141 : f32 to vector<16x16xf32>
    %246 = arith.mulf %244, %245 : vector<16x16xf32>
    %247 = arith.addf %246, %220 : vector<16x16xf32>
    %cst_142 = arith.constant dense<0xFF800000> : vector<16xf32>
    %248 = vector.multi_reduction <maximumf>, %247, %cst_142 [1] : vector<16x16xf32> to vector<16xf32>
    %249 = vector.shape_cast %248 : vector<16xf32> to vector<16x1xf32>
    %250 = vector.broadcast %249 : vector<16x1xf32> to vector<16x16xf32>
    %251 = arith.subf %247, %250 : vector<16x16xf32>
    %252 = math.exp %251 : vector<16x16xf32>
    %cst_143 = arith.constant dense<0.000000e+00> : vector<16xf32>
    %253 = vector.multi_reduction <add>, %252, %cst_143 [1] : vector<16x16xf32> to vector<16xf32>
    %254 = vector.shape_cast %253 : vector<16xf32> to vector<16x1xf32>
    %255 = tpu.reciprocal %254 {approx = true} : vector<16x1xf32> -> vector<16x1xf32>
    %256 = vector.broadcast %255 : vector<16x1xf32> to vector<16x16xf32>
    %257 = arith.mulf %252, %256 : vector<16x16xf32>
    %cst_144 = arith.constant dense<0.000000e+00> : vector<16x8xf32>
    %258 = tpu.matmul %257, %243, %cst_144 {dimension_numbers = #tpu.dot_dimension_numbers<[1], [0], [0], [1], [0, 0, 1, 1], [], []>} : vector<16x16xf32>, vector<16x8xf32>, vector<16x8xf32> -> vector<16x8xf32>
    %259 = vector.extract_strided_slice %191 {offsets = [8, 0], sizes = [8, 32], strides = [1, 1]} : vector<32x32xf32> to vector<8x32xf32>
    %cst_145 = arith.constant dense<0.000000e+00> : vector<16x32xf32>
    %260 = tpu.matmul %258, %259, %cst_145 {dimension_numbers = #tpu.dot_dimension_numbers<[1], [0], [0], [1], [0, 0, 1, 1], [], []>} : vector<16x8xf32>, vector<8x32xf32>, vector<16x32xf32> -> vector<16x32xf32>
    %261 = arith.addf %240, %260 : vector<16x32xf32>
    %262 = vector.extract_strided_slice %212 {offsets = [0, 16], sizes = [16, 8], strides = [1, 1]} : vector<16x32xf32> to vector<16x8xf32>
    %263 = vector.extract_strided_slice %213 {offsets = [0, 16], sizes = [16, 8], strides = [1, 1]} : vector<16x32xf32> to vector<16x8xf32>
    %264 = vector.extract_strided_slice %214 {offsets = [0, 16], sizes = [16, 8], strides = [1, 1]} : vector<16x32xf32> to vector<16x8xf32>
    %cst_146 = arith.constant dense<0.000000e+00> : vector<16x16xf32>
    %265 = tpu.matmul %262, %263, %cst_146 {dimension_numbers = #tpu.dot_dimension_numbers<[1], [1], [0], [0], [0, 0, 1, 0], [], []>} : vector<16x8xf32>, vector<16x8xf32>, vector<16x16xf32> -> vector<16x16xf32>
    %cst_147 = arith.constant 0.353553385 : f32
    %266 = vector.broadcast %cst_147 : f32 to vector<16x16xf32>
    %267 = arith.mulf %265, %266 : vector<16x16xf32>
    %268 = arith.addf %267, %220 : vector<16x16xf32>
    %cst_148 = arith.constant dense<0xFF800000> : vector<16xf32>
    %269 = vector.multi_reduction <maximumf>, %268, %cst_148 [1] : vector<16x16xf32> to vector<16xf32>
    %270 = vector.shape_cast %269 : vector<16xf32> to vector<16x1xf32>
    %271 = vector.broadcast %270 : vector<16x1xf32> to vector<16x16xf32>
    %272 = arith.subf %268, %271 : vector<16x16xf32>
    %273 = math.exp %272 : vector<16x16xf32>
    %cst_149 = arith.constant dense<0.000000e+00> : vector<16xf32>
    %274 = vector.multi_reduction <add>, %273, %cst_149 [1] : vector<16x16xf32> to vector<16xf32>
    %275 = vector.shape_cast %274 : vector<16xf32> to vector<16x1xf32>
    %276 = tpu.reciprocal %275 {approx = true} : vector<16x1xf32> -> vector<16x1xf32>
    %277 = vector.broadcast %276 : vector<16x1xf32> to vector<16x16xf32>
    %278 = arith.mulf %273, %277 : vector<16x16xf32>
    %cst_150 = arith.constant dense<0.000000e+00> : vector<16x8xf32>
    %279 = tpu.matmul %278, %264, %cst_150 {dimension_numbers = #tpu.dot_dimension_numbers<[1], [0], [0], [1], [0, 0, 1, 1], [], []>} : vector<16x16xf32>, vector<16x8xf32>, vector<16x8xf32> -> vector<16x8xf32>
    %280 = vector.extract_strided_slice %191 {offsets = [16, 0], sizes = [8, 32], strides = [1, 1]} : vector<32x32xf32> to vector<8x32xf32>
    %cst_151 = arith.constant dense<0.000000e+00> : vector<16x32xf32>
    %281 = tpu.matmul %279, %280, %cst_151 {dimension_numbers = #tpu.dot_dimension_numbers<[1], [0], [0], [1], [0, 0, 1, 1], [], []>} : vector<16x8xf32>, vector<8x32xf32>, vector<16x32xf32> -> vector<16x32xf32>
    %282 = arith.addf %261, %281 : vector<16x32xf32>
    %283 = vector.extract_strided_slice %212 {offsets = [0, 24], sizes = [16, 8], strides = [1, 1]} : vector<16x32xf32> to vector<16x8xf32>
    %284 = vector.extract_strided_slice %213 {offsets = [0, 24], sizes = [16, 8], strides = [1, 1]} : vector<16x32xf32> to vector<16x8xf32>
    %285 = vector.extract_strided_slice %214 {offsets = [0, 24], sizes = [16, 8], strides = [1, 1]} : vector<16x32xf32> to vector<16x8xf32>
    %cst_152 = arith.constant dense<0.000000e+00> : vector<16x16xf32>
    %286 = tpu.matmul %283, %284, %cst_152 {dimension_numbers = #tpu.dot_dimension_numbers<[1], [1], [0], [0], [0, 0, 1, 0], [], []>} : vector<16x8xf32>, vector<16x8xf32>, vector<16x16xf32> -> vector<16x16xf32>
    %cst_153 = arith.constant 0.353553385 : f32
    %287 = vector.broadcast %cst_153 : f32 to vector<16x16xf32>
    %288 = arith.mulf %286, %287 : vector<16x16xf32>
    %289 = arith.addf %288, %220 : vector<16x16xf32>
    %cst_154 = arith.constant dense<0xFF800000> : vector<16xf32>
    %290 = vector.multi_reduction <maximumf>, %289, %cst_154 [1] : vector<16x16xf32> to vector<16xf32>
    %291 = vector.shape_cast %290 : vector<16xf32> to vector<16x1xf32>
    %292 = vector.broadcast %291 : vector<16x1xf32> to vector<16x16xf32>
    %293 = arith.subf %289, %292 : vector<16x16xf32>
    %294 = math.exp %293 : vector<16x16xf32>
    %cst_155 = arith.constant dense<0.000000e+00> : vector<16xf32>
    %295 = vector.multi_reduction <add>, %294, %cst_155 [1] : vector<16x16xf32> to vector<16xf32>
    %296 = vector.shape_cast %295 : vector<16xf32> to vector<16x1xf32>
    %297 = tpu.reciprocal %296 {approx = true} : vector<16x1xf32> -> vector<16x1xf32>
    %298 = vector.broadcast %297 : vector<16x1xf32> to vector<16x16xf32>
    %299 = arith.mulf %294, %298 : vector<16x16xf32>
    %cst_156 = arith.constant dense<0.000000e+00> : vector<16x8xf32>
    %300 = tpu.matmul %299, %285, %cst_156 {dimension_numbers = #tpu.dot_dimension_numbers<[1], [0], [0], [1], [0, 0, 1, 1], [], []>} : vector<16x16xf32>, vector<16x8xf32>, vector<16x8xf32> -> vector<16x8xf32>
    %301 = vector.extract_strided_slice %191 {offsets = [24, 0], sizes = [8, 32], strides = [1, 1]} : vector<32x32xf32> to vector<8x32xf32>
    %cst_157 = arith.constant dense<0.000000e+00> : vector<16x32xf32>
    %302 = tpu.matmul %300, %301, %cst_157 {dimension_numbers = #tpu.dot_dimension_numbers<[1], [0], [0], [1], [0, 0, 1, 1], [], []>} : vector<16x8xf32>, vector<8x32xf32>, vector<16x32xf32> -> vector<16x32xf32>
    %303 = arith.addf %282, %302 : vector<16x32xf32>
    %304 = vector.broadcast %192 : vector<1x32xf32> to vector<16x32xf32>
    %305 = arith.addf %303, %304 : vector<16x32xf32>
    %306 = arith.addf %188, %305 : vector<16x32xf32>
    %cst_158 = arith.constant dense<0.000000e+00> : vector<16xf32>
    %307 = vector.multi_reduction <add>, %306, %cst_158 [1] : vector<16x32xf32> to vector<16xf32>
    %308 = vector.shape_cast %307 : vector<16xf32> to vector<16x1xf32>
    %cst_159 = arith.constant 3.200000e+01 : f32
    %309 = vector.broadcast %cst_159 : f32 to vector<16x1xf32>
    %310 = arith.divf %308, %309 : vector<16x1xf32>
    %311 = vector.broadcast %310 : vector<16x1xf32> to vector<16x32xf32>
    %312 = arith.subf %306, %311 : vector<16x32xf32>
    %313 = arith.mulf %312, %312 : vector<16x32xf32>
    %cst_160 = arith.constant dense<0.000000e+00> : vector<16xf32>
    %314 = vector.multi_reduction <add>, %313, %cst_160 [1] : vector<16x32xf32> to vector<16xf32>
    %315 = vector.shape_cast %314 : vector<16xf32> to vector<16x1xf32>
    %cst_161 = arith.constant 3.200000e+01 : f32
    %316 = vector.broadcast %cst_161 : f32 to vector<16x1xf32>
    %317 = arith.divf %315, %316 : vector<16x1xf32>
    %cst_162 = arith.constant 9.99999974E-6 : f32
    %318 = vector.broadcast %cst_162 : f32 to vector<16x1xf32>
    %319 = arith.addf %317, %318 : vector<16x1xf32>
    %320 = math.rsqrt %319 : vector<16x1xf32>
    %321 = vector.broadcast %320 : vector<16x1xf32> to vector<16x32xf32>
    %322 = arith.mulf %312, %321 : vector<16x32xf32>
    %323 = vector.broadcast %203 : vector<1x32xf32> to vector<16x32xf32>
    %324 = arith.mulf %322, %323 : vector<16x32xf32>
    %325 = vector.broadcast %204 : vector<1x32xf32> to vector<16x32xf32>
    %326 = arith.addf %324, %325 : vector<16x32xf32>
    %cst_163 = arith.constant dense<0.000000e+00> : vector<16x32xf32>
    %327 = tpu.matmul %326, %193, %cst_163 {dimension_numbers = #tpu.dot_dimension_numbers<[1], [0], [0], [1], [0, 0, 1, 1], [], []>} : vector<16x32xf32>, vector<32x32xf32>, vector<16x32xf32> -> vector<16x32xf32>
    %328 = vector.broadcast %194 : vector<1x32xf32> to vector<16x32xf32>
    %329 = arith.addf %327, %328 : vector<16x32xf32>
    %cst_164 = arith.constant dense<0.000000e+00> : vector<4x64xf32>
    %330 = tpu.matmul %177, %195, %cst_164 {dimension_numbers = #tpu.dot_dimension_numbers<[1], [0], [0], [1], [0, 0, 1, 1], [], []>} : vector<4x32xf32>, vector<32x64xf32>, vector<4x64xf32> -> vector<4x64xf32>
    %331 = vector.broadcast %196 : vector<1x64xf32> to vector<4x64xf32>
    %332 = arith.addf %330, %331 : vector<4x64xf32>
    %333 = vector.extract_strided_slice %332 {offsets = [0, 0], sizes = [4, 32], strides = [1, 1]} : vector<4x64xf32> to vector<4x32xf32>
    %334 = vector.extract_strided_slice %332 {offsets = [0, 32], sizes = [4, 32], strides = [1, 1]} : vector<4x64xf32> to vector<4x32xf32>
    %335 = vector.extract_strided_slice %329 {offsets = [0, 0], sizes = [16, 8], strides = [1, 1]} : vector<16x32xf32> to vector<16x8xf32>
    %336 = vector.extract_strided_slice %333 {offsets = [0, 0], sizes = [4, 8], strides = [1, 1]} : vector<4x32xf32> to vector<4x8xf32>
    %337 = vector.extract_strided_slice %334 {offsets = [0, 0], sizes = [4, 8], strides = [1, 1]} : vector<4x32xf32> to vector<4x8xf32>
    %cst_165 = arith.constant dense<0.000000e+00> : vector<16x4xf32>
    %338 = tpu.matmul %335, %336, %cst_165 {dimension_numbers = #tpu.dot_dimension_numbers<[1], [1], [0], [0], [0, 0, 1, 0], [], []>} : vector<16x8xf32>, vector<4x8xf32>, vector<16x4xf32> -> vector<16x4xf32>
    %cst_166 = arith.constant 0.353553385 : f32
    %339 = vector.broadcast %cst_166 : f32 to vector<16x4xf32>
    %340 = arith.mulf %338, %339 : vector<16x4xf32>
    %cst_167 = arith.constant dense<0xFF800000> : vector<16xf32>
    %341 = vector.multi_reduction <maximumf>, %340, %cst_167 [1] : vector<16x4xf32> to vector<16xf32>
    %342 = vector.shape_cast %341 : vector<16xf32> to vector<16x1xf32>
    %343 = vector.broadcast %342 : vector<16x1xf32> to vector<16x4xf32>
    %344 = arith.subf %340, %343 : vector<16x4xf32>
    %345 = math.exp %344 : vector<16x4xf32>
    %cst_168 = arith.constant dense<0.000000e+00> : vector<16xf32>
    %346 = vector.multi_reduction <add>, %345, %cst_168 [1] : vector<16x4xf32> to vector<16xf32>
    %347 = vector.shape_cast %346 : vector<16xf32> to vector<16x1xf32>
    %348 = tpu.reciprocal %347 {approx = true} : vector<16x1xf32> -> vector<16x1xf32>
    %349 = vector.broadcast %348 : vector<16x1xf32> to vector<16x4xf32>
    %350 = arith.mulf %345, %349 : vector<16x4xf32>
    %cst_169 = arith.constant dense<0.000000e+00> : vector<16x8xf32>
    %351 = tpu.matmul %350, %337, %cst_169 {dimension_numbers = #tpu.dot_dimension_numbers<[1], [0], [0], [1], [0, 0, 1, 1], [], []>} : vector<16x4xf32>, vector<4x8xf32>, vector<16x8xf32> -> vector<16x8xf32>
    %352 = vector.extract_strided_slice %197 {offsets = [0, 0], sizes = [8, 32], strides = [1, 1]} : vector<32x32xf32> to vector<8x32xf32>
    %cst_170 = arith.constant dense<0.000000e+00> : vector<16x32xf32>
    %353 = tpu.matmul %351, %352, %cst_170 {dimension_numbers = #tpu.dot_dimension_numbers<[1], [0], [0], [1], [0, 0, 1, 1], [], []>} : vector<16x8xf32>, vector<8x32xf32>, vector<16x32xf32> -> vector<16x32xf32>
    %354 = vector.extract_strided_slice %329 {offsets = [0, 8], sizes = [16, 8], strides = [1, 1]} : vector<16x32xf32> to vector<16x8xf32>
    %355 = vector.extract_strided_slice %333 {offsets = [0, 8], sizes = [4, 8], strides = [1, 1]} : vector<4x32xf32> to vector<4x8xf32>
    %356 = vector.extract_strided_slice %334 {offsets = [0, 8], sizes = [4, 8], strides = [1, 1]} : vector<4x32xf32> to vector<4x8xf32>
    %cst_171 = arith.constant dense<0.000000e+00> : vector<16x4xf32>
    %357 = tpu.matmul %354, %355, %cst_171 {dimension_numbers = #tpu.dot_dimension_numbers<[1], [1], [0], [0], [0, 0, 1, 0], [], []>} : vector<16x8xf32>, vector<4x8xf32>, vector<16x4xf32> -> vector<16x4xf32>
    %cst_172 = arith.constant 0.353553385 : f32
    %358 = vector.broadcast %cst_172 : f32 to vector<16x4xf32>
    %359 = arith.mulf %357, %358 : vector<16x4xf32>
    %cst_173 = arith.constant dense<0xFF800000> : vector<16xf32>
    %360 = vector.multi_reduction <maximumf>, %359, %cst_173 [1] : vector<16x4xf32> to vector<16xf32>
    %361 = vector.shape_cast %360 : vector<16xf32> to vector<16x1xf32>
    %362 = vector.broadcast %361 : vector<16x1xf32> to vector<16x4xf32>
    %363 = arith.subf %359, %362 : vector<16x4xf32>
    %364 = math.exp %363 : vector<16x4xf32>
    %cst_174 = arith.constant dense<0.000000e+00> : vector<16xf32>
    %365 = vector.multi_reduction <add>, %364, %cst_174 [1] : vector<16x4xf32> to vector<16xf32>
    %366 = vector.shape_cast %365 : vector<16xf32> to vector<16x1xf32>
    %367 = tpu.reciprocal %366 {approx = true} : vector<16x1xf32> -> vector<16x1xf32>
    %368 = vector.broadcast %367 : vector<16x1xf32> to vector<16x4xf32>
    %369 = arith.mulf %364, %368 : vector<16x4xf32>
    %cst_175 = arith.constant dense<0.000000e+00> : vector<16x8xf32>
    %370 = tpu.matmul %369, %356, %cst_175 {dimension_numbers = #tpu.dot_dimension_numbers<[1], [0], [0], [1], [0, 0, 1, 1], [], []>} : vector<16x4xf32>, vector<4x8xf32>, vector<16x8xf32> -> vector<16x8xf32>
    %371 = vector.extract_strided_slice %197 {offsets = [8, 0], sizes = [8, 32], strides = [1, 1]} : vector<32x32xf32> to vector<8x32xf32>
    %cst_176 = arith.constant dense<0.000000e+00> : vector<16x32xf32>
    %372 = tpu.matmul %370, %371, %cst_176 {dimension_numbers = #tpu.dot_dimension_numbers<[1], [0], [0], [1], [0, 0, 1, 1], [], []>} : vector<16x8xf32>, vector<8x32xf32>, vector<16x32xf32> -> vector<16x32xf32>
    %373 = arith.addf %353, %372 : vector<16x32xf32>
    %374 = vector.extract_strided_slice %329 {offsets = [0, 16], sizes = [16, 8], strides = [1, 1]} : vector<16x32xf32> to vector<16x8xf32>
    %375 = vector.extract_strided_slice %333 {offsets = [0, 16], sizes = [4, 8], strides = [1, 1]} : vector<4x32xf32> to vector<4x8xf32>
    %376 = vector.extract_strided_slice %334 {offsets = [0, 16], sizes = [4, 8], strides = [1, 1]} : vector<4x32xf32> to vector<4x8xf32>
    %cst_177 = arith.constant dense<0.000000e+00> : vector<16x4xf32>
    %377 = tpu.matmul %374, %375, %cst_177 {dimension_numbers = #tpu.dot_dimension_numbers<[1], [1], [0], [0], [0, 0, 1, 0], [], []>} : vector<16x8xf32>, vector<4x8xf32>, vector<16x4xf32> -> vector<16x4xf32>
    %cst_178 = arith.constant 0.353553385 : f32
    %378 = vector.broadcast %cst_178 : f32 to vector<16x4xf32>
    %379 = arith.mulf %377, %378 : vector<16x4xf32>
    %cst_179 = arith.constant dense<0xFF800000> : vector<16xf32>
    %380 = vector.multi_reduction <maximumf>, %379, %cst_179 [1] : vector<16x4xf32> to vector<16xf32>
    %381 = vector.shape_cast %380 : vector<16xf32> to vector<16x1xf32>
    %382 = vector.broadcast %381 : vector<16x1xf32> to vector<16x4xf32>
    %383 = arith.subf %379, %382 : vector<16x4xf32>
    %384 = math.exp %383 : vector<16x4xf32>
    %cst_180 = arith.constant dense<0.000000e+00> : vector<16xf32>
    %385 = vector.multi_reduction <add>, %384, %cst_180 [1] : vector<16x4xf32> to vector<16xf32>
    %386 = vector.shape_cast %385 : vector<16xf32> to vector<16x1xf32>
    %387 = tpu.reciprocal %386 {approx = true} : vector<16x1xf32> -> vector<16x1xf32>
    %388 = vector.broadcast %387 : vector<16x1xf32> to vector<16x4xf32>
    %389 = arith.mulf %384, %388 : vector<16x4xf32>
    %cst_181 = arith.constant dense<0.000000e+00> : vector<16x8xf32>
    %390 = tpu.matmul %389, %376, %cst_181 {dimension_numbers = #tpu.dot_dimension_numbers<[1], [0], [0], [1], [0, 0, 1, 1], [], []>} : vector<16x4xf32>, vector<4x8xf32>, vector<16x8xf32> -> vector<16x8xf32>
    %391 = vector.extract_strided_slice %197 {offsets = [16, 0], sizes = [8, 32], strides = [1, 1]} : vector<32x32xf32> to vector<8x32xf32>
    %cst_182 = arith.constant dense<0.000000e+00> : vector<16x32xf32>
    %392 = tpu.matmul %390, %391, %cst_182 {dimension_numbers = #tpu.dot_dimension_numbers<[1], [0], [0], [1], [0, 0, 1, 1], [], []>} : vector<16x8xf32>, vector<8x32xf32>, vector<16x32xf32> -> vector<16x32xf32>
    %393 = arith.addf %373, %392 : vector<16x32xf32>
    %394 = vector.extract_strided_slice %329 {offsets = [0, 24], sizes = [16, 8], strides = [1, 1]} : vector<16x32xf32> to vector<16x8xf32>
    %395 = vector.extract_strided_slice %333 {offsets = [0, 24], sizes = [4, 8], strides = [1, 1]} : vector<4x32xf32> to vector<4x8xf32>
    %396 = vector.extract_strided_slice %334 {offsets = [0, 24], sizes = [4, 8], strides = [1, 1]} : vector<4x32xf32> to vector<4x8xf32>
    %cst_183 = arith.constant dense<0.000000e+00> : vector<16x4xf32>
    %397 = tpu.matmul %394, %395, %cst_183 {dimension_numbers = #tpu.dot_dimension_numbers<[1], [1], [0], [0], [0, 0, 1, 0], [], []>} : vector<16x8xf32>, vector<4x8xf32>, vector<16x4xf32> -> vector<16x4xf32>
    %cst_184 = arith.constant 0.353553385 : f32
    %398 = vector.broadcast %cst_184 : f32 to vector<16x4xf32>
    %399 = arith.mulf %397, %398 : vector<16x4xf32>
    %cst_185 = arith.constant dense<0xFF800000> : vector<16xf32>
    %400 = vector.multi_reduction <maximumf>, %399, %cst_185 [1] : vector<16x4xf32> to vector<16xf32>
    %401 = vector.shape_cast %400 : vector<16xf32> to vector<16x1xf32>
    %402 = vector.broadcast %401 : vector<16x1xf32> to vector<16x4xf32>
    %403 = arith.subf %399, %402 : vector<16x4xf32>
    %404 = math.exp %403 : vector<16x4xf32>
    %cst_186 = arith.constant dense<0.000000e+00> : vector<16xf32>
    %405 = vector.multi_reduction <add>, %404, %cst_186 [1] : vector<16x4xf32> to vector<16xf32>
    %406 = vector.shape_cast %405 : vector<16xf32> to vector<16x1xf32>
    %407 = tpu.reciprocal %406 {approx = true} : vector<16x1xf32> -> vector<16x1xf32>
    %408 = vector.broadcast %407 : vector<16x1xf32> to vector<16x4xf32>
    %409 = arith.mulf %404, %408 : vector<16x4xf32>
    %cst_187 = arith.constant dense<0.000000e+00> : vector<16x8xf32>
    %410 = tpu.matmul %409, %396, %cst_187 {dimension_numbers = #tpu.dot_dimension_numbers<[1], [0], [0], [1], [0, 0, 1, 1], [], []>} : vector<16x4xf32>, vector<4x8xf32>, vector<16x8xf32> -> vector<16x8xf32>
    %411 = vector.extract_strided_slice %197 {offsets = [24, 0], sizes = [8, 32], strides = [1, 1]} : vector<32x32xf32> to vector<8x32xf32>
    %cst_188 = arith.constant dense<0.000000e+00> : vector<16x32xf32>
    %412 = tpu.matmul %410, %411, %cst_188 {dimension_numbers = #tpu.dot_dimension_numbers<[1], [0], [0], [1], [0, 0, 1, 1], [], []>} : vector<16x8xf32>, vector<8x32xf32>, vector<16x32xf32> -> vector<16x32xf32>
    %413 = arith.addf %393, %412 : vector<16x32xf32>
    %414 = vector.broadcast %198 : vector<1x32xf32> to vector<16x32xf32>
    %415 = arith.addf %413, %414 : vector<16x32xf32>
    %416 = arith.addf %326, %415 : vector<16x32xf32>
    %cst_189 = arith.constant dense<0.000000e+00> : vector<16xf32>
    %417 = vector.multi_reduction <add>, %416, %cst_189 [1] : vector<16x32xf32> to vector<16xf32>
    %418 = vector.shape_cast %417 : vector<16xf32> to vector<16x1xf32>
    %cst_190 = arith.constant 3.200000e+01 : f32
    %419 = vector.broadcast %cst_190 : f32 to vector<16x1xf32>
    %420 = arith.divf %418, %419 : vector<16x1xf32>
    %421 = vector.broadcast %420 : vector<16x1xf32> to vector<16x32xf32>
    %422 = arith.subf %416, %421 : vector<16x32xf32>
    %423 = arith.mulf %422, %422 : vector<16x32xf32>
    %cst_191 = arith.constant dense<0.000000e+00> : vector<16xf32>
    %424 = vector.multi_reduction <add>, %423, %cst_191 [1] : vector<16x32xf32> to vector<16xf32>
    %425 = vector.shape_cast %424 : vector<16xf32> to vector<16x1xf32>
    %cst_192 = arith.constant 3.200000e+01 : f32
    %426 = vector.broadcast %cst_192 : f32 to vector<16x1xf32>
    %427 = arith.divf %425, %426 : vector<16x1xf32>
    %cst_193 = arith.constant 9.99999974E-6 : f32
    %428 = vector.broadcast %cst_193 : f32 to vector<16x1xf32>
    %429 = arith.addf %427, %428 : vector<16x1xf32>
    %430 = math.rsqrt %429 : vector<16x1xf32>
    %431 = vector.broadcast %430 : vector<16x1xf32> to vector<16x32xf32>
    %432 = arith.mulf %422, %431 : vector<16x32xf32>
    %433 = vector.broadcast %205 : vector<1x32xf32> to vector<16x32xf32>
    %434 = arith.mulf %432, %433 : vector<16x32xf32>
    %435 = vector.broadcast %206 : vector<1x32xf32> to vector<16x32xf32>
    %436 = arith.addf %434, %435 : vector<16x32xf32>
    %cst_194 = arith.constant dense<0.000000e+00> : vector<16x64xf32>
    %437 = tpu.matmul %436, %199, %cst_194 {dimension_numbers = #tpu.dot_dimension_numbers<[1], [0], [0], [1], [0, 0, 1, 1], [], []>} : vector<16x32xf32>, vector<32x64xf32>, vector<16x64xf32> -> vector<16x64xf32>
    %438 = vector.broadcast %200 : vector<1x64xf32> to vector<16x64xf32>
    %439 = arith.addf %437, %438 : vector<16x64xf32>
    %cst_195 = arith.constant 0.000000e+00 : f32
    %440 = vector.broadcast %cst_195 : f32 to vector<16x64xf32>
    %441 = arith.maximumf %439, %440 : vector<16x64xf32>
    %cst_196 = arith.constant dense<0.000000e+00> : vector<16x32xf32>
    %442 = tpu.matmul %441, %201, %cst_196 {dimension_numbers = #tpu.dot_dimension_numbers<[1], [0], [0], [1], [0, 0, 1, 1], [], []>} : vector<16x64xf32>, vector<64x32xf32>, vector<16x32xf32> -> vector<16x32xf32>
    %443 = vector.broadcast %202 : vector<1x32xf32> to vector<16x32xf32>
    %444 = arith.addf %442, %443 : vector<16x32xf32>
    %445 = arith.addf %436, %444 : vector<16x32xf32>
    %cst_197 = arith.constant dense<0.000000e+00> : vector<16xf32>
    %446 = vector.multi_reduction <add>, %445, %cst_197 [1] : vector<16x32xf32> to vector<16xf32>
    %447 = vector.shape_cast %446 : vector<16xf32> to vector<16x1xf32>
    %cst_198 = arith.constant 3.200000e+01 : f32
    %448 = vector.broadcast %cst_198 : f32 to vector<16x1xf32>
    %449 = arith.divf %447, %448 : vector<16x1xf32>
    %450 = vector.broadcast %449 : vector<16x1xf32> to vector<16x32xf32>
    %451 = arith.subf %445, %450 : vector<16x32xf32>
    %452 = arith.mulf %451, %451 : vector<16x32xf32>
    %cst_199 = arith.constant dense<0.000000e+00> : vector<16xf32>
    %453 = vector.multi_reduction <add>, %452, %cst_199 [1] : vector<16x32xf32> to vector<16xf32>
    %454 = vector.shape_cast %453 : vector<16xf32> to vector<16x1xf32>
    %cst_200 = arith.constant 3.200000e+01 : f32
    %455 = vector.broadcast %cst_200 : f32 to vector<16x1xf32>
    %456 = arith.divf %454, %455 : vector<16x1xf32>
    %cst_201 = arith.constant 9.99999974E-6 : f32
    %457 = vector.broadcast %cst_201 : f32 to vector<16x1xf32>
    %458 = arith.addf %456, %457 : vector<16x1xf32>
    %459 = math.rsqrt %458 : vector<16x1xf32>
    %460 = vector.broadcast %459 : vector<16x1xf32> to vector<16x32xf32>
    %461 = arith.mulf %451, %460 : vector<16x32xf32>
    %462 = vector.broadcast %207 : vector<1x32xf32> to vector<16x32xf32>
    %463 = arith.mulf %461, %462 : vector<16x32xf32>
    %464 = vector.broadcast %208 : vector<1x32xf32> to vector<16x32xf32>
    %465 = arith.addf %463, %464 : vector<16x32xf32>
    %c0_202 = arith.constant 0 : index
    %c0_203 = arith.constant 0 : index
    %466 = vector.load %arg44[%c0_202, %c0_203] : memref<1x32xf32, #tpu.memory_space<vmem>>, vector<1x32xf32>
    %c0_204 = arith.constant 0 : index
    %c0_205 = arith.constant 0 : index
    %467 = vector.load %arg45[%c0_204, %c0_205] : memref<1x32xf32, #tpu.memory_space<vmem>>, vector<1x32xf32>
    %cst_206 = arith.constant dense<0.000000e+00> : vector<16xf32>
    %468 = vector.multi_reduction <add>, %465, %cst_206 [1] : vector<16x32xf32> to vector<16xf32>
    %469 = vector.shape_cast %468 : vector<16xf32> to vector<16x1xf32>
    %cst_207 = arith.constant 3.200000e+01 : f32
    %470 = vector.broadcast %cst_207 : f32 to vector<16x1xf32>
    %471 = arith.divf %469, %470 : vector<16x1xf32>
    %472 = vector.broadcast %471 : vector<16x1xf32> to vector<16x32xf32>
    %473 = arith.subf %465, %472 : vector<16x32xf32>
    %474 = arith.mulf %473, %473 : vector<16x32xf32>
    %cst_208 = arith.constant dense<0.000000e+00> : vector<16xf32>
    %475 = vector.multi_reduction <add>, %474, %cst_208 [1] : vector<16x32xf32> to vector<16xf32>
    %476 = vector.shape_cast %475 : vector<16xf32> to vector<16x1xf32>
    %cst_209 = arith.constant 3.200000e+01 : f32
    %477 = vector.broadcast %cst_209 : f32 to vector<16x1xf32>
    %478 = arith.divf %476, %477 : vector<16x1xf32>
    %cst_210 = arith.constant 9.99999974E-6 : f32
    %479 = vector.broadcast %cst_210 : f32 to vector<16x1xf32>
    %480 = arith.addf %478, %479 : vector<16x1xf32>
    %481 = math.rsqrt %480 : vector<16x1xf32>
    %482 = vector.broadcast %481 : vector<16x1xf32> to vector<16x32xf32>
    %483 = arith.mulf %473, %482 : vector<16x32xf32>
    %484 = vector.broadcast %466 : vector<1x32xf32> to vector<16x32xf32>
    %485 = arith.mulf %483, %484 : vector<16x32xf32>
    %486 = vector.broadcast %467 : vector<1x32xf32> to vector<16x32xf32>
    %487 = arith.addf %485, %486 : vector<16x32xf32>
    %c0_211 = arith.constant 0 : index
    %c0_212 = arith.constant 0 : index
    %488 = vector.load %arg46[%c0_211, %c0_212] : memref<32x4xf32, #tpu.memory_space<vmem>>, vector<32x4xf32>
    %c0_213 = arith.constant 0 : index
    %c0_214 = arith.constant 0 : index
    %489 = vector.load %arg47[%c0_213, %c0_214] : memref<1x4xf32, #tpu.memory_space<vmem>>, vector<1x4xf32>
    %cst_215 = arith.constant dense<0.000000e+00> : vector<16x4xf32>
    %490 = tpu.matmul %487, %488, %cst_215 {dimension_numbers = #tpu.dot_dimension_numbers<[1], [0], [0], [1], [0, 0, 1, 1], [], []>} : vector<16x32xf32>, vector<32x4xf32>, vector<16x4xf32> -> vector<16x4xf32>
    %491 = vector.broadcast %489 : vector<1x4xf32> to vector<16x4xf32>
    %492 = arith.addf %490, %491 : vector<16x4xf32>
    %c0_216 = arith.constant 0 : index
    %c0_217 = arith.constant 0 : index
    %c0_218 = arith.constant 0 : index
    %493 = vector.load %arg2[%c0_216, %c0_217, %c0_218] : memref<1x1x1xf32, #tpu.memory_space<vmem>>, vector<1x1x1xf32>
    %494 = vector.shape_cast %493 : vector<1x1x1xf32> to vector<1x1xf32>
    %495 = vector.broadcast %494 : vector<1x1xf32> to vector<16x4xf32>
    %496 = arith.addf %492, %495 : vector<16x4xf32>
    %497 = vector.extract_strided_slice %496 {offsets = [8, 0], sizes = [8, 4], strides = [1, 1]} : vector<16x4xf32> to vector<8x4xf32>
    %c0_219 = arith.constant 0 : index
    %c0_220 = arith.constant 0 : index
    %c0_221 = arith.constant 0 : index
    %498 = vector.load %arg48[%c0_219, %c0_220, %c0_221] : memref<1x8x4xf32, #tpu.memory_space<vmem>>, vector<1x8x4xf32>
    %499 = vector.shape_cast %498 : vector<1x8x4xf32> to vector<8x4xf32>
    %500 = vector.shape_cast %497 : vector<8x4xf32> to vector<1x8x4xf32>
    tpu.vector_store %arg48[%c0_219, %c0_220, %c0_221], %500 {strides = array<i32>} : memref<1x8x4xf32, #tpu.memory_space<vmem>>, vector<1x8x4xf32>,
    return
  }
  func.func @transform_0(%arg0: i32) -> (i32, i32, i32) {
    %c0_i32 = arith.constant 0 : i32
    %c0_i32_0 = arith.constant 0 : i32
    %c0_i32_1 = arith.constant 0 : i32
    return %arg0, %c0_i32, %c0_i32_0 : i32, i32, i32
  }
  func.func @transform_1(%arg0: i32) -> (i32, i32, i32) {
    %c0_i32 = arith.constant 0 : i32
    %c0_i32_0 = arith.constant 0 : i32
    %c0_i32_1 = arith.constant 0 : i32
    return %arg0, %c0_i32, %c0_i32_0 : i32, i32, i32
  }
  func.func @transform_2(%arg0: i32) -> (i32, i32, i32) {
    %c0_i32 = arith.constant 0 : i32
    %c0_i32_0 = arith.constant 0 : i32
    %c0_i32_1 = arith.constant 0 : i32
    return %arg0, %c0_i32, %c0_i32_0 : i32, i32, i32
  }
  func.func @transform_3(%arg0: i32) -> (i32, i32, i32) {
    %c0_i32 = arith.constant 0 : i32
    %c0_i32_0 = arith.constant 0 : i32
    %c0_i32_1 = arith.constant 0 : i32
    return %arg0, %c0_i32, %c0_i32_0 : i32, i32, i32
  }
  func.func @transform_4(%arg0: i32) -> (i32, i32) {
    %c0_i32 = arith.constant 0 : i32
    %c0_i32_0 = arith.constant 0 : i32
    %c0_i32_1 = arith.constant 0 : i32
    return %c0_i32, %c0_i32_0 : i32, i32
  }
  func.func @transform_5(%arg0: i32) -> (i32, i32) {
    %c0_i32 = arith.constant 0 : i32
    %c0_i32_0 = arith.constant 0 : i32
    %c0_i32_1 = arith.constant 0 : i32
    return %c0_i32, %c0_i32_0 : i32, i32
  }
  func.func @transform_6(%arg0: i32) -> (i32, i32) {
    %c0_i32 = arith.constant 0 : i32
    %c0_i32_0 = arith.constant 0 : i32
    %c0_i32_1 = arith.constant 0 : i32
    return %c0_i32, %c0_i32_0 : i32, i32
  }
  func.func @transform_7(%arg0: i32) -> (i32, i32) {
    %c0_i32 = arith.constant 0 : i32
    %c0_i32_0 = arith.constant 0 : i32
    %c0_i32_1 = arith.constant 0 : i32
    return %c0_i32, %c0_i32_0 : i32, i32
  }
  func.func @transform_8(%arg0: i32) -> (i32, i32) {
    %c0_i32 = arith.constant 0 : i32
    %c0_i32_0 = arith.constant 0 : i32
    %c0_i32_1 = arith.constant 0 : i32
    return %c0_i32, %c0_i32_0 : i32, i32
  }
  func.func @transform_9(%arg0: i32) -> (i32, i32) {
    %c0_i32 = arith.constant 0 : i32
    %c0_i32_0 = arith.constant 0 : i32
    %c0_i32_1 = arith.constant 0 : i32
    return %c0_i32, %c0_i32_0 : i32, i32
  }
  func.func @transform_10(%arg0: i32) -> (i32, i32) {
    %c0_i32 = arith.constant 0 : i32
    %c0_i32_0 = arith.constant 0 : i32
    %c0_i32_1 = arith.constant 0 : i32
    return %c0_i32, %c0_i32_0 : i32, i32
  }
  func.func @transform_11(%arg0: i32) -> (i32, i32) {
    %c0_i32 = arith.constant 0 : i32
    %c0_i32_0 = arith.constant 0 : i32
    %c0_i32_1 = arith.constant 0 : i32
    return %c0_i32, %c0_i32_0 : i32, i32
  }
  func.func @transform_12(%arg0: i32) -> (i32, i32) {
    %c0_i32 = arith.constant 0 : i32
    %c0_i32_0 = arith.constant 0 : i32
    %c0_i32_1 = arith.constant 0 : i32
    return %c0_i32, %c0_i32_0 : i32, i32
  }
  func.func @transform_13(%arg0: i32) -> (i32, i32) {
    %c0_i32 = arith.constant 0 : i32
    %c0_i32_0 = arith.constant 0 : i32
    %c0_i32_1 = arith.constant 0 : i32
    return %c0_i32, %c0_i32_0 : i32, i32
  }
  func.func @transform_14(%arg0: i32) -> (i32, i32) {
    %c0_i32 = arith.constant 0 : i32
    %c0_i32_0 = arith.constant 0 : i32
    %c0_i32_1 = arith.constant 0 : i32
    return %c0_i32, %c0_i32_0 : i32, i32
  }
  func.func @transform_15(%arg0: i32) -> (i32, i32) {
    %c0_i32 = arith.constant 0 : i32
    %c0_i32_0 = arith.constant 0 : i32
    %c0_i32_1 = arith.constant 0 : i32
    return %c0_i32, %c0_i32_0 : i32, i32
  }
  func.func @transform_16(%arg0: i32) -> (i32, i32) {
    %c0_i32 = arith.constant 0 : i32
    %c0_i32_0 = arith.constant 0 : i32
    %c0_i32_1 = arith.constant 0 : i32
    return %c0_i32, %c0_i32_0 : i32, i32
  }
  func.func @transform_17(%arg0: i32) -> (i32, i32) {
    %c0_i32 = arith.constant 0 : i32
    %c0_i32_0 = arith.constant 0 : i32
    %c0_i32_1 = arith.constant 0 : i32
    return %c0_i32, %c0_i32_0 : i32, i32
  }
  func.func @transform_18(%arg0: i32) -> (i32, i32) {
    %c0_i32 = arith.constant 0 : i32
    %c0_i32_0 = arith.constant 0 : i32
    %c0_i32_1 = arith.constant 0 : i32
    return %c0_i32, %c0_i32_0 : i32, i32
  }
  func.func @transform_19(%arg0: i32) -> (i32, i32) {
    %c0_i32 = arith.constant 0 : i32
    %c0_i32_0 = arith.constant 0 : i32
    %c0_i32_1 = arith.constant 0 : i32
    return %c0_i32, %c0_i32_0 : i32, i32
  }
  func.func @transform_20(%arg0: i32) -> (i32, i32) {
    %c0_i32 = arith.constant 0 : i32
    %c0_i32_0 = arith.constant 0 : i32
    %c0_i32_1 = arith.constant 0 : i32
    return %c0_i32, %c0_i32_0 : i32, i32
  }
  func.func @transform_21(%arg0: i32) -> (i32, i32) {
    %c0_i32 = arith.constant 0 : i32
    %c0_i32_0 = arith.constant 0 : i32
    %c0_i32_1 = arith.constant 0 : i32
    return %c0_i32, %c0_i32_0 : i32, i32
  }
  func.func @transform_22(%arg0: i32) -> (i32, i32) {
    %c0_i32 = arith.constant 0 : i32
    %c0_i32_0 = arith.constant 0 : i32
    %c0_i32_1 = arith.constant 0 : i32
    return %c0_i32, %c0_i32_0 : i32, i32
  }
  func.func @transform_23(%arg0: i32) -> (i32, i32) {
    %c0_i32 = arith.constant 0 : i32
    %c0_i32_0 = arith.constant 0 : i32
    %c0_i32_1 = arith.constant 0 : i32
    return %c0_i32, %c0_i32_0 : i32, i32
  }
  func.func @transform_24(%arg0: i32) -> (i32, i32) {
    %c0_i32 = arith.constant 0 : i32
    %c0_i32_0 = arith.constant 0 : i32
    %c0_i32_1 = arith.constant 0 : i32
    return %c0_i32, %c0_i32_0 : i32, i32
  }
  func.func @transform_25(%arg0: i32) -> (i32, i32) {
    %c0_i32 = arith.constant 0 : i32
    %c0_i32_0 = arith.constant 0 : i32
    %c0_i32_1 = arith.constant 0 : i32
    return %c0_i32, %c0_i32_0 : i32, i32
  }
  func.func @transform_26(%arg0: i32) -> (i32, i32) {
    %c0_i32 = arith.constant 0 : i32
    %c0_i32_0 = arith.constant 0 : i32
    %c0_i32_1 = arith.constant 0 : i32
    return %c0_i32, %c0_i32_0 : i32, i32
  }
  func.func @transform_27(%arg0: i32) -> (i32, i32) {
    %c0_i32 = arith.constant 0 : i32
    %c0_i32_0 = arith.constant 0 : i32
    %c0_i32_1 = arith.constant 0 : i32
    return %c0_i32, %c0_i32_0 : i32, i32
  }
  func.func @transform_28(%arg0: i32) -> (i32, i32) {
    %c0_i32 = arith.constant 0 : i32
    %c0_i32_0 = arith.constant 0 : i32
    %c0_i32_1 = arith.constant 0 : i32
    return %c0_i32, %c0_i32_0 : i32, i32
  }
  func.func @transform_29(%arg0: i32) -> (i32, i32) {
    %c0_i32 = arith.constant 0 : i32
    %c0_i32_0 = arith.constant 0 : i32
    %c0_i32_1 = arith.constant 0 : i32
    return %c0_i32, %c0_i32_0 : i32, i32
  }
  func.func @transform_30(%arg0: i32) -> (i32, i32) {
    %c0_i32 = arith.constant 0 : i32
    %c0_i32_0 = arith.constant 0 : i32
    %c0_i32_1 = arith.constant 0 : i32
    return %c0_i32, %c0_i32_0 : i32, i32
  }
  func.func @transform_31(%arg0: i32) -> (i32, i32) {
    %c0_i32 = arith.constant 0 : i32
    %c0_i32_0 = arith.constant 0 : i32
    %c0_i32_1 = arith.constant 0 : i32
    return %c0_i32, %c0_i32_0 : i32, i32
  }
  func.func @transform_32(%arg0: i32) -> (i32, i32) {
    %c0_i32 = arith.constant 0 : i32
    %c0_i32_0 = arith.constant 0 : i32
    %c0_i32_1 = arith.constant 0 : i32
    return %c0_i32, %c0_i32_0 : i32, i32
  }
  func.func @transform_33(%arg0: i32) -> (i32, i32) {
    %c0_i32 = arith.constant 0 : i32
    %c0_i32_0 = arith.constant 0 : i32
    %c0_i32_1 = arith.constant 0 : i32
    return %c0_i32, %c0_i32_0 : i32, i32
  }
  func.func @transform_34(%arg0: i32) -> (i32, i32) {
    %c0_i32 = arith.constant 0 : i32
    %c0_i32_0 = arith.constant 0 : i32
    %c0_i32_1 = arith.constant 0 : i32
    return %c0_i32, %c0_i32_0 : i32, i32
  }
  func.func @transform_35(%arg0: i32) -> (i32, i32) {
    %c0_i32 = arith.constant 0 : i32
    %c0_i32_0 = arith.constant 0 : i32
    %c0_i32_1 = arith.constant 0 : i32
    return %c0_i32, %c0_i32_0 : i32, i32
  }
  func.func @transform_36(%arg0: i32) -> (i32, i32) {
    %c0_i32 = arith.constant 0 : i32
    %c0_i32_0 = arith.constant 0 : i32
    %c0_i32_1 = arith.constant 0 : i32
    return %c0_i32, %c0_i32_0 : i32, i32
  }
  func.func @transform_37(%arg0: i32) -> (i32, i32) {
    %c0_i32 = arith.constant 0 : i32
    %c0_i32_0 = arith.constant 0 : i32
    %c0_i32_1 = arith.constant 0 : i32
    return %c0_i32, %c0_i32_0 : i32, i32
  }
  func.func @transform_38(%arg0: i32) -> (i32, i32) {
    %c0_i32 = arith.constant 0 : i32
    %c0_i32_0 = arith.constant 0 : i32
    %c0_i32_1 = arith.constant 0 : i32
    return %c0_i32, %c0_i32_0 : i32, i32
  }
  func.func @transform_39(%arg0: i32) -> (i32, i32) {
    %c0_i32 = arith.constant 0 : i32
    %c0_i32_0 = arith.constant 0 : i32
    %c0_i32_1 = arith.constant 0 : i32
    return %c0_i32, %c0_i32_0 : i32, i32
  }
  func.func @transform_40(%arg0: i32) -> (i32, i32) {
    %c0_i32 = arith.constant 0 : i32
    %c0_i32_0 = arith.constant 0 : i32
    %c0_i32_1 = arith.constant 0 : i32
    return %c0_i32, %c0_i32_0 : i32, i32
  }
  func.func @transform_41(%arg0: i32) -> (i32, i32) {
    %c0_i32 = arith.constant 0 : i32
    %c0_i32_0 = arith.constant 0 : i32
    %c0_i32_1 = arith.constant 0 : i32
    return %c0_i32, %c0_i32_0 : i32, i32
  }
  func.func @transform_42(%arg0: i32) -> (i32, i32) {
    %c0_i32 = arith.constant 0 : i32
    %c0_i32_0 = arith.constant 0 : i32
    %c0_i32_1 = arith.constant 0 : i32
    return %c0_i32, %c0_i32_0 : i32, i32
  }
  func.func @transform_43(%arg0: i32) -> (i32, i32) {
    %c0_i32 = arith.constant 0 : i32
    %c0_i32_0 = arith.constant 0 : i32
    %c0_i32_1 = arith.constant 0 : i32
    return %c0_i32, %c0_i32_0 : i32, i32
  }
  func.func @transform_44(%arg0: i32) -> (i32, i32) {
    %c0_i32 = arith.constant 0 : i32
    %c0_i32_0 = arith.constant 0 : i32
    %c0_i32_1 = arith.constant 0 : i32
    return %c0_i32, %c0_i32_0 : i32, i32
  }
  func.func @transform_45(%arg0: i32) -> (i32, i32) {
    %c0_i32 = arith.constant 0 : i32
    %c0_i32_0 = arith.constant 0 : i32
    %c0_i32_1 = arith.constant 0 : i32
    return %c0_i32, %c0_i32_0 : i32, i32
  }
  func.func @transform_46(%arg0: i32) -> (i32, i32) {
    %c0_i32 = arith.constant 0 : i32
    %c0_i32_0 = arith.constant 0 : i32
    %c0_i32_1 = arith.constant 0 : i32
    return %c0_i32, %c0_i32_0 : i32, i32
  }
  func.func @transform_47(%arg0: i32) -> (i32, i32, i32) {
    %c0_i32 = arith.constant 0 : i32
    %c0_i32_0 = arith.constant 0 : i32
    %c0_i32_1 = arith.constant 0 : i32
    return %arg0, %c0_i32, %c0_i32_0 : i32, i32, i32
  }
}

</mosaic_0001>

<llo_original>
// kernel: forward.1
$region0: #{forward.1}
  #allocation0 [shape = 'u32[]', space=smem, size = 0x4, offset = 0x4, fixed_abs, tag = 'smem constant byte address 0x4 - core index']
  #allocation1 [shape = 'u32[144,128]{1,0:T(1,128)}', space=vmem, size = 0x12000, scoped, tag = 'internal scratch']
  %s0 = inlined_call_operand.smem [shape: u32[48], index: -1, kind: input, shape index: {}]
  %s1 = sld [smem:[%s0]]
  %s2 = scalar_lea.smem %s0, 1
  %s3 = sld [smem:[%s2]]
  %s4 = scalar_lea.smem %s0, 2
  %s5 = sld [smem:[%s4]]
  %s6 = scalar_lea.smem %s0, 3
  %s7 = sld [smem:[%s6]]
  %s8 = scalar_lea.smem %s0, 4
  %s9 = sld [smem:[%s8]]
  %s10 = scalar_lea.smem %s0, 5
  %s11 = sld [smem:[%s10]]
  %s12 = scalar_lea.smem %s0, 6
  %s13 = sld [smem:[%s12]]
  %s14 = scalar_lea.smem %s0, 7
  %s15 = sld [smem:[%s14]]
  %s16 = scalar_lea.smem %s0, 8
  %s17 = sld [smem:[%s16]]
  %s18 = scalar_lea.smem %s0, 9
  %s19 = sld [smem:[%s18]]
  %s20 = scalar_lea.smem %s0, 10
  %s21 = sld [smem:[%s20]]
  %s22 = scalar_lea.smem %s0, 11
  %s23 = sld [smem:[%s22]]
  %s24 = scalar_lea.smem %s0, 12
  %s25 = sld [smem:[%s24]]
  %s26 = scalar_lea.smem %s0, 13
  %s27 = sld [smem:[%s26]]
  %s28 = scalar_lea.smem %s0, 14
  %s29 = sld [smem:[%s28]]
  %s30 = scalar_lea.smem %s0, 15
  %s31 = sld [smem:[%s30]]
  %s32 = scalar_lea.smem %s0, 16
  %s33 = sld [smem:[%s32]]
  %s34 = scalar_lea.smem %s0, 17
  %s35 = sld [smem:[%s34]]
  %s36 = scalar_lea.smem %s0, 18
  %s37 = sld [smem:[%s36]]
  %s38 = scalar_lea.smem %s0, 19
  %s39 = sld [smem:[%s38]]
  %s40 = scalar_lea.smem %s0, 20
  %s41 = sld [smem:[%s40]]
  %s42 = scalar_lea.smem %s0, 21
  %s43 = sld [smem:[%s42]]
  %s44 = scalar_lea.smem %s0, 22
  %s45 = sld [smem:[%s44]]
  %s46 = scalar_lea.smem %s0, 23
  %s47 = sld [smem:[%s46]]
  %s48 = scalar_lea.smem %s0, 24
  %s49 = sld [smem:[%s48]]
  %s50 = scalar_lea.smem %s0, 25
  %s51 = sld [smem:[%s50]]
  %s52 = scalar_lea.smem %s0, 26
  %s53 = sld [smem:[%s52]]
  %s54 = scalar_lea.smem %s0, 27
  %s55 = sld [smem:[%s54]]
  %s56 = scalar_lea.smem %s0, 28
  %s57 = sld [smem:[%s56]]
  %s58 = scalar_lea.smem %s0, 29
  %s59 = sld [smem:[%s58]]
  %s60 = scalar_lea.smem %s0, 30
  %s61 = sld [smem:[%s60]]
  %s62 = scalar_lea.smem %s0, 31
  %s63 = sld [smem:[%s62]]
  %s64 = scalar_lea.smem %s0, 32
  %s65 = sld [smem:[%s64]]
  %s66 = scalar_lea.smem %s0, 33
  %s67 = sld [smem:[%s66]]
  %s68 = scalar_lea.smem %s0, 34
  %s69 = sld [smem:[%s68]]
  %s70 = scalar_lea.smem %s0, 35
  %s71 = sld [smem:[%s70]]
  %s72 = scalar_lea.smem %s0, 36
  %s73 = sld [smem:[%s72]]
  %s74 = scalar_lea.smem %s0, 37
  %s75 = sld [smem:[%s74]]
  %s76 = scalar_lea.smem %s0, 38
  %s77 = sld [smem:[%s76]]
  %s78 = scalar_lea.smem %s0, 39
  %s79 = sld [smem:[%s78]]
  %s80 = scalar_lea.smem %s0, 40
  %s81 = sld [smem:[%s80]]
  %s82 = scalar_lea.smem %s0, 41
  %s83 = sld [smem:[%s82]]
  %s84 = scalar_lea.smem %s0, 42
  %s85 = sld [smem:[%s84]]
  %s86 = scalar_lea.smem %s0, 43
  %s87 = sld [smem:[%s86]]
  %s88 = scalar_lea.smem %s0, 44
  %s89 = sld [smem:[%s88]]
  %s90 = scalar_lea.smem %s0, 45
  %s91 = sld [smem:[%s90]]
  %s92 = scalar_lea.smem %s0, 46
  %s93 = sld [smem:[%s92]]
  %s94 = scalar_lea.smem %s0, 47
  %s95 = sld [smem:[%s94]]
  %s96 = sld [smem:[#allocation0]]
  $region233: #{forward.1} parent=0
    _
  %s98 = ssub.s32 1, %s96
  %s99 = scalar_select 0, %s98, %s96
  $region1: #{forward.1} parent=0
    #allocation2 [shape = 'u8[512]{0}', space=vmem, size = 0x400, scoped, tag = 'input window, operand 43, single buffered']
    #allocation3 [shape = 's32[2]{0}', space=sflag, size = 0x8, scoped, tag = 'scoped memory for forward.1']
    #allocation4 [shape = 'u8[512]{0}', space=vmem, size = 0x400, scoped, tag = 'input window, operand 44, single buffered']
    #allocation5 [shape = 's32[1]{0}', space=sflag, size = 0x4, scoped, tag = 'scoped memory for forward.1']
    #allocation6 [shape = 'u8[512]{0}', space=vmem, size = 0x400, scoped, tag = 'input window, operand 46, single buffered']
    %100 = vsyncpa [#allocation3], 0
    %101 = vsyncpa [#allocation5], 0
    loop: start=0, step=1, limit=4
    $region2: #{forward.1} parent=1 // loop_pre_header
      _
    $region3: #{forward.1} parent=1 // loop_header
      %s103 = sphi 0, %s107
      %p104 = scmp.ge.s32.totalorder %s103, 4
      %s113 = sphi 0, %s115
      %s116 = sphi 0, %s113
      %s117 = sphi 0, %s116
      %s133 = sphi 0, %s117
      %s139 = sphi 0, %s141
      %s142 = sphi 0, %s139
      %s143 = sphi 0, %s142
      %s159 = sphi 0, %s143
      %s165 = sphi 0, %s167
      %s168 = sphi 0, %s165
      %s169 = sphi 0, %s168
      %s185 = sphi 0, %s169
      %s191 = sphi 0, %s193
      %s194 = sphi 0, %s191
      %s195 = sphi 0, %s194
      %s211 = sphi 0, %s195
      %s215 = sphi 0, %s215
      %s217 = sphi 0, %s215
      %s218 = sphi 0, %s217
      %s232 = sphi 0, %s218
      %s236 = sphi 0, %s236
      %s238 = sphi 0, %s236
      %s239 = sphi 0, %s238
      %s253 = sphi 0, %s239
      %s257 = sphi 0, %s257
      %s259 = sphi 0, %s257
      %s260 = sphi 0, %s259
      %s274 = sphi 0, %s260
      %s278 = sphi 0, %s278
      %s280 = sphi 0, %s278
      %s281 = sphi 0, %s280
      %s295 = sphi 0, %s281
      %s299 = sphi 0, %s299
      %s301 = sphi 0, %s299
      %s302 = sphi 0, %s301
      %s316 = sphi 0, %s302
      %s320 = sphi 0, %s320
      %s322 = sphi 0, %s320
      %s323 = sphi 0, %s322
      %s337 = sphi 0, %s323
      %s341 = sphi 0, %s341
      %s343 = sphi 0, %s341
      %s344 = sphi 0, %s343
      %s358 = sphi 0, %s344
      %s362 = sphi 0, %s362
      %s364 = sphi 0, %s362
      %s365 = sphi 0, %s364
      %s379 = sphi 0, %s365
      %s383 = sphi 0, %s383
      %s385 = sphi 0, %s383
      %s386 = sphi 0, %s385
      %s400 = sphi 0, %s386
      %s404 = sphi 0, %s404
      %s406 = sphi 0, %s404
      %s407 = sphi 0, %s406
      %s421 = sphi 0, %s407
      %s425 = sphi 0, %s425
      %s427 = sphi 0, %s425
      %s428 = sphi 0, %s427
      %s442 = sphi 0, %s428
      %s446 = sphi 0, %s446
      %s448 = sphi 0, %s446
      %s449 = sphi 0, %s448
      %s463 = sphi 0, %s449
      %s467 = sphi 0, %s467
      %s469 = sphi 0, %s467
      %s470 = sphi 0, %s469
      %s484 = sphi 0, %s470
      %s488 = sphi 0, %s488
      %s490 = sphi 0, %s488
      %s491 = sphi 0, %s490
      %s505 = sphi 0, %s491
      %s509 = sphi 0, %s509
      %s511 = sphi 0, %s509
      %s512 = sphi 0, %s511
      %s526 = sphi 0, %s512
      %s530 = sphi 0, %s530
      %s532 = sphi 0, %s530
      %s533 = sphi 0, %s532
      %s547 = sphi 0, %s533
      %s551 = sphi 0, %s551
      %s553 = sphi 0, %s551
      %s554 = sphi 0, %s553
      %s568 = sphi 0, %s554
      %s572 = sphi 0, %s572
      %s574 = sphi 0, %s572
      %s575 = sphi 0, %s574
      %s589 = sphi 0, %s575
      %s593 = sphi 0, %s593
      %s595 = sphi 0, %s593
      %s596 = sphi 0, %s595
      %s610 = sphi 0, %s596
      %s614 = sphi 0, %s614
      %s616 = sphi 0, %s614
      %s617 = sphi 0, %s616
      %s631 = sphi 0, %s617
      %s635 = sphi 0, %s635
      %s637 = sphi 0, %s635
      %s638 = sphi 0, %s637
      %s652 = sphi 0, %s638
      %s656 = sphi 0, %s656
      %s658 = sphi 0, %s656
      %s659 = sphi 0, %s658
      %s673 = sphi 0, %s659
      %s677 = sphi 0, %s677
      %s679 = sphi 0, %s677
      %s680 = sphi 0, %s679
      %s694 = sphi 0, %s680
      %s698 = sphi 0, %s698
      %s700 = sphi 0, %s698
      %s701 = sphi 0, %s700
      %s715 = sphi 0, %s701
      %s719 = sphi 0, %s719
      %s721 = sphi 0, %s719
      %s722 = sphi 0, %s721
      %s736 = sphi 0, %s722
      %s740 = sphi 0, %s740
      %s742 = sphi 0, %s740
      %s743 = sphi 0, %s742
      %s757 = sphi 0, %s743
      %s761 = sphi 0, %s761
      %s763 = sphi 0, %s761
      %s764 = sphi 0, %s763
      %s778 = sphi 0, %s764
      %s782 = sphi 0, %s782
      %s784 = sphi 0, %s782
      %s785 = sphi 0, %s784
      %s799 = sphi 0, %s785
      %s803 = sphi 0, %s803
      %s805 = sphi 0, %s803
      %s806 = sphi 0, %s805
      %s820 = sphi 0, %s806
      %s824 = sphi 0, %s824
      %s826 = sphi 0, %s824
      %s827 = sphi 0, %s826
      %s841 = sphi 0, %s827
      %s845 = sphi 0, %s845
      %s847 = sphi 0, %s845
      %s848 = sphi 0, %s847
      %s862 = sphi 0, %s848
      %s866 = sphi 0, %s866
      %s868 = sphi 0, %s866
      %s869 = sphi 0, %s868
      %s883 = sphi 0, %s869
      %s887 = sphi 0, %s887
      %s889 = sphi 0, %s887
      %s890 = sphi 0, %s889
      %s904 = sphi 0, %s890
      %s908 = sphi 0, %s908
      %s910 = sphi 0, %s908
      %s911 = sphi 0, %s910
      %s925 = sphi 0, %s911
      %s929 = sphi 0, %s929
      %s931 = sphi 0, %s929
      %s932 = sphi 0, %s931
      %s946 = sphi 0, %s932
      %s950 = sphi 0, %s950
      %s952 = sphi 0, %s950
      %s953 = sphi 0, %s952
      %s967 = sphi 0, %s953
      %s971 = sphi 0, %s971
      %s973 = sphi 0, %s971
      %s974 = sphi 0, %s973
      %s988 = sphi 0, %s974
      %s992 = sphi 0, %s992
      %s994 = sphi 0, %s992
      %s995 = sphi 0, %s994
      %s1009 = sphi 0, %s995
      %s1013 = sphi 0, %s1013
      %s1015 = sphi 0, %s1013
      %s1016 = sphi 0, %s1015
      %s1030 = sphi 0, %s1016
      %s1034 = sphi 0, %s1034
      %s1036 = sphi 0, %s1034
      %s1037 = sphi 0, %s1036
      %s1051 = sphi 0, %s1037
      %s1055 = sphi 0, %s1055
      %s1057 = sphi 0, %s1055
      %s1058 = sphi 0, %s1057
      %s1072 = sphi 0, %s1058
      %s1076 = sphi 0, %s1076
      %s1078 = sphi 0, %s1076
      %s1079 = sphi 0, %s1078
      %s1093 = sphi 0, %s1079
      %s1097 = sphi 0, %s1097
      %s1099 = sphi 0, %s1097
      %s1100 = sphi 0, %s1099
      %s1114 = sphi 0, %s1100
      %s1120 = sphi 0, %s1122
      %s1123 = sphi 0, %s1120
      %s1124 = sphi 0, %s1123
      %s1140 = sphi 0, %s1124
    $region4: #{forward.1} parent=1 // loop_header_branch
      %106 = sbr.rel (%p104) target = $region8
    $region5: #{forward.1} parent=1 // loop_body
      %s108 = ssub.s32 %s103, 1
      %s109 = ssub.s32 %s103, 2
      %s110 = sadd.s32 %s103, 1
      %s111 = ssub.s32 %s103, %s110
      %p112 = scmp.eq.s32.totalorder %s111, 0
      %s114 = sadd.s32 %s113, 1
      %s115 = scalar_select %p112, %s113, %s114
      %p118 = pneg %p112
      %p119 = scmp.eq.s32.totalorder %s103, 1
      %p120 = por %p118, %p119
      %p121 = scmp.ne.s32.totalorder %s113, %s116
      %p122 = scmp.eq.s32.totalorder %s103, 0
      %p123 = por %p121, %p122
      %p124 = scmp.ne.s32.totalorder %s113, %s116
      %p125 = scmp.eq.s32.totalorder %s108, 1
      %p126 = por %p124, %p125
      %p127 = scmp.ne.s32.totalorder %s116, %s117
      %p128 = scmp.eq.s32.totalorder %s108, 0
      %p129 = por %p127, %p128
      %p130 = scmp.ne.s32.totalorder %s116, %s117
      %p131 = scmp.eq.s32.totalorder %s109, 1
      %p132 = por %p130, %p131
      %p134 = scmp.ne.s32.totalorder %s117, %s133
      %p135 = scmp.eq.s32.totalorder %s109, 0
      %p136 = por %p134, %p135
      %s137 = ssub.s32 %s103, %s110
      %p138 = scmp.eq.s32.totalorder %s137, 0
      %s140 = sadd.s32 %s139, 1
      %s141 = scalar_select %p138, %s139, %s140
      %p144 = pneg %p138
      %p145 = scmp.eq.s32.totalorder %s103, 1
      %p146 = por %p144, %p145
      %p147 = scmp.ne.s32.totalorder %s139, %s142
      %p148 = scmp.eq.s32.totalorder %s103, 0
      %p149 = por %p147, %p148
      %p150 = scmp.ne.s32.totalorder %s139, %s142
      %p151 = scmp.eq.s32.totalorder %s108, 1
      %p152 = por %p150, %p151
      %p153 = scmp.ne.s32.totalorder %s142, %s143
      %p154 = scmp.eq.s32.totalorder %s108, 0
      %p155 = por %p153, %p154
      %p156 = scmp.ne.s32.totalorder %s142, %s143
      %p157 = scmp.eq.s32.totalorder %s109, 1
      %p158 = por %p156, %p157
      %p160 = scmp.ne.s32.totalorder %s143, %s159
      %p161 = scmp.eq.s32.totalorder %s109, 0
      %p162 = por %p160, %p161
      %s163 = ssub.s32 %s103, %s110
      %p164 = scmp.eq.s32.totalorder %s163, 0
      %s166 = sadd.s32 %s165, 1
      %s167 = scalar_select %p164, %s165, %s166
      %p170 = pneg %p164
      %p171 = scmp.eq.s32.totalorder %s103, 1
      %p172 = por %p170, %p171
      %p173 = scmp.ne.s32.totalorder %s165, %s168
      %p174 = scmp.eq.s32.totalorder %s103, 0
      %p175 = por %p173, %p174
      %p176 = scmp.ne.s32.totalorder %s165, %s168
      %p177 = scmp.eq.s32.totalorder %s108, 1
      %p178 = por %p176, %p177
      %p179 = scmp.ne.s32.totalorder %s168, %s169
      %p180 = scmp.eq.s32.totalorder %s108, 0
      %p181 = por %p179, %p180
      %p182 = scmp.ne.s32.totalorder %s168, %s169
      %p183 = scmp.eq.s32.totalorder %s109, 1
      %p184 = por %p182, %p183
      %p186 = scmp.ne.s32.totalorder %s169, %s185
      %p187 = scmp.eq.s32.totalorder %s109, 0
      %p188 = por %p186, %p187
      %s189 = ssub.s32 %s103, %s110
      %p190 = scmp.eq.s32.totalorder %s189, 0
      %s192 = sadd.s32 %s191, 1
      %s193 = scalar_select %p190, %s191, %s192
      %p196 = pneg %p190
      %p197 = scmp.eq.s32.totalorder %s103, 1
      %p198 = por %p196, %p197
      %p199 = scmp.ne.s32.totalorder %s191, %s194
      %p200 = scmp.eq.s32.totalorder %s103, 0
      %p201 = por %p199, %p200
      %p202 = scmp.ne.s32.totalorder %s191, %s194
      %p203 = scmp.eq.s32.totalorder %s108, 1
      %p204 = por %p202, %p203
      %p205 = scmp.ne.s32.totalorder %s194, %s195
      %p206 = scmp.eq.s32.totalorder %s108, 0
      %p207 = por %p205, %p206
      %p208 = scmp.ne.s32.totalorder %s194, %s195
      %p209 = scmp.eq.s32.totalorder %s109, 1
      %p210 = por %p208, %p209
      %p212 = scmp.ne.s32.totalorder %s195, %s211
      %p213 = scmp.eq.s32.totalorder %s109, 0
      %p214 = por %p212, %p213
      %s216 = sadd.s32 %s215, 1
      %p219 = scmp.eq.s32.totalorder %s103, 1
      %p220 = scmp.ne.s32.totalorder %s215, %s217
      %p221 = scmp.eq.s32.totalorder %s103, 0
      %p222 = por %p220, %p221
      %p223 = scmp.ne.s32.totalorder %s215, %s217
      %p224 = scmp.eq.s32.totalorder %s108, 1
      %p225 = por %p223, %p224
      %p226 = scmp.ne.s32.totalorder %s217, %s218
      %p227 = scmp.eq.s32.totalorder %s108, 0
      %p228 = por %p226, %p227
      %p229 = scmp.ne.s32.totalorder %s217, %s218
      %p230 = scmp.eq.s32.totalorder %s109, 1
      %p231 = por %p229, %p230
      %p233 = scmp.ne.s32.totalorder %s218, %s232
      %p234 = scmp.eq.s32.totalorder %s109, 0
      %p235 = por %p233, %p234
      %s237 = sadd.s32 %s236, 1
      %p240 = scmp.eq.s32.totalorder %s103, 1
      %p241 = scmp.ne.s32.totalorder %s236, %s238
      %p242 = scmp.eq.s32.totalorder %s103, 0
      %p243 = por %p241, %p242
      %p244 = scmp.ne.s32.totalorder %s236, %s238
      %p245 = scmp.eq.s32.totalorder %s108, 1
      %p246 = por %p244, %p245
      %p247 = scmp.ne.s32.totalorder %s238, %s239
      %p248 = scmp.eq.s32.totalorder %s108, 0
      %p249 = por %p247, %p248
      %p250 = scmp.ne.s32.totalorder %s238, %s239
      %p251 = scmp.eq.s32.totalorder %s109, 1
      %p252 = por %p250, %p251
      %p254 = scmp.ne.s32.totalorder %s239, %s253
      %p255 = scmp.eq.s32.totalorder %s109, 0
      %p256 = por %p254, %p255
      %s258 = sadd.s32 %s257, 1
      %p261 = scmp.eq.s32.totalorder %s103, 1
      %p262 = scmp.ne.s32.totalorder %s257, %s259
      %p263 = scmp.eq.s32.totalorder %s103, 0
      %p264 = por %p262, %p263
      %p265 = scmp.ne.s32.totalorder %s257, %s259
      %p266 = scmp.eq.s32.totalorder %s108, 1
      %p267 = por %p265, %p266
      %p268 = scmp.ne.s32.totalorder %s259, %s260
      %p269 = scmp.eq.s32.totalorder %s108, 0
      %p270 = por %p268, %p269
      %p271 = scmp.ne.s32.totalorder %s259, %s260
      %p272 = scmp.eq.s32.totalorder %s109, 1
      %p273 = por %p271, %p272
      %p275 = scmp.ne.s32.totalorder %s260, %s274
      %p276 = scmp.eq.s32.totalorder %s109, 0
      %p277 = por %p275, %p276
      %s279 = sadd.s32 %s278, 1
      %p282 = scmp.eq.s32.totalorder %s103, 1
      %p283 = scmp.ne.s32.totalorder %s278, %s280
      %p284 = scmp.eq.s32.totalorder %s103, 0
      %p285 = por %p283, %p284
      %p286 = scmp.ne.s32.totalorder %s278, %s280
      %p287 = scmp.eq.s32.totalorder %s108, 1
      %p288 = por %p286, %p287
      %p289 = scmp.ne.s32.totalorder %s280, %s281
      %p290 = scmp.eq.s32.totalorder %s108, 0
      %p291 = por %p289, %p290
      %p292 = scmp.ne.s32.totalorder %s280, %s281
      %p293 = scmp.eq.s32.totalorder %s109, 1
      %p294 = por %p292, %p293
      %p296 = scmp.ne.s32.totalorder %s281, %s295
      %p297 = scmp.eq.s32.totalorder %s109, 0
      %p298 = por %p296, %p297
      %s300 = sadd.s32 %s299, 1
      %p303 = scmp.eq.s32.totalorder %s103, 1
      %p304 = scmp.ne.s32.totalorder %s299, %s301
      %p305 = scmp.eq.s32.totalorder %s103, 0
      %p306 = por %p304, %p305
      %p307 = scmp.ne.s32.totalorder %s299, %s301
      %p308 = scmp.eq.s32.totalorder %s108, 1
      %p309 = por %p307, %p308
      %p310 = scmp.ne.s32.totalorder %s301, %s302
      %p311 = scmp.eq.s32.totalorder %s108, 0
      %p312 = por %p310, %p311
      %p313 = scmp.ne.s32.totalorder %s301, %s302
      %p314 = scmp.eq.s32.totalorder %s109, 1
      %p315 = por %p313, %p314
      %p317 = scmp.ne.s32.totalorder %s302, %s316
      %p318 = scmp.eq.s32.totalorder %s109, 0
      %p319 = por %p317, %p318
      %s321 = sadd.s32 %s320, 1
      %p324 = scmp.eq.s32.totalorder %s103, 1
      %p325 = scmp.ne.s32.totalorder %s320, %s322
      %p326 = scmp.eq.s32.totalorder %s103, 0
      %p327 = por %p325, %p326
      %p328 = scmp.ne.s32.totalorder %s320, %s322
      %p329 = scmp.eq.s32.totalorder %s108, 1
      %p330 = por %p328, %p329
      %p331 = scmp.ne.s32.totalorder %s322, %s323
      %p332 = scmp.eq.s32.totalorder %s108, 0
      %p333 = por %p331, %p332
      %p334 = scmp.ne.s32.totalorder %s322, %s323
      %p335 = scmp.eq.s32.totalorder %s109, 1
      %p336 = por %p334, %p335
      %p338 = scmp.ne.s32.totalorder %s323, %s337
      %p339 = scmp.eq.s32.totalorder %s109, 0
      %p340 = por %p338, %p339
      %s342 = sadd.s32 %s341, 1
      %p345 = scmp.eq.s32.totalorder %s103, 1
      %p346 = scmp.ne.s32.totalorder %s341, %s343
      %p347 = scmp.eq.s32.totalorder %s103, 0
      %p348 = por %p346, %p347
      %p349 = scmp.ne.s32.totalorder %s341, %s343
      %p350 = scmp.eq.s32.totalorder %s108, 1
      %p351 = por %p349, %p350
      %p352 = scmp.ne.s32.totalorder %s343, %s344
      %p353 = scmp.eq.s32.totalorder %s108, 0
      %p354 = por %p352, %p353
      %p355 = scmp.ne.s32.totalorder %s343, %s344
      %p356 = scmp.eq.s32.totalorder %s109, 1
      %p357 = por %p355, %p356
      %p359 = scmp.ne.s32.totalorder %s344, %s358
      %p360 = scmp.eq.s32.totalorder %s109, 0
      %p361 = por %p359, %p360
      %s363 = sadd.s32 %s362, 1
      %p366 = scmp.eq.s32.totalorder %s103, 1
      %p367 = scmp.ne.s32.totalorder %s362, %s364
      %p368 = scmp.eq.s32.totalorder %s103, 0
      %p369 = por %p367, %p368
      %p370 = scmp.ne.s32.totalorder %s362, %s364
      %p371 = scmp.eq.s32.totalorder %s108, 1
      %p372 = por %p370, %p371
      %p373 = scmp.ne.s32.totalorder %s364, %s365
      %p374 = scmp.eq.s32.totalorder %s108, 0
      %p375 = por %p373, %p374
      %p376 = scmp.ne.s32.totalorder %s364, %s365
      %p377 = scmp.eq.s32.totalorder %s109, 1
      %p378 = por %p376, %p377
      %p380 = scmp.ne.s32.totalorder %s365, %s379
      %p381 = scmp.eq.s32.totalorder %s109, 0
      %p382 = por %p380, %p381
      %s384 = sadd.s32 %s383, 1
      %p387 = scmp.eq.s32.totalorder %s103, 1
      %p388 = scmp.ne.s32.totalorder %s383, %s385
      %p389 = scmp.eq.s32.totalorder %s103, 0
      %p390 = por %p388, %p389
      %p391 = scmp.ne.s32.totalorder %s383, %s385
      %p392 = scmp.eq.s32.totalorder %s108, 1
      %p393 = por %p391, %p392
      %p394 = scmp.ne.s32.totalorder %s385, %s386
      %p395 = scmp.eq.s32.totalorder %s108, 0
      %p396 = por %p394, %p395
      %p397 = scmp.ne.s32.totalorder %s385, %s386
      %p398 = scmp.eq.s32.totalorder %s109, 1
      %p399 = por %p397, %p398
      %p401 = scmp.ne.s32.totalorder %s386, %s400
      %p402 = scmp.eq.s32.totalorder %s109, 0
      %p403 = por %p401, %p402
      %s405 = sadd.s32 %s404, 1
      %p408 = scmp.eq.s32.totalorder %s103, 1
      %p409 = scmp.ne.s32.totalorder %s404, %s406
      %p410 = scmp.eq.s32.totalorder %s103, 0
      %p411 = por %p409, %p410
      %p412 = scmp.ne.s32.totalorder %s404, %s406
      %p413 = scmp.eq.s32.totalorder %s108, 1
      %p414 = por %p412, %p413
      %p415 = scmp.ne.s32.totalorder %s406, %s407
      %p416 = scmp.eq.s32.totalorder %s108, 0
      %p417 = por %p415, %p416
      %p418 = scmp.ne.s32.totalorder %s406, %s407
      %p419 = scmp.eq.s32.totalorder %s109, 1
      %p420 = por %p418, %p419
      %p422 = scmp.ne.s32.totalorder %s407, %s421
      %p423 = scmp.eq.s32.totalorder %s109, 0
      %p424 = por %p422, %p423
      %s426 = sadd.s32 %s425, 1
      %p429 = scmp.eq.s32.totalorder %s103, 1
      %p430 = scmp.ne.s32.totalorder %s425, %s427
      %p431 = scmp.eq.s32.totalorder %s103, 0
      %p432 = por %p430, %p431
      %p433 = scmp.ne.s32.totalorder %s425, %s427
      %p434 = scmp.eq.s32.totalorder %s108, 1
      %p435 = por %p433, %p434
      %p436 = scmp.ne.s32.totalorder %s427, %s428
      %p437 = scmp.eq.s32.totalorder %s108, 0
      %p438 = por %p436, %p437
      %p439 = scmp.ne.s32.totalorder %s427, %s428
      %p440 = scmp.eq.s32.totalorder %s109, 1
      %p441 = por %p439, %p440
      %p443 = scmp.ne.s32.totalorder %s428, %s442
      %p444 = scmp.eq.s32.totalorder %s109, 0
      %p445 = por %p443, %p444
      %s447 = sadd.s32 %s446, 1
      %p450 = scmp.eq.s32.totalorder %s103, 1
      %p451 = scmp.ne.s32.totalorder %s446, %s448
      %p452 = scmp.eq.s32.totalorder %s103, 0
      %p453 = por %p451, %p452
      %p454 = scmp.ne.s32.totalorder %s446, %s448
      %p455 = scmp.eq.s32.totalorder %s108, 1
      %p456 = por %p454, %p455
      %p457 = scmp.ne.s32.totalorder %s448, %s449
      %p458 = scmp.eq.s32.totalorder %s108, 0
      %p459 = por %p457, %p458
      %p460 = scmp.ne.s32.totalorder %s448, %s449
      %p461 = scmp.eq.s32.totalorder %s109, 1
      %p462 = por %p460, %p461
      %p464 = scmp.ne.s32.totalorder %s449, %s463
      %p465 = scmp.eq.s32.totalorder %s109, 0
      %p466 = por %p464, %p465
      %s468 = sadd.s32 %s467, 1
      %p471 = scmp.eq.s32.totalorder %s103, 1
      %p472 = scmp.ne.s32.totalorder %s467, %s469
      %p473 = scmp.eq.s32.totalorder %s103, 0
      %p474 = por %p472, %p473
      %p475 = scmp.ne.s32.totalorder %s467, %s469
      %p476 = scmp.eq.s32.totalorder %s108, 1
      %p477 = por %p475, %p476
      %p478 = scmp.ne.s32.totalorder %s469, %s470
      %p479 = scmp.eq.s32.totalorder %s108, 0
      %p480 = por %p478, %p479
      %p481 = scmp.ne.s32.totalorder %s469, %s470
      %p482 = scmp.eq.s32.totalorder %s109, 1
      %p483 = por %p481, %p482
      %p485 = scmp.ne.s32.totalorder %s470, %s484
      %p486 = scmp.eq.s32.totalorder %s109, 0
      %p487 = por %p485, %p486
      %s489 = sadd.s32 %s488, 1
      %p492 = scmp.eq.s32.totalorder %s103, 1
      %p493 = scmp.ne.s32.totalorder %s488, %s490
      %p494 = scmp.eq.s32.totalorder %s103, 0
      %p495 = por %p493, %p494
      %p496 = scmp.ne.s32.totalorder %s488, %s490
      %p497 = scmp.eq.s32.totalorder %s108, 1
      %p498 = por %p496, %p497
      %p499 = scmp.ne.s32.totalorder %s490, %s491
      %p500 = scmp.eq.s32.totalorder %s108, 0
      %p501 = por %p499, %p500
      %p502 = scmp.ne.s32.totalorder %s490, %s491
      %p503 = scmp.eq.s32.totalorder %s109, 1
      %p504 = por %p502, %p503
      %p506 = scmp.ne.s32.totalorder %s491, %s505
      %p507 = scmp.eq.s32.totalorder %s109, 0
      %p508 = por %p506, %p507
      %s510 = sadd.s32 %s509, 1
      %p513 = scmp.eq.s32.totalorder %s103, 1
      %p514 = scmp.ne.s32.totalorder %s509, %s511
      %p515 = scmp.eq.s32.totalorder %s103, 0
      %p516 = por %p514, %p515
      %p517 = scmp.ne.s32.totalorder %s509, %s511
      %p518 = scmp.eq.s32.totalorder %s108, 1
      %p519 = por %p517, %p518
      %p520 = scmp.ne.s32.totalorder %s511, %s512
      %p521 = scmp.eq.s32.totalorder %s108, 0
      %p522 = por %p520, %p521
      %p523 = scmp.ne.s32.totalorder %s511, %s512
      %p524 = scmp.eq.s32.totalorder %s109, 1
      %p525 = por %p523, %p524
      %p527 = scmp.ne.s32.totalorder %s512, %s526
      %p528 = scmp.eq.s32.totalorder %s109, 0
      %p529 = por %p527, %p528
      %s531 = sadd.s32 %s530, 1
      %p534 = scmp.eq.s32.totalorder %s103, 1
      %p535 = scmp.ne.s32.totalorder %s530, %s532
      %p536 = scmp.eq.s32.totalorder %s103, 0
      %p537 = por %p535, %p536
      %p538 = scmp.ne.s32.totalorder %s530, %s532
      %p539 = scmp.eq.s32.totalorder %s108, 1
      %p540 = por %p538, %p539
      %p541 = scmp.ne.s32.totalorder %s532, %s533
      %p542 = scmp.eq.s32.totalorder %s108, 0
      %p543 = por %p541, %p542
      %p544 = scmp.ne.s32.totalorder %s532, %s533
      %p545 = scmp.eq.s32.totalorder %s109, 1
      %p546 = por %p544, %p545
      %p548 = scmp.ne.s32.totalorder %s533, %s547
      %p549 = scmp.eq.s32.totalorder %s109, 0
      %p550 = por %p548, %p549
      %s552 = sadd.s32 %s551, 1
      %p555 = scmp.eq.s32.totalorder %s103, 1
      %p556 = scmp.ne.s32.totalorder %s551, %s553
      %p557 = scmp.eq.s32.totalorder %s103, 0
      %p558 = por %p556, %p557
      %p559 = scmp.ne.s32.totalorder %s551, %s553
      %p560 = scmp.eq.s32.totalorder %s108, 1
      %p561 = por %p559, %p560
      %p562 = scmp.ne.s32.totalorder %s553, %s554
      %p563 = scmp.eq.s32.totalorder %s108, 0
      %p564 = por %p562, %p563
      %p565 = scmp.ne.s32.totalorder %s553, %s554
      %p566 = scmp.eq.s32.totalorder %s109, 1
      %p567 = por %p565, %p566
      %p569 = scmp.ne.s32.totalorder %s554, %s568
      %p570 = scmp.eq.s32.totalorder %s109, 0
      %p571 = por %p569, %p570
      %s573 = sadd.s32 %s572, 1
      %p576 = scmp.eq.s32.totalorder %s103, 1
      %p577 = scmp.ne.s32.totalorder %s572, %s574
      %p578 = scmp.eq.s32.totalorder %s103, 0
      %p579 = por %p577, %p578
      %p580 = scmp.ne.s32.totalorder %s572, %s574
      %p581 = scmp.eq.s32.totalorder %s108, 1
      %p582 = por %p580, %p581
      %p583 = scmp.ne.s32.totalorder %s574, %s575
      %p584 = scmp.eq.s32.totalorder %s108, 0
      %p585 = por %p583, %p584
      %p586 = scmp.ne.s32.totalorder %s574, %s575
      %p587 = scmp.eq.s32.totalorder %s109, 1
      %p588 = por %p586, %p587
      %p590 = scmp.ne.s32.totalorder %s575, %s589
      %p591 = scmp.eq.s32.totalorder %s109, 0
      %p592 = por %p590, %p591
      %s594 = sadd.s32 %s593, 1
      %p597 = scmp.eq.s32.totalorder %s103, 1
      %p598 = scmp.ne.s32.totalorder %s593, %s595
      %p599 = scmp.eq.s32.totalorder %s103, 0
      %p600 = por %p598, %p599
      %p601 = scmp.ne.s32.totalorder %s593, %s595
      %p602 = scmp.eq.s32.totalorder %s108, 1
      %p603 = por %p601, %p602
      %p604 = scmp.ne.s32.totalorder %s595, %s596
      %p605 = scmp.eq.s32.totalorder %s108, 0
      %p606 = por %p604, %p605
      %p607 = scmp.ne.s32.totalorder %s595, %s596
      %p608 = scmp.eq.s32.totalorder %s109, 1
      %p609 = por %p607, %p608
      %p611 = scmp.ne.s32.totalorder %s596, %s610
      %p612 = scmp.eq.s32.totalorder %s109, 0
      %p613 = por %p611, %p612
      %s615 = sadd.s32 %s614, 1
      %p618 = scmp.eq.s32.totalorder %s103, 1
      %p619 = scmp.ne.s32.totalorder %s614, %s616
      %p620 = scmp.eq.s32.totalorder %s103, 0
      %p621 = por %p619, %p620
      %p622 = scmp.ne.s32.totalorder %s614, %s616
      %p623 = scmp.eq.s32.totalorder %s108, 1
      %p624 = por %p622, %p623
      %p625 = scmp.ne.s32.totalorder %s616, %s617
      %p626 = scmp.eq.s32.totalorder %s108, 0
      %p627 = por %p625, %p626
      %p628 = scmp.ne.s32.totalorder %s616, %s617
      %p629 = scmp.eq.s32.totalorder %s109, 1
      %p630 = por %p628, %p629
      %p632 = scmp.ne.s32.totalorder %s617, %s631
      %p633 = scmp.eq.s32.totalorder %s109, 0
      %p634 = por %p632, %p633
      %s636 = sadd.s32 %s635, 1
      %p639 = scmp.eq.s32.totalorder %s103, 1
      %p640 = scmp.ne.s32.totalorder %s635, %s637
      %p641 = scmp.eq.s32.totalorder %s103, 0
      %p642 = por %p640, %p641
      %p643 = scmp.ne.s32.totalorder %s635, %s637
      %p644 = scmp.eq.s32.totalorder %s108, 1
      %p645 = por %p643, %p644
      %p646 = scmp.ne.s32.totalorder %s637, %s638
      %p647 = scmp.eq.s32.totalorder %s108, 0
      %p648 = por %p646, %p647
      %p649 = scmp.ne.s32.totalorder %s637, %s638
      %p650 = scmp.eq.s32.totalorder %s109, 1
      %p651 = por %p649, %p650
      %p653 = scmp.ne.s32.totalorder %s638, %s652
      %p654 = scmp.eq.s32.totalorder %s109, 0
      %p655 = por %p653, %p654
      %s657 = sadd.s32 %s656, 1
      %p660 = scmp.eq.s32.totalorder %s103, 1
      %p661 = scmp.ne.s32.totalorder %s656, %s658
      %p662 = scmp.eq.s32.totalorder %s103, 0
      %p663 = por %p661, %p662
      %p664 = scmp.ne.s32.totalorder %s656, %s658
      %p665 = scmp.eq.s32.totalorder %s108, 1
      %p666 = por %p664, %p665
      %p667 = scmp.ne.s32.totalorder %s658, %s659
      %p668 = scmp.eq.s32.totalorder %s108, 0
      %p669 = por %p667, %p668
      %p670 = scmp.ne.s32.totalorder %s658, %s659
      %p671 = scmp.eq.s32.totalorder %s109, 1
      %p672 = por %p670, %p671
      %p674 = scmp.ne.s32.totalorder %s659, %s673
      %p675 = scmp.eq.s32.totalorder %s109, 0
      %p676 = por %p674, %p675
      %s678 = sadd.s32 %s677, 1
      %p681 = scmp.eq.s32.totalorder %s103, 1
      %p682 = scmp.ne.s32.totalorder %s677, %s679
      %p683 = scmp.eq.s32.totalorder %s103, 0
      %p684 = por %p682, %p683
      %p685 = scmp.ne.s32.totalorder %s677, %s679
      %p686 = scmp.eq.s32.totalorder %s108, 1
      %p687 = por %p685, %p686
      %p688 = scmp.ne.s32.totalorder %s679, %s680
      %p689 = scmp.eq.s32.totalorder %s108, 0
      %p690 = por %p688, %p689
      %p691 = scmp.ne.s32.totalorder %s679, %s680
      %p692 = scmp.eq.s32.totalorder %s109, 1
      %p693 = por %p691, %p692
      %p695 = scmp.ne.s32.totalorder %s680, %s694
      %p696 = scmp.eq.s32.totalorder %s109, 0
      %p697 = por %p695, %p696
      %s699 = sadd.s32 %s698, 1
      %p702 = scmp.eq.s32.totalorder %s103, 1
      %p703 = scmp.ne.s32.totalorder %s698, %s700
      %p704 = scmp.eq.s32.totalorder %s103, 0
      %p705 = por %p703, %p704
      %p706 = scmp.ne.s32.totalorder %s698, %s700
      %p707 = scmp.eq.s32.totalorder %s108, 1
      %p708 = por %p706, %p707
      %p709 = scmp.ne.s32.totalorder %s700, %s701
      %p710 = scmp.eq.s32.totalorder %s108, 0
      %p711 = por %p709, %p710
      %p712 = scmp.ne.s32.totalorder %s700, %s701
      %p713 = scmp.eq.s32.totalorder %s109, 1
      %p714 = por %p712, %p713
      %p716 = scmp.ne.s32.totalorder %s701, %s715
      %p717 = scmp.eq.s32.totalorder %s109, 0
      %p718 = por %p716, %p717
      %s720 = sadd.s32 %s719, 1
      %p723 = scmp.eq.s32.totalorder %s103, 1
      %p724 = scmp.ne.s32.totalorder %s719, %s721
      %p725 = scmp.eq.s32.totalorder %s103, 0
      %p726 = por %p724, %p725
      %p727 = scmp.ne.s32.totalorder %s719, %s721
      %p728 = scmp.eq.s32.totalorder %s108, 1
      %p729 = por %p727, %p728
      %p730 = scmp.ne.s32.totalorder %s721, %s722
      %p731 = scmp.eq.s32.totalorder %s108, 0
      %p732 = por %p730, %p731
      %p733 = scmp.ne.s32.totalorder %s721, %s722
      %p734 = scmp.eq.s32.totalorder %s109, 1
      %p735 = por %p733, %p734
      %p737 = scmp.ne.s32.totalorder %s722, %s736
      %p738 = scmp.eq.s32.totalorder %s109, 0
      %p739 = por %p737, %p738
      %s741 = sadd.s32 %s740, 1
      %p744 = scmp.eq.s32.totalorder %s103, 1
      %p745 = scmp.ne.s32.totalorder %s740, %s742
      %p746 = scmp.eq.s32.totalorder %s103, 0
      %p747 = por %p745, %p746
      %p748 = scmp.ne.s32.totalorder %s740, %s742
      %p749 = scmp.eq.s32.totalorder %s108, 1
      %p750 = por %p748, %p749
      %p751 = scmp.ne.s32.totalorder %s742, %s743
      %p752 = scmp.eq.s32.totalorder %s108, 0
      %p753 = por %p751, %p752
      %p754 = scmp.ne.s32.totalorder %s742, %s743
      %p755 = scmp.eq.s32.totalorder %s109, 1
      %p756 = por %p754, %p755
      %p758 = scmp.ne.s32.totalorder %s743, %s757
      %p759 = scmp.eq.s32.totalorder %s109, 0
      %p760 = por %p758, %p759
      %s762 = sadd.s32 %s761, 1
      %p765 = scmp.eq.s32.totalorder %s103, 1
      %p766 = scmp.ne.s32.totalorder %s761, %s763
      %p767 = scmp.eq.s32.totalorder %s103, 0
      %p768 = por %p766, %p767
      %p769 = scmp.ne.s32.totalorder %s761, %s763
      %p770 = scmp.eq.s32.totalorder %s108, 1
      %p771 = por %p769, %p770
      %p772 = scmp.ne.s32.totalorder %s763, %s764
      %p773 = scmp.eq.s32.totalorder %s108, 0
      %p774 = por %p772, %p773
      %p775 = scmp.ne.s32.totalorder %s763, %s764
      %p776 = scmp.eq.s32.totalorder %s109, 1
      %p777 = por %p775, %p776
      %p779 = scmp.ne.s32.totalorder %s764, %s778
      %p780 = scmp.eq.s32.totalorder %s109, 0
      %p781 = por %p779, %p780
      %s783 = sadd.s32 %s782, 1
      %p786 = scmp.eq.s32.totalorder %s103, 1
      %p787 = scmp.ne.s32.totalorder %s782, %s784
      %p788 = scmp.eq.s32.totalorder %s103, 0
      %p789 = por %p787, %p788
      %p790 = scmp.ne.s32.totalorder %s782, %s784
      %p791 = scmp.eq.s32.totalorder %s108, 1
      %p792 = por %p790, %p791
      %p793 = scmp.ne.s32.totalorder %s784, %s785
      %p794 = scmp.eq.s32.totalorder %s108, 0
      %p795 = por %p793, %p794
      %p796 = scmp.ne.s32.totalorder %s784, %s785
      %p797 = scmp.eq.s32.totalorder %s109, 1
      %p798 = por %p796, %p797
      %p800 = scmp.ne.s32.totalorder %s785, %s799
      %p801 = scmp.eq.s32.totalorder %s109, 0
      %p802 = por %p800, %p801
      %s804 = sadd.s32 %s803, 1
      %p807 = scmp.eq.s32.totalorder %s103, 1
      %p808 = scmp.ne.s32.totalorder %s803, %s805
      %p809 = scmp.eq.s32.totalorder %s103, 0
      %p810 = por %p808, %p809
      %p811 = scmp.ne.s32.totalorder %s803, %s805
      %p812 = scmp.eq.s32.totalorder %s108, 1
      %p813 = por %p811, %p812
      %p814 = scmp.ne.s32.totalorder %s805, %s806
      %p815 = scmp.eq.s32.totalorder %s108, 0
      %p816 = por %p814, %p815
      %p817 = scmp.ne.s32.totalorder %s805, %s806
      %p818 = scmp.eq.s32.totalorder %s109, 1
      %p819 = por %p817, %p818
      %p821 = scmp.ne.s32.totalorder %s806, %s820
      %p822 = scmp.eq.s32.totalorder %s109, 0
      %p823 = por %p821, %p822
      %s825 = sadd.s32 %s824, 1
      %p828 = scmp.eq.s32.totalorder %s103, 1
      %p829 = scmp.ne.s32.totalorder %s824, %s826
      %p830 = scmp.eq.s32.totalorder %s103, 0
      %p831 = por %p829, %p830
      %p832 = scmp.ne.s32.totalorder %s824, %s826
      %p833 = scmp.eq.s32.totalorder %s108, 1
      %p834 = por %p832, %p833
      %p835 = scmp.ne.s32.totalorder %s826, %s827
      %p836 = scmp.eq.s32.totalorder %s108, 0
      %p837 = por %p835, %p836
      %p838 = scmp.ne.s32.totalorder %s826, %s827
      %p839 = scmp.eq.s32.totalorder %s109, 1
      %p840 = por %p838, %p839
      %p842 = scmp.ne.s32.totalorder %s827, %s841
      %p843 = scmp.eq.s32.totalorder %s109, 0
      %p844 = por %p842, %p843
      %s846 = sadd.s32 %s845, 1
      %p849 = scmp.eq.s32.totalorder %s103, 1
      %p850 = scmp.ne.s32.totalorder %s845, %s847
      %p851 = scmp.eq.s32.totalorder %s103, 0
      %p852 = por %p850, %p851
      %p853 = scmp.ne.s32.totalorder %s845, %s847
      %p854 = scmp.eq.s32.totalorder %s108, 1
      %p855 = por %p853, %p854
      %p856 = scmp.ne.s32.totalorder %s847, %s848
      %p857 = scmp.eq.s32.totalorder %s108, 0
      %p858 = por %p856, %p857
      %p859 = scmp.ne.s32.totalorder %s847, %s848
      %p860 = scmp.eq.s32.totalorder %s109, 1
      %p861 = por %p859, %p860
      %p863 = scmp.ne.s32.totalorder %s848, %s862
      %p864 = scmp.eq.s32.totalorder %s109, 0
      %p865 = por %p863, %p864
      %s867 = sadd.s32 %s866, 1
      %p870 = scmp.eq.s32.totalorder %s103, 1
      %p871 = scmp.ne.s32.totalorder %s866, %s868
      %p872 = scmp.eq.s32.totalorder %s103, 0
      %p873 = por %p871, %p872
      %p874 = scmp.ne.s32.totalorder %s866, %s868
      %p875 = scmp.eq.s32.totalorder %s108, 1
      %p876 = por %p874, %p875
      %p877 = scmp.ne.s32.totalorder %s868, %s869
      %p878 = scmp.eq.s32.totalorder %s108, 0
      %p879 = por %p877, %p878
      %p880 = scmp.ne.s32.totalorder %s868, %s869
      %p881 = scmp.eq.s32.totalorder %s109, 1
      %p882 = por %p880, %p881
      %p884 = scmp.ne.s32.totalorder %s869, %s883
      %p885 = scmp.eq.s32.totalorder %s109, 0
      %p886 = por %p884, %p885
      %s888 = sadd.s32 %s887, 1
      %p891 = scmp.eq.s32.totalorder %s103, 1
      %p892 = scmp.ne.s32.totalorder %s887, %s889
      %p893 = scmp.eq.s32.totalorder %s103, 0
      %p894 = por %p892, %p893
      %p895 = scmp.ne.s32.totalorder %s887, %s889
      %p896 = scmp.eq.s32.totalorder %s108, 1
      %p897 = por %p895, %p896
      %p898 = scmp.ne.s32.totalorder %s889, %s890
      %p899 = scmp.eq.s32.totalorder %s108, 0
      %p900 = por %p898, %p899
      %p901 = scmp.ne.s32.totalorder %s889, %s890
      %p902 = scmp.eq.s32.totalorder %s109, 1
      %p903 = por %p901, %p902
      %p905 = scmp.ne.s32.totalorder %s890, %s904
      %p906 = scmp.eq.s32.totalorder %s109, 0
      %p907 = por %p905, %p906
      %s909 = sadd.s32 %s908, 1
      %p912 = scmp.eq.s32.totalorder %s103, 1
      %p913 = scmp.ne.s32.totalorder %s908, %s910
      %p914 = scmp.eq.s32.totalorder %s103, 0
      %p915 = por %p913, %p914
      %p916 = scmp.ne.s32.totalorder %s908, %s910
      %p917 = scmp.eq.s32.totalorder %s108, 1
      %p918 = por %p916, %p917
      %p919 = scmp.ne.s32.totalorder %s910, %s911
      %p920 = scmp.eq.s32.totalorder %s108, 0
      %p921 = por %p919, %p920
      %p922 = scmp.ne.s32.totalorder %s910, %s911
      %p923 = scmp.eq.s32.totalorder %s109, 1
      %p924 = por %p922, %p923
      %p926 = scmp.ne.s32.totalorder %s911, %s925
      %p927 = scmp.eq.s32.totalorder %s109, 0
      %p928 = por %p926, %p927
      %s930 = sadd.s32 %s929, 1
      %p933 = scmp.eq.s32.totalorder %s103, 1
      %p934 = scmp.ne.s32.totalorder %s929, %s931
      %p935 = scmp.eq.s32.totalorder %s103, 0
      %p936 = por %p934, %p935
      %p937 = scmp.ne.s32.totalorder %s929, %s931
      %p938 = scmp.eq.s32.totalorder %s108, 1
      %p939 = por %p937, %p938
      %p940 = scmp.ne.s32.totalorder %s931, %s932
      %p941 = scmp.eq.s32.totalorder %s108, 0
      %p942 = por %p940, %p941
      %p943 = scmp.ne.s32.totalorder %s931, %s932
      %p944 = scmp.eq.s32.totalorder %s109, 1
      %p945 = por %p943, %p944
      %p947 = scmp.ne.s32.totalorder %s932, %s946
      %p948 = scmp.eq.s32.totalorder %s109, 0
      %p949 = por %p947, %p948
      %s951 = sadd.s32 %s950, 1
      %p954 = scmp.eq.s32.totalorder %s103, 1
      %p955 = scmp.ne.s32.totalorder %s950, %s952
      %p956 = scmp.eq.s32.totalorder %s103, 0
      %p957 = por %p955, %p956
      %p958 = scmp.ne.s32.totalorder %s950, %s952
      %p959 = scmp.eq.s32.totalorder %s108, 1
      %p960 = por %p958, %p959
      %p961 = scmp.ne.s32.totalorder %s952, %s953
      %p962 = scmp.eq.s32.totalorder %s108, 0
      %p963 = por %p961, %p962
      %p964 = scmp.ne.s32.totalorder %s952, %s953
      %p965 = scmp.eq.s32.totalorder %s109, 1
      %p966 = por %p964, %p965
      %p968 = scmp.ne.s32.totalorder %s953, %s967
      %p969 = scmp.eq.s32.totalorder %s109, 0
      %p970 = por %p968, %p969
      %s972 = sadd.s32 %s971, 1
      %p975 = scmp.eq.s32.totalorder %s103, 1
      %p976 = scmp.ne.s32.totalorder %s971, %s973
      %p977 = scmp.eq.s32.totalorder %s103, 0
      %p978 = por %p976, %p977
      %p979 = scmp.ne.s32.totalorder %s971, %s973
      %p980 = scmp.eq.s32.totalorder %s108, 1
      %p981 = por %p979, %p980
      %p982 = scmp.ne.s32.totalorder %s973, %s974
      %p983 = scmp.eq.s32.totalorder %s108, 0
      %p984 = por %p982, %p983
      %p985 = scmp.ne.s32.totalorder %s973, %s974
      %p986 = scmp.eq.s32.totalorder %s109, 1
      %p987 = por %p985, %p986
      %p989 = scmp.ne.s32.totalorder %s974, %s988
      %p990 = scmp.eq.s32.totalorder %s109, 0
      %p991 = por %p989, %p990
      %s993 = sadd.s32 %s992, 1
      %p996 = scmp.eq.s32.totalorder %s103, 1
      %p997 = scmp.ne.s32.totalorder %s992, %s994
      %p998 = scmp.eq.s32.totalorder %s103, 0
      %p999 = por %p997, %p998
      %p1000 = scmp.ne.s32.totalorder %s992, %s994
      %p1001 = scmp.eq.s32.totalorder %s108, 1
      %p1002 = por %p1000, %p1001
      %p1003 = scmp.ne.s32.totalorder %s994, %s995
      %p1004 = scmp.eq.s32.totalorder %s108, 0
      %p1005 = por %p1003, %p1004
      %p1006 = scmp.ne.s32.totalorder %s994, %s995
      %p1007 = scmp.eq.s32.totalorder %s109, 1
      %p1008 = por %p1006, %p1007
      %p1010 = scmp.ne.s32.totalorder %s995, %s1009
      %p1011 = scmp.eq.s32.totalorder %s109, 0
      %p1012 = por %p1010, %p1011
      %s1014 = sadd.s32 %s1013, 1
      %p1017 = scmp.eq.s32.totalorder %s103, 1
      %p1018 = scmp.ne.s32.totalorder %s1013, %s1015
      %p1019 = scmp.eq.s32.totalorder %s103, 0
      %p1020 = por %p1018, %p1019
      %p1021 = scmp.ne.s32.totalorder %s1013, %s1015
      %p1022 = scmp.eq.s32.totalorder %s108, 1
      %p1023 = por %p1021, %p1022
      %p1024 = scmp.ne.s32.totalorder %s1015, %s1016
      %p1025 = scmp.eq.s32.totalorder %s108, 0
      %p1026 = por %p1024, %p1025
      %p1027 = scmp.ne.s32.totalorder %s1015, %s1016
      %p1028 = scmp.eq.s32.totalorder %s109, 1
      %p1029 = por %p1027, %p1028
      %p1031 = scmp.ne.s32.totalorder %s1016, %s1030
      %p1032 = scmp.eq.s32.totalorder %s109, 0
      %p1033 = por %p1031, %p1032
      %s1035 = sadd.s32 %s1034, 1
      %p1038 = scmp.eq.s32.totalorder %s103, 1
      %p1039 = scmp.ne.s32.totalorder %s1034, %s1036
      %p1040 = scmp.eq.s32.totalorder %s103, 0
      %p1041 = por %p1039, %p1040
      %p1042 = scmp.ne.s32.totalorder %s1034, %s1036
      %p1043 = scmp.eq.s32.totalorder %s108, 1
      %p1044 = por %p1042, %p1043
      %p1045 = scmp.ne.s32.totalorder %s1036, %s1037
      %p1046 = scmp.eq.s32.totalorder %s108, 0
      %p1047 = por %p1045, %p1046
      %p1048 = scmp.ne.s32.totalorder %s1036, %s1037
      %p1049 = scmp.eq.s32.totalorder %s109, 1
      %p1050 = por %p1048, %p1049
      %p1052 = scmp.ne.s32.totalorder %s1037, %s1051
      %p1053 = scmp.eq.s32.totalorder %s109, 0
      %p1054 = por %p1052, %p1053
      %s1056 = sadd.s32 %s1055, 1
      %p1059 = scmp.eq.s32.totalorder %s103, 1
      %p1060 = scmp.ne.s32.totalorder %s1055, %s1057
      %p1061 = scmp.eq.s32.totalorder %s103, 0
      %p1062 = por %p1060, %p1061
      %p1063 = scmp.ne.s32.totalorder %s1055, %s1057
      %p1064 = scmp.eq.s32.totalorder %s108, 1
      %p1065 = por %p1063, %p1064
      %p1066 = scmp.ne.s32.totalorder %s1057, %s1058
      %p1067 = scmp.eq.s32.totalorder %s108, 0
      %p1068 = por %p1066, %p1067
      %p1069 = scmp.ne.s32.totalorder %s1057, %s1058
      %p1070 = scmp.eq.s32.totalorder %s109, 1
      %p1071 = por %p1069, %p1070
      %p1073 = scmp.ne.s32.totalorder %s1058, %s1072
      %p1074 = scmp.eq.s32.totalorder %s109, 0
      %p1075 = por %p1073, %p1074
      %s1077 = sadd.s32 %s1076, 1
      %p1080 = scmp.eq.s32.totalorder %s103, 1
      %p1081 = scmp.ne.s32.totalorder %s1076, %s1078
      %p1082 = scmp.eq.s32.totalorder %s103, 0
      %p1083 = por %p1081, %p1082
      %p1084 = scmp.ne.s32.totalorder %s1076, %s1078
      %p1085 = scmp.eq.s32.totalorder %s108, 1
      %p1086 = por %p1084, %p1085
      %p1087 = scmp.ne.s32.totalorder %s1078, %s1079
      %p1088 = scmp.eq.s32.totalorder %s108, 0
      %p1089 = por %p1087, %p1088
      %p1090 = scmp.ne.s32.totalorder %s1078, %s1079
      %p1091 = scmp.eq.s32.totalorder %s109, 1
      %p1092 = por %p1090, %p1091
      %p1094 = scmp.ne.s32.totalorder %s1079, %s1093
      %p1095 = scmp.eq.s32.totalorder %s109, 0
      %p1096 = por %p1094, %p1095
      %s1098 = sadd.s32 %s1097, 1
      %p1101 = scmp.eq.s32.totalorder %s103, 1
      %p1102 = scmp.ne.s32.totalorder %s1097, %s1099
      %p1103 = scmp.eq.s32.totalorder %s103, 0
      %p1104 = por %p1102, %p1103
      %p1105 = scmp.ne.s32.totalorder %s1097, %s1099
      %p1106 = scmp.eq.s32.totalorder %s108, 1
      %p1107 = por %p1105, %p1106
      %p1108 = scmp.ne.s32.totalorder %s1099, %s1100
      %p1109 = scmp.eq.s32.totalorder %s108, 0
      %p1110 = por %p1108, %p1109
      %p1111 = scmp.ne.s32.totalorder %s1099, %s1100
      %p1112 = scmp.eq.s32.totalorder %s109, 1
      %p1113 = por %p1111, %p1112
      %p1115 = scmp.ne.s32.totalorder %s1100, %s1114
      %p1116 = scmp.eq.s32.totalorder %s109, 0
      %p1117 = por %p1115, %p1116
      %s1118 = ssub.s32 %s103, %s110
      %p1119 = scmp.eq.s32.totalorder %s1118, 0
      %s1121 = sadd.s32 %s1120, 1
      %s1122 = scalar_select %p1119, %s1120, %s1121
      %p1125 = pneg %p1119
      %p1126 = scmp.eq.s32.totalorder %s103, 1
      %p1127 = por %p1125, %p1126
      %p1128 = scmp.ne.s32.totalorder %s1120, %s1123
      %p1129 = scmp.eq.s32.totalorder %s103, 0
      %p1130 = por %p1128, %p1129
      %p1131 = scmp.ne.s32.totalorder %s1120, %s1123
      %p1132 = scmp.eq.s32.totalorder %s108, 1
      %p1133 = por %p1131, %p1132
      %p1134 = scmp.ne.s32.totalorder %s1123, %s1124
      %p1135 = scmp.eq.s32.totalorder %s108, 0
      %p1136 = por %p1134, %p1135
      %p1137 = scmp.ne.s32.totalorder %s1123, %s1124
      %p1138 = scmp.eq.s32.totalorder %s109, 1
      %p1139 = por %p1137, %p1138
      %p1141 = scmp.ne.s32.totalorder %s1124, %s1140
      %p1142 = scmp.eq.s32.totalorder %s109, 0
      %p1143 = por %p1141, %p1142
      %p1144 = scmp.le.s32.totalorder 1, %s103
      %p1145 = scmp.lt.s32.totalorder %s103, 3
      %p1146 = pnand %p1144, %p1145
      %p1147 = pneg %p1146
      // Predicated region
      $region9: #{forward.1} parent=5 // pred_check
        _
      $region10: #{forward.1} parent=5 // pred_check_branch
        %1149 = sbr.rel (%p1146) target = $region12
      $region11: #{forward.1} parent=5 // pred_region
        %s1150 = ssub.s32 %s103, 1
        // Predicated region
        $region13: #{forward.1} parent=11 // pred_check
          %p1151 = pneg %p228
        $region14: #{forward.1} parent=11 // pred_check_branch
          %1153 = sbr.rel (%p1151) target = $region16
        $region15: #{forward.1} parent=11 // pred_region
          _
        $region16: #{forward.1} parent=11 // pred_fallthru
          _
        // Predicated region
        $region17: #{forward.1} parent=11 // pred_check
          %p1154 = pneg %p249
        $region18: #{forward.1} parent=11 // pred_check_branch
          %1156 = sbr.rel (%p1154) target = $region20
        $region19: #{forward.1} parent=11 // pred_region
          _
        $region20: #{forward.1} parent=11 // pred_fallthru
          _
        // Predicated region
        $region21: #{forward.1} parent=11 // pred_check
          %p1157 = pneg %p270
        $region22: #{forward.1} parent=11 // pred_check_branch
          %1159 = sbr.rel (%p1157) target = $region24
        $region23: #{forward.1} parent=11 // pred_region
          _
        $region24: #{forward.1} parent=11 // pred_fallthru
          _
        // Predicated region
        $region25: #{forward.1} parent=11 // pred_check
          %p1160 = pneg %p291
        $region26: #{forward.1} parent=11 // pred_check_branch
          %1162 = sbr.rel (%p1160) target = $region28
        $region27: #{forward.1} parent=11 // pred_region
          _
        $region28: #{forward.1} parent=11 // pred_fallthru
          _
        // Predicated region
        $region29: #{forward.1} parent=11 // pred_check
          %p1163 = pneg %p312
        $region30: #{forward.1} parent=11 // pred_check_branch
          %1165 = sbr.rel (%p1163) target = $region32
        $region31: #{forward.1} parent=11 // pred_region
          _
        $region32: #{forward.1} parent=11 // pred_fallthru
          _
        // Predicated region
        $region33: #{forward.1} parent=11 // pred_check
          %p1166 = pneg %p333
        $region34: #{forward.1} parent=11 // pred_check_branch
          %1168 = sbr.rel (%p1166) target = $region36
        $region35: #{forward.1} parent=11 // pred_region
          _
        $region36: #{forward.1} parent=11 // pred_fallthru
          _
        // Predicated region
        $region37: #{forward.1} parent=11 // pred_check
          %p1169 = pneg %p354
        $region38: #{forward.1} parent=11 // pred_check_branch
          %1171 = sbr.rel (%p1169) target = $region40
        $region39: #{forward.1} parent=11 // pred_region
          _
        $region40: #{forward.1} parent=11 // pred_fallthru
          _
        // Predicated region
        $region41: #{forward.1} parent=11 // pred_check
          %p1172 = pneg %p375
        $region42: #{forward.1} parent=11 // pred_check_branch
          %1174 = sbr.rel (%p1172) target = $region44
        $region43: #{forward.1} parent=11 // pred_region
          _
        $region44: #{forward.1} parent=11 // pred_fallthru
          _
        // Predicated region
        $region45: #{forward.1} parent=11 // pred_check
          %p1175 = pneg %p396
        $region46: #{forward.1} parent=11 // pred_check_branch
          %1177 = sbr.rel (%p1175) target = $region48
        $region47: #{forward.1} parent=11 // pred_region
          _
        $region48: #{forward.1} parent=11 // pred_fallthru
          _
        // Predicated region
        $region49: #{forward.1} parent=11 // pred_check
          %p1178 = pneg %p417
        $region50: #{forward.1} parent=11 // pred_check_branch
          %1180 = sbr.rel (%p1178) target = $region52
        $region51: #{forward.1} parent=11 // pred_region
          _
        $region52: #{forward.1} parent=11 // pred_fallthru
          _
        // Predicated region
        $region53: #{forward.1} parent=11 // pred_check
          %p1181 = pneg %p438
        $region54: #{forward.1} parent=11 // pred_check_branch
          %1183 = sbr.rel (%p1181) target = $region56
        $region55: #{forward.1} parent=11 // pred_region
          _
        $region56: #{forward.1} parent=11 // pred_fallthru
          _
        // Predicated region
        $region57: #{forward.1} parent=11 // pred_check
          %p1184 = pneg %p459
        $region58: #{forward.1} parent=11 // pred_check_branch
          %1186 = sbr.rel (%p1184) target = $region60
        $region59: #{forward.1} parent=11 // pred_region
          _
        $region60: #{forward.1} parent=11 // pred_fallthru
          _
        // Predicated region
        $region61: #{forward.1} parent=11 // pred_check
          %p1187 = pneg %p480
        $region62: #{forward.1} parent=11 // pred_check_branch
          %1189 = sbr.rel (%p1187) target = $region64
        $region63: #{forward.1} parent=11 // pred_region
          _
        $region64: #{forward.1} parent=11 // pred_fallthru
          _
        // Predicated region
        $region65: #{forward.1} parent=11 // pred_check
          %p1190 = pneg %p501
        $region66: #{forward.1} parent=11 // pred_check_branch
          %1192 = sbr.rel (%p1190) target = $region68
        $region67: #{forward.1} parent=11 // pred_region
          _
        $region68: #{forward.1} parent=11 // pred_fallthru
          _
        // Predicated region
        $region69: #{forward.1} parent=11 // pred_check
          %p1193 = pneg %p522
        $region70: #{forward.1} parent=11 // pred_check_branch
          %1195 = sbr.rel (%p1193) target = $region72
        $region71: #{forward.1} parent=11 // pred_region
          _
        $region72: #{forward.1} parent=11 // pred_fallthru
          _
        // Predicated region
        $region73: #{forward.1} parent=11 // pred_check
          %p1196 = pneg %p543
        $region74: #{forward.1} parent=11 // pred_check_branch
          %1198 = sbr.rel (%p1196) target = $region76
        $region75: #{forward.1} parent=11 // pred_region
          _
        $region76: #{forward.1} parent=11 // pred_fallthru
          _
        // Predicated region
        $region77: #{forward.1} parent=11 // pred_check
          %p1199 = pneg %p564
        $region78: #{forward.1} parent=11 // pred_check_branch
          %1201 = sbr.rel (%p1199) target = $region80
        $region79: #{forward.1} parent=11 // pred_region
          _
        $region80: #{forward.1} parent=11 // pred_fallthru
          _
        // Predicated region
        $region81: #{forward.1} parent=11 // pred_check
          %p1202 = pneg %p585
        $region82: #{forward.1} parent=11 // pred_check_branch
          %1204 = sbr.rel (%p1202) target = $region84
        $region83: #{forward.1} parent=11 // pred_region
          _
        $region84: #{forward.1} parent=11 // pred_fallthru
          _
        // Predicated region
        $region85: #{forward.1} parent=11 // pred_check
          %p1205 = pneg %p606
        $region86: #{forward.1} parent=11 // pred_check_branch
          %1207 = sbr.rel (%p1205) target = $region88
        $region87: #{forward.1} parent=11 // pred_region
          _
        $region88: #{forward.1} parent=11 // pred_fallthru
          _
        // Predicated region
        $region89: #{forward.1} parent=11 // pred_check
          %p1208 = pneg %p627
        $region90: #{forward.1} parent=11 // pred_check_branch
          %1210 = sbr.rel (%p1208) target = $region92
        $region91: #{forward.1} parent=11 // pred_region
          _
        $region92: #{forward.1} parent=11 // pred_fallthru
          _
        // Predicated region
        $region93: #{forward.1} parent=11 // pred_check
          %p1211 = pneg %p648
        $region94: #{forward.1} parent=11 // pred_check_branch
          %1213 = sbr.rel (%p1211) target = $region96
        $region95: #{forward.1} parent=11 // pred_region
          _
        $region96: #{forward.1} parent=11 // pred_fallthru
          _
        // Predicated region
        $region97: #{forward.1} parent=11 // pred_check
          %p1214 = pneg %p669
        $region98: #{forward.1} parent=11 // pred_check_branch
          %1216 = sbr.rel (%p1214) target = $region100
        $region99: #{forward.1} parent=11 // pred_region
          _
        $region100: #{forward.1} parent=11 // pred_fallthru
          _
        // Predicated region
        $region101: #{forward.1} parent=11 // pred_check
          %p1217 = pneg %p690
        $region102: #{forward.1} parent=11 // pred_check_branch
          %1219 = sbr.rel (%p1217) target = $region104
        $region103: #{forward.1} parent=11 // pred_region
          _
        $region104: #{forward.1} parent=11 // pred_fallthru
          _
        // Predicated region
        $region105: #{forward.1} parent=11 // pred_check
          %p1220 = pneg %p711
        $region106: #{forward.1} parent=11 // pred_check_branch
          %1222 = sbr.rel (%p1220) target = $region108
        $region107: #{forward.1} parent=11 // pred_region
          _
        $region108: #{forward.1} parent=11 // pred_fallthru
          _
        // Predicated region
        $region109: #{forward.1} parent=11 // pred_check
          %p1223 = pneg %p732
        $region110: #{forward.1} parent=11 // pred_check_branch
          %1225 = sbr.rel (%p1223) target = $region112
        $region111: #{forward.1} parent=11 // pred_region
          _
        $region112: #{forward.1} parent=11 // pred_fallthru
          _
        // Predicated region
        $region113: #{forward.1} parent=11 // pred_check
          %p1226 = pneg %p753
        $region114: #{forward.1} parent=11 // pred_check_branch
          %1228 = sbr.rel (%p1226) target = $region116
        $region115: #{forward.1} parent=11 // pred_region
          _
        $region116: #{forward.1} parent=11 // pred_fallthru
          _
        // Predicated region
        $region117: #{forward.1} parent=11 // pred_check
          %p1229 = pneg %p774
        $region118: #{forward.1} parent=11 // pred_check_branch
          %1231 = sbr.rel (%p1229) target = $region120
        $region119: #{forward.1} parent=11 // pred_region
          _
        $region120: #{forward.1} parent=11 // pred_fallthru
          _
        // Predicated region
        $region121: #{forward.1} parent=11 // pred_check
          %p1232 = pneg %p795
        $region122: #{forward.1} parent=11 // pred_check_branch
          %1234 = sbr.rel (%p1232) target = $region124
        $region123: #{forward.1} parent=11 // pred_region
          _
        $region124: #{forward.1} parent=11 // pred_fallthru
          _
        // Predicated region
        $region125: #{forward.1} parent=11 // pred_check
          %p1235 = pneg %p816
        $region126: #{forward.1} parent=11 // pred_check_branch
          %1237 = sbr.rel (%p1235) target = $region128
        $region127: #{forward.1} parent=11 // pred_region
          _
        $region128: #{forward.1} parent=11 // pred_fallthru
          _
        // Predicated region
        $region129: #{forward.1} parent=11 // pred_check
          %p1238 = pneg %p837
        $region130: #{forward.1} parent=11 // pred_check_branch
          %1240 = sbr.rel (%p1238) target = $region132
        $region131: #{forward.1} parent=11 // pred_region
          _
        $region132: #{forward.1} parent=11 // pred_fallthru
          _
        // Predicated region
        $region133: #{forward.1} parent=11 // pred_check
          %p1241 = pneg %p858
        $region134: #{forward.1} parent=11 // pred_check_branch
          %1243 = sbr.rel (%p1241) target = $region136
        $region135: #{forward.1} parent=11 // pred_region
          _
        $region136: #{forward.1} parent=11 // pred_fallthru
          _
        // Predicated region
        $region137: #{forward.1} parent=11 // pred_check
          %p1244 = pneg %p879
        $region138: #{forward.1} parent=11 // pred_check_branch
          %1246 = sbr.rel (%p1244) target = $region140
        $region139: #{forward.1} parent=11 // pred_region
          _
        $region140: #{forward.1} parent=11 // pred_fallthru
          _
        // Predicated region
        $region141: #{forward.1} parent=11 // pred_check
          %p1247 = pneg %p900
        $region142: #{forward.1} parent=11 // pred_check_branch
          %1249 = sbr.rel (%p1247) target = $region144
        $region143: #{forward.1} parent=11 // pred_region
          _
        $region144: #{forward.1} parent=11 // pred_fallthru
          _
        // Predicated region
        $region145: #{forward.1} parent=11 // pred_check
          %p1250 = pneg %p921
        $region146: #{forward.1} parent=11 // pred_check_branch
          %1252 = sbr.rel (%p1250) target = $region148
        $region147: #{forward.1} parent=11 // pred_region
          _
        $region148: #{forward.1} parent=11 // pred_fallthru
          _
        // Predicated region
        $region149: #{forward.1} parent=11 // pred_check
          %p1253 = pneg %p942
        $region150: #{forward.1} parent=11 // pred_check_branch
          %1255 = sbr.rel (%p1253) target = $region152
        $region151: #{forward.1} parent=11 // pred_region
          _
        $region152: #{forward.1} parent=11 // pred_fallthru
          _
        // Predicated region
        $region153: #{forward.1} parent=11 // pred_check
          %p1256 = pneg %p963
        $region154: #{forward.1} parent=11 // pred_check_branch
          %1258 = sbr.rel (%p1256) target = $region156
        $region155: #{forward.1} parent=11 // pred_region
          _
        $region156: #{forward.1} parent=11 // pred_fallthru
          _
        // Predicated region
        $region157: #{forward.1} parent=11 // pred_check
          %p1259 = pneg %p984
        $region158: #{forward.1} parent=11 // pred_check_branch
          %1261 = sbr.rel (%p1259) target = $region160
        $region159: #{forward.1} parent=11 // pred_region
          _
        $region160: #{forward.1} parent=11 // pred_fallthru
          _
        // Predicated region
        $region161: #{forward.1} parent=11 // pred_check
          %p1262 = pneg %p1005
        $region162: #{forward.1} parent=11 // pred_check_branch
          %1264 = sbr.rel (%p1262) target = $region164
        $region163: #{forward.1} parent=11 // pred_region
          _
        $region164: #{forward.1} parent=11 // pred_fallthru
          _
        // Predicated region
        $region165: #{forward.1} parent=11 // pred_check
          %p1265 = pneg %p1026
        $region166: #{forward.1} parent=11 // pred_check_branch
          %1267 = sbr.rel (%p1265) target = $region168
        $region167: #{forward.1} parent=11 // pred_region
          _
        $region168: #{forward.1} parent=11 // pred_fallthru
          _
        // Predicated region
        $region169: #{forward.1} parent=11 // pred_check
          %p1268 = pneg %p1047
        $region170: #{forward.1} parent=11 // pred_check_branch
          %1270 = sbr.rel (%p1268) target = $region172
        $region171: #{forward.1} parent=11 // pred_region
          %s1272 = ssub.s32 16, 16
          %1273 = vsyncadd [#allocation3], %s1272
          %s1275 = sshll.u32 [#allocation2], 4
          %s1276 = int_to_ptr.vmem [resolvable:$true] %s1275
          %1278 = dma.hbm_to_vmem [thread:$0]  %s87, 16, %s1276, [#allocation3]
        $region172: #{forward.1} parent=11 // pred_fallthru
          _
        // Predicated region
        $region173: #{forward.1} parent=11 // pred_check
          %p1279 = pneg %p1068
        $region174: #{forward.1} parent=11 // pred_check_branch
          %1281 = sbr.rel (%p1279) target = $region176
        $region175: #{forward.1} parent=11 // pred_region
          %s1283 = ssub.s32 16, 16
          %1284 = vsyncadd [#allocation5], %s1283
          %s1286 = sshll.u32 [#allocation4], 4
          %s1287 = int_to_ptr.vmem [resolvable:$true] %s1286
          %1289 = dma.hbm_to_vmem [thread:$0]  %s89, 16, %s1287, [#allocation5]
        $region176: #{forward.1} parent=11 // pred_fallthru
          _
        // Predicated region
        $region177: #{forward.1} parent=11 // pred_check
          %p1290 = pneg %p1089
        $region178: #{forward.1} parent=11 // pred_check_branch
          %1292 = sbr.rel (%p1290) target = $region180
        $region179: #{forward.1} parent=11 // pred_region
          _
        $region180: #{forward.1} parent=11 // pred_fallthru
          _
        // Predicated region
        $region181: #{forward.1} parent=11 // pred_check
          %p1293 = pneg %p1110
        $region182: #{forward.1} parent=11 // pred_check_branch
          %1295 = sbr.rel (%p1293) target = $region184
        $region183: #{forward.1} parent=11 // pred_region
          %s1297 = ssub.s32 16, 16
          %1298 = vsyncadd [#allocation5], %s1297
          %s1300 = sshll.u32 [#allocation6], 4
          %s1301 = int_to_ptr.vmem [resolvable:$true] %s1300
          %1303 = dma.hbm_to_vmem [thread:$0]  %s93, 16, %s1301, [#allocation5]
        $region184: #{forward.1} parent=11 // pred_fallthru
          _
      $region12: #{forward.1} parent=5 // pred_fallthru
        _
      %p1304 = scmp.lt.s32.totalorder %s103, 2
      // Predicated region
      $region185: #{forward.1} parent=5 // pred_check
        %p1305 = pneg %p1304
      $region186: #{forward.1} parent=5 // pred_check_branch
        %1307 = sbr.rel (%p1305) target = $region188
      $region187: #{forward.1} parent=5 // pred_region
        // Predicated region
        $region189: #{forward.1} parent=187 // pred_check
          %p1308 = pneg %p123
        $region190: #{forward.1} parent=187 // pred_check_branch
          %1310 = sbr.rel (%p1308) target = $region192
        $region191: #{forward.1} parent=187 // pred_region
          %p1311 = scmp.lt.s32.totalorder %s103, 1
          %s1312 = scalar_select %p1311, %s103, 1
          %s1313 = smul.addr %s1312, 4
          %s1314 = scalar_lea.vmem %s1, %s1313
        $region192: #{forward.1} parent=187 // pred_fallthru
          _
        // Predicated region
        $region193: #{forward.1} parent=187 // pred_check
          %p1315 = pneg %p149
        $region194: #{forward.1} parent=187 // pred_check_branch
          %1317 = sbr.rel (%p1315) target = $region196
        $region195: #{forward.1} parent=187 // pred_region
          %p1318 = scmp.lt.s32.totalorder %s103, 1
          %s1319 = scalar_select %p1318, %s103, 1
          %s1320 = scalar_lea.vmem %s3, %s1319
        $region196: #{forward.1} parent=187 // pred_fallthru
          _
        // Predicated region
        $region197: #{forward.1} parent=187 // pred_check
          %p1321 = pneg %p175
        $region198: #{forward.1} parent=187 // pred_check_branch
          %1323 = sbr.rel (%p1321) target = $region200
        $region199: #{forward.1} parent=187 // pred_region
          %p1324 = scmp.lt.s32.totalorder %s103, 1
          %s1325 = scalar_select %p1324, %s103, 1
          %s1326 = smul.addr %s1325, 2
          %s1327 = smul.addr %s1326, 8
          %s1328 = scalar_lea.vmem %s5, %s1327
        $region200: #{forward.1} parent=187 // pred_fallthru
          _
        // Predicated region
        $region201: #{forward.1} parent=187 // pred_check
          %p1329 = pneg %p201
        $region202: #{forward.1} parent=187 // pred_check_branch
          %1331 = sbr.rel (%p1329) target = $region204
        $region203: #{forward.1} parent=187 // pred_region
          %p1332 = scmp.lt.s32.totalorder %s103, 1
          %s1333 = scalar_select %p1332, %s103, 1
          %s1334 = smul.addr %s1333, 2
          %s1335 = smul.addr %s1334, 8
          %s1336 = scalar_lea.vmem %s7, %s1335
        $region204: #{forward.1} parent=187 // pred_fallthru
          _
      $region188: #{forward.1} parent=5 // pred_fallthru
        _
      %p1337 = scmp.le.s32.totalorder 1, %s103
      %p1338 = scmp.lt.s32.totalorder %s103, 3
      %p1339 = pnand %p1337, %p1338
      %p1340 = pneg %p1339
      // Predicated region
      $region205: #{forward.1} parent=5 // pred_check
        _
      $region206: #{forward.1} parent=5 // pred_check_branch
        %1342 = sbr.rel (%p1339) target = $region208
      $region207: #{forward.1} parent=5 // pred_region
        %s1343 = ssub.s32 %s103, 1
        // Predicated region
        $region209: #{forward.1} parent=207 // pred_check
          %p1344 = pneg %p1047
        $region210: #{forward.1} parent=207 // pred_check_branch
          %1346 = sbr.rel (%p1344) target = $region212
        $region211: #{forward.1} parent=207 // pred_region
          %1347 = dma.done [#allocation3], 16
        $region212: #{forward.1} parent=207 // pred_fallthru
          _
        // Predicated region
        $region213: #{forward.1} parent=207 // pred_check
          %p1348 = pneg %p1068
        $region214: #{forward.1} parent=207 // pred_check_branch
          %1350 = sbr.rel (%p1348) target = $region216
        $region215: #{forward.1} parent=207 // pred_region
          %1351 = dma.done [#allocation5], 16
        $region216: #{forward.1} parent=207 // pred_fallthru
          _
        // Predicated region
        $region217: #{forward.1} parent=207 // pred_check
          %p1352 = pneg %p1110
        $region218: #{forward.1} parent=207 // pred_check_branch
          %1354 = sbr.rel (%p1352) target = $region220
        $region219: #{forward.1} parent=207 // pred_region
          %1355 = dma.done [#allocation5], 16
        $region220: #{forward.1} parent=207 // pred_fallthru
          _
        %p1356 = scmp.lt.s32.totalorder %s108, 1
        %s1357 = scalar_select %p1356, %s108, 1
        %s1358 = smul.addr %s1357, 4
        %s1359 = scalar_lea.vmem %s1, %s1358
        %p1360 = pneg %p129
        %p1361 = pneg %p126
        %p1362 = scmp.lt.s32.totalorder %s108, 1
        %s1363 = scalar_select %p1362, %s108, 1
        %s1364 = scalar_lea.vmem %s3, %s1363
        %p1365 = pneg %p155
        %p1366 = pneg %p152
        %p1367 = scmp.lt.s32.totalorder %s108, 1
        %s1368 = scalar_select %p1367, %s108, 1
        %s1369 = smul.addr %s1368, 2
        %s1370 = smul.addr %s1369, 8
        %s1371 = scalar_lea.vmem %s5, %s1370
        %p1372 = pneg %p181
        %p1373 = pneg %p178
        %p1374 = scmp.lt.s32.totalorder %s108, 1
        %s1375 = scalar_select %p1374, %s108, 1
        %s1376 = smul.addr %s1375, 2
        %s1377 = smul.addr %s1376, 8
        %s1378 = scalar_lea.vmem %s7, %s1377
        %p1379 = pneg %p207
        %p1380 = pneg %p204
        %p1381 = pneg %p228
        %p1382 = pneg %p225
        %p1383 = pneg %p249
        %p1384 = pneg %p246
        %p1385 = pneg %p270
        %p1386 = pneg %p267
        %p1387 = pneg %p291
        %p1388 = pneg %p288
        %p1389 = pneg %p312
        %p1390 = pneg %p309
        %p1391 = pneg %p333
        %p1392 = pneg %p330
        %p1393 = pneg %p354
        %p1394 = pneg %p351
        %p1395 = pneg %p375
        %p1396 = pneg %p372
        %p1397 = pneg %p396
        %p1398 = pneg %p393
        %p1399 = pneg %p417
        %p1400 = pneg %p414
        %p1401 = pneg %p438
        %p1402 = pneg %p435
        %p1403 = pneg %p459
        %p1404 = pneg %p456
        %p1405 = pneg %p480
        %p1406 = pneg %p477
        %p1407 = pneg %p501
        %p1408 = pneg %p498
        %p1409 = pneg %p522
        %p1410 = pneg %p519
        %p1411 = pneg %p543
        %p1412 = pneg %p540
        %p1413 = pneg %p564
        %p1414 = pneg %p561
        %p1415 = pneg %p585
        %p1416 = pneg %p582
        %p1417 = pneg %p606
        %p1418 = pneg %p603
        %p1419 = pneg %p627
        %p1420 = pneg %p624
        %p1421 = pneg %p648
        %p1422 = pneg %p645
        %p1423 = pneg %p669
        %p1424 = pneg %p666
        %p1425 = pneg %p690
        %p1426 = pneg %p687
        %p1427 = pneg %p711
        %p1428 = pneg %p708
        %p1429 = pneg %p732
        %p1430 = pneg %p729
        %p1431 = pneg %p753
        %p1432 = pneg %p750
        %p1433 = pneg %p774
        %p1434 = pneg %p771
        %p1435 = pneg %p795
        %p1436 = pneg %p792
        %p1437 = pneg %p816
        %p1438 = pneg %p813
        %p1439 = pneg %p837
        %p1440 = pneg %p834
        %p1441 = pneg %p858
        %p1442 = pneg %p855
        %p1443 = pneg %p879
        %p1444 = pneg %p876
        %p1445 = pneg %p900
        %p1446 = pneg %p897
        %p1447 = pneg %p921
        %p1448 = pneg %p918
        %p1449 = pneg %p942
        %p1450 = pneg %p939
        %p1451 = pneg %p963
        %p1452 = pneg %p960
        %p1453 = pneg %p984
        %p1454 = pneg %p981
        %p1455 = pneg %p1005
        %p1456 = pneg %p1002
        %p1457 = pneg %p1026
        %p1458 = pneg %p1023
        %p1459 = pneg %p1047
        %p1460 = pneg %p1044
        %p1461 = pneg %p1068
        %p1462 = pneg %p1065
        %p1463 = pneg %p1089
        %p1464 = pneg %p1086
        %p1465 = pneg %p1110
        %p1466 = pneg %p1107
        %p1467 = pneg %p1136
        %p1468 = pneg %p1133
        %p1469 = scmp.lt.s32.totalorder %s108, 1
        %s1470 = scalar_select %p1469, %s108, 1
        %s1471 = smul.addr %s1470, 8
        %s1472 = scalar_lea.vmem %s95, %s1471
        %p1473 = scmp.lt.s32.totalorder %s108, 1
        %s1474 = scalar_select %p1473, %s108, 1
        %s1475 = smul.addr %s1474, 4
        %s1476 = scalar_lea.vmem %s1, %s1475
        %p1477 = scmp.lt.s32.totalorder %s108, 1
        %s1478 = scalar_select %p1477, %s108, 1
        %s1479 = scalar_lea.vmem %s3, %s1478
        %p1480 = scmp.lt.s32.totalorder %s108, 1
        %s1481 = scalar_select %p1480, %s108, 1
        %s1482 = smul.addr %s1481, 2
        %s1483 = smul.addr %s1482, 8
        %s1484 = scalar_lea.vmem %s5, %s1483
        %p1485 = scmp.lt.s32.totalorder %s108, 1
        %s1486 = scalar_select %p1485, %s108, 1
        %s1487 = smul.addr %s1486, 2
        %s1488 = smul.addr %s1487, 8
        %s1489 = scalar_lea.vmem %s7, %s1488
        %p1490 = scmp.lt.s32.totalorder %s108, 1
        %s1491 = scalar_select %p1490, %s108, 1
        %s1492 = smul.addr %s1491, 8
        %s1493 = scalar_lea.vmem %s95, %s1492
        %v1494 = vld [vmem:[%s11] sm:$0xff]
        %v1495 = vld [vmem:[%s11 + $0x8] sm:$0xff]
        %v1496 = vld [vmem:[%s13] sm:$0x1]
        %v1497 = vld [vmem:[%s1476] sm:$0xf]
        %v1499 = vlaneseq
        %v1500 = vshrl.u32 %v1499, 7
        %v1501 = vsub.s32 0, %v1500
        %v1502 = vrot.slane %v1496, %v1501
        %vm1504 = vcmask 130048
        %v1506 = vsel %vm1504, %v1497, 0
        %1508 = vmatprep.subr.mxu0 0.0
        %1509 = vmatpush1.msra.mxu0 %v1494
        %1510 = vmatprep.subr.mxu0 0.0
        %1511 = vmatpush1.msra.mxu0 %v1495
        %1512 = vmatprep.subr.mxu0 0.0
        %1513 = vmatpush1.msra.mxu0 0.0
        %1514 = vmatprep.subr.mxu0 0.0
        %1515 = vmatpush1.msra.mxu0 0.0
        %1516 = vmatprep.subr.mxu0 0.0
        %1517 = vmatpush1.msra.mxu0 0.0
        %1518 = vmatprep.subr.mxu0 0.0
        %1519 = vmatpush1.msra.mxu0 0.0
        %1520 = vmatprep.subr.mxu0 0.0
        %1521 = vmatpush1.msra.mxu0 0.0
        %1522 = vmatprep.subr.mxu0 0.0
        %1523 = vmatpush1.msra.mxu0 0.0
        %1524 = vmatprep.subr.mxu0 0.0
        %1525 = vmatpush1.msra.mxu0 0.0
        %1526 = vmatprep.subr.mxu0 0.0
        %1527 = vmatpush1.msra.mxu0 0.0
        %1528 = vmatprep.subr.mxu0 0.0
        %1529 = vmatpush1.msra.mxu0 0.0
        %1530 = vmatprep.subr.mxu0 0.0
        %1531 = vmatpush1.msra.mxu0 0.0
        %1532 = vmatprep.subr.mxu0 0.0
        %1533 = vmatpush1.msra.mxu0 0.0
        %1534 = vmatprep.subr.mxu0 0.0
        %1535 = vmatpush1.msra.mxu0 0.0
        %1536 = vmatprep.subr.mxu0 0.0
        %1537 = vmatpush1.msra.mxu0 0.0
        %1538 = vmatprep.subr.mxu0 0.0
        %1539 = vmatpush1.msra.mxu0 0.0
        %1540 = vmatprep.subr.mxu0 0.0
        %1541 = vmatpush1.msra.mxu0 0.0
        %1542 = vmatprep.subr.mxu0 0.0
        %1543 = vmatpush1.msra.mxu0 0.0
        %1544 = vmatprep.subr.mxu0 0.0
        %1545 = vmatpush1.msra.mxu0 0.0
        %1546 = vmatprep.subr.mxu0 0.0
        %1547 = vmatpush1.msra.mxu0 0.0
        %1548 = vmatprep.subr.mxu0 0.0
        %1549 = vmatpush1.msra.mxu0 0.0
        %1550 = vmatprep.subr.mxu0 0.0
        %1551 = vmatpush1.msra.mxu0 0.0
        %1552 = vmatprep.subr.mxu0 0.0
        %1553 = vmatpush1.msra.mxu0 0.0
        %1554 = vmatprep.subr.mxu0 0.0
        %1555 = vmatpush1.msra.mxu0 0.0
        %1556 = vmatprep.subr.mxu0 0.0
        %1557 = vmatpush1.msra.mxu0 0.0
        %1558 = vmatprep.subr.mxu0 0.0
        %1559 = vmatpush1.msra.mxu0 0.0
        %1560 = vmatprep.subr.mxu0 0.0
        %1561 = vmatpush1.msra.mxu0 0.0
        %1562 = vmatprep.subr.mxu0 0.0
        %1563 = vmatpush1.msra.mxu0 0.0
        %1564 = vmatprep.subr.mxu0 0.0
        %1565 = vmatpush1.msra.mxu0 0.0
        %1566 = vmatprep.subr.mxu0 0.0
        %1567 = vmatpush1.msra.mxu0 0.0
        %1568 = vmatprep.subr.mxu0 0.0
        %1569 = vmatpush1.msra.mxu0 0.0
        %1570 = vmatprep.subr.mxu0 0.0
        %1571 = vmatpush1.msra.mxu0 0.0
        %1572 = vmatprep.mubr.f32.mxu0 0.0
        %1573 = vmatmul.mubr.f32.gmra.mrb[0].mxu0 %v1506
        %v1574 = vpop.f32.mrb[0].mxu0
        %v1575 = vadd.f32 %v1502, %v1574
        %v1576 = vpop.f32.mrb[0].mxu0
        %1577 = vdwg.mxu0
        %v1578 = vld [vmem:[%s15] sm:$0xff]
        %v1579 = vld [vmem:[%s15 + $0x8] sm:$0xff]
        %v1580 = vld [vmem:[%s15 + $0x10] sm:$0xff]
        %v1581 = vld [vmem:[%s15 + $0x18] sm:$0xff]
        %v1582 = vld [vmem:[%s17] sm:$0x1]
        %v1583 = vld [vmem:[%s19] sm:$0xff]
        %v1584 = vld [vmem:[%s19 + $0x8] sm:$0xff]
        %v1585 = vld [vmem:[%s19 + $0x10] sm:$0xff]
        %v1586 = vld [vmem:[%s19 + $0x18] sm:$0xff]
        %v1587 = vld [vmem:[%s21] sm:$0x1]
        %v1588 = vld [vmem:[%s23] sm:$0xff]
        %v1589 = vld [vmem:[%s23 + $0x8] sm:$0xff]
        %v1590 = vld [vmem:[%s23 + $0x10] sm:$0xff]
        %v1591 = vld [vmem:[%s23 + $0x18] sm:$0xff]
        %v1592 = vld [vmem:[%s25] sm:$0x1]
        %v1593 = vld [vmem:[%s27] sm:$0xff]
        %v1594 = vld [vmem:[%s27 + $0x8] sm:$0xff]
        %v1595 = vld [vmem:[%s27 + $0x10] sm:$0xff]
        %v1596 = vld [vmem:[%s27 + $0x18] sm:$0xff]
        %v1597 = vld [vmem:[%s27 + $0x20] sm:$0xff]
        %v1598 = vld [vmem:[%s27 + $0x28] sm:$0xff]
        %v1599 = vld [vmem:[%s27 + $0x30] sm:$0xff]
        %v1600 = vld [vmem:[%s27 + $0x38] sm:$0xff]
        %v1601 = vld [vmem:[%s29] sm:$0x1]
        %v1602 = vld [vmem:[%s31] sm:$0x1]
        %v1603 = vld [vmem:[%s33] sm:$0x1]
        %v1604 = vld [vmem:[%s35] sm:$0x1]
        %v1605 = vld [vmem:[%s37] sm:$0x1]
        %v1607 = vlaneseq
        %v1608 = vshrl.u32 %v1607, 7
        %v1609 = vsub.s32 0, %v1608
        %v1610 = vrot.slane %v1582, %v1609
        %vm1612 = vcmask 261120
        %v1614 = vsel %vm1612, %v1575, 0
        %1616 = vmatprep.subr.mxu0 0.0
        %1617 = vmatpush1.msra.mxu0 %v1578
        %1618 = vmatprep.subr.mxu0 0.0
        %1619 = vmatpush1.msra.mxu0 %v1579
        %1620 = vmatprep.subr.mxu0 0.0
        %1621 = vmatpush1.msra.mxu0 %v1580
        %1622 = vmatprep.subr.mxu0 0.0
        %1623 = vmatpush1.msra.mxu0 %v1581
        %1624 = vmatprep.subr.mxu0 0.0
        %1625 = vmatpush1.msra.mxu0 0.0
        %1626 = vmatprep.subr.mxu0 0.0
        %1627 = vmatpush1.msra.mxu0 0.0
        %1628 = vmatprep.subr.mxu0 0.0
        %1629 = vmatpush1.msra.mxu0 0.0
        %1630 = vmatprep.subr.mxu0 0.0
        %1631 = vmatpush1.msra.mxu0 0.0
        %1632 = vmatprep.subr.mxu0 0.0
        %1633 = vmatpush1.msra.mxu0 0.0
        %1634 = vmatprep.subr.mxu0 0.0
        %1635 = vmatpush1.msra.mxu0 0.0
        %1636 = vmatprep.subr.mxu0 0.0
        %1637 = vmatpush1.msra.mxu0 0.0
        %1638 = vmatprep.subr.mxu0 0.0
        %1639 = vmatpush1.msra.mxu0 0.0
        %1640 = vmatprep.subr.mxu0 0.0
        %1641 = vmatpush1.msra.mxu0 0.0
        %1642 = vmatprep.subr.mxu0 0.0
        %1643 = vmatpush1.msra.mxu0 0.0
        %1644 = vmatprep.subr.mxu0 0.0
        %1645 = vmatpush1.msra.mxu0 0.0
        %1646 = vmatprep.subr.mxu0 0.0
        %1647 = vmatpush1.msra.mxu0 0.0
        %1648 = vmatprep.subr.mxu0 0.0
        %1649 = vmatpush1.msra.mxu0 0.0
        %1650 = vmatprep.subr.mxu0 0.0
        %1651 = vmatpush1.msra.mxu0 0.0
        %1652 = vmatprep.subr.mxu0 0.0
        %1653 = vmatpush1.msra.mxu0 0.0
        %1654 = vmatprep.subr.mxu0 0.0
        %1655 = vmatpush1.msra.mxu0 0.0
        %1656 = vmatprep.subr.mxu0 0.0
        %1657 = vmatpush1.msra.mxu0 0.0
        %1658 = vmatprep.subr.mxu0 0.0
        %1659 = vmatpush1.msra.mxu0 0.0
        %1660 = vmatprep.subr.mxu0 0.0
        %1661 = vmatpush1.msra.mxu0 0.0
        %1662 = vmatprep.subr.mxu0 0.0
        %1663 = vmatpush1.msra.mxu0 0.0
        %1664 = vmatprep.subr.mxu0 0.0
        %1665 = vmatpush1.msra.mxu0 0.0
        %1666 = vmatprep.subr.mxu0 0.0
        %1667 = vmatpush1.msra.mxu0 0.0
        %1668 = vmatprep.subr.mxu0 0.0
        %1669 = vmatpush1.msra.mxu0 0.0
        %1670 = vmatprep.subr.mxu0 0.0
        %1671 = vmatpush1.msra.mxu0 0.0
        %1672 = vmatprep.subr.mxu0 0.0
        %1673 = vmatpush1.msra.mxu0 0.0
        %1674 = vmatprep.subr.mxu0 0.0
        %1675 = vmatpush1.msra.mxu0 0.0
        %1676 = vmatprep.subr.mxu0 0.0
        %1677 = vmatpush1.msra.mxu0 0.0
        %1678 = vmatprep.subr.mxu0 0.0
        %1679 = vmatpush1.msra.mxu0 0.0
        %1680 = vmatprep.mubr.f32.mxu0 0.0
        %1681 = vmatmul.mubr.f32.gmra.mrb[0].mxu0 %v1614
        %v1682 = vpop.f32.mrb[0].mxu0
        %v1683 = vadd.f32 %v1610, %v1682
        %v1684 = vpop.f32.mrb[0].mxu0
        %1685 = vdwg.mxu0
        %1687 = vrot.lane.b32.xlu0 %v1683, 96
        %v1688 = vpop.permute.xlu0 %1687
        %vm1689 = vcmask 64512
        %v1690 = vsel %vm1689, %v1683, 0
        %v1692 = vsel %vm1689, %v1688, 0
        %1694 = vmatprep.subr.mxu0 0.0
        %1695 = vmatpush1.xpose.msra.mxu0 %v1692
        %1696 = vmatprep.subr.mxu0 0.0
        %1697 = vmatpush1.xpose.msra.mxu0 0.0
        %1698 = vmatprep.subr.mxu0 0.0
        %1699 = vmatpush1.xpose.msra.mxu0 0.0
        %1700 = vmatprep.subr.mxu0 0.0
        %1701 = vmatpush1.xpose.msra.mxu0 0.0
        %1702 = vmatprep.subr.mxu0 0.0
        %1703 = vmatpush1.xpose.msra.mxu0 0.0
        %1704 = vmatprep.subr.mxu0 0.0
        %1705 = vmatpush1.xpose.msra.mxu0 0.0
        %1706 = vmatprep.subr.mxu0 0.0
        %1707 = vmatpush1.xpose.msra.mxu0 0.0
        %1708 = vmatprep.subr.mxu0 0.0
        %1709 = vmatpush1.xpose.msra.mxu0 0.0
        %1710 = vmatprep.subr.mxu0 0.0
        %1711 = vmatpush1.xpose.msra.mxu0 0.0
        %1712 = vmatprep.subr.mxu0 0.0
        %1713 = vmatpush1.xpose.msra.mxu0 0.0
        %1714 = vmatprep.subr.mxu0 0.0
        %1715 = vmatpush1.xpose.msra.mxu0 0.0
        %1716 = vmatprep.subr.mxu0 0.0
        %1717 = vmatpush1.xpose.msra.mxu0 0.0
        %1718 = vmatprep.subr.mxu0 0.0
        %1719 = vmatpush1.xpose.msra.mxu0 0.0
        %1720 = vmatprep.subr.mxu0 0.0
        %1721 = vmatpush1.xpose.msra.mxu0 0.0
        %1722 = vmatprep.subr.mxu0 0.0
        %1723 = vmatpush1.xpose.msra.mxu0 0.0
        %1724 = vmatprep.subr.mxu0 0.0
        %1725 = vmatpush1.xpose.msra.mxu0 0.0
        %1726 = vmatprep.subr.mxu0 0.0
        %1727 = vmatpush1.xpose.msra.mxu0 0.0
        %1728 = vmatprep.subr.mxu0 0.0
        %1729 = vmatpush1.xpose.msra.mxu0 0.0
        %1730 = vmatprep.subr.mxu0 0.0
        %1731 = vmatpush1.xpose.msra.mxu0 0.0
        %1732 = vmatprep.subr.mxu0 0.0
        %1733 = vmatpush1.xpose.msra.mxu0 0.0
        %1734 = vmatprep.subr.mxu0 0.0
        %1735 = vmatpush1.xpose.msra.mxu0 0.0
        %1736 = vmatprep.subr.mxu0 0.0
        %1737 = vmatpush1.xpose.msra.mxu0 0.0
        %1738 = vmatprep.subr.mxu0 0.0
        %1739 = vmatpush1.xpose.msra.mxu0 0.0
        %1740 = vmatprep.subr.mxu0 0.0
        %1741 = vmatpush1.xpose.msra.mxu0 0.0
        %1742 = vmatprep.subr.mxu0 0.0
        %1743 = vmatpush1.xpose.msra.mxu0 0.0
        %1744 = vmatprep.subr.mxu0 0.0
        %1745 = vmatpush1.xpose.msra.mxu0 0.0
        %1746 = vmatprep.subr.mxu0 0.0
        %1747 = vmatpush1.xpose.msra.mxu0 0.0
        %1748 = vmatprep.subr.mxu0 0.0
        %1749 = vmatpush1.xpose.msra.mxu0 0.0
        %1750 = vmatprep.subr.mxu0 0.0
        %1751 = vmatpush1.xpose.msra.mxu0 0.0
        %1752 = vmatprep.subr.mxu0 0.0
        %1753 = vmatpush1.xpose.msra.mxu0 0.0
        %1754 = vmatprep.subr.mxu0 0.0
        %1755 = vmatpush1.xpose.msra.mxu0 0.0
        %1756 = vmatprep.subr.mxu0 0.0
        %1757 = vmatpush1.xpose.msra.mxu0 0.0
        %1758 = vmatprep.mubr.f32.mxu0 0.0
        %1759 = vmatmul.mubr.f32.gmra.mrb[0].mxu0 %v1690
        %v1760 = vpop.f32.mrb[0].mxu0
        %v1761 = vadd.f32 0.0, %v1760
        %v1762 = vpop.f32.mrb[0].mxu0
        %1763 = vdwg.mxu0
        %v1764 = vmul.f32 %v1761, 0.35355338
        %vm1765 = vcmask 27648
        %v1766 = vsel %vm1765, %v1764, -inf
        %1767 = vmax.xlane.f32.xlu0 %v1766
        %v1768 = vpop.xlane.xlu0 %1767
        %v1769 = vsub.f32 %v1764, %v1768
        %v1770 = vmul.f32 %v1769, 1.442695
        %v1771 = vpow.pop %v1770
        %v1772 = vsel %vm1765, %v1771, 0.0
        %1773 = vadd.xlane.f32.xlu0 %v1772
        %v1774 = vpop.xlane.xlu0 %1773
        %v1775 = vrcp.pop %v1774
        %v1776 = vmul.f32 %v1771, %v1775
        %1777 = vrot.lane.b32.xlu0 %v1683, 64
        %v1778 = vpop.permute.xlu0 %1777
        %vm1779 = vcmask 31744
        %v1781 = vsel %vm1779, %v1776, 0
        %vm1783 = vcmask 1043456
        %v1784 = vsel %vm1783, %v1778, 0
        %1786 = vmatprep.subr.mxu0 0.0
        %1787 = vmatpush1.msra.mxu0 %v1784
        %1788 = vmatprep.subr.mxu0 0.0
        %1789 = vmatpush1.msra.mxu0 0.0
        %1790 = vmatprep.subr.mxu0 0.0
        %1791 = vmatpush1.msra.mxu0 0.0
        %1792 = vmatprep.subr.mxu0 0.0
        %1793 = vmatpush1.msra.mxu0 0.0
        %1794 = vmatprep.subr.mxu0 0.0
        %1795 = vmatpush1.msra.mxu0 0.0
        %1796 = vmatprep.subr.mxu0 0.0
        %1797 = vmatpush1.msra.mxu0 0.0
        %1798 = vmatprep.subr.mxu0 0.0
        %1799 = vmatpush1.msra.mxu0 0.0
        %1800 = vmatprep.subr.mxu0 0.0
        %1801 = vmatpush1.msra.mxu0 0.0
        %1802 = vmatprep.subr.mxu0 0.0
        %1803 = vmatpush1.msra.mxu0 0.0
        %1804 = vmatprep.subr.mxu0 0.0
        %1805 = vmatpush1.msra.mxu0 0.0
        %1806 = vmatprep.subr.mxu0 0.0
        %1807 = vmatpush1.msra.mxu0 0.0
        %1808 = vmatprep.subr.mxu0 0.0
        %1809 = vmatpush1.msra.mxu0 0.0
        %1810 = vmatprep.subr.mxu0 0.0
        %1811 = vmatpush1.msra.mxu0 0.0
        %1812 = vmatprep.subr.mxu0 0.0
        %1813 = vmatpush1.msra.mxu0 0.0
        %1814 = vmatprep.subr.mxu0 0.0
        %1815 = vmatpush1.msra.mxu0 0.0
        %1816 = vmatprep.subr.mxu0 0.0
        %1817 = vmatpush1.msra.mxu0 0.0
        %1818 = vmatprep.subr.mxu0 0.0
        %1819 = vmatpush1.msra.mxu0 0.0
        %1820 = vmatprep.subr.mxu0 0.0
        %1821 = vmatpush1.msra.mxu0 0.0
        %1822 = vmatprep.subr.mxu0 0.0
        %1823 = vmatpush1.msra.mxu0 0.0
        %1824 = vmatprep.subr.mxu0 0.0
        %1825 = vmatpush1.msra.mxu0 0.0
        %1826 = vmatprep.subr.mxu0 0.0
        %1827 = vmatpush1.msra.mxu0 0.0
        %1828 = vmatprep.subr.mxu0 0.0
        %1829 = vmatpush1.msra.mxu0 0.0
        %1830 = vmatprep.subr.mxu0 0.0
        %1831 = vmatpush1.msra.mxu0 0.0
        %1832 = vmatprep.subr.mxu0 0.0
        %1833 = vmatpush1.msra.mxu0 0.0
        %1834 = vmatprep.subr.mxu0 0.0
        %1835 = vmatpush1.msra.mxu0 0.0
        %1836 = vmatprep.subr.mxu0 0.0
        %1837 = vmatpush1.msra.mxu0 0.0
        %1838 = vmatprep.subr.mxu0 0.0
        %1839 = vmatpush1.msra.mxu0 0.0
        %1840 = vmatprep.subr.mxu0 0.0
        %1841 = vmatpush1.msra.mxu0 0.0
        %1842 = vmatprep.subr.mxu0 0.0
        %1843 = vmatpush1.msra.mxu0 0.0
        %1844 = vmatprep.subr.mxu0 0.0
        %1845 = vmatpush1.msra.mxu0 0.0
        %1846 = vmatprep.subr.mxu0 0.0
        %1847 = vmatpush1.msra.mxu0 0.0
        %1848 = vmatprep.subr.mxu0 0.0
        %1849 = vmatpush1.msra.mxu0 0.0
        %1850 = vmatprep.mubr.f32.mxu0 0.0
        %1851 = vmatmul.mubr.f32.gmra.mrb[0].mxu0 %v1781
        %v1852 = vpop.f32.mrb[0].mxu0
        %v1853 = vadd.f32 0.0, %v1852
        %v1854 = vpop.f32.mrb[0].mxu0
        %1855 = vdwg.mxu0
        %1856 = vrot.lane.b32.xlu0 %v1683, 120
        %v1857 = vpop.permute.xlu0 %1856
        %1858 = vrot.lane.b32.xlu0 %v1683, 88
        %v1859 = vpop.permute.xlu0 %1858
        %v1860 = vsel %vm1689, %v1857, 0
        %v1862 = vsel %vm1689, %v1859, 0
        %1864 = vmatprep.subr.mxu0 0.0
        %1865 = vmatpush1.xpose.msra.mxu0 %v1862
        %1866 = vmatprep.subr.mxu0 0.0
        %1867 = vmatpush1.xpose.msra.mxu0 0.0
        %1868 = vmatprep.subr.mxu0 0.0
        %1869 = vmatpush1.xpose.msra.mxu0 0.0
        %1870 = vmatprep.subr.mxu0 0.0
        %1871 = vmatpush1.xpose.msra.mxu0 0.0
        %1872 = vmatprep.subr.mxu0 0.0
        %1873 = vmatpush1.xpose.msra.mxu0 0.0
        %1874 = vmatprep.subr.mxu0 0.0
        %1875 = vmatpush1.xpose.msra.mxu0 0.0
        %1876 = vmatprep.subr.mxu0 0.0
        %1877 = vmatpush1.xpose.msra.mxu0 0.0
        %1878 = vmatprep.subr.mxu0 0.0
        %1879 = vmatpush1.xpose.msra.mxu0 0.0
        %1880 = vmatprep.subr.mxu0 0.0
        %1881 = vmatpush1.xpose.msra.mxu0 0.0
        %1882 = vmatprep.subr.mxu0 0.0
        %1883 = vmatpush1.xpose.msra.mxu0 0.0
        %1884 = vmatprep.subr.mxu0 0.0
        %1885 = vmatpush1.xpose.msra.mxu0 0.0
        %1886 = vmatprep.subr.mxu0 0.0
        %1887 = vmatpush1.xpose.msra.mxu0 0.0
        %1888 = vmatprep.subr.mxu0 0.0
        %1889 = vmatpush1.xpose.msra.mxu0 0.0
        %1890 = vmatprep.subr.mxu0 0.0
        %1891 = vmatpush1.xpose.msra.mxu0 0.0
        %1892 = vmatprep.subr.mxu0 0.0
        %1893 = vmatpush1.xpose.msra.mxu0 0.0
        %1894 = vmatprep.subr.mxu0 0.0
        %1895 = vmatpush1.xpose.msra.mxu0 0.0
        %1896 = vmatprep.subr.mxu0 0.0
        %1897 = vmatpush1.xpose.msra.mxu0 0.0
        %1898 = vmatprep.subr.mxu0 0.0
        %1899 = vmatpush1.xpose.msra.mxu0 0.0
        %1900 = vmatprep.subr.mxu0 0.0
        %1901 = vmatpush1.xpose.msra.mxu0 0.0
        %1902 = vmatprep.subr.mxu0 0.0
        %1903 = vmatpush1.xpose.msra.mxu0 0.0
        %1904 = vmatprep.subr.mxu0 0.0
        %1905 = vmatpush1.xpose.msra.mxu0 0.0
        %1906 = vmatprep.subr.mxu0 0.0
        %1907 = vmatpush1.xpose.msra.mxu0 0.0
        %1908 = vmatprep.subr.mxu0 0.0
        %1909 = vmatpush1.xpose.msra.mxu0 0.0
        %1910 = vmatprep.subr.mxu0 0.0
        %1911 = vmatpush1.xpose.msra.mxu0 0.0
        %1912 = vmatprep.subr.mxu0 0.0
        %1913 = vmatpush1.xpose.msra.mxu0 0.0
        %1914 = vmatprep.subr.mxu0 0.0
        %1915 = vmatpush1.xpose.msra.mxu0 0.0
        %1916 = vmatprep.subr.mxu0 0.0
        %1917 = vmatpush1.xpose.msra.mxu0 0.0
        %1918 = vmatprep.subr.mxu0 0.0
        %1919 = vmatpush1.xpose.msra.mxu0 0.0
        %1920 = vmatprep.subr.mxu0 0.0
        %1921 = vmatpush1.xpose.msra.mxu0 0.0
        %1922 = vmatprep.subr.mxu0 0.0
        %1923 = vmatpush1.xpose.msra.mxu0 0.0
        %1924 = vmatprep.subr.mxu0 0.0
        %1925 = vmatpush1.xpose.msra.mxu0 0.0
        %1926 = vmatprep.subr.mxu0 0.0
        %1927 = vmatpush1.xpose.msra.mxu0 0.0
        %1928 = vmatprep.mubr.f32.mxu0 0.0
        %1929 = vmatmul.mubr.f32.gmra.mrb[0].mxu0 %v1860
        %v1930 = vpop.f32.mrb[0].mxu0
        %v1931 = vadd.f32 0.0, %v1930
        %v1932 = vpop.f32.mrb[0].mxu0
        %1933 = vdwg.mxu0
        %v1934 = vmul.f32 %v1931, 0.35355338
        %v1935 = vsel %vm1765, %v1934, -inf
        %1936 = vmax.xlane.f32.xlu0 %v1935
        %v1937 = vpop.xlane.xlu0 %1936
        %v1938 = vsub.f32 %v1934, %v1937
        %v1939 = vmul.f32 %v1938, 1.442695
        %v1940 = vpow.pop %v1939
        %v1941 = vsel %vm1765, %v1940, 0.0
        %1942 = vadd.xlane.f32.xlu0 %v1941
        %v1943 = vpop.xlane.xlu0 %1942
        %v1944 = vrcp.pop %v1943
        %v1945 = vmul.f32 %v1940, %v1944
        %1946 = vrot.lane.b32.xlu0 %v1683, 56
        %v1947 = vpop.permute.xlu0 %1946
        %v1949 = vsel %vm1779, %v1945, 0
        %v1951 = vsel %vm1783, %v1947, 0
        %1953 = vmatprep.subr.mxu0 0.0
        %1954 = vmatpush1.msra.mxu0 %v1951
        %1955 = vmatprep.subr.mxu0 0.0
        %1956 = vmatpush1.msra.mxu0 0.0
        %1957 = vmatprep.subr.mxu0 0.0
        %1958 = vmatpush1.msra.mxu0 0.0
        %1959 = vmatprep.subr.mxu0 0.0
        %1960 = vmatpush1.msra.mxu0 0.0
        %1961 = vmatprep.subr.mxu0 0.0
        %1962 = vmatpush1.msra.mxu0 0.0
        %1963 = vmatprep.subr.mxu0 0.0
        %1964 = vmatpush1.msra.mxu0 0.0
        %1965 = vmatprep.subr.mxu0 0.0
        %1966 = vmatpush1.msra.mxu0 0.0
        %1967 = vmatprep.subr.mxu0 0.0
        %1968 = vmatpush1.msra.mxu0 0.0
        %1969 = vmatprep.subr.mxu0 0.0
        %1970 = vmatpush1.msra.mxu0 0.0
        %1971 = vmatprep.subr.mxu0 0.0
        %1972 = vmatpush1.msra.mxu0 0.0
        %1973 = vmatprep.subr.mxu0 0.0
        %1974 = vmatpush1.msra.mxu0 0.0
        %1975 = vmatprep.subr.mxu0 0.0
        %1976 = vmatpush1.msra.mxu0 0.0
        %1977 = vmatprep.subr.mxu0 0.0
        %1978 = vmatpush1.msra.mxu0 0.0
        %1979 = vmatprep.subr.mxu0 0.0
        %1980 = vmatpush1.msra.mxu0 0.0
        %1981 = vmatprep.subr.mxu0 0.0
        %1982 = vmatpush1.msra.mxu0 0.0
        %1983 = vmatprep.subr.mxu0 0.0
        %1984 = vmatpush1.msra.mxu0 0.0
        %1985 = vmatprep.subr.mxu0 0.0
        %1986 = vmatpush1.msra.mxu0 0.0
        %1987 = vmatprep.subr.mxu0 0.0
        %1988 = vmatpush1.msra.mxu0 0.0
        %1989 = vmatprep.subr.mxu0 0.0
        %1990 = vmatpush1.msra.mxu0 0.0
        %1991 = vmatprep.subr.mxu0 0.0
        %1992 = vmatpush1.msra.mxu0 0.0
        %1993 = vmatprep.subr.mxu0 0.0
        %1994 = vmatpush1.msra.mxu0 0.0
        %1995 = vmatprep.subr.mxu0 0.0
        %1996 = vmatpush1.msra.mxu0 0.0
        %1997 = vmatprep.subr.mxu0 0.0
        %1998 = vmatpush1.msra.mxu0 0.0
        %1999 = vmatprep.subr.mxu0 0.0
        %2000 = vmatpush1.msra.mxu0 0.0
        %2001 = vmatprep.subr.mxu0 0.0
        %2002 = vmatpush1.msra.mxu0 0.0
        %2003 = vmatprep.subr.mxu0 0.0
        %2004 = vmatpush1.msra.mxu0 0.0
        %2005 = vmatprep.subr.mxu0 0.0
        %2006 = vmatpush1.msra.mxu0 0.0
        %2007 = vmatprep.subr.mxu0 0.0
        %2008 = vmatpush1.msra.mxu0 0.0
        %2009 = vmatprep.subr.mxu0 0.0
        %2010 = vmatpush1.msra.mxu0 0.0
        %2011 = vmatprep.subr.mxu0 0.0
        %2012 = vmatpush1.msra.mxu0 0.0
        %2013 = vmatprep.subr.mxu0 0.0
        %2014 = vmatpush1.msra.mxu0 0.0
        %2015 = vmatprep.subr.mxu0 0.0
        %2016 = vmatpush1.msra.mxu0 0.0
        %2017 = vmatprep.mubr.f32.mxu0 0.0
        %2018 = vmatmul.mubr.f32.gmra.mrb[0].mxu0 %v1949
        %v2019 = vpop.f32.mrb[0].mxu0
        %v2020 = vadd.f32 0.0, %v2019
        %v2021 = vpop.f32.mrb[0].mxu0
        %2022 = vdwg.mxu0
        %v2024 = vsel %vm1689, %v2020, 0
        %2026 = vmatprep.subr.mxu0 0.0
        %2027 = vmatpush1.msra.mxu0 %v1584
        %2028 = vmatprep.subr.mxu0 0.0
        %2029 = vmatpush1.msra.mxu0 0.0
        %2030 = vmatprep.subr.mxu0 0.0
        %2031 = vmatpush1.msra.mxu0 0.0
        %2032 = vmatprep.subr.mxu0 0.0
        %2033 = vmatpush1.msra.mxu0 0.0
        %2034 = vmatprep.subr.mxu0 0.0
        %2035 = vmatpush1.msra.mxu0 0.0
        %2036 = vmatprep.subr.mxu0 0.0
        %2037 = vmatpush1.msra.mxu0 0.0
        %2038 = vmatprep.subr.mxu0 0.0
        %2039 = vmatpush1.msra.mxu0 0.0
        %2040 = vmatprep.subr.mxu0 0.0
        %2041 = vmatpush1.msra.mxu0 0.0
        %2042 = vmatprep.subr.mxu0 0.0
        %2043 = vmatpush1.msra.mxu0 0.0
        %2044 = vmatprep.subr.mxu0 0.0
        %2045 = vmatpush1.msra.mxu0 0.0
        %2046 = vmatprep.subr.mxu0 0.0
        %2047 = vmatpush1.msra.mxu0 0.0
        %2048 = vmatprep.subr.mxu0 0.0
        %2049 = vmatpush1.msra.mxu0 0.0
        %2050 = vmatprep.subr.mxu0 0.0
        %2051 = vmatpush1.msra.mxu0 0.0
        %2052 = vmatprep.subr.mxu0 0.0
        %2053 = vmatpush1.msra.mxu0 0.0
        %2054 = vmatprep.subr.mxu0 0.0
        %2055 = vmatpush1.msra.mxu0 0.0
        %2056 = vmatprep.subr.mxu0 0.0
        %2057 = vmatpush1.msra.mxu0 0.0
        %2058 = vmatprep.subr.mxu0 0.0
        %2059 = vmatpush1.msra.mxu0 0.0
        %2060 = vmatprep.subr.mxu0 0.0
        %2061 = vmatpush1.msra.mxu0 0.0
        %2062 = vmatprep.subr.mxu0 0.0
        %2063 = vmatpush1.msra.mxu0 0.0
        %2064 = vmatprep.subr.mxu0 0.0
        %2065 = vmatpush1.msra.mxu0 0.0
        %2066 = vmatprep.subr.mxu0 0.0
        %2067 = vmatpush1.msra.mxu0 0.0
        %2068 = vmatprep.subr.mxu0 0.0
        %2069 = vmatpush1.msra.mxu0 0.0
        %2070 = vmatprep.subr.mxu0 0.0
        %2071 = vmatpush1.msra.mxu0 0.0
        %2072 = vmatprep.subr.mxu0 0.0
        %2073 = vmatpush1.msra.mxu0 0.0
        %2074 = vmatprep.subr.mxu0 0.0
        %2075 = vmatpush1.msra.mxu0 0.0
        %2076 = vmatprep.subr.mxu0 0.0
        %2077 = vmatpush1.msra.mxu0 0.0
        %2078 = vmatprep.subr.mxu0 0.0
        %2079 = vmatpush1.msra.mxu0 0.0
        %2080 = vmatprep.subr.mxu0 0.0
        %2081 = vmatpush1.msra.mxu0 0.0
        %2082 = vmatprep.subr.mxu0 0.0
        %2083 = vmatpush1.msra.mxu0 0.0
        %2084 = vmatprep.subr.mxu0 0.0
        %2085 = vmatpush1.msra.mxu0 0.0
        %2086 = vmatprep.subr.mxu0 0.0
        %2087 = vmatpush1.msra.mxu0 0.0
        %2088 = vmatprep.subr.mxu0 0.0
        %2089 = vmatpush1.msra.mxu0 0.0
        %2090 = vmatprep.mubr.f32.mxu0 0.0
        %2091 = vmatmul.mubr.f32.gmra.mrb[0].mxu0 %v2024
        %v2092 = vpop.f32.mrb[0].mxu0
        %v2093 = vadd.f32 0.0, %v2092
        %v2094 = vpop.f32.mrb[0].mxu0
        %2095 = vdwg.mxu0
        %v2097 = vsel %vm1689, %v1853, 0
        %2099 = vmatprep.subr.mxu0 0.0
        %2100 = vmatpush1.msra.mxu0 %v1583
        %2101 = vmatprep.subr.mxu0 0.0
        %2102 = vmatpush1.msra.mxu0 0.0
        %2103 = vmatprep.subr.mxu0 0.0
        %2104 = vmatpush1.msra.mxu0 0.0
        %2105 = vmatprep.subr.mxu0 0.0
        %2106 = vmatpush1.msra.mxu0 0.0
        %2107 = vmatprep.subr.mxu0 0.0
        %2108 = vmatpush1.msra.mxu0 0.0
        %2109 = vmatprep.subr.mxu0 0.0
        %2110 = vmatpush1.msra.mxu0 0.0
        %2111 = vmatprep.subr.mxu0 0.0
        %2112 = vmatpush1.msra.mxu0 0.0
        %2113 = vmatprep.subr.mxu0 0.0
        %2114 = vmatpush1.msra.mxu0 0.0
        %2115 = vmatprep.subr.mxu0 0.0
        %2116 = vmatpush1.msra.mxu0 0.0
        %2117 = vmatprep.subr.mxu0 0.0
        %2118 = vmatpush1.msra.mxu0 0.0
        %2119 = vmatprep.subr.mxu0 0.0
        %2120 = vmatpush1.msra.mxu0 0.0
        %2121 = vmatprep.subr.mxu0 0.0
        %2122 = vmatpush1.msra.mxu0 0.0
        %2123 = vmatprep.subr.mxu0 0.0
        %2124 = vmatpush1.msra.mxu0 0.0
        %2125 = vmatprep.subr.mxu0 0.0
        %2126 = vmatpush1.msra.mxu0 0.0
        %2127 = vmatprep.subr.mxu0 0.0
        %2128 = vmatpush1.msra.mxu0 0.0
        %2129 = vmatprep.subr.mxu0 0.0
        %2130 = vmatpush1.msra.mxu0 0.0
        %2131 = vmatprep.subr.mxu0 0.0
        %2132 = vmatpush1.msra.mxu0 0.0
        %2133 = vmatprep.subr.mxu0 0.0
        %2134 = vmatpush1.msra.mxu0 0.0
        %2135 = vmatprep.subr.mxu0 0.0
        %2136 = vmatpush1.msra.mxu0 0.0
        %2137 = vmatprep.subr.mxu0 0.0
        %2138 = vmatpush1.msra.mxu0 0.0
        %2139 = vmatprep.subr.mxu0 0.0
        %2140 = vmatpush1.msra.mxu0 0.0
        %2141 = vmatprep.subr.mxu0 0.0
        %2142 = vmatpush1.msra.mxu0 0.0
        %2143 = vmatprep.subr.mxu0 0.0
        %2144 = vmatpush1.msra.mxu0 0.0
        %2145 = vmatprep.subr.mxu0 0.0
        %2146 = vmatpush1.msra.mxu0 0.0
        %2147 = vmatprep.subr.mxu0 0.0
        %2148 = vmatpush1.msra.mxu0 0.0
        %2149 = vmatprep.subr.mxu0 0.0
        %2150 = vmatpush1.msra.mxu0 0.0
        %2151 = vmatprep.subr.mxu0 0.0
        %2152 = vmatpush1.msra.mxu0 0.0
        %2153 = vmatprep.subr.mxu0 0.0
        %2154 = vmatpush1.msra.mxu0 0.0
        %2155 = vmatprep.subr.mxu0 0.0
        %2156 = vmatpush1.msra.mxu0 0.0
        %2157 = vmatprep.subr.mxu0 0.0
        %2158 = vmatpush1.msra.mxu0 0.0
        %2159 = vmatprep.subr.mxu0 0.0
        %2160 = vmatpush1.msra.mxu0 0.0
        %2161 = vmatprep.subr.mxu0 0.0
        %2162 = vmatpush1.msra.mxu0 0.0
        %2163 = vmatprep.mubr.f32.mxu0 0.0
        %2164 = vmatmul.mubr.f32.gmra.mrb[0].mxu0 %v2097
        %v2165 = vpop.f32.mrb[0].mxu0
        %v2166 = vadd.f32 %v2093, %v2165
        %v2167 = vpop.f32.mrb[0].mxu0
        %2168 = vdwg.mxu0
        %2169 = vrot.lane.b32.xlu0 %v1683, 112
        %v2170 = vpop.permute.xlu0 %2169
        %2171 = vrot.lane.b32.xlu0 %v1683, 80
        %v2172 = vpop.permute.xlu0 %2171
        %v2173 = vsel %vm1689, %v2170, 0
        %v2175 = vsel %vm1689, %v2172, 0
        %2177 = vmatprep.subr.mxu0 0.0
        %2178 = vmatpush1.xpose.msra.mxu0 %v2175
        %2179 = vmatprep.subr.mxu0 0.0
        %2180 = vmatpush1.xpose.msra.mxu0 0.0
        %2181 = vmatprep.subr.mxu0 0.0
        %2182 = vmatpush1.xpose.msra.mxu0 0.0
        %2183 = vmatprep.subr.mxu0 0.0
        %2184 = vmatpush1.xpose.msra.mxu0 0.0
        %2185 = vmatprep.subr.mxu0 0.0
        %2186 = vmatpush1.xpose.msra.mxu0 0.0
        %2187 = vmatprep.subr.mxu0 0.0
        %2188 = vmatpush1.xpose.msra.mxu0 0.0
        %2189 = vmatprep.subr.mxu0 0.0
        %2190 = vmatpush1.xpose.msra.mxu0 0.0
        %2191 = vmatprep.subr.mxu0 0.0
        %2192 = vmatpush1.xpose.msra.mxu0 0.0
        %2193 = vmatprep.subr.mxu0 0.0
        %2194 = vmatpush1.xpose.msra.mxu0 0.0
        %2195 = vmatprep.subr.mxu0 0.0
        %2196 = vmatpush1.xpose.msra.mxu0 0.0
        %2197 = vmatprep.subr.mxu0 0.0
        %2198 = vmatpush1.xpose.msra.mxu0 0.0
        %2199 = vmatprep.subr.mxu0 0.0
        %2200 = vmatpush1.xpose.msra.mxu0 0.0
        %2201 = vmatprep.subr.mxu0 0.0
        %2202 = vmatpush1.xpose.msra.mxu0 0.0
        %2203 = vmatprep.subr.mxu0 0.0
        %2204 = vmatpush1.xpose.msra.mxu0 0.0
        %2205 = vmatprep.subr.mxu0 0.0
        %2206 = vmatpush1.xpose.msra.mxu0 0.0
        %2207 = vmatprep.subr.mxu0 0.0
        %2208 = vmatpush1.xpose.msra.mxu0 0.0
        %2209 = vmatprep.subr.mxu0 0.0
        %2210 = vmatpush1.xpose.msra.mxu0 0.0
        %2211 = vmatprep.subr.mxu0 0.0
        %2212 = vmatpush1.xpose.msra.mxu0 0.0
        %2213 = vmatprep.subr.mxu0 0.0
        %2214 = vmatpush1.xpose.msra.mxu0 0.0
        %2215 = vmatprep.subr.mxu0 0.0
        %2216 = vmatpush1.xpose.msra.mxu0 0.0
        %2217 = vmatprep.subr.mxu0 0.0
        %2218 = vmatpush1.xpose.msra.mxu0 0.0
        %2219 = vmatprep.subr.mxu0 0.0
        %2220 = vmatpush1.xpose.msra.mxu0 0.0
        %2221 = vmatprep.subr.mxu0 0.0
        %2222 = vmatpush1.xpose.msra.mxu0 0.0
        %2223 = vmatprep.subr.mxu0 0.0
        %2224 = vmatpush1.xpose.msra.mxu0 0.0
        %2225 = vmatprep.subr.mxu0 0.0
        %2226 = vmatpush1.xpose.msra.mxu0 0.0
        %2227 = vmatprep.subr.mxu0 0.0
        %2228 = vmatpush1.xpose.msra.mxu0 0.0
        %2229 = vmatprep.subr.mxu0 0.0
        %2230 = vmatpush1.xpose.msra.mxu0 0.0
        %2231 = vmatprep.subr.mxu0 0.0
        %2232 = vmatpush1.xpose.msra.mxu0 0.0
        %2233 = vmatprep.subr.mxu0 0.0
        %2234 = vmatpush1.xpose.msra.mxu0 0.0
        %2235 = vmatprep.subr.mxu0 0.0
        %2236 = vmatpush1.xpose.msra.mxu0 0.0
        %2237 = vmatprep.subr.mxu0 0.0
        %2238 = vmatpush1.xpose.msra.mxu0 0.0
        %2239 = vmatprep.subr.mxu0 0.0
        %2240 = vmatpush1.xpose.msra.mxu0 0.0
        %2241 = vmatprep.mubr.f32.mxu0 0.0
        %2242 = vmatmul.mubr.f32.gmra.mrb[0].mxu0 %v2173
        %v2243 = vpop.f32.mrb[0].mxu0
        %v2244 = vadd.f32 0.0, %v2243
        %v2245 = vpop.f32.mrb[0].mxu0
        %2246 = vdwg.mxu0
        %v2247 = vmul.f32 %v2244, 0.35355338
        %v2248 = vsel %vm1765, %v2247, -inf
        %2249 = vmax.xlane.f32.xlu0 %v2248
        %v2250 = vpop.xlane.xlu0 %2249
        %v2251 = vsub.f32 %v2247, %v2250
        %v2252 = vmul.f32 %v2251, 1.442695
        %v2253 = vpow.pop %v2252
        %v2254 = vsel %vm1765, %v2253, 0.0
        %2255 = vadd.xlane.f32.xlu0 %v2254
        %v2256 = vpop.xlane.xlu0 %2255
        %v2257 = vrcp.pop %v2256
        %v2258 = vmul.f32 %v2253, %v2257
        %2259 = vrot.lane.b32.xlu0 %v1683, 48
        %v2260 = vpop.permute.xlu0 %2259
        %v2262 = vsel %vm1779, %v2258, 0
        %v2264 = vsel %vm1783, %v2260, 0
        %2266 = vmatprep.subr.mxu0 0.0
        %2267 = vmatpush1.msra.mxu0 %v2264
        %2268 = vmatprep.subr.mxu0 0.0
        %2269 = vmatpush1.msra.mxu0 0.0
        %2270 = vmatprep.subr.mxu0 0.0
        %2271 = vmatpush1.msra.mxu0 0.0
        %2272 = vmatprep.subr.mxu0 0.0
        %2273 = vmatpush1.msra.mxu0 0.0
        %2274 = vmatprep.subr.mxu0 0.0
        %2275 = vmatpush1.msra.mxu0 0.0
        %2276 = vmatprep.subr.mxu0 0.0
        %2277 = vmatpush1.msra.mxu0 0.0
        %2278 = vmatprep.subr.mxu0 0.0
        %2279 = vmatpush1.msra.mxu0 0.0
        %2280 = vmatprep.subr.mxu0 0.0
        %2281 = vmatpush1.msra.mxu0 0.0
        %2282 = vmatprep.subr.mxu0 0.0
        %2283 = vmatpush1.msra.mxu0 0.0
        %2284 = vmatprep.subr.mxu0 0.0
        %2285 = vmatpush1.msra.mxu0 0.0
        %2286 = vmatprep.subr.mxu0 0.0
        %2287 = vmatpush1.msra.mxu0 0.0
        %2288 = vmatprep.subr.mxu0 0.0
        %2289 = vmatpush1.msra.mxu0 0.0
        %2290 = vmatprep.subr.mxu0 0.0
        %2291 = vmatpush1.msra.mxu0 0.0
        %2292 = vmatprep.subr.mxu0 0.0
        %2293 = vmatpush1.msra.mxu0 0.0
        %2294 = vmatprep.subr.mxu0 0.0
        %2295 = vmatpush1.msra.mxu0 0.0
        %2296 = vmatprep.subr.mxu0 0.0
        %2297 = vmatpush1.msra.mxu0 0.0
        %2298 = vmatprep.subr.mxu0 0.0
        %2299 = vmatpush1.msra.mxu0 0.0
        %2300 = vmatprep.subr.mxu0 0.0
        %2301 = vmatpush1.msra.mxu0 0.0
        %2302 = vmatprep.subr.mxu0 0.0
        %2303 = vmatpush1.msra.mxu0 0.0
        %2304 = vmatprep.subr.mxu0 0.0
        %2305 = vmatpush1.msra.mxu0 0.0
        %2306 = vmatprep.subr.mxu0 0.0
        %2307 = vmatpush1.msra.mxu0 0.0
        %2308 = vmatprep.subr.mxu0 0.0
        %2309 = vmatpush1.msra.mxu0 0.0
        %2310 = vmatprep.subr.mxu0 0.0
        %2311 = vmatpush1.msra.mxu0 0.0
        %2312 = vmatprep.subr.mxu0 0.0
        %2313 = vmatpush1.msra.mxu0 0.0
        %2314 = vmatprep.subr.mxu0 0.0
        %2315 = vmatpush1.msra.mxu0 0.0
        %2316 = vmatprep.subr.mxu0 0.0
        %2317 = vmatpush1.msra.mxu0 0.0
        %2318 = vmatprep.subr.mxu0 0.0
        %2319 = vmatpush1.msra.mxu0 0.0
        %2320 = vmatprep.subr.mxu0 0.0
        %2321 = vmatpush1.msra.mxu0 0.0
        %2322 = vmatprep.subr.mxu0 0.0
        %2323 = vmatpush1.msra.mxu0 0.0
        %2324 = vmatprep.subr.mxu0 0.0
        %2325 = vmatpush1.msra.mxu0 0.0
        %2326 = vmatprep.subr.mxu0 0.0
        %2327 = vmatpush1.msra.mxu0 0.0
        %2328 = vmatprep.subr.mxu0 0.0
        %2329 = vmatpush1.msra.mxu0 0.0
        %2330 = vmatprep.mubr.f32.mxu0 0.0
        %2331 = vmatmul.mubr.f32.gmra.mrb[0].mxu0 %v2262
        %v2332 = vpop.f32.mrb[0].mxu0
        %v2333 = vadd.f32 0.0, %v2332
        %v2334 = vpop.f32.mrb[0].mxu0
        %2335 = vdwg.mxu0
        %v2337 = vsel %vm1689, %v2333, 0
        %2339 = vmatprep.subr.mxu0 0.0
        %2340 = vmatpush1.msra.mxu0 %v1585
        %2341 = vmatprep.subr.mxu0 0.0
        %2342 = vmatpush1.msra.mxu0 0.0
        %2343 = vmatprep.subr.mxu0 0.0
        %2344 = vmatpush1.msra.mxu0 0.0
        %2345 = vmatprep.subr.mxu0 0.0
        %2346 = vmatpush1.msra.mxu0 0.0
        %2347 = vmatprep.subr.mxu0 0.0
        %2348 = vmatpush1.msra.mxu0 0.0
        %2349 = vmatprep.subr.mxu0 0.0
        %2350 = vmatpush1.msra.mxu0 0.0
        %2351 = vmatprep.subr.mxu0 0.0
        %2352 = vmatpush1.msra.mxu0 0.0
        %2353 = vmatprep.subr.mxu0 0.0
        %2354 = vmatpush1.msra.mxu0 0.0
        %2355 = vmatprep.subr.mxu0 0.0
        %2356 = vmatpush1.msra.mxu0 0.0
        %2357 = vmatprep.subr.mxu0 0.0
        %2358 = vmatpush1.msra.mxu0 0.0
        %2359 = vmatprep.subr.mxu0 0.0
        %2360 = vmatpush1.msra.mxu0 0.0
        %2361 = vmatprep.subr.mxu0 0.0
        %2362 = vmatpush1.msra.mxu0 0.0
        %2363 = vmatprep.subr.mxu0 0.0
        %2364 = vmatpush1.msra.mxu0 0.0
        %2365 = vmatprep.subr.mxu0 0.0
        %2366 = vmatpush1.msra.mxu0 0.0
        %2367 = vmatprep.subr.mxu0 0.0
        %2368 = vmatpush1.msra.mxu0 0.0
        %2369 = vmatprep.subr.mxu0 0.0
        %2370 = vmatpush1.msra.mxu0 0.0
        %2371 = vmatprep.subr.mxu0 0.0
        %2372 = vmatpush1.msra.mxu0 0.0
        %2373 = vmatprep.subr.mxu0 0.0
        %2374 = vmatpush1.msra.mxu0 0.0
        %2375 = vmatprep.subr.mxu0 0.0
        %2376 = vmatpush1.msra.mxu0 0.0
        %2377 = vmatprep.subr.mxu0 0.0
        %2378 = vmatpush1.msra.mxu0 0.0
        %2379 = vmatprep.subr.mxu0 0.0
        %2380 = vmatpush1.msra.mxu0 0.0
        %2381 = vmatprep.subr.mxu0 0.0
        %2382 = vmatpush1.msra.mxu0 0.0
        %2383 = vmatprep.subr.mxu0 0.0
        %2384 = vmatpush1.msra.mxu0 0.0
        %2385 = vmatprep.subr.mxu0 0.0
        %2386 = vmatpush1.msra.mxu0 0.0
        %2387 = vmatprep.subr.mxu0 0.0
        %2388 = vmatpush1.msra.mxu0 0.0
        %2389 = vmatprep.subr.mxu0 0.0
        %2390 = vmatpush1.msra.mxu0 0.0
        %2391 = vmatprep.subr.mxu0 0.0
        %2392 = vmatpush1.msra.mxu0 0.0
        %2393 = vmatprep.subr.mxu0 0.0
        %2394 = vmatpush1.msra.mxu0 0.0
        %2395 = vmatprep.subr.mxu0 0.0
        %2396 = vmatpush1.msra.mxu0 0.0
        %2397 = vmatprep.subr.mxu0 0.0
        %2398 = vmatpush1.msra.mxu0 0.0
        %2399 = vmatprep.subr.mxu0 0.0
        %2400 = vmatpush1.msra.mxu0 0.0
        %2401 = vmatprep.subr.mxu0 0.0
        %2402 = vmatpush1.msra.mxu0 0.0
        %2403 = vmatprep.mubr.f32.mxu0 0.0
        %2404 = vmatmul.mubr.f32.gmra.mrb[0].mxu0 %v2337
        %v2405 = vpop.f32.mrb[0].mxu0
        %v2406 = vadd.f32 0.0, %v2405
        %v2407 = vpop.f32.mrb[0].mxu0
        %2408 = vdwg.mxu0
        %v2409 = vadd.f32 %v2166, %v2406
        %2410 = vrot.lane.b32.xlu0 %v1683, 104
        %v2411 = vpop.permute.xlu0 %2410
        %2412 = vrot.lane.b32.xlu0 %v1683, 72
        %v2413 = vpop.permute.xlu0 %2412
        %v2414 = vsel %vm1689, %v2411, 0
        %v2416 = vsel %vm1689, %v2413, 0
        %2418 = vmatprep.subr.mxu0 0.0
        %2419 = vmatpush1.xpose.msra.mxu0 %v2416
        %2420 = vmatprep.subr.mxu0 0.0
        %2421 = vmatpush1.xpose.msra.mxu0 0.0
        %2422 = vmatprep.subr.mxu0 0.0
        %2423 = vmatpush1.xpose.msra.mxu0 0.0
        %2424 = vmatprep.subr.mxu0 0.0
        %2425 = vmatpush1.xpose.msra.mxu0 0.0
        %2426 = vmatprep.subr.mxu0 0.0
        %2427 = vmatpush1.xpose.msra.mxu0 0.0
        %2428 = vmatprep.subr.mxu0 0.0
        %2429 = vmatpush1.xpose.msra.mxu0 0.0
        %2430 = vmatprep.subr.mxu0 0.0
        %2431 = vmatpush1.xpose.msra.mxu0 0.0
        %2432 = vmatprep.subr.mxu0 0.0
        %2433 = vmatpush1.xpose.msra.mxu0 0.0
        %2434 = vmatprep.subr.mxu0 0.0
        %2435 = vmatpush1.xpose.msra.mxu0 0.0
        %2436 = vmatprep.subr.mxu0 0.0
        %2437 = vmatpush1.xpose.msra.mxu0 0.0
        %2438 = vmatprep.subr.mxu0 0.0
        %2439 = vmatpush1.xpose.msra.mxu0 0.0
        %2440 = vmatprep.subr.mxu0 0.0
        %2441 = vmatpush1.xpose.msra.mxu0 0.0
        %2442 = vmatprep.subr.mxu0 0.0
        %2443 = vmatpush1.xpose.msra.mxu0 0.0
        %2444 = vmatprep.subr.mxu0 0.0
        %2445 = vmatpush1.xpose.msra.mxu0 0.0
        %2446 = vmatprep.subr.mxu0 0.0
        %2447 = vmatpush1.xpose.msra.mxu0 0.0
        %2448 = vmatprep.subr.mxu0 0.0
        %2449 = vmatpush1.xpose.msra.mxu0 0.0
        %2450 = vmatprep.subr.mxu0 0.0
        %2451 = vmatpush1.xpose.msra.mxu0 0.0
        %2452 = vmatprep.subr.mxu0 0.0
        %2453 = vmatpush1.xpose.msra.mxu0 0.0
        %2454 = vmatprep.subr.mxu0 0.0
        %2455 = vmatpush1.xpose.msra.mxu0 0.0
        %2456 = vmatprep.subr.mxu0 0.0
        %2457 = vmatpush1.xpose.msra.mxu0 0.0
        %2458 = vmatprep.subr.mxu0 0.0
        %2459 = vmatpush1.xpose.msra.mxu0 0.0
        %2460 = vmatprep.subr.mxu0 0.0
        %2461 = vmatpush1.xpose.msra.mxu0 0.0
        %2462 = vmatprep.subr.mxu0 0.0
        %2463 = vmatpush1.xpose.msra.mxu0 0.0
        %2464 = vmatprep.subr.mxu0 0.0
        %2465 = vmatpush1.xpose.msra.mxu0 0.0
        %2466 = vmatprep.subr.mxu0 0.0
        %2467 = vmatpush1.xpose.msra.mxu0 0.0
        %2468 = vmatprep.subr.mxu0 0.0
        %2469 = vmatpush1.xpose.msra.mxu0 0.0
        %2470 = vmatprep.subr.mxu0 0.0
        %2471 = vmatpush1.xpose.msra.mxu0 0.0
        %2472 = vmatprep.subr.mxu0 0.0
        %2473 = vmatpush1.xpose.msra.mxu0 0.0
        %2474 = vmatprep.subr.mxu0 0.0
        %2475 = vmatpush1.xpose.msra.mxu0 0.0
        %2476 = vmatprep.subr.mxu0 0.0
        %2477 = vmatpush1.xpose.msra.mxu0 0.0
        %2478 = vmatprep.subr.mxu0 0.0
        %2479 = vmatpush1.xpose.msra.mxu0 0.0
        %2480 = vmatprep.subr.mxu0 0.0
        %2481 = vmatpush1.xpose.msra.mxu0 0.0
        %2482 = vmatprep.mubr.f32.mxu0 0.0
        %2483 = vmatmul.mubr.f32.gmra.mrb[0].mxu0 %v2414
        %v2484 = vpop.f32.mrb[0].mxu0
        %v2485 = vadd.f32 0.0, %v2484
        %v2486 = vpop.f32.mrb[0].mxu0
        %2487 = vdwg.mxu0
        %v2488 = vmul.f32 %v2485, 0.35355338
        %v2489 = vsel %vm1765, %v2488, -inf
        %2490 = vmax.xlane.f32.xlu0 %v2489
        %v2491 = vpop.xlane.xlu0 %2490
        %v2492 = vsub.f32 %v2488, %v2491
        %v2493 = vmul.f32 %v2492, 1.442695
        %v2494 = vpow.pop %v2493
        %v2495 = vsel %vm1765, %v2494, 0.0
        %2496 = vadd.xlane.f32.xlu0 %v2495
        %v2497 = vpop.xlane.xlu0 %2496
        %v2498 = vrcp.pop %v2497
        %v2499 = vmul.f32 %v2494, %v2498
        %2500 = vrot.lane.b32.xlu0 %v1683, 40
        %v2501 = vpop.permute.xlu0 %2500
        %v2503 = vsel %vm1779, %v2499, 0
        %v2505 = vsel %vm1783, %v2501, 0
        %2507 = vmatprep.subr.mxu0 0.0
        %2508 = vmatpush1.msra.mxu0 %v2505
        %2509 = vmatprep.subr.mxu0 0.0
        %2510 = vmatpush1.msra.mxu0 0.0
        %2511 = vmatprep.subr.mxu0 0.0
        %2512 = vmatpush1.msra.mxu0 0.0
        %2513 = vmatprep.subr.mxu0 0.0
        %2514 = vmatpush1.msra.mxu0 0.0
        %2515 = vmatprep.subr.mxu0 0.0
        %2516 = vmatpush1.msra.mxu0 0.0
        %2517 = vmatprep.subr.mxu0 0.0
        %2518 = vmatpush1.msra.mxu0 0.0
        %2519 = vmatprep.subr.mxu0 0.0
        %2520 = vmatpush1.msra.mxu0 0.0
        %2521 = vmatprep.subr.mxu0 0.0
        %2522 = vmatpush1.msra.mxu0 0.0
        %2523 = vmatprep.subr.mxu0 0.0
        %2524 = vmatpush1.msra.mxu0 0.0
        %2525 = vmatprep.subr.mxu0 0.0
        %2526 = vmatpush1.msra.mxu0 0.0
        %2527 = vmatprep.subr.mxu0 0.0
        %2528 = vmatpush1.msra.mxu0 0.0
        %2529 = vmatprep.subr.mxu0 0.0
        %2530 = vmatpush1.msra.mxu0 0.0
        %2531 = vmatprep.subr.mxu0 0.0
        %2532 = vmatpush1.msra.mxu0 0.0
        %2533 = vmatprep.subr.mxu0 0.0
        %2534 = vmatpush1.msra.mxu0 0.0
        %2535 = vmatprep.subr.mxu0 0.0
        %2536 = vmatpush1.msra.mxu0 0.0
        %2537 = vmatprep.subr.mxu0 0.0
        %2538 = vmatpush1.msra.mxu0 0.0
        %2539 = vmatprep.subr.mxu0 0.0
        %2540 = vmatpush1.msra.mxu0 0.0
        %2541 = vmatprep.subr.mxu0 0.0
        %2542 = vmatpush1.msra.mxu0 0.0
        %2543 = vmatprep.subr.mxu0 0.0
        %2544 = vmatpush1.msra.mxu0 0.0
        %2545 = vmatprep.subr.mxu0 0.0
        %2546 = vmatpush1.msra.mxu0 0.0
        %2547 = vmatprep.subr.mxu0 0.0
        %2548 = vmatpush1.msra.mxu0 0.0
        %2549 = vmatprep.subr.mxu0 0.0
        %2550 = vmatpush1.msra.mxu0 0.0
        %2551 = vmatprep.subr.mxu0 0.0
        %2552 = vmatpush1.msra.mxu0 0.0
        %2553 = vmatprep.subr.mxu0 0.0
        %2554 = vmatpush1.msra.mxu0 0.0
        %2555 = vmatprep.subr.mxu0 0.0
        %2556 = vmatpush1.msra.mxu0 0.0
        %2557 = vmatprep.subr.mxu0 0.0
        %2558 = vmatpush1.msra.mxu0 0.0
        %2559 = vmatprep.subr.mxu0 0.0
        %2560 = vmatpush1.msra.mxu0 0.0
        %2561 = vmatprep.subr.mxu0 0.0
        %2562 = vmatpush1.msra.mxu0 0.0
        %2563 = vmatprep.subr.mxu0 0.0
        %2564 = vmatpush1.msra.mxu0 0.0
        %2565 = vmatprep.subr.mxu0 0.0
        %2566 = vmatpush1.msra.mxu0 0.0
        %2567 = vmatprep.subr.mxu0 0.0
        %2568 = vmatpush1.msra.mxu0 0.0
        %2569 = vmatprep.subr.mxu0 0.0
        %2570 = vmatpush1.msra.mxu0 0.0
        %2571 = vmatprep.mubr.f32.mxu0 0.0
        %2572 = vmatmul.mubr.f32.gmra.mrb[0].mxu0 %v2503
        %v2573 = vpop.f32.mrb[0].mxu0
        %v2574 = vadd.f32 0.0, %v2573
        %v2575 = vpop.f32.mrb[0].mxu0
        %2576 = vdwg.mxu0
        %v2578 = vsel %vm1689, %v2574, 0
        %2580 = vmatprep.subr.mxu0 0.0
        %2581 = vmatpush1.msra.mxu0 %v1586
        %2582 = vmatprep.subr.mxu0 0.0
        %2583 = vmatpush1.msra.mxu0 0.0
        %2584 = vmatprep.subr.mxu0 0.0
        %2585 = vmatpush1.msra.mxu0 0.0
        %2586 = vmatprep.subr.mxu0 0.0
        %2587 = vmatpush1.msra.mxu0 0.0
        %2588 = vmatprep.subr.mxu0 0.0
        %2589 = vmatpush1.msra.mxu0 0.0
        %2590 = vmatprep.subr.mxu0 0.0
        %2591 = vmatpush1.msra.mxu0 0.0
        %2592 = vmatprep.subr.mxu0 0.0
        %2593 = vmatpush1.msra.mxu0 0.0
        %2594 = vmatprep.subr.mxu0 0.0
        %2595 = vmatpush1.msra.mxu0 0.0
        %2596 = vmatprep.subr.mxu0 0.0
        %2597 = vmatpush1.msra.mxu0 0.0
        %2598 = vmatprep.subr.mxu0 0.0
        %2599 = vmatpush1.msra.mxu0 0.0
        %2600 = vmatprep.subr.mxu0 0.0
        %2601 = vmatpush1.msra.mxu0 0.0
        %2602 = vmatprep.subr.mxu0 0.0
        %2603 = vmatpush1.msra.mxu0 0.0
        %2604 = vmatprep.subr.mxu0 0.0
        %2605 = vmatpush1.msra.mxu0 0.0
        %2606 = vmatprep.subr.mxu0 0.0
        %2607 = vmatpush1.msra.mxu0 0.0
        %2608 = vmatprep.subr.mxu0 0.0
        %2609 = vmatpush1.msra.mxu0 0.0
        %2610 = vmatprep.subr.mxu0 0.0
        %2611 = vmatpush1.msra.mxu0 0.0
        %2612 = vmatprep.subr.mxu0 0.0
        %2613 = vmatpush1.msra.mxu0 0.0
        %2614 = vmatprep.subr.mxu0 0.0
        %2615 = vmatpush1.msra.mxu0 0.0
        %2616 = vmatprep.subr.mxu0 0.0
        %2617 = vmatpush1.msra.mxu0 0.0
        %2618 = vmatprep.subr.mxu0 0.0
        %2619 = vmatpush1.msra.mxu0 0.0
        %2620 = vmatprep.subr.mxu0 0.0
        %2621 = vmatpush1.msra.mxu0 0.0
        %2622 = vmatprep.subr.mxu0 0.0
        %2623 = vmatpush1.msra.mxu0 0.0
        %2624 = vmatprep.subr.mxu0 0.0
        %2625 = vmatpush1.msra.mxu0 0.0
        %2626 = vmatprep.subr.mxu0 0.0
        %2627 = vmatpush1.msra.mxu0 0.0
        %2628 = vmatprep.subr.mxu0 0.0
        %2629 = vmatpush1.msra.mxu0 0.0
        %2630 = vmatprep.subr.mxu0 0.0
        %2631 = vmatpush1.msra.mxu0 0.0
        %2632 = vmatprep.subr.mxu0 0.0
        %2633 = vmatpush1.msra.mxu0 0.0
        %2634 = vmatprep.subr.mxu0 0.0
        %2635 = vmatpush1.msra.mxu0 0.0
        %2636 = vmatprep.subr.mxu0 0.0
        %2637 = vmatpush1.msra.mxu0 0.0
        %2638 = vmatprep.subr.mxu0 0.0
        %2639 = vmatpush1.msra.mxu0 0.0
        %2640 = vmatprep.subr.mxu0 0.0
        %2641 = vmatpush1.msra.mxu0 0.0
        %2642 = vmatprep.subr.mxu0 0.0
        %2643 = vmatpush1.msra.mxu0 0.0
        %2644 = vmatprep.mubr.f32.mxu0 0.0
        %2645 = vmatmul.mubr.f32.gmra.mrb[0].mxu0 %v2578
        %v2646 = vpop.f32.mrb[0].mxu0
        %v2647 = vadd.f32 0.0, %v2646
        %v2648 = vpop.f32.mrb[0].mxu0
        %2649 = vdwg.mxu0
        %v2650 = vadd.f32 %v2409, %v2647
        %v2652 = vlaneseq
        %v2653 = vshrl.u32 %v2652, 7
        %v2654 = vsub.s32 0, %v2653
        %v2655 = vrot.slane %v1587, %v2654
        %v2657 = vadd.f32 %v2650, %v2655
        %v2658 = vadd.f32 %v1575, %v2657
        %vm2659 = vcmask 257024
        %v2660 = vsel %vm2659, %v2658, 0.0
        %2661 = vadd.xlane.f32.xlu0 %v2660
        %v2662 = vpop.xlane.xlu0 %2661
        %v2663 = vrcp.pop 32.0
        %v2664 = vmul.f32 %v2662, %v2663
        %v2665 = vsub.f32 %v2658, %v2664
        %v2666 = vmul.f32 %v2665, %v2665
        %v2667 = vsel %vm2659, %v2666, 0.0
        %2668 = vadd.xlane.f32.xlu0 %v2667
        %v2669 = vpop.xlane.xlu0 %2668
        %v2670 = vmul.f32 %v2669, %v2663
        %v2671 = vadd.f32 %v2670, 1e-05
        %v2672 = vrsqrt.pop %v2671
        %v2673 = vmul.f32 %v2665, %v2672
        %v2675 = vlaneseq
        %v2676 = vshrl.u32 %v2675, 7
        %v2677 = vsub.s32 0, %v2676
        %v2678 = vrot.slane %v1602, %v2677
        %v2680 = vmul.f32 %v2673, %v2678
        %v2682 = vlaneseq
        %v2683 = vshrl.u32 %v2682, 7
        %v2684 = vsub.s32 0, %v2683
        %v2685 = vrot.slane %v1603, %v2684
        %v2687 = vadd.f32 %v2680, %v2685
        %v2689 = vlaneseq
        %v2690 = vshrl.u32 %v2689, 7
        %v2691 = vsub.s32 0, %v2690
        %v2692 = vrot.slane %v1592, %v2691
        %v2695 = vsel %vm1612, %v2687, 0
        %2697 = vmatprep.subr.mxu0 0.0
        %2698 = vmatpush1.msra.mxu0 %v1588
        %2699 = vmatprep.subr.mxu0 0.0
        %2700 = vmatpush1.msra.mxu0 %v1589
        %2701 = vmatprep.subr.mxu0 0.0
        %2702 = vmatpush1.msra.mxu0 %v1590
        %2703 = vmatprep.subr.mxu0 0.0
        %2704 = vmatpush1.msra.mxu0 %v1591
        %2705 = vmatprep.subr.mxu0 0.0
        %2706 = vmatpush1.msra.mxu0 0.0
        %2707 = vmatprep.subr.mxu0 0.0
        %2708 = vmatpush1.msra.mxu0 0.0
        %2709 = vmatprep.subr.mxu0 0.0
        %2710 = vmatpush1.msra.mxu0 0.0
        %2711 = vmatprep.subr.mxu0 0.0
        %2712 = vmatpush1.msra.mxu0 0.0
        %2713 = vmatprep.subr.mxu0 0.0
        %2714 = vmatpush1.msra.mxu0 0.0
        %2715 = vmatprep.subr.mxu0 0.0
        %2716 = vmatpush1.msra.mxu0 0.0
        %2717 = vmatprep.subr.mxu0 0.0
        %2718 = vmatpush1.msra.mxu0 0.0
        %2719 = vmatprep.subr.mxu0 0.0
        %2720 = vmatpush1.msra.mxu0 0.0
        %2721 = vmatprep.subr.mxu0 0.0
        %2722 = vmatpush1.msra.mxu0 0.0
        %2723 = vmatprep.subr.mxu0 0.0
        %2724 = vmatpush1.msra.mxu0 0.0
        %2725 = vmatprep.subr.mxu0 0.0
        %2726 = vmatpush1.msra.mxu0 0.0
        %2727 = vmatprep.subr.mxu0 0.0
        %2728 = vmatpush1.msra.mxu0 0.0
        %2729 = vmatprep.subr.mxu0 0.0
        %2730 = vmatpush1.msra.mxu0 0.0
        %2731 = vmatprep.subr.mxu0 0.0
        %2732 = vmatpush1.msra.mxu0 0.0
        %2733 = vmatprep.subr.mxu0 0.0
        %2734 = vmatpush1.msra.mxu0 0.0
        %2735 = vmatprep.subr.mxu0 0.0
        %2736 = vmatpush1.msra.mxu0 0.0
        %2737 = vmatprep.subr.mxu0 0.0
        %2738 = vmatpush1.msra.mxu0 0.0
        %2739 = vmatprep.subr.mxu0 0.0
        %2740 = vmatpush1.msra.mxu0 0.0
        %2741 = vmatprep.subr.mxu0 0.0
        %2742 = vmatpush1.msra.mxu0 0.0
        %2743 = vmatprep.subr.mxu0 0.0
        %2744 = vmatpush1.msra.mxu0 0.0
        %2745 = vmatprep.subr.mxu0 0.0
        %2746 = vmatpush1.msra.mxu0 0.0
        %2747 = vmatprep.subr.mxu0 0.0
        %2748 = vmatpush1.msra.mxu0 0.0
        %2749 = vmatprep.subr.mxu0 0.0
        %2750 = vmatpush1.msra.mxu0 0.0
        %2751 = vmatprep.subr.mxu0 0.0
        %2752 = vmatpush1.msra.mxu0 0.0
        %2753 = vmatprep.subr.mxu0 0.0
        %2754 = vmatpush1.msra.mxu0 0.0
        %2755 = vmatprep.subr.mxu0 0.0
        %2756 = vmatpush1.msra.mxu0 0.0
        %2757 = vmatprep.subr.mxu0 0.0
        %2758 = vmatpush1.msra.mxu0 0.0
        %2759 = vmatprep.subr.mxu0 0.0
        %2760 = vmatpush1.msra.mxu0 0.0
        %2761 = vmatprep.mubr.f32.mxu0 0.0
        %2762 = vmatmul.mubr.f32.gmra.mrb[0].mxu0 %v2695
        %v2763 = vpop.f32.mrb[0].mxu0
        %v2764 = vadd.f32 %v2692, %v2763
        %v2765 = vpop.f32.mrb[0].mxu0
        %2766 = vdwg.mxu0
        %v2767 = vmax.f32 %v2764, 0.0
        %v2769 = vlaneseq
        %v2770 = vshrl.u32 %v2769, 7
        %v2771 = vsub.s32 0, %v2770
        %v2772 = vrot.slane %v1601, %v2771
        %vm2774 = vcmask 523264
        %v2776 = vsel %vm2774, %v2767, 0
        %2778 = vmatprep.subr.mxu0 0.0
        %2779 = vmatpush1.msra.mxu0 %v1593
        %2780 = vmatprep.subr.mxu0 0.0
        %2781 = vmatpush1.msra.mxu0 %v1594
        %2782 = vmatprep.subr.mxu0 0.0
        %2783 = vmatpush1.msra.mxu0 %v1595
        %2784 = vmatprep.subr.mxu0 0.0
        %2785 = vmatpush1.msra.mxu0 %v1596
        %2786 = vmatprep.subr.mxu0 0.0
        %2787 = vmatpush1.msra.mxu0 %v1597
        %2788 = vmatprep.subr.mxu0 0.0
        %2789 = vmatpush1.msra.mxu0 %v1598
        %2790 = vmatprep.subr.mxu0 0.0
        %2791 = vmatpush1.msra.mxu0 %v1599
        %2792 = vmatprep.subr.mxu0 0.0
        %2793 = vmatpush1.msra.mxu0 %v1600
        %2794 = vmatprep.subr.mxu0 0.0
        %2795 = vmatpush1.msra.mxu0 0.0
        %2796 = vmatprep.subr.mxu0 0.0
        %2797 = vmatpush1.msra.mxu0 0.0
        %2798 = vmatprep.subr.mxu0 0.0
        %2799 = vmatpush1.msra.mxu0 0.0
        %2800 = vmatprep.subr.mxu0 0.0
        %2801 = vmatpush1.msra.mxu0 0.0
        %2802 = vmatprep.subr.mxu0 0.0
        %2803 = vmatpush1.msra.mxu0 0.0
        %2804 = vmatprep.subr.mxu0 0.0
        %2805 = vmatpush1.msra.mxu0 0.0
        %2806 = vmatprep.subr.mxu0 0.0
        %2807 = vmatpush1.msra.mxu0 0.0
        %2808 = vmatprep.subr.mxu0 0.0
        %2809 = vmatpush1.msra.mxu0 0.0
        %2810 = vmatprep.subr.mxu0 0.0
        %2811 = vmatpush1.msra.mxu0 0.0
        %2812 = vmatprep.subr.mxu0 0.0
        %2813 = vmatpush1.msra.mxu0 0.0
        %2814 = vmatprep.subr.mxu0 0.0
        %2815 = vmatpush1.msra.mxu0 0.0
        %2816 = vmatprep.subr.mxu0 0.0
        %2817 = vmatpush1.msra.mxu0 0.0
        %2818 = vmatprep.subr.mxu0 0.0
        %2819 = vmatpush1.msra.mxu0 0.0
        %2820 = vmatprep.subr.mxu0 0.0
        %2821 = vmatpush1.msra.mxu0 0.0
        %2822 = vmatprep.subr.mxu0 0.0
        %2823 = vmatpush1.msra.mxu0 0.0
        %2824 = vmatprep.subr.mxu0 0.0
        %2825 = vmatpush1.msra.mxu0 0.0
        %2826 = vmatprep.subr.mxu0 0.0
        %2827 = vmatpush1.msra.mxu0 0.0
        %2828 = vmatprep.subr.mxu0 0.0
        %2829 = vmatpush1.msra.mxu0 0.0
        %2830 = vmatprep.subr.mxu0 0.0
        %2831 = vmatpush1.msra.mxu0 0.0
        %2832 = vmatprep.subr.mxu0 0.0
        %2833 = vmatpush1.msra.mxu0 0.0
        %2834 = vmatprep.subr.mxu0 0.0
        %2835 = vmatpush1.msra.mxu0 0.0
        %2836 = vmatprep.subr.mxu0 0.0
        %2837 = vmatpush1.msra.mxu0 0.0
        %2838 = vmatprep.subr.mxu0 0.0
        %2839 = vmatpush1.msra.mxu0 0.0
        %2840 = vmatprep.subr.mxu0 0.0
        %2841 = vmatpush1.msra.mxu0 0.0
        %2842 = vmatprep.mubr.f32.mxu0 0.0
        %2843 = vmatmul.mubr.f32.gmra.mrb[0].mxu0 %v2776
        %v2844 = vpop.f32.mrb[0].mxu0
        %v2845 = vadd.f32 %v2772, %v2844
        %v2846 = vpop.f32.mrb[0].mxu0
        %2847 = vdwg.mxu0
        %v2848 = vadd.f32 %v2687, %v2845
        %v2849 = vsel %vm2659, %v2848, 0.0
        %2850 = vadd.xlane.f32.xlu0 %v2849
        %v2851 = vpop.xlane.xlu0 %2850
        %v2852 = vmul.f32 %v2851, %v2663
        %v2853 = vsub.f32 %v2848, %v2852
        %v2854 = vmul.f32 %v2853, %v2853
        %v2855 = vsel %vm2659, %v2854, 0.0
        %2856 = vadd.xlane.f32.xlu0 %v2855
        %v2857 = vpop.xlane.xlu0 %2856
        %v2858 = vmul.f32 %v2857, %v2663
        %v2859 = vadd.f32 %v2858, 1e-05
        %v2860 = vrsqrt.pop %v2859
        %v2861 = vmul.f32 %v2853, %v2860
        %v2863 = vlaneseq
        %v2864 = vshrl.u32 %v2863, 7
        %v2865 = vsub.s32 0, %v2864
        %v2866 = vrot.slane %v1604, %v2865
        %v2868 = vmul.f32 %v2861, %v2866
        %v2870 = vlaneseq
        %v2871 = vshrl.u32 %v2870, 7
        %v2872 = vsub.s32 0, %v2871
        %v2873 = vrot.slane %v1605, %v2872
        %v2875 = vadd.f32 %v2868, %v2873
        %v2876 = vld [vmem:[%s39] sm:$0x1]
        %v2877 = vld [vmem:[%s41] sm:$0x1]
        %v2878 = vsel %vm2659, %v2875, 0.0
        %2879 = vadd.xlane.f32.xlu0 %v2878
        %v2880 = vpop.xlane.xlu0 %2879
        %v2881 = vmul.f32 %v2880, %v2663
        %v2882 = vsub.f32 %v2875, %v2881
        %v2883 = vmul.f32 %v2882, %v2882
        %v2884 = vsel %vm2659, %v2883, 0.0
        %2885 = vadd.xlane.f32.xlu0 %v2884
        %v2886 = vpop.xlane.xlu0 %2885
        %v2887 = vmul.f32 %v2886, %v2663
        %v2888 = vadd.f32 %v2887, 1e-05
        %v2889 = vrsqrt.pop %v2888
        %v2890 = vmul.f32 %v2882, %v2889
        %v2892 = vlaneseq
        %v2893 = vshrl.u32 %v2892, 7
        %v2894 = vsub.s32 0, %v2893
        %v2895 = vrot.slane %v2876, %v2894
        %v2897 = vmul.f32 %v2890, %v2895
        %v2899 = vlaneseq
        %v2900 = vshrl.u32 %v2899, 7
        %v2901 = vsub.s32 0, %v2900
        %v2902 = vrot.slane %v2877, %v2901
        %v2904 = vadd.f32 %v2897, %v2902
        %v2905 = vld [vmem:[%s43] sm:$0xff]
        %v2906 = vld [vmem:[%s43 + $0x8] sm:$0xf]
        %v2907 = vld [vmem:[%s45] sm:$0xf]
        %v2908 = vld [vmem:[%s1484] sm:$0xff]
        %v2909 = vld [vmem:[%s1484 + $0x8] sm:$0xff]
        %v2910 = vld [vmem:[%s1489] sm:$0xff]
        %v2911 = vld [vmem:[%s1489 + $0x8] sm:$0xff]
        %v2913 = vsel %vm1779, %v2910, 0
        %v2916 = vsel %vm1779, %v2911, 0
        %v2919 = vsel %vm1783, %v2907, 0
        %2921 = vmatprep.subr.mxu0 0.0
        %2922 = vmatpush1.msra.mxu0 %v2919
        %2923 = vmatprep.subr.mxu0 0.0
        %2924 = vmatpush1.msra.mxu0 0.0
        %2925 = vmatprep.subr.mxu0 0.0
        %2926 = vmatpush1.msra.mxu0 0.0
        %2927 = vmatprep.subr.mxu0 0.0
        %2928 = vmatpush1.msra.mxu0 0.0
        %2929 = vmatprep.subr.mxu0 0.0
        %2930 = vmatpush1.msra.mxu0 0.0
        %2931 = vmatprep.subr.mxu0 0.0
        %2932 = vmatpush1.msra.mxu0 0.0
        %2933 = vmatprep.subr.mxu0 0.0
        %2934 = vmatpush1.msra.mxu0 0.0
        %2935 = vmatprep.subr.mxu0 0.0
        %2936 = vmatpush1.msra.mxu0 0.0
        %2937 = vmatprep.subr.mxu0 0.0
        %2938 = vmatpush1.msra.mxu0 0.0
        %2939 = vmatprep.subr.mxu0 0.0
        %2940 = vmatpush1.msra.mxu0 0.0
        %2941 = vmatprep.subr.mxu0 0.0
        %2942 = vmatpush1.msra.mxu0 0.0
        %2943 = vmatprep.subr.mxu0 0.0
        %2944 = vmatpush1.msra.mxu0 0.0
        %2945 = vmatprep.subr.mxu0 0.0
        %2946 = vmatpush1.msra.mxu0 0.0
        %2947 = vmatprep.subr.mxu0 0.0
        %2948 = vmatpush1.msra.mxu0 0.0
        %2949 = vmatprep.subr.mxu0 0.0
        %2950 = vmatpush1.msra.mxu0 0.0
        %2951 = vmatprep.subr.mxu0 0.0
        %2952 = vmatpush1.msra.mxu0 0.0
        %2953 = vmatprep.subr.mxu0 0.0
        %2954 = vmatpush1.msra.mxu0 0.0
        %2955 = vmatprep.subr.mxu0 0.0
        %2956 = vmatpush1.msra.mxu0 0.0
        %2957 = vmatprep.subr.mxu0 0.0
        %2958 = vmatpush1.msra.mxu0 0.0
        %2959 = vmatprep.subr.mxu0 0.0
        %2960 = vmatpush1.msra.mxu0 0.0
        %2961 = vmatprep.subr.mxu0 0.0
        %2962 = vmatpush1.msra.mxu0 0.0
        %2963 = vmatprep.subr.mxu0 0.0
        %2964 = vmatpush1.msra.mxu0 0.0
        %2965 = vmatprep.subr.mxu0 0.0
        %2966 = vmatpush1.msra.mxu0 0.0
        %2967 = vmatprep.subr.mxu0 0.0
        %2968 = vmatpush1.msra.mxu0 0.0
        %2969 = vmatprep.subr.mxu0 0.0
        %2970 = vmatpush1.msra.mxu0 0.0
        %2971 = vmatprep.subr.mxu0 0.0
        %2972 = vmatpush1.msra.mxu0 0.0
        %2973 = vmatprep.subr.mxu0 0.0
        %2974 = vmatpush1.msra.mxu0 0.0
        %2975 = vmatprep.subr.mxu0 0.0
        %2976 = vmatpush1.msra.mxu0 0.0
        %2977 = vmatprep.subr.mxu0 0.0
        %2978 = vmatpush1.msra.mxu0 0.0
        %2979 = vmatprep.subr.mxu0 0.0
        %2980 = vmatpush1.msra.mxu0 0.0
        %2981 = vmatprep.subr.mxu0 0.0
        %2982 = vmatpush1.msra.mxu0 0.0
        %2983 = vmatprep.subr.mxu0 0.0
        %2984 = vmatpush1.msra.mxu0 0.0
        %2985 = vmatprep.mubr.f32.mxu0 0.0
        %2986 = vmatmul.mubr.f32.gmra.mrb[0].mxu0 %v2913
        %v2987 = vpop.f32.mrb[0].mxu0
        %v2988 = vadd.f32 0.0, %v2987
        %v2989 = vpop.f32.mrb[0].mxu0
        %2990 = vmatprep.mubr.f32.mxu0 0.0
        %2991 = vmatmul.mubr.f32.gmra.mrb[0].mxu0 %v2916
        %v2992 = vpop.f32.mrb[0].mxu0
        %v2993 = vadd.f32 0.0, %v2992
        %v2994 = vpop.f32.mrb[0].mxu0
        %2995 = vdwg.mxu0
        %vm2996 = vcmask 97280
        %v2998 = vsel %vm2996, %v2908, 0
        %v3001 = vsel %vm2996, %v2909, 0
        %v3004 = vsel %vm1783, %v2906, 0
        %3006 = vmatprep.subr.mxu0 0.0
        %3007 = vmatpush1.msra.mxu0 %v2905
        %3008 = vmatprep.subr.mxu0 0.0
        %3009 = vmatpush1.msra.mxu0 %v3004
        %3010 = vmatprep.subr.mxu0 0.0
        %3011 = vmatpush1.msra.mxu0 0.0
        %3012 = vmatprep.subr.mxu0 0.0
        %3013 = vmatpush1.msra.mxu0 0.0
        %3014 = vmatprep.subr.mxu0 0.0
        %3015 = vmatpush1.msra.mxu0 0.0
        %3016 = vmatprep.subr.mxu0 0.0
        %3017 = vmatpush1.msra.mxu0 0.0
        %3018 = vmatprep.subr.mxu0 0.0
        %3019 = vmatpush1.msra.mxu0 0.0
        %3020 = vmatprep.subr.mxu0 0.0
        %3021 = vmatpush1.msra.mxu0 0.0
        %3022 = vmatprep.subr.mxu0 0.0
        %3023 = vmatpush1.msra.mxu0 0.0
        %3024 = vmatprep.subr.mxu0 0.0
        %3025 = vmatpush1.msra.mxu0 0.0
        %3026 = vmatprep.subr.mxu0 0.0
        %3027 = vmatpush1.msra.mxu0 0.0
        %3028 = vmatprep.subr.mxu0 0.0
        %3029 = vmatpush1.msra.mxu0 0.0
        %3030 = vmatprep.subr.mxu0 0.0
        %3031 = vmatpush1.msra.mxu0 0.0
        %3032 = vmatprep.subr.mxu0 0.0
        %3033 = vmatpush1.msra.mxu0 0.0
        %3034 = vmatprep.subr.mxu0 0.0
        %3035 = vmatpush1.msra.mxu0 0.0
        %3036 = vmatprep.subr.mxu0 0.0
        %3037 = vmatpush1.msra.mxu0 0.0
        %3038 = vmatprep.subr.mxu0 0.0
        %3039 = vmatpush1.msra.mxu0 0.0
        %3040 = vmatprep.subr.mxu0 0.0
        %3041 = vmatpush1.msra.mxu0 0.0
        %3042 = vmatprep.subr.mxu0 0.0
        %3043 = vmatpush1.msra.mxu0 0.0
        %3044 = vmatprep.subr.mxu0 0.0
        %3045 = vmatpush1.msra.mxu0 0.0
        %3046 = vmatprep.subr.mxu0 0.0
        %3047 = vmatpush1.msra.mxu0 0.0
        %3048 = vmatprep.subr.mxu0 0.0
        %3049 = vmatpush1.msra.mxu0 0.0
        %3050 = vmatprep.subr.mxu0 0.0
        %3051 = vmatpush1.msra.mxu0 0.0
        %3052 = vmatprep.subr.mxu0 0.0
        %3053 = vmatpush1.msra.mxu0 0.0
        %3054 = vmatprep.subr.mxu0 0.0
        %3055 = vmatpush1.msra.mxu0 0.0
        %3056 = vmatprep.subr.mxu0 0.0
        %3057 = vmatpush1.msra.mxu0 0.0
        %3058 = vmatprep.subr.mxu0 0.0
        %3059 = vmatpush1.msra.mxu0 0.0
        %3060 = vmatprep.subr.mxu0 0.0
        %3061 = vmatpush1.msra.mxu0 0.0
        %3062 = vmatprep.subr.mxu0 0.0
        %3063 = vmatpush1.msra.mxu0 0.0
        %3064 = vmatprep.subr.mxu0 0.0
        %3065 = vmatpush1.msra.mxu0 0.0
        %3066 = vmatprep.subr.mxu0 0.0
        %3067 = vmatpush1.msra.mxu0 0.0
        %3068 = vmatprep.subr.mxu0 0.0
        %3069 = vmatpush1.msra.mxu0 0.0
        %3070 = vmatprep.mubr.f32.mxu0 0.0
        %3071 = vmatmul.mubr.f32.gmra.mrb[0].mxu0 %v2998
        %v3072 = vpop.f32.mrb[0].mxu0
        %v3073 = vadd.f32 %v2988, %v3072
        %v3074 = vpop.f32.mrb[0].mxu0
        %3075 = vmatprep.mubr.f32.mxu0 0.0
        %3076 = vmatmul.mubr.f32.gmra.mrb[0].mxu0 %v3001
        %v3077 = vpop.f32.mrb[0].mxu0
        %v3078 = vadd.f32 %v2993, %v3077
        %v3079 = vpop.f32.mrb[0].mxu0
        %3080 = vdwg.mxu0
        %v3081 = vld [vmem:[%s9] sm:$0xff]
        %v3082 = vld [vmem:[%s9 + $0x8] sm:$0xff]
        %v3083 = vadd.f32 %v3073, %v3081
        %v3084 = vadd.f32 %v3078, %v3082
        %v3085 = vld [vmem:[%s47] sm:$0xff]
        %v3086 = vld [vmem:[%s47 + $0x8] sm:$0xff]
        %v3087 = vld [vmem:[%s47 + $0x10] sm:$0xff]
        %v3088 = vld [vmem:[%s47 + $0x18] sm:$0xff]
        %v3089 = vld [vmem:[%s49] sm:$0x1]
        %v3090 = vld [vmem:[%s51] sm:$0xff]
        %v3091 = vld [vmem:[%s51 + $0x8] sm:$0xff]
        %v3092 = vld [vmem:[%s51 + $0x10] sm:$0xff]
        %v3093 = vld [vmem:[%s51 + $0x18] sm:$0xff]
        %v3094 = vld [vmem:[%s53] sm:$0x1]
        %v3095 = vld [vmem:[%s55] sm:$0xff]
        %v3096 = vld [vmem:[%s55 + $0x8] sm:$0xff]
        %v3097 = vld [vmem:[%s55 + $0x10] sm:$0xff]
        %v3098 = vld [vmem:[%s55 + $0x18] sm:$0xff]
        %v3099 = vld [vmem:[%s57] sm:$0x1]
        %v3100 = vld [vmem:[%s59] sm:$0xff]
        %v3101 = vld [vmem:[%s59 + $0x8] sm:$0xff]
        %v3102 = vld [vmem:[%s59 + $0x10] sm:$0xff]
        %v3103 = vld [vmem:[%s59 + $0x18] sm:$0xff]
        %v3104 = vld [vmem:[%s61] sm:$0x1]
        %v3105 = vld [vmem:[%s63] sm:$0xff]
        %v3106 = vld [vmem:[%s63 + $0x8] sm:$0xff]
        %v3107 = vld [vmem:[%s63 + $0x10] sm:$0xff]
        %v3108 = vld [vmem:[%s63 + $0x18] sm:$0xff]
        %v3109 = vld [vmem:[%s65] sm:$0x1]
        %v3110 = vld [vmem:[%s67] sm:$0xff]
        %v3111 = vld [vmem:[%s67 + $0x8] sm:$0xff]
        %v3112 = vld [vmem:[%s67 + $0x10] sm:$0xff]
        %v3113 = vld [vmem:[%s67 + $0x18] sm:$0xff]
        %v3114 = vld [vmem:[%s69] sm:$0x1]
        %v3115 = vld [vmem:[%s71] sm:$0xff]
        %v3116 = vld [vmem:[%s71 + $0x8] sm:$0xff]
        %v3117 = vld [vmem:[%s71 + $0x10] sm:$0xff]
        %v3118 = vld [vmem:[%s71 + $0x18] sm:$0xff]
        %v3119 = vld [vmem:[%s71 + $0x20] sm:$0xff]
        %v3120 = vld [vmem:[%s71 + $0x28] sm:$0xff]
        %v3121 = vld [vmem:[%s71 + $0x30] sm:$0xff]
        %v3122 = vld [vmem:[%s71 + $0x38] sm:$0xff]
        %v3123 = vld [vmem:[%s73] sm:$0x1]
        %v3124 = vld [vmem:[%s75] sm:$0x1]
        %v3125 = vld [vmem:[%s77] sm:$0x1]
        %v3126 = vld [vmem:[%s79] sm:$0x1]
        %v3127 = vld [vmem:[%s81] sm:$0x1]
        %v3128 = vld [vmem:[%s83] sm:$0x1]
        %v3129 = vld [vmem:[%s85] sm:$0x1]
        %v3131 = vlaneseq
        %v3132 = vshrl.u32 %v3131, 7
        %v3133 = vsub.s32 0, %v3132
        %v3134 = vrot.slane %v3089, %v3133
        %v3137 = vsel %vm1612, %v3083, 0
        %v3140 = vsel %vm1612, %v3084, 0
        %3142 = vmatprep.subr.mxu0 0.0
        %3143 = vmatpush1.msra.mxu0 %v3085
        %3144 = vmatprep.subr.mxu0 0.0
        %3145 = vmatpush1.msra.mxu0 %v3086
        %3146 = vmatprep.subr.mxu0 0.0
        %3147 = vmatpush1.msra.mxu0 %v3087
        %3148 = vmatprep.subr.mxu0 0.0
        %3149 = vmatpush1.msra.mxu0 %v3088
        %3150 = vmatprep.subr.mxu0 0.0
        %3151 = vmatpush1.msra.mxu0 0.0
        %3152 = vmatprep.subr.mxu0 0.0
        %3153 = vmatpush1.msra.mxu0 0.0
        %3154 = vmatprep.subr.mxu0 0.0
        %3155 = vmatpush1.msra.mxu0 0.0
        %3156 = vmatprep.subr.mxu0 0.0
        %3157 = vmatpush1.msra.mxu0 0.0
        %3158 = vmatprep.subr.mxu0 0.0
        %3159 = vmatpush1.msra.mxu0 0.0
        %3160 = vmatprep.subr.mxu0 0.0
        %3161 = vmatpush1.msra.mxu0 0.0
        %3162 = vmatprep.subr.mxu0 0.0
        %3163 = vmatpush1.msra.mxu0 0.0
        %3164 = vmatprep.subr.mxu0 0.0
        %3165 = vmatpush1.msra.mxu0 0.0
        %3166 = vmatprep.subr.mxu0 0.0
        %3167 = vmatpush1.msra.mxu0 0.0
        %3168 = vmatprep.subr.mxu0 0.0
        %3169 = vmatpush1.msra.mxu0 0.0
        %3170 = vmatprep.subr.mxu0 0.0
        %3171 = vmatpush1.msra.mxu0 0.0
        %3172 = vmatprep.subr.mxu0 0.0
        %3173 = vmatpush1.msra.mxu0 0.0
        %3174 = vmatprep.subr.mxu0 0.0
        %3175 = vmatpush1.msra.mxu0 0.0
        %3176 = vmatprep.subr.mxu0 0.0
        %3177 = vmatpush1.msra.mxu0 0.0
        %3178 = vmatprep.subr.mxu0 0.0
        %3179 = vmatpush1.msra.mxu0 0.0
        %3180 = vmatprep.subr.mxu0 0.0
        %3181 = vmatpush1.msra.mxu0 0.0
        %3182 = vmatprep.subr.mxu0 0.0
        %3183 = vmatpush1.msra.mxu0 0.0
        %3184 = vmatprep.subr.mxu0 0.0
        %3185 = vmatpush1.msra.mxu0 0.0
        %3186 = vmatprep.subr.mxu0 0.0
        %3187 = vmatpush1.msra.mxu0 0.0
        %3188 = vmatprep.subr.mxu0 0.0
        %3189 = vmatpush1.msra.mxu0 0.0
        %3190 = vmatprep.subr.mxu0 0.0
        %3191 = vmatpush1.msra.mxu0 0.0
        %3192 = vmatprep.subr.mxu0 0.0
        %3193 = vmatpush1.msra.mxu0 0.0
        %3194 = vmatprep.subr.mxu0 0.0
        %3195 = vmatpush1.msra.mxu0 0.0
        %3196 = vmatprep.subr.mxu0 0.0
        %3197 = vmatpush1.msra.mxu0 0.0
        %3198 = vmatprep.subr.mxu0 0.0
        %3199 = vmatpush1.msra.mxu0 0.0
        %3200 = vmatprep.subr.mxu0 0.0
        %3201 = vmatpush1.msra.mxu0 0.0
        %3202 = vmatprep.subr.mxu0 0.0
        %3203 = vmatpush1.msra.mxu0 0.0
        %3204 = vmatprep.subr.mxu0 0.0
        %3205 = vmatpush1.msra.mxu0 0.0
        %3206 = vmatprep.mubr.f32.mxu0 0.0
        %3207 = vmatmul.mubr.f32.gmra.mrb[0].mxu0 %v3137
        %v3208 = vpop.f32.mrb[0].mxu0
        %v3209 = vadd.f32 %v3134, %v3208
        %v3210 = vpop.f32.mrb[0].mxu0
        %3211 = vmatprep.mubr.f32.mxu0 0.0
        %3212 = vmatmul.mubr.f32.gmra.mrb[0].mxu0 %v3140
        %v3213 = vpop.f32.mrb[0].mxu0
        %v3214 = vadd.f32 %v3134, %v3213
        %v3215 = vpop.f32.mrb[0].mxu0
        %3216 = vdwg.mxu0
        %v3217 = vlaneseq
        %v3218 = vshrl.u32 %v3217, 7
        %v3219 = vadd.s32 %v3218, 8
        %v3220 = vlaneseq
        %v3221 = vand.u32 %v3220, 127
        %vm3222 = vcmp.gt.s32.totalorder %v3221, %v3218
        %vm3223 = vcmp.gt.s32.totalorder %v3221, %v3219
        %v3224 = vsel %vm3222, -inf, 0.0
        %v3225 = vsel %vm3223, -inf, 0.0
        %3228 = vrot.lane.b32.xlu0 %v3209, 96
        %v3229 = vpop.permute.xlu0 %3228
        %3230 = vrot.lane.b32.xlu0 %v3214, 96
        %v3231 = vpop.permute.xlu0 %3230
        %v3232 = vsel %vm1689, %v3209, 0
        %v3234 = vsel %vm1689, %v3214, 0
        %v3236 = vsel %vm1689, %v3229, 0
        %v3238 = vsel %vm1689, %v3231, 0
        %3240 = vmatprep.subr.mxu0 0.0
        %3241 = vmatpush1.xpose.msra.mxu0 %v3236
        %3242 = vmatprep.subr.mxu0 0.0
        %3243 = vmatpush1.xpose.msra.mxu0 %v3238
        %3244 = vmatprep.subr.mxu0 0.0
        %3245 = vmatpush1.xpose.msra.mxu0 0.0
        %3246 = vmatprep.subr.mxu0 0.0
        %3247 = vmatpush1.xpose.msra.mxu0 0.0
        %3248 = vmatprep.subr.mxu0 0.0
        %3249 = vmatpush1.xpose.msra.mxu0 0.0
        %3250 = vmatprep.subr.mxu0 0.0
        %3251 = vmatpush1.xpose.msra.mxu0 0.0
        %3252 = vmatprep.subr.mxu0 0.0
        %3253 = vmatpush1.xpose.msra.mxu0 0.0
        %3254 = vmatprep.subr.mxu0 0.0
        %3255 = vmatpush1.xpose.msra.mxu0 0.0
        %3256 = vmatprep.subr.mxu0 0.0
        %3257 = vmatpush1.xpose.msra.mxu0 0.0
        %3258 = vmatprep.subr.mxu0 0.0
        %3259 = vmatpush1.xpose.msra.mxu0 0.0
        %3260 = vmatprep.subr.mxu0 0.0
        %3261 = vmatpush1.xpose.msra.mxu0 0.0
        %3262 = vmatprep.subr.mxu0 0.0
        %3263 = vmatpush1.xpose.msra.mxu0 0.0
        %3264 = vmatprep.subr.mxu0 0.0
        %3265 = vmatpush1.xpose.msra.mxu0 0.0
        %3266 = vmatprep.subr.mxu0 0.0
        %3267 = vmatpush1.xpose.msra.mxu0 0.0
        %3268 = vmatprep.subr.mxu0 0.0
        %3269 = vmatpush1.xpose.msra.mxu0 0.0
        %3270 = vmatprep.subr.mxu0 0.0
        %3271 = vmatpush1.xpose.msra.mxu0 0.0
        %3272 = vmatprep.subr.mxu0 0.0
        %3273 = vmatpush1.xpose.msra.mxu0 0.0
        %3274 = vmatprep.subr.mxu0 0.0
        %3275 = vmatpush1.xpose.msra.mxu0 0.0
        %3276 = vmatprep.subr.mxu0 0.0
        %3277 = vmatpush1.xpose.msra.mxu0 0.0
        %3278 = vmatprep.subr.mxu0 0.0
        %3279 = vmatpush1.xpose.msra.mxu0 0.0
        %3280 = vmatprep.subr.mxu0 0.0
        %3281 = vmatpush1.xpose.msra.mxu0 0.0
        %3282 = vmatprep.subr.mxu0 0.0
        %3283 = vmatpush1.xpose.msra.mxu0 0.0
        %3284 = vmatprep.subr.mxu0 0.0
        %3285 = vmatpush1.xpose.msra.mxu0 0.0
        %3286 = vmatprep.subr.mxu0 0.0
        %3287 = vmatpush1.xpose.msra.mxu0 0.0
        %3288 = vmatprep.subr.mxu0 0.0
        %3289 = vmatpush1.xpose.msra.mxu0 0.0
        %3290 = vmatprep.subr.mxu0 0.0
        %3291 = vmatpush1.xpose.msra.mxu0 0.0
        %3292 = vmatprep.subr.mxu0 0.0
        %3293 = vmatpush1.xpose.msra.mxu0 0.0
        %3294 = vmatprep.subr.mxu0 0.0
        %3295 = vmatpush1.xpose.msra.mxu0 0.0
        %3296 = vmatprep.subr.mxu0 0.0
        %3297 = vmatpush1.xpose.msra.mxu0 0.0
        %3298 = vmatprep.subr.mxu0 0.0
        %3299 = vmatpush1.xpose.msra.mxu0 0.0
        %3300 = vmatprep.subr.mxu0 0.0
        %3301 = vmatpush1.xpose.msra.mxu0 0.0
        %3302 = vmatprep.subr.mxu0 0.0
        %3303 = vmatpush1.xpose.msra.mxu0 0.0
        %3304 = vmatprep.mubr.f32.mxu0 0.0
        %3305 = vmatmul.mubr.f32.gmra.mrb[0].mxu0 %v3232
        %v3306 = vpop.f32.mrb[0].mxu0
        %v3307 = vadd.f32 0.0, %v3306
        %v3308 = vpop.f32.mrb[0].mxu0
        %3309 = vmatprep.mubr.f32.mxu0 0.0
        %3310 = vmatmul.mubr.f32.gmra.mrb[0].mxu0 %v3234
        %v3311 = vpop.f32.mrb[0].mxu0
        %v3312 = vadd.f32 0.0, %v3311
        %v3313 = vpop.f32.mrb[0].mxu0
        %3314 = vdwg.mxu0
        %v3315 = vmul.f32 %v3307, 0.35355338
        %v3316 = vmul.f32 %v3312, 0.35355338
        %v3317 = vadd.f32 %v3315, %v3224
        %v3318 = vadd.f32 %v3316, %v3225
        %v3319 = vsel %vm1504, %v3317, -inf
        %3320 = vmax.xlane.f32.xlu0 %v3319
        %v3321 = vpop.xlane.xlu0 %3320
        %v3322 = vsel %vm1504, %v3318, -inf
        %3323 = vmax.xlane.f32.xlu0 %v3322
        %v3324 = vpop.xlane.xlu0 %3323
        %v3325 = vsub.f32 %v3317, %v3321
        %v3326 = vsub.f32 %v3318, %v3324
        %v3327 = vmul.f32 %v3325, 1.442695
        %v3328 = vpow.pop %v3327
        %v3329 = vmul.f32 %v3326, 1.442695
        %v3330 = vpow.pop %v3329
        %v3331 = vsel %vm1504, %v3328, 0.0
        %3332 = vadd.xlane.f32.xlu0 %v3331
        %v3333 = vpop.xlane.xlu0 %3332
        %v3334 = vsel %vm1504, %v3330, 0.0
        %3335 = vadd.xlane.f32.xlu0 %v3334
        %v3336 = vpop.xlane.xlu0 %3335
        %v3337 = vrcp.pop %v3333
        %v3338 = vrcp.pop %v3336
        %v3339 = vmul.f32 %v3328, %v3337
        %v3340 = vmul.f32 %v3330, %v3338
        %3341 = vrot.lane.b32.xlu0 %v3209, 64
        %v3342 = vpop.permute.xlu0 %3341
        %3343 = vrot.lane.b32.xlu0 %v3214, 64
        %v3344 = vpop.permute.xlu0 %3343
        %v3348 = vsel %vm1504, %v3339, 0
        %v3351 = vsel %vm1504, %v3340, 0
        %3353 = vmatprep.subr.mxu0 0.0
        %3354 = vmatpush1.msra.mxu0 %v3342
        %3355 = vmatprep.subr.mxu0 0.0
        %3356 = vmatpush1.msra.mxu0 %v3344
        %3357 = vmatprep.subr.mxu0 0.0
        %3358 = vmatpush1.msra.mxu0 0.0
        %3359 = vmatprep.subr.mxu0 0.0
        %3360 = vmatpush1.msra.mxu0 0.0
        %3361 = vmatprep.subr.mxu0 0.0
        %3362 = vmatpush1.msra.mxu0 0.0
        %3363 = vmatprep.subr.mxu0 0.0
        %3364 = vmatpush1.msra.mxu0 0.0
        %3365 = vmatprep.subr.mxu0 0.0
        %3366 = vmatpush1.msra.mxu0 0.0
        %3367 = vmatprep.subr.mxu0 0.0
        %3368 = vmatpush1.msra.mxu0 0.0
        %3369 = vmatprep.subr.mxu0 0.0
        %3370 = vmatpush1.msra.mxu0 0.0
        %3371 = vmatprep.subr.mxu0 0.0
        %3372 = vmatpush1.msra.mxu0 0.0
        %3373 = vmatprep.subr.mxu0 0.0
        %3374 = vmatpush1.msra.mxu0 0.0
        %3375 = vmatprep.subr.mxu0 0.0
        %3376 = vmatpush1.msra.mxu0 0.0
        %3377 = vmatprep.subr.mxu0 0.0
        %3378 = vmatpush1.msra.mxu0 0.0
        %3379 = vmatprep.subr.mxu0 0.0
        %3380 = vmatpush1.msra.mxu0 0.0
        %3381 = vmatprep.subr.mxu0 0.0
        %3382 = vmatpush1.msra.mxu0 0.0
        %3383 = vmatprep.subr.mxu0 0.0
        %3384 = vmatpush1.msra.mxu0 0.0
        %3385 = vmatprep.subr.mxu0 0.0
        %3386 = vmatpush1.msra.mxu0 0.0
        %3387 = vmatprep.subr.mxu0 0.0
        %3388 = vmatpush1.msra.mxu0 0.0
        %3389 = vmatprep.subr.mxu0 0.0
        %3390 = vmatpush1.msra.mxu0 0.0
        %3391 = vmatprep.subr.mxu0 0.0
        %3392 = vmatpush1.msra.mxu0 0.0
        %3393 = vmatprep.subr.mxu0 0.0
        %3394 = vmatpush1.msra.mxu0 0.0
        %3395 = vmatprep.subr.mxu0 0.0
        %3396 = vmatpush1.msra.mxu0 0.0
        %3397 = vmatprep.subr.mxu0 0.0
        %3398 = vmatpush1.msra.mxu0 0.0
        %3399 = vmatprep.subr.mxu0 0.0
        %3400 = vmatpush1.msra.mxu0 0.0
        %3401 = vmatprep.subr.mxu0 0.0
        %3402 = vmatpush1.msra.mxu0 0.0
        %3403 = vmatprep.subr.mxu0 0.0
        %3404 = vmatpush1.msra.mxu0 0.0
        %3405 = vmatprep.subr.mxu0 0.0
        %3406 = vmatpush1.msra.mxu0 0.0
        %3407 = vmatprep.subr.mxu0 0.0
        %3408 = vmatpush1.msra.mxu0 0.0
        %3409 = vmatprep.subr.mxu0 0.0
        %3410 = vmatpush1.msra.mxu0 0.0
        %3411 = vmatprep.subr.mxu0 0.0
        %3412 = vmatpush1.msra.mxu0 0.0
        %3413 = vmatprep.subr.mxu0 0.0
        %3414 = vmatpush1.msra.mxu0 0.0
        %3415 = vmatprep.subr.mxu0 0.0
        %3416 = vmatpush1.msra.mxu0 0.0
        %3417 = vmatprep.mubr.f32.mxu0 0.0
        %3418 = vmatmul.mubr.f32.gmra.mrb[0].mxu0 %v3348
        %v3419 = vpop.f32.mrb[0].mxu0
        %v3420 = vadd.f32 0.0, %v3419
        %v3421 = vpop.f32.mrb[0].mxu0
        %3422 = vmatprep.mubr.f32.mxu0 0.0
        %3423 = vmatmul.mubr.f32.gmra.mrb[0].mxu0 %v3351
        %v3424 = vpop.f32.mrb[0].mxu0
        %v3425 = vadd.f32 0.0, %v3424
        %v3426 = vpop.f32.mrb[0].mxu0
        %3427 = vdwg.mxu0
        %3428 = vrot.lane.b32.xlu0 %v3209, 120
        %v3429 = vpop.permute.xlu0 %3428
        %3430 = vrot.lane.b32.xlu0 %v3214, 120
        %v3431 = vpop.permute.xlu0 %3430
        %3432 = vrot.lane.b32.xlu0 %v3209, 88
        %v3433 = vpop.permute.xlu0 %3432
        %3434 = vrot.lane.b32.xlu0 %v3214, 88
        %v3435 = vpop.permute.xlu0 %3434
        %v3436 = vsel %vm1689, %v3429, 0
        %v3438 = vsel %vm1689, %v3431, 0
        %v3440 = vsel %vm1689, %v3433, 0
        %v3442 = vsel %vm1689, %v3435, 0
        %3444 = vmatprep.subr.mxu0 0.0
        %3445 = vmatpush1.xpose.msra.mxu0 %v3440
        %3446 = vmatprep.subr.mxu0 0.0
        %3447 = vmatpush1.xpose.msra.mxu0 %v3442
        %3448 = vmatprep.subr.mxu0 0.0
        %3449 = vmatpush1.xpose.msra.mxu0 0.0
        %3450 = vmatprep.subr.mxu0 0.0
        %3451 = vmatpush1.xpose.msra.mxu0 0.0
        %3452 = vmatprep.subr.mxu0 0.0
        %3453 = vmatpush1.xpose.msra.mxu0 0.0
        %3454 = vmatprep.subr.mxu0 0.0
        %3455 = vmatpush1.xpose.msra.mxu0 0.0
        %3456 = vmatprep.subr.mxu0 0.0
        %3457 = vmatpush1.xpose.msra.mxu0 0.0
        %3458 = vmatprep.subr.mxu0 0.0
        %3459 = vmatpush1.xpose.msra.mxu0 0.0
        %3460 = vmatprep.subr.mxu0 0.0
        %3461 = vmatpush1.xpose.msra.mxu0 0.0
        %3462 = vmatprep.subr.mxu0 0.0
        %3463 = vmatpush1.xpose.msra.mxu0 0.0
        %3464 = vmatprep.subr.mxu0 0.0
        %3465 = vmatpush1.xpose.msra.mxu0 0.0
        %3466 = vmatprep.subr.mxu0 0.0
        %3467 = vmatpush1.xpose.msra.mxu0 0.0
        %3468 = vmatprep.subr.mxu0 0.0
        %3469 = vmatpush1.xpose.msra.mxu0 0.0
        %3470 = vmatprep.subr.mxu0 0.0
        %3471 = vmatpush1.xpose.msra.mxu0 0.0
        %3472 = vmatprep.subr.mxu0 0.0
        %3473 = vmatpush1.xpose.msra.mxu0 0.0
        %3474 = vmatprep.subr.mxu0 0.0
        %3475 = vmatpush1.xpose.msra.mxu0 0.0
        %3476 = vmatprep.subr.mxu0 0.0
        %3477 = vmatpush1.xpose.msra.mxu0 0.0
        %3478 = vmatprep.subr.mxu0 0.0
        %3479 = vmatpush1.xpose.msra.mxu0 0.0
        %3480 = vmatprep.subr.mxu0 0.0
        %3481 = vmatpush1.xpose.msra.mxu0 0.0
        %3482 = vmatprep.subr.mxu0 0.0
        %3483 = vmatpush1.xpose.msra.mxu0 0.0
        %3484 = vmatprep.subr.mxu0 0.0
        %3485 = vmatpush1.xpose.msra.mxu0 0.0
        %3486 = vmatprep.subr.mxu0 0.0
        %3487 = vmatpush1.xpose.msra.mxu0 0.0
        %3488 = vmatprep.subr.mxu0 0.0
        %3489 = vmatpush1.xpose.msra.mxu0 0.0
        %3490 = vmatprep.subr.mxu0 0.0
        %3491 = vmatpush1.xpose.msra.mxu0 0.0
        %3492 = vmatprep.subr.mxu0 0.0
        %3493 = vmatpush1.xpose.msra.mxu0 0.0
        %3494 = vmatprep.subr.mxu0 0.0
        %3495 = vmatpush1.xpose.msra.mxu0 0.0
        %3496 = vmatprep.subr.mxu0 0.0
        %3497 = vmatpush1.xpose.msra.mxu0 0.0
        %3498 = vmatprep.subr.mxu0 0.0
        %3499 = vmatpush1.xpose.msra.mxu0 0.0
        %3500 = vmatprep.subr.mxu0 0.0
        %3501 = vmatpush1.xpose.msra.mxu0 0.0
        %3502 = vmatprep.subr.mxu0 0.0
        %3503 = vmatpush1.xpose.msra.mxu0 0.0
        %3504 = vmatprep.subr.mxu0 0.0
        %3505 = vmatpush1.xpose.msra.mxu0 0.0
        %3506 = vmatprep.subr.mxu0 0.0
        %3507 = vmatpush1.xpose.msra.mxu0 0.0
        %3508 = vmatprep.mubr.f32.mxu0 0.0
        %3509 = vmatmul.mubr.f32.gmra.mrb[0].mxu0 %v3436
        %v3510 = vpop.f32.mrb[0].mxu0
        %v3511 = vadd.f32 0.0, %v3510
        %v3512 = vpop.f32.mrb[0].mxu0
        %3513 = vmatprep.mubr.f32.mxu0 0.0
        %3514 = vmatmul.mubr.f32.gmra.mrb[0].mxu0 %v3438
        %v3515 = vpop.f32.mrb[0].mxu0
        %v3516 = vadd.f32 0.0, %v3515
        %v3517 = vpop.f32.mrb[0].mxu0
        %3518 = vdwg.mxu0
        %v3519 = vmul.f32 %v3511, 0.35355338
        %v3520 = vmul.f32 %v3516, 0.35355338
        %v3521 = vadd.f32 %v3519, %v3224
        %v3522 = vadd.f32 %v3520, %v3225
        %v3523 = vsel %vm1504, %v3521, -inf
        %3524 = vmax.xlane.f32.xlu0 %v3523
        %v3525 = vpop.xlane.xlu0 %3524
        %v3526 = vsel %vm1504, %v3522, -inf
        %3527 = vmax.xlane.f32.xlu0 %v3526
        %v3528 = vpop.xlane.xlu0 %3527
        %v3529 = vsub.f32 %v3521, %v3525
        %v3530 = vsub.f32 %v3522, %v3528
        %v3531 = vmul.f32 %v3529, 1.442695
        %v3532 = vpow.pop %v3531
        %v3533 = vmul.f32 %v3530, 1.442695
        %v3534 = vpow.pop %v3533
        %v3535 = vsel %vm1504, %v3532, 0.0
        %3536 = vadd.xlane.f32.xlu0 %v3535
        %v3537 = vpop.xlane.xlu0 %3536
        %v3538 = vsel %vm1504, %v3534, 0.0
        %3539 = vadd.xlane.f32.xlu0 %v3538
        %v3540 = vpop.xlane.xlu0 %3539
        %v3541 = vrcp.pop %v3537
        %v3542 = vrcp.pop %v3540
        %v3543 = vmul.f32 %v3532, %v3541
        %v3544 = vmul.f32 %v3534, %v3542
        %3545 = vrot.lane.b32.xlu0 %v3209, 56
        %v3546 = vpop.permute.xlu0 %3545
        %3547 = vrot.lane.b32.xlu0 %v3214, 56
        %v3548 = vpop.permute.xlu0 %3547
        %v3552 = vsel %vm1504, %v3543, 0
        %v3555 = vsel %vm1504, %v3544, 0
        %3557 = vmatprep.subr.mxu0 0.0
        %3558 = vmatpush1.msra.mxu0 %v3546
        %3559 = vmatprep.subr.mxu0 0.0
        %3560 = vmatpush1.msra.mxu0 %v3548
        %3561 = vmatprep.subr.mxu0 0.0
        %3562 = vmatpush1.msra.mxu0 0.0
        %3563 = vmatprep.subr.mxu0 0.0
        %3564 = vmatpush1.msra.mxu0 0.0
        %3565 = vmatprep.subr.mxu0 0.0
        %3566 = vmatpush1.msra.mxu0 0.0
        %3567 = vmatprep.subr.mxu0 0.0
        %3568 = vmatpush1.msra.mxu0 0.0
        %3569 = vmatprep.subr.mxu0 0.0
        %3570 = vmatpush1.msra.mxu0 0.0
        %3571 = vmatprep.subr.mxu0 0.0
        %3572 = vmatpush1.msra.mxu0 0.0
        %3573 = vmatprep.subr.mxu0 0.0
        %3574 = vmatpush1.msra.mxu0 0.0
        %3575 = vmatprep.subr.mxu0 0.0
        %3576 = vmatpush1.msra.mxu0 0.0
        %3577 = vmatprep.subr.mxu0 0.0
        %3578 = vmatpush1.msra.mxu0 0.0
        %3579 = vmatprep.subr.mxu0 0.0
        %3580 = vmatpush1.msra.mxu0 0.0
        %3581 = vmatprep.subr.mxu0 0.0
        %3582 = vmatpush1.msra.mxu0 0.0
        %3583 = vmatprep.subr.mxu0 0.0
        %3584 = vmatpush1.msra.mxu0 0.0
        %3585 = vmatprep.subr.mxu0 0.0
        %3586 = vmatpush1.msra.mxu0 0.0
        %3587 = vmatprep.subr.mxu0 0.0
        %3588 = vmatpush1.msra.mxu0 0.0
        %3589 = vmatprep.subr.mxu0 0.0
        %3590 = vmatpush1.msra.mxu0 0.0
        %3591 = vmatprep.subr.mxu0 0.0
        %3592 = vmatpush1.msra.mxu0 0.0
        %3593 = vmatprep.subr.mxu0 0.0
        %3594 = vmatpush1.msra.mxu0 0.0
        %3595 = vmatprep.subr.mxu0 0.0
        %3596 = vmatpush1.msra.mxu0 0.0
        %3597 = vmatprep.subr.mxu0 0.0
        %3598 = vmatpush1.msra.mxu0 0.0
        %3599 = vmatprep.subr.mxu0 0.0
        %3600 = vmatpush1.msra.mxu0 0.0
        %3601 = vmatprep.subr.mxu0 0.0
        %3602 = vmatpush1.msra.mxu0 0.0
        %3603 = vmatprep.subr.mxu0 0.0
        %3604 = vmatpush1.msra.mxu0 0.0
        %3605 = vmatprep.subr.mxu0 0.0
        %3606 = vmatpush1.msra.mxu0 0.0
        %3607 = vmatprep.subr.mxu0 0.0
        %3608 = vmatpush1.msra.mxu0 0.0
        %3609 = vmatprep.subr.mxu0 0.0
        %3610 = vmatpush1.msra.mxu0 0.0
        %3611 = vmatprep.subr.mxu0 0.0
        %3612 = vmatpush1.msra.mxu0 0.0
        %3613 = vmatprep.subr.mxu0 0.0
        %3614 = vmatpush1.msra.mxu0 0.0
        %3615 = vmatprep.subr.mxu0 0.0
        %3616 = vmatpush1.msra.mxu0 0.0
        %3617 = vmatprep.subr.mxu0 0.0
        %3618 = vmatpush1.msra.mxu0 0.0
        %3619 = vmatprep.subr.mxu0 0.0
        %3620 = vmatpush1.msra.mxu0 0.0
        %3621 = vmatprep.mubr.f32.mxu0 0.0
        %3622 = vmatmul.mubr.f32.gmra.mrb[0].mxu0 %v3552
        %v3623 = vpop.f32.mrb[0].mxu0
        %v3624 = vadd.f32 0.0, %v3623
        %v3625 = vpop.f32.mrb[0].mxu0
        %3626 = vmatprep.mubr.f32.mxu0 0.0
        %3627 = vmatmul.mubr.f32.gmra.mrb[0].mxu0 %v3555
        %v3628 = vpop.f32.mrb[0].mxu0
        %v3629 = vadd.f32 0.0, %v3628
        %v3630 = vpop.f32.mrb[0].mxu0
        %3631 = vdwg.mxu0
        %v3633 = vsel %vm1689, %v3624, 0
        %v3636 = vsel %vm1689, %v3629, 0
        %3638 = vmatprep.subr.mxu0 0.0
        %3639 = vmatpush1.msra.mxu0 %v3091
        %3640 = vmatprep.subr.mxu0 0.0
        %3641 = vmatpush1.msra.mxu0 0.0
        %3642 = vmatprep.subr.mxu0 0.0
        %3643 = vmatpush1.msra.mxu0 0.0
        %3644 = vmatprep.subr.mxu0 0.0
        %3645 = vmatpush1.msra.mxu0 0.0
        %3646 = vmatprep.subr.mxu0 0.0
        %3647 = vmatpush1.msra.mxu0 0.0
        %3648 = vmatprep.subr.mxu0 0.0
        %3649 = vmatpush1.msra.mxu0 0.0
        %3650 = vmatprep.subr.mxu0 0.0
        %3651 = vmatpush1.msra.mxu0 0.0
        %3652 = vmatprep.subr.mxu0 0.0
        %3653 = vmatpush1.msra.mxu0 0.0
        %3654 = vmatprep.subr.mxu0 0.0
        %3655 = vmatpush1.msra.mxu0 0.0
        %3656 = vmatprep.subr.mxu0 0.0
        %3657 = vmatpush1.msra.mxu0 0.0
        %3658 = vmatprep.subr.mxu0 0.0
        %3659 = vmatpush1.msra.mxu0 0.0
        %3660 = vmatprep.subr.mxu0 0.0
        %3661 = vmatpush1.msra.mxu0 0.0
        %3662 = vmatprep.subr.mxu0 0.0
        %3663 = vmatpush1.msra.mxu0 0.0
        %3664 = vmatprep.subr.mxu0 0.0
        %3665 = vmatpush1.msra.mxu0 0.0
        %3666 = vmatprep.subr.mxu0 0.0
        %3667 = vmatpush1.msra.mxu0 0.0
        %3668 = vmatprep.subr.mxu0 0.0
        %3669 = vmatpush1.msra.mxu0 0.0
        %3670 = vmatprep.subr.mxu0 0.0
        %3671 = vmatpush1.msra.mxu0 0.0
        %3672 = vmatprep.subr.mxu0 0.0
        %3673 = vmatpush1.msra.mxu0 0.0
        %3674 = vmatprep.subr.mxu0 0.0
        %3675 = vmatpush1.msra.mxu0 0.0
        %3676 = vmatprep.subr.mxu0 0.0
        %3677 = vmatpush1.msra.mxu0 0.0
        %3678 = vmatprep.subr.mxu0 0.0
        %3679 = vmatpush1.msra.mxu0 0.0
        %3680 = vmatprep.subr.mxu0 0.0
        %3681 = vmatpush1.msra.mxu0 0.0
        %3682 = vmatprep.subr.mxu0 0.0
        %3683 = vmatpush1.msra.mxu0 0.0
        %3684 = vmatprep.subr.mxu0 0.0
        %3685 = vmatpush1.msra.mxu0 0.0
        %3686 = vmatprep.subr.mxu0 0.0
        %3687 = vmatpush1.msra.mxu0 0.0
        %3688 = vmatprep.subr.mxu0 0.0
        %3689 = vmatpush1.msra.mxu0 0.0
        %3690 = vmatprep.subr.mxu0 0.0
        %3691 = vmatpush1.msra.mxu0 0.0
        %3692 = vmatprep.subr.mxu0 0.0
        %3693 = vmatpush1.msra.mxu0 0.0
        %3694 = vmatprep.subr.mxu0 0.0
        %3695 = vmatpush1.msra.mxu0 0.0
        %3696 = vmatprep.subr.mxu0 0.0
        %3697 = vmatpush1.msra.mxu0 0.0
        %3698 = vmatprep.subr.mxu0 0.0
        %3699 = vmatpush1.msra.mxu0 0.0
        %3700 = vmatprep.subr.mxu0 0.0
        %3701 = vmatpush1.msra.mxu0 0.0
        %3702 = vmatprep.mubr.f32.mxu0 0.0
        %3703 = vmatmul.mubr.f32.gmra.mrb[0].mxu0 %v3633
        %v3704 = vpop.f32.mrb[0].mxu0
        %v3705 = vadd.f32 0.0, %v3704
        %v3706 = vpop.f32.mrb[0].mxu0
        %3707 = vmatprep.mubr.f32.mxu0 0.0
        %3708 = vmatmul.mubr.f32.gmra.mrb[0].mxu0 %v3636
        %v3709 = vpop.f32.mrb[0].mxu0
        %v3710 = vadd.f32 0.0, %v3709
        %v3711 = vpop.f32.mrb[0].mxu0
        %3712 = vdwg.mxu0
        %v3714 = vsel %vm1689, %v3420, 0
        %v3717 = vsel %vm1689, %v3425, 0
        %3719 = vmatprep.subr.mxu0 0.0
        %3720 = vmatpush1.msra.mxu0 %v3090
        %3721 = vmatprep.subr.mxu0 0.0
        %3722 = vmatpush1.msra.mxu0 0.0
        %3723 = vmatprep.subr.mxu0 0.0
        %3724 = vmatpush1.msra.mxu0 0.0
        %3725 = vmatprep.subr.mxu0 0.0
        %3726 = vmatpush1.msra.mxu0 0.0
        %3727 = vmatprep.subr.mxu0 0.0
        %3728 = vmatpush1.msra.mxu0 0.0
        %3729 = vmatprep.subr.mxu0 0.0
        %3730 = vmatpush1.msra.mxu0 0.0
        %3731 = vmatprep.subr.mxu0 0.0
        %3732 = vmatpush1.msra.mxu0 0.0
        %3733 = vmatprep.subr.mxu0 0.0
        %3734 = vmatpush1.msra.mxu0 0.0
        %3735 = vmatprep.subr.mxu0 0.0
        %3736 = vmatpush1.msra.mxu0 0.0
        %3737 = vmatprep.subr.mxu0 0.0
        %3738 = vmatpush1.msra.mxu0 0.0
        %3739 = vmatprep.subr.mxu0 0.0
        %3740 = vmatpush1.msra.mxu0 0.0
        %3741 = vmatprep.subr.mxu0 0.0
        %3742 = vmatpush1.msra.mxu0 0.0
        %3743 = vmatprep.subr.mxu0 0.0
        %3744 = vmatpush1.msra.mxu0 0.0
        %3745 = vmatprep.subr.mxu0 0.0
        %3746 = vmatpush1.msra.mxu0 0.0
        %3747 = vmatprep.subr.mxu0 0.0
        %3748 = vmatpush1.msra.mxu0 0.0
        %3749 = vmatprep.subr.mxu0 0.0
        %3750 = vmatpush1.msra.mxu0 0.0
        %3751 = vmatprep.subr.mxu0 0.0
        %3752 = vmatpush1.msra.mxu0 0.0
        %3753 = vmatprep.subr.mxu0 0.0
        %3754 = vmatpush1.msra.mxu0 0.0
        %3755 = vmatprep.subr.mxu0 0.0
        %3756 = vmatpush1.msra.mxu0 0.0
        %3757 = vmatprep.subr.mxu0 0.0
        %3758 = vmatpush1.msra.mxu0 0.0
        %3759 = vmatprep.subr.mxu0 0.0
        %3760 = vmatpush1.msra.mxu0 0.0
        %3761 = vmatprep.subr.mxu0 0.0
        %3762 = vmatpush1.msra.mxu0 0.0
        %3763 = vmatprep.subr.mxu0 0.0
        %3764 = vmatpush1.msra.mxu0 0.0
        %3765 = vmatprep.subr.mxu0 0.0
        %3766 = vmatpush1.msra.mxu0 0.0
        %3767 = vmatprep.subr.mxu0 0.0
        %3768 = vmatpush1.msra.mxu0 0.0
        %3769 = vmatprep.subr.mxu0 0.0
        %3770 = vmatpush1.msra.mxu0 0.0
        %3771 = vmatprep.subr.mxu0 0.0
        %3772 = vmatpush1.msra.mxu0 0.0
        %3773 = vmatprep.subr.mxu0 0.0
        %3774 = vmatpush1.msra.mxu0 0.0
        %3775 = vmatprep.subr.mxu0 0.0
        %3776 = vmatpush1.msra.mxu0 0.0
        %3777 = vmatprep.subr.mxu0 0.0
        %3778 = vmatpush1.msra.mxu0 0.0
        %3779 = vmatprep.subr.mxu0 0.0
        %3780 = vmatpush1.msra.mxu0 0.0
        %3781 = vmatprep.subr.mxu0 0.0
        %3782 = vmatpush1.msra.mxu0 0.0
        %3783 = vmatprep.mubr.f32.mxu0 0.0
        %3784 = vmatmul.mubr.f32.gmra.mrb[0].mxu0 %v3714
        %v3785 = vpop.f32.mrb[0].mxu0
        %v3786 = vadd.f32 %v3705, %v3785
        %v3787 = vpop.f32.mrb[0].mxu0
        %3788 = vmatprep.mubr.f32.mxu0 0.0
        %3789 = vmatmul.mubr.f32.gmra.mrb[0].mxu0 %v3717
        %v3790 = vpop.f32.mrb[0].mxu0
        %v3791 = vadd.f32 %v3710, %v3790
        %v3792 = vpop.f32.mrb[0].mxu0
        %3793 = vdwg.mxu0
        %3794 = vrot.lane.b32.xlu0 %v3209, 112
        %v3795 = vpop.permute.xlu0 %3794
        %3796 = vrot.lane.b32.xlu0 %v3214, 112
        %v3797 = vpop.permute.xlu0 %3796
        %3798 = vrot.lane.b32.xlu0 %v3209, 80
        %v3799 = vpop.permute.xlu0 %3798
        %3800 = vrot.lane.b32.xlu0 %v3214, 80
        %v3801 = vpop.permute.xlu0 %3800
        %v3802 = vsel %vm1689, %v3795, 0
        %v3804 = vsel %vm1689, %v3797, 0
        %v3806 = vsel %vm1689, %v3799, 0
        %v3808 = vsel %vm1689, %v3801, 0
        %3810 = vmatprep.subr.mxu0 0.0
        %3811 = vmatpush1.xpose.msra.mxu0 %v3806
        %3812 = vmatprep.subr.mxu0 0.0
        %3813 = vmatpush1.xpose.msra.mxu0 %v3808
        %3814 = vmatprep.subr.mxu0 0.0
        %3815 = vmatpush1.xpose.msra.mxu0 0.0
        %3816 = vmatprep.subr.mxu0 0.0
        %3817 = vmatpush1.xpose.msra.mxu0 0.0
        %3818 = vmatprep.subr.mxu0 0.0
        %3819 = vmatpush1.xpose.msra.mxu0 0.0
        %3820 = vmatprep.subr.mxu0 0.0
        %3821 = vmatpush1.xpose.msra.mxu0 0.0
        %3822 = vmatprep.subr.mxu0 0.0
        %3823 = vmatpush1.xpose.msra.mxu0 0.0
        %3824 = vmatprep.subr.mxu0 0.0
        %3825 = vmatpush1.xpose.msra.mxu0 0.0
        %3826 = vmatprep.subr.mxu0 0.0
        %3827 = vmatpush1.xpose.msra.mxu0 0.0
        %3828 = vmatprep.subr.mxu0 0.0
        %3829 = vmatpush1.xpose.msra.mxu0 0.0
        %3830 = vmatprep.subr.mxu0 0.0
        %3831 = vmatpush1.xpose.msra.mxu0 0.0
        %3832 = vmatprep.subr.mxu0 0.0
        %3833 = vmatpush1.xpose.msra.mxu0 0.0
        %3834 = vmatprep.subr.mxu0 0.0
        %3835 = vmatpush1.xpose.msra.mxu0 0.0
        %3836 = vmatprep.subr.mxu0 0.0
        %3837 = vmatpush1.xpose.msra.mxu0 0.0
        %3838 = vmatprep.subr.mxu0 0.0
        %3839 = vmatpush1.xpose.msra.mxu0 0.0
        %3840 = vmatprep.subr.mxu0 0.0
        %3841 = vmatpush1.xpose.msra.mxu0 0.0
        %3842 = vmatprep.subr.mxu0 0.0
        %3843 = vmatpush1.xpose.msra.mxu0 0.0
        %3844 = vmatprep.subr.mxu0 0.0
        %3845 = vmatpush1.xpose.msra.mxu0 0.0
        %3846 = vmatprep.subr.mxu0 0.0
        %3847 = vmatpush1.xpose.msra.mxu0 0.0
        %3848 = vmatprep.subr.mxu0 0.0
        %3849 = vmatpush1.xpose.msra.mxu0 0.0
        %3850 = vmatprep.subr.mxu0 0.0
        %3851 = vmatpush1.xpose.msra.mxu0 0.0
        %3852 = vmatprep.subr.mxu0 0.0
        %3853 = vmatpush1.xpose.msra.mxu0 0.0
        %3854 = vmatprep.subr.mxu0 0.0
        %3855 = vmatpush1.xpose.msra.mxu0 0.0
        %3856 = vmatprep.subr.mxu0 0.0
        %3857 = vmatpush1.xpose.msra.mxu0 0.0
        %3858 = vmatprep.subr.mxu0 0.0
        %3859 = vmatpush1.xpose.msra.mxu0 0.0
        %3860 = vmatprep.subr.mxu0 0.0
        %3861 = vmatpush1.xpose.msra.mxu0 0.0
        %3862 = vmatprep.subr.mxu0 0.0
        %3863 = vmatpush1.xpose.msra.mxu0 0.0
        %3864 = vmatprep.subr.mxu0 0.0
        %3865 = vmatpush1.xpose.msra.mxu0 0.0
        %3866 = vmatprep.subr.mxu0 0.0
        %3867 = vmatpush1.xpose.msra.mxu0 0.0
        %3868 = vmatprep.subr.mxu0 0.0
        %3869 = vmatpush1.xpose.msra.mxu0 0.0
        %3870 = vmatprep.subr.mxu0 0.0
        %3871 = vmatpush1.xpose.msra.mxu0 0.0
        %3872 = vmatprep.subr.mxu0 0.0
        %3873 = vmatpush1.xpose.msra.mxu0 0.0
        %3874 = vmatprep.mubr.f32.mxu0 0.0
        %3875 = vmatmul.mubr.f32.gmra.mrb[0].mxu0 %v3802
        %v3876 = vpop.f32.mrb[0].mxu0
        %v3877 = vadd.f32 0.0, %v3876
        %v3878 = vpop.f32.mrb[0].mxu0
        %3879 = vmatprep.mubr.f32.mxu0 0.0
        %3880 = vmatmul.mubr.f32.gmra.mrb[0].mxu0 %v3804
        %v3881 = vpop.f32.mrb[0].mxu0
        %v3882 = vadd.f32 0.0, %v3881
        %v3883 = vpop.f32.mrb[0].mxu0
        %3884 = vdwg.mxu0
        %v3885 = vmul.f32 %v3877, 0.35355338
        %v3886 = vmul.f32 %v3882, 0.35355338
        %v3887 = vadd.f32 %v3885, %v3224
        %v3888 = vadd.f32 %v3886, %v3225
        %v3889 = vsel %vm1504, %v3887, -inf
        %3890 = vmax.xlane.f32.xlu0 %v3889
        %v3891 = vpop.xlane.xlu0 %3890
        %v3892 = vsel %vm1504, %v3888, -inf
        %3893 = vmax.xlane.f32.xlu0 %v3892
        %v3894 = vpop.xlane.xlu0 %3893
        %v3895 = vsub.f32 %v3887, %v3891
        %v3896 = vsub.f32 %v3888, %v3894
        %v3897 = vmul.f32 %v3895, 1.442695
        %v3898 = vpow.pop %v3897
        %v3899 = vmul.f32 %v3896, 1.442695
        %v3900 = vpow.pop %v3899
        %v3901 = vsel %vm1504, %v3898, 0.0
        %3902 = vadd.xlane.f32.xlu0 %v3901
        %v3903 = vpop.xlane.xlu0 %3902
        %v3904 = vsel %vm1504, %v3900, 0.0
        %3905 = vadd.xlane.f32.xlu0 %v3904
        %v3906 = vpop.xlane.xlu0 %3905
        %v3907 = vrcp.pop %v3903
        %v3908 = vrcp.pop %v3906
        %v3909 = vmul.f32 %v3898, %v3907
        %v3910 = vmul.f32 %v3900, %v3908
        %3911 = vrot.lane.b32.xlu0 %v3209, 48
        %v3912 = vpop.permute.xlu0 %3911
        %3913 = vrot.lane.b32.xlu0 %v3214, 48
        %v3914 = vpop.permute.xlu0 %3913
        %v3918 = vsel %vm1504, %v3909, 0
        %v3921 = vsel %vm1504, %v3910, 0
        %3923 = vmatprep.subr.mxu0 0.0
        %3924 = vmatpush1.msra.mxu0 %v3912
        %3925 = vmatprep.subr.mxu0 0.0
        %3926 = vmatpush1.msra.mxu0 %v3914
        %3927 = vmatprep.subr.mxu0 0.0
        %3928 = vmatpush1.msra.mxu0 0.0
        %3929 = vmatprep.subr.mxu0 0.0
        %3930 = vmatpush1.msra.mxu0 0.0
        %3931 = vmatprep.subr.mxu0 0.0
        %3932 = vmatpush1.msra.mxu0 0.0
        %3933 = vmatprep.subr.mxu0 0.0
        %3934 = vmatpush1.msra.mxu0 0.0
        %3935 = vmatprep.subr.mxu0 0.0
        %3936 = vmatpush1.msra.mxu0 0.0
        %3937 = vmatprep.subr.mxu0 0.0
        %3938 = vmatpush1.msra.mxu0 0.0
        %3939 = vmatprep.subr.mxu0 0.0
        %3940 = vmatpush1.msra.mxu0 0.0
        %3941 = vmatprep.subr.mxu0 0.0
        %3942 = vmatpush1.msra.mxu0 0.0
        %3943 = vmatprep.subr.mxu0 0.0
        %3944 = vmatpush1.msra.mxu0 0.0
        %3945 = vmatprep.subr.mxu0 0.0
        %3946 = vmatpush1.msra.mxu0 0.0
        %3947 = vmatprep.subr.mxu0 0.0
        %3948 = vmatpush1.msra.mxu0 0.0
        %3949 = vmatprep.subr.mxu0 0.0
        %3950 = vmatpush1.msra.mxu0 0.0
        %3951 = vmatprep.subr.mxu0 0.0
        %3952 = vmatpush1.msra.mxu0 0.0
        %3953 = vmatprep.subr.mxu0 0.0
        %3954 = vmatpush1.msra.mxu0 0.0
        %3955 = vmatprep.subr.mxu0 0.0
        %3956 = vmatpush1.msra.mxu0 0.0
        %3957 = vmatprep.subr.mxu0 0.0
        %3958 = vmatpush1.msra.mxu0 0.0
        %3959 = vmatprep.subr.mxu0 0.0
        %3960 = vmatpush1.msra.mxu0 0.0
        %3961 = vmatprep.subr.mxu0 0.0
        %3962 = vmatpush1.msra.mxu0 0.0
        %3963 = vmatprep.subr.mxu0 0.0
        %3964 = vmatpush1.msra.mxu0 0.0
        %3965 = vmatprep.subr.mxu0 0.0
        %3966 = vmatpush1.msra.mxu0 0.0
        %3967 = vmatprep.subr.mxu0 0.0
        %3968 = vmatpush1.msra.mxu0 0.0
        %3969 = vmatprep.subr.mxu0 0.0
        %3970 = vmatpush1.msra.mxu0 0.0
        %3971 = vmatprep.subr.mxu0 0.0
        %3972 = vmatpush1.msra.mxu0 0.0
        %3973 = vmatprep.subr.mxu0 0.0
        %3974 = vmatpush1.msra.mxu0 0.0
        %3975 = vmatprep.subr.mxu0 0.0
        %3976 = vmatpush1.msra.mxu0 0.0
        %3977 = vmatprep.subr.mxu0 0.0
        %3978 = vmatpush1.msra.mxu0 0.0
        %3979 = vmatprep.subr.mxu0 0.0
        %3980 = vmatpush1.msra.mxu0 0.0
        %3981 = vmatprep.subr.mxu0 0.0
        %3982 = vmatpush1.msra.mxu0 0.0
        %3983 = vmatprep.subr.mxu0 0.0
        %3984 = vmatpush1.msra.mxu0 0.0
        %3985 = vmatprep.subr.mxu0 0.0
        %3986 = vmatpush1.msra.mxu0 0.0
        %3987 = vmatprep.mubr.f32.mxu0 0.0
        %3988 = vmatmul.mubr.f32.gmra.mrb[0].mxu0 %v3918
        %v3989 = vpop.f32.mrb[0].mxu0
        %v3990 = vadd.f32 0.0, %v3989
        %v3991 = vpop.f32.mrb[0].mxu0
        %3992 = vmatprep.mubr.f32.mxu0 0.0
        %3993 = vmatmul.mubr.f32.gmra.mrb[0].mxu0 %v3921
        %v3994 = vpop.f32.mrb[0].mxu0
        %v3995 = vadd.f32 0.0, %v3994
        %v3996 = vpop.f32.mrb[0].mxu0
        %3997 = vdwg.mxu0
        %v3999 = vsel %vm1689, %v3990, 0
        %v4002 = vsel %vm1689, %v3995, 0
        %4004 = vmatprep.subr.mxu0 0.0
        %4005 = vmatpush1.msra.mxu0 %v3092
        %4006 = vmatprep.subr.mxu0 0.0
        %4007 = vmatpush1.msra.mxu0 0.0
        %4008 = vmatprep.subr.mxu0 0.0
        %4009 = vmatpush1.msra.mxu0 0.0
        %4010 = vmatprep.subr.mxu0 0.0
        %4011 = vmatpush1.msra.mxu0 0.0
        %4012 = vmatprep.subr.mxu0 0.0
        %4013 = vmatpush1.msra.mxu0 0.0
        %4014 = vmatprep.subr.mxu0 0.0
        %4015 = vmatpush1.msra.mxu0 0.0
        %4016 = vmatprep.subr.mxu0 0.0
        %4017 = vmatpush1.msra.mxu0 0.0
        %4018 = vmatprep.subr.mxu0 0.0
        %4019 = vmatpush1.msra.mxu0 0.0
        %4020 = vmatprep.subr.mxu0 0.0
        %4021 = vmatpush1.msra.mxu0 0.0
        %4022 = vmatprep.subr.mxu0 0.0
        %4023 = vmatpush1.msra.mxu0 0.0
        %4024 = vmatprep.subr.mxu0 0.0
        %4025 = vmatpush1.msra.mxu0 0.0
        %4026 = vmatprep.subr.mxu0 0.0
        %4027 = vmatpush1.msra.mxu0 0.0
        %4028 = vmatprep.subr.mxu0 0.0
        %4029 = vmatpush1.msra.mxu0 0.0
        %4030 = vmatprep.subr.mxu0 0.0
        %4031 = vmatpush1.msra.mxu0 0.0
        %4032 = vmatprep.subr.mxu0 0.0
        %4033 = vmatpush1.msra.mxu0 0.0
        %4034 = vmatprep.subr.mxu0 0.0
        %4035 = vmatpush1.msra.mxu0 0.0
        %4036 = vmatprep.subr.mxu0 0.0
        %4037 = vmatpush1.msra.mxu0 0.0
        %4038 = vmatprep.subr.mxu0 0.0
        %4039 = vmatpush1.msra.mxu0 0.0
        %4040 = vmatprep.subr.mxu0 0.0
        %4041 = vmatpush1.msra.mxu0 0.0
        %4042 = vmatprep.subr.mxu0 0.0
        %4043 = vmatpush1.msra.mxu0 0.0
        %4044 = vmatprep.subr.mxu0 0.0
        %4045 = vmatpush1.msra.mxu0 0.0
        %4046 = vmatprep.subr.mxu0 0.0
        %4047 = vmatpush1.msra.mxu0 0.0
        %4048 = vmatprep.subr.mxu0 0.0
        %4049 = vmatpush1.msra.mxu0 0.0
        %4050 = vmatprep.subr.mxu0 0.0
        %4051 = vmatpush1.msra.mxu0 0.0
        %4052 = vmatprep.subr.mxu0 0.0
        %4053 = vmatpush1.msra.mxu0 0.0
        %4054 = vmatprep.subr.mxu0 0.0
        %4055 = vmatpush1.msra.mxu0 0.0
        %4056 = vmatprep.subr.mxu0 0.0
        %4057 = vmatpush1.msra.mxu0 0.0
        %4058 = vmatprep.subr.mxu0 0.0
        %4059 = vmatpush1.msra.mxu0 0.0
        %4060 = vmatprep.subr.mxu0 0.0
        %4061 = vmatpush1.msra.mxu0 0.0
        %4062 = vmatprep.subr.mxu0 0.0
        %4063 = vmatpush1.msra.mxu0 0.0
        %4064 = vmatprep.subr.mxu0 0.0
        %4065 = vmatpush1.msra.mxu0 0.0
        %4066 = vmatprep.subr.mxu0 0.0
        %4067 = vmatpush1.msra.mxu0 0.0
        %4068 = vmatprep.mubr.f32.mxu0 0.0
        %4069 = vmatmul.mubr.f32.gmra.mrb[0].mxu0 %v3999
        %v4070 = vpop.f32.mrb[0].mxu0
        %v4071 = vadd.f32 0.0, %v4070
        %v4072 = vpop.f32.mrb[0].mxu0
        %4073 = vmatprep.mubr.f32.mxu0 0.0
        %4074 = vmatmul.mubr.f32.gmra.mrb[0].mxu0 %v4002
        %v4075 = vpop.f32.mrb[0].mxu0
        %v4076 = vadd.f32 0.0, %v4075
        %v4077 = vpop.f32.mrb[0].mxu0
        %4078 = vdwg.mxu0
        %v4079 = vadd.f32 %v3786, %v4071
        %v4080 = vadd.f32 %v3791, %v4076
        %4081 = vrot.lane.b32.xlu0 %v3209, 104
        %v4082 = vpop.permute.xlu0 %4081
        %4083 = vrot.lane.b32.xlu0 %v3214, 104
        %v4084 = vpop.permute.xlu0 %4083
        %4085 = vrot.lane.b32.xlu0 %v3209, 72
        %v4086 = vpop.permute.xlu0 %4085
        %4087 = vrot.lane.b32.xlu0 %v3214, 72
        %v4088 = vpop.permute.xlu0 %4087
        %v4089 = vsel %vm1689, %v4082, 0
        %v4091 = vsel %vm1689, %v4084, 0
        %v4093 = vsel %vm1689, %v4086, 0
        %v4095 = vsel %vm1689, %v4088, 0
        %4097 = vmatprep.subr.mxu0 0.0
        %4098 = vmatpush1.xpose.msra.mxu0 %v4093
        %4099 = vmatprep.subr.mxu0 0.0
        %4100 = vmatpush1.xpose.msra.mxu0 %v4095
        %4101 = vmatprep.subr.mxu0 0.0
        %4102 = vmatpush1.xpose.msra.mxu0 0.0
        %4103 = vmatprep.subr.mxu0 0.0
        %4104 = vmatpush1.xpose.msra.mxu0 0.0
        %4105 = vmatprep.subr.mxu0 0.0
        %4106 = vmatpush1.xpose.msra.mxu0 0.0
        %4107 = vmatprep.subr.mxu0 0.0
        %4108 = vmatpush1.xpose.msra.mxu0 0.0
        %4109 = vmatprep.subr.mxu0 0.0
        %4110 = vmatpush1.xpose.msra.mxu0 0.0
        %4111 = vmatprep.subr.mxu0 0.0
        %4112 = vmatpush1.xpose.msra.mxu0 0.0
        %4113 = vmatprep.subr.mxu0 0.0
        %4114 = vmatpush1.xpose.msra.mxu0 0.0
        %4115 = vmatprep.subr.mxu0 0.0
        %4116 = vmatpush1.xpose.msra.mxu0 0.0
        %4117 = vmatprep.subr.mxu0 0.0
        %4118 = vmatpush1.xpose.msra.mxu0 0.0
        %4119 = vmatprep.subr.mxu0 0.0
        %4120 = vmatpush1.xpose.msra.mxu0 0.0
        %4121 = vmatprep.subr.mxu0 0.0
        %4122 = vmatpush1.xpose.msra.mxu0 0.0
        %4123 = vmatprep.subr.mxu0 0.0
        %4124 = vmatpush1.xpose.msra.mxu0 0.0
        %4125 = vmatprep.subr.mxu0 0.0
        %4126 = vmatpush1.xpose.msra.mxu0 0.0
        %4127 = vmatprep.subr.mxu0 0.0
        %4128 = vmatpush1.xpose.msra.mxu0 0.0
        %4129 = vmatprep.subr.mxu0 0.0
        %4130 = vmatpush1.xpose.msra.mxu0 0.0
        %4131 = vmatprep.subr.mxu0 0.0
        %4132 = vmatpush1.xpose.msra.mxu0 0.0
        %4133 = vmatprep.subr.mxu0 0.0
        %4134 = vmatpush1.xpose.msra.mxu0 0.0
        %4135 = vmatprep.subr.mxu0 0.0
        %4136 = vmatpush1.xpose.msra.mxu0 0.0
        %4137 = vmatprep.subr.mxu0 0.0
        %4138 = vmatpush1.xpose.msra.mxu0 0.0
        %4139 = vmatprep.subr.mxu0 0.0
        %4140 = vmatpush1.xpose.msra.mxu0 0.0
        %4141 = vmatprep.subr.mxu0 0.0
        %4142 = vmatpush1.xpose.msra.mxu0 0.0
        %4143 = vmatprep.subr.mxu0 0.0
        %4144 = vmatpush1.xpose.msra.mxu0 0.0
        %4145 = vmatprep.subr.mxu0 0.0
        %4146 = vmatpush1.xpose.msra.mxu0 0.0
        %4147 = vmatprep.subr.mxu0 0.0
        %4148 = vmatpush1.xpose.msra.mxu0 0.0
        %4149 = vmatprep.subr.mxu0 0.0
        %4150 = vmatpush1.xpose.msra.mxu0 0.0
        %4151 = vmatprep.subr.mxu0 0.0
        %4152 = vmatpush1.xpose.msra.mxu0 0.0
        %4153 = vmatprep.subr.mxu0 0.0
        %4154 = vmatpush1.xpose.msra.mxu0 0.0
        %4155 = vmatprep.subr.mxu0 0.0
        %4156 = vmatpush1.xpose.msra.mxu0 0.0
        %4157 = vmatprep.subr.mxu0 0.0
        %4158 = vmatpush1.xpose.msra.mxu0 0.0
        %4159 = vmatprep.subr.mxu0 0.0
        %4160 = vmatpush1.xpose.msra.mxu0 0.0
        %4161 = vmatprep.mubr.f32.mxu0 0.0
        %4162 = vmatmul.mubr.f32.gmra.mrb[0].mxu0 %v4089
        %v4163 = vpop.f32.mrb[0].mxu0
        %v4164 = vadd.f32 0.0, %v4163
        %v4165 = vpop.f32.mrb[0].mxu0
        %4166 = vmatprep.mubr.f32.mxu0 0.0
        %4167 = vmatmul.mubr.f32.gmra.mrb[0].mxu0 %v4091
        %v4168 = vpop.f32.mrb[0].mxu0
        %v4169 = vadd.f32 0.0, %v4168
        %v4170 = vpop.f32.mrb[0].mxu0
        %4171 = vdwg.mxu0
        %v4172 = vmul.f32 %v4164, 0.35355338
        %v4173 = vmul.f32 %v4169, 0.35355338
        %v4174 = vadd.f32 %v4172, %v3224
        %v4175 = vadd.f32 %v4173, %v3225
        %v4176 = vsel %vm1504, %v4174, -inf
        %4177 = vmax.xlane.f32.xlu0 %v4176
        %v4178 = vpop.xlane.xlu0 %4177
        %v4179 = vsel %vm1504, %v4175, -inf
        %4180 = vmax.xlane.f32.xlu0 %v4179
        %v4181 = vpop.xlane.xlu0 %4180
        %v4182 = vsub.f32 %v4174, %v4178
        %v4183 = vsub.f32 %v4175, %v4181
        %v4184 = vmul.f32 %v4182, 1.442695
        %v4185 = vpow.pop %v4184
        %v4186 = vmul.f32 %v4183, 1.442695
        %v4187 = vpow.pop %v4186
        %v4188 = vsel %vm1504, %v4185, 0.0
        %4189 = vadd.xlane.f32.xlu0 %v4188
        %v4190 = vpop.xlane.xlu0 %4189
        %v4191 = vsel %vm1504, %v4187, 0.0
        %4192 = vadd.xlane.f32.xlu0 %v4191
        %v4193 = vpop.xlane.xlu0 %4192
        %v4194 = vrcp.pop %v4190
        %v4195 = vrcp.pop %v4193
        %v4196 = vmul.f32 %v4185, %v4194
        %v4197 = vmul.f32 %v4187, %v4195
        %4198 = vrot.lane.b32.xlu0 %v3209, 40
        %v4199 = vpop.permute.xlu0 %4198
        %4200 = vrot.lane.b32.xlu0 %v3214, 40
        %v4201 = vpop.permute.xlu0 %4200
        %v4205 = vsel %vm1504, %v4196, 0
        %v4208 = vsel %vm1504, %v4197, 0
        %4210 = vmatprep.subr.mxu0 0.0
        %4211 = vmatpush1.msra.mxu0 %v4199
        %4212 = vmatprep.subr.mxu0 0.0
        %4213 = vmatpush1.msra.mxu0 %v4201
        %4214 = vmatprep.subr.mxu0 0.0
        %4215 = vmatpush1.msra.mxu0 0.0
        %4216 = vmatprep.subr.mxu0 0.0
        %4217 = vmatpush1.msra.mxu0 0.0
        %4218 = vmatprep.subr.mxu0 0.0
        %4219 = vmatpush1.msra.mxu0 0.0
        %4220 = vmatprep.subr.mxu0 0.0
        %4221 = vmatpush1.msra.mxu0 0.0
        %4222 = vmatprep.subr.mxu0 0.0
        %4223 = vmatpush1.msra.mxu0 0.0
        %4224 = vmatprep.subr.mxu0 0.0
        %4225 = vmatpush1.msra.mxu0 0.0
        %4226 = vmatprep.subr.mxu0 0.0
        %4227 = vmatpush1.msra.mxu0 0.0
        %4228 = vmatprep.subr.mxu0 0.0
        %4229 = vmatpush1.msra.mxu0 0.0
        %4230 = vmatprep.subr.mxu0 0.0
        %4231 = vmatpush1.msra.mxu0 0.0
        %4232 = vmatprep.subr.mxu0 0.0
        %4233 = vmatpush1.msra.mxu0 0.0
        %4234 = vmatprep.subr.mxu0 0.0
        %4235 = vmatpush1.msra.mxu0 0.0
        %4236 = vmatprep.subr.mxu0 0.0
        %4237 = vmatpush1.msra.mxu0 0.0
        %4238 = vmatprep.subr.mxu0 0.0
        %4239 = vmatpush1.msra.mxu0 0.0
        %4240 = vmatprep.subr.mxu0 0.0
        %4241 = vmatpush1.msra.mxu0 0.0
        %4242 = vmatprep.subr.mxu0 0.0
        %4243 = vmatpush1.msra.mxu0 0.0
        %4244 = vmatprep.subr.mxu0 0.0
        %4245 = vmatpush1.msra.mxu0 0.0
        %4246 = vmatprep.subr.mxu0 0.0
        %4247 = vmatpush1.msra.mxu0 0.0
        %4248 = vmatprep.subr.mxu0 0.0
        %4249 = vmatpush1.msra.mxu0 0.0
        %4250 = vmatprep.subr.mxu0 0.0
        %4251 = vmatpush1.msra.mxu0 0.0
        %4252 = vmatprep.subr.mxu0 0.0
        %4253 = vmatpush1.msra.mxu0 0.0
        %4254 = vmatprep.subr.mxu0 0.0
        %4255 = vmatpush1.msra.mxu0 0.0
        %4256 = vmatprep.subr.mxu0 0.0
        %4257 = vmatpush1.msra.mxu0 0.0
        %4258 = vmatprep.subr.mxu0 0.0
        %4259 = vmatpush1.msra.mxu0 0.0
        %4260 = vmatprep.subr.mxu0 0.0
        %4261 = vmatpush1.msra.mxu0 0.0
        %4262 = vmatprep.subr.mxu0 0.0
        %4263 = vmatpush1.msra.mxu0 0.0
        %4264 = vmatprep.subr.mxu0 0.0
        %4265 = vmatpush1.msra.mxu0 0.0
        %4266 = vmatprep.subr.mxu0 0.0
        %4267 = vmatpush1.msra.mxu0 0.0
        %4268 = vmatprep.subr.mxu0 0.0
        %4269 = vmatpush1.msra.mxu0 0.0
        %4270 = vmatprep.subr.mxu0 0.0
        %4271 = vmatpush1.msra.mxu0 0.0
        %4272 = vmatprep.subr.mxu0 0.0
        %4273 = vmatpush1.msra.mxu0 0.0
        %4274 = vmatprep.mubr.f32.mxu0 0.0
        %4275 = vmatmul.mubr.f32.gmra.mrb[0].mxu0 %v4205
        %v4276 = vpop.f32.mrb[0].mxu0
        %v4277 = vadd.f32 0.0, %v4276
        %v4278 = vpop.f32.mrb[0].mxu0
        %4279 = vmatprep.mubr.f32.mxu0 0.0
        %4280 = vmatmul.mubr.f32.gmra.mrb[0].mxu0 %v4208
        %v4281 = vpop.f32.mrb[0].mxu0
        %v4282 = vadd.f32 0.0, %v4281
        %v4283 = vpop.f32.mrb[0].mxu0
        %4284 = vdwg.mxu0
        %v4286 = vsel %vm1689, %v4277, 0
        %v4289 = vsel %vm1689, %v4282, 0
        %4291 = vmatprep.subr.mxu0 0.0
        %4292 = vmatpush1.msra.mxu0 %v3093
        %4293 = vmatprep.subr.mxu0 0.0
        %4294 = vmatpush1.msra.mxu0 0.0
        %4295 = vmatprep.subr.mxu0 0.0
        %4296 = vmatpush1.msra.mxu0 0.0
        %4297 = vmatprep.subr.mxu0 0.0
        %4298 = vmatpush1.msra.mxu0 0.0
        %4299 = vmatprep.subr.mxu0 0.0
        %4300 = vmatpush1.msra.mxu0 0.0
        %4301 = vmatprep.subr.mxu0 0.0
        %4302 = vmatpush1.msra.mxu0 0.0
        %4303 = vmatprep.subr.mxu0 0.0
        %4304 = vmatpush1.msra.mxu0 0.0
        %4305 = vmatprep.subr.mxu0 0.0
        %4306 = vmatpush1.msra.mxu0 0.0
        %4307 = vmatprep.subr.mxu0 0.0
        %4308 = vmatpush1.msra.mxu0 0.0
        %4309 = vmatprep.subr.mxu0 0.0
        %4310 = vmatpush1.msra.mxu0 0.0
        %4311 = vmatprep.subr.mxu0 0.0
        %4312 = vmatpush1.msra.mxu0 0.0
        %4313 = vmatprep.subr.mxu0 0.0
        %4314 = vmatpush1.msra.mxu0 0.0
        %4315 = vmatprep.subr.mxu0 0.0
        %4316 = vmatpush1.msra.mxu0 0.0
        %4317 = vmatprep.subr.mxu0 0.0
        %4318 = vmatpush1.msra.mxu0 0.0
        %4319 = vmatprep.subr.mxu0 0.0
        %4320 = vmatpush1.msra.mxu0 0.0
        %4321 = vmatprep.subr.mxu0 0.0
        %4322 = vmatpush1.msra.mxu0 0.0
        %4323 = vmatprep.subr.mxu0 0.0
        %4324 = vmatpush1.msra.mxu0 0.0
        %4325 = vmatprep.subr.mxu0 0.0
        %4326 = vmatpush1.msra.mxu0 0.0
        %4327 = vmatprep.subr.mxu0 0.0
        %4328 = vmatpush1.msra.mxu0 0.0
        %4329 = vmatprep.subr.mxu0 0.0
        %4330 = vmatpush1.msra.mxu0 0.0
        %4331 = vmatprep.subr.mxu0 0.0
        %4332 = vmatpush1.msra.mxu0 0.0
        %4333 = vmatprep.subr.mxu0 0.0
        %4334 = vmatpush1.msra.mxu0 0.0
        %4335 = vmatprep.subr.mxu0 0.0
        %4336 = vmatpush1.msra.mxu0 0.0
        %4337 = vmatprep.subr.mxu0 0.0
        %4338 = vmatpush1.msra.mxu0 0.0
        %4339 = vmatprep.subr.mxu0 0.0
        %4340 = vmatpush1.msra.mxu0 0.0
        %4341 = vmatprep.subr.mxu0 0.0
        %4342 = vmatpush1.msra.mxu0 0.0
        %4343 = vmatprep.subr.mxu0 0.0
        %4344 = vmatpush1.msra.mxu0 0.0
        %4345 = vmatprep.subr.mxu0 0.0
        %4346 = vmatpush1.msra.mxu0 0.0
        %4347 = vmatprep.subr.mxu0 0.0
        %4348 = vmatpush1.msra.mxu0 0.0
        %4349 = vmatprep.subr.mxu0 0.0
        %4350 = vmatpush1.msra.mxu0 0.0
        %4351 = vmatprep.subr.mxu0 0.0
        %4352 = vmatpush1.msra.mxu0 0.0
        %4353 = vmatprep.subr.mxu0 0.0
        %4354 = vmatpush1.msra.mxu0 0.0
        %4355 = vmatprep.mubr.f32.mxu0 0.0
        %4356 = vmatmul.mubr.f32.gmra.mrb[0].mxu0 %v4286
        %v4357 = vpop.f32.mrb[0].mxu0
        %v4358 = vadd.f32 0.0, %v4357
        %v4359 = vpop.f32.mrb[0].mxu0
        %4360 = vmatprep.mubr.f32.mxu0 0.0
        %4361 = vmatmul.mubr.f32.gmra.mrb[0].mxu0 %v4289
        %v4362 = vpop.f32.mrb[0].mxu0
        %v4363 = vadd.f32 0.0, %v4362
        %v4364 = vpop.f32.mrb[0].mxu0
        %4365 = vdwg.mxu0
        %v4366 = vadd.f32 %v4079, %v4358
        %v4367 = vadd.f32 %v4080, %v4363
        %v4369 = vlaneseq
        %v4370 = vshrl.u32 %v4369, 7
        %v4371 = vsub.s32 0, %v4370
        %v4372 = vrot.slane %v3094, %v4371
        %v4374 = vadd.f32 %v4366, %v4372
        %v4375 = vadd.f32 %v4367, %v4372
        %v4376 = vadd.f32 %v3083, %v4374
        %v4377 = vadd.f32 %v3084, %v4375
        %v4378 = vsel %vm1612, %v4376, 0.0
        %4379 = vadd.xlane.f32.xlu0 %v4378
        %v4380 = vpop.xlane.xlu0 %4379
        %v4381 = vsel %vm1612, %v4377, 0.0
        %4382 = vadd.xlane.f32.xlu0 %v4381
        %v4383 = vpop.xlane.xlu0 %4382
        %v4384 = vmul.f32 %v4380, %v2663
        %v4385 = vmul.f32 %v4383, %v2663
        %v4386 = vsub.f32 %v4376, %v4384
        %v4387 = vsub.f32 %v4377, %v4385
        %v4388 = vmul.f32 %v4386, %v4386
        %v4389 = vmul.f32 %v4387, %v4387
        %v4390 = vsel %vm1612, %v4388, 0.0
        %4391 = vadd.xlane.f32.xlu0 %v4390
        %v4392 = vpop.xlane.xlu0 %4391
        %v4393 = vsel %vm1612, %v4389, 0.0
        %4394 = vadd.xlane.f32.xlu0 %v4393
        %v4395 = vpop.xlane.xlu0 %4394
        %v4396 = vmul.f32 %v4392, %v2663
        %v4397 = vmul.f32 %v4395, %v2663
        %v4398 = vadd.f32 %v4396, 1e-05
        %v4399 = vadd.f32 %v4397, 1e-05
        %v4400 = vrsqrt.pop %v4398
        %v4401 = vrsqrt.pop %v4399
        %v4402 = vmul.f32 %v4386, %v4400
        %v4403 = vmul.f32 %v4387, %v4401
        %v4405 = vlaneseq
        %v4406 = vshrl.u32 %v4405, 7
        %v4407 = vsub.s32 0, %v4406
        %v4408 = vrot.slane %v3124, %v4407
        %v4410 = vmul.f32 %v4402, %v4408
        %v4411 = vmul.f32 %v4403, %v4408
        %v4413 = vlaneseq
        %v4414 = vshrl.u32 %v4413, 7
        %v4415 = vsub.s32 0, %v4414
        %v4416 = vrot.slane %v3125, %v4415
        %v4418 = vadd.f32 %v4410, %v4416
        %v4419 = vadd.f32 %v4411, %v4416
        %v4421 = vlaneseq
        %v4422 = vshrl.u32 %v4421, 7
        %v4423 = vsub.s32 0, %v4422
        %v4424 = vrot.slane %v3099, %v4423
        %v4427 = vsel %vm1612, %v4418, 0
        %v4430 = vsel %vm1612, %v4419, 0
        %4432 = vmatprep.subr.mxu0 0.0
        %4433 = vmatpush1.msra.mxu0 %v3095
        %4434 = vmatprep.subr.mxu0 0.0
        %4435 = vmatpush1.msra.mxu0 %v3096
        %4436 = vmatprep.subr.mxu0 0.0
        %4437 = vmatpush1.msra.mxu0 %v3097
        %4438 = vmatprep.subr.mxu0 0.0
        %4439 = vmatpush1.msra.mxu0 %v3098
        %4440 = vmatprep.subr.mxu0 0.0
        %4441 = vmatpush1.msra.mxu0 0.0
        %4442 = vmatprep.subr.mxu0 0.0
        %4443 = vmatpush1.msra.mxu0 0.0
        %4444 = vmatprep.subr.mxu0 0.0
        %4445 = vmatpush1.msra.mxu0 0.0
        %4446 = vmatprep.subr.mxu0 0.0
        %4447 = vmatpush1.msra.mxu0 0.0
        %4448 = vmatprep.subr.mxu0 0.0
        %4449 = vmatpush1.msra.mxu0 0.0
        %4450 = vmatprep.subr.mxu0 0.0
        %4451 = vmatpush1.msra.mxu0 0.0
        %4452 = vmatprep.subr.mxu0 0.0
        %4453 = vmatpush1.msra.mxu0 0.0
        %4454 = vmatprep.subr.mxu0 0.0
        %4455 = vmatpush1.msra.mxu0 0.0
        %4456 = vmatprep.subr.mxu0 0.0
        %4457 = vmatpush1.msra.mxu0 0.0
        %4458 = vmatprep.subr.mxu0 0.0
        %4459 = vmatpush1.msra.mxu0 0.0
        %4460 = vmatprep.subr.mxu0 0.0
        %4461 = vmatpush1.msra.mxu0 0.0
        %4462 = vmatprep.subr.mxu0 0.0
        %4463 = vmatpush1.msra.mxu0 0.0
        %4464 = vmatprep.subr.mxu0 0.0
        %4465 = vmatpush1.msra.mxu0 0.0
        %4466 = vmatprep.subr.mxu0 0.0
        %4467 = vmatpush1.msra.mxu0 0.0
        %4468 = vmatprep.subr.mxu0 0.0
        %4469 = vmatpush1.msra.mxu0 0.0
        %4470 = vmatprep.subr.mxu0 0.0
        %4471 = vmatpush1.msra.mxu0 0.0
        %4472 = vmatprep.subr.mxu0 0.0
        %4473 = vmatpush1.msra.mxu0 0.0
        %4474 = vmatprep.subr.mxu0 0.0
        %4475 = vmatpush1.msra.mxu0 0.0
        %4476 = vmatprep.subr.mxu0 0.0
        %4477 = vmatpush1.msra.mxu0 0.0
        %4478 = vmatprep.subr.mxu0 0.0
        %4479 = vmatpush1.msra.mxu0 0.0
        %4480 = vmatprep.subr.mxu0 0.0
        %4481 = vmatpush1.msra.mxu0 0.0
        %4482 = vmatprep.subr.mxu0 0.0
        %4483 = vmatpush1.msra.mxu0 0.0
        %4484 = vmatprep.subr.mxu0 0.0
        %4485 = vmatpush1.msra.mxu0 0.0
        %4486 = vmatprep.subr.mxu0 0.0
        %4487 = vmatpush1.msra.mxu0 0.0
        %4488 = vmatprep.subr.mxu0 0.0
        %4489 = vmatpush1.msra.mxu0 0.0
        %4490 = vmatprep.subr.mxu0 0.0
        %4491 = vmatpush1.msra.mxu0 0.0
        %4492 = vmatprep.subr.mxu0 0.0
        %4493 = vmatpush1.msra.mxu0 0.0
        %4494 = vmatprep.subr.mxu0 0.0
        %4495 = vmatpush1.msra.mxu0 0.0
        %4496 = vmatprep.mubr.f32.mxu0 0.0
        %4497 = vmatmul.mubr.f32.gmra.mrb[0].mxu0 %v4427
        %v4498 = vpop.f32.mrb[0].mxu0
        %v4499 = vadd.f32 %v4424, %v4498
        %v4500 = vpop.f32.mrb[0].mxu0
        %4501 = vmatprep.mubr.f32.mxu0 0.0
        %4502 = vmatmul.mubr.f32.gmra.mrb[0].mxu0 %v4430
        %v4503 = vpop.f32.mrb[0].mxu0
        %v4504 = vadd.f32 %v4424, %v4503
        %v4505 = vpop.f32.mrb[0].mxu0
        %4506 = vdwg.mxu0
        %v4508 = vlaneseq
        %v4509 = vshrl.u32 %v4508, 7
        %v4510 = vsub.s32 0, %v4509
        %v4511 = vrot.slane %v3104, %v4510
        %v4514 = vsel %vm1612, %v2904, 0
        %4516 = vmatprep.subr.mxu0 0.0
        %4517 = vmatpush1.msra.mxu0 %v3100
        %4518 = vmatprep.subr.mxu0 0.0
        %4519 = vmatpush1.msra.mxu0 %v3101
        %4520 = vmatprep.subr.mxu0 0.0
        %4521 = vmatpush1.msra.mxu0 %v3102
        %4522 = vmatprep.subr.mxu0 0.0
        %4523 = vmatpush1.msra.mxu0 %v3103
        %4524 = vmatprep.subr.mxu0 0.0
        %4525 = vmatpush1.msra.mxu0 0.0
        %4526 = vmatprep.subr.mxu0 0.0
        %4527 = vmatpush1.msra.mxu0 0.0
        %4528 = vmatprep.subr.mxu0 0.0
        %4529 = vmatpush1.msra.mxu0 0.0
        %4530 = vmatprep.subr.mxu0 0.0
        %4531 = vmatpush1.msra.mxu0 0.0
        %4532 = vmatprep.subr.mxu0 0.0
        %4533 = vmatpush1.msra.mxu0 0.0
        %4534 = vmatprep.subr.mxu0 0.0
        %4535 = vmatpush1.msra.mxu0 0.0
        %4536 = vmatprep.subr.mxu0 0.0
        %4537 = vmatpush1.msra.mxu0 0.0
        %4538 = vmatprep.subr.mxu0 0.0
        %4539 = vmatpush1.msra.mxu0 0.0
        %4540 = vmatprep.subr.mxu0 0.0
        %4541 = vmatpush1.msra.mxu0 0.0
        %4542 = vmatprep.subr.mxu0 0.0
        %4543 = vmatpush1.msra.mxu0 0.0
        %4544 = vmatprep.subr.mxu0 0.0
        %4545 = vmatpush1.msra.mxu0 0.0
        %4546 = vmatprep.subr.mxu0 0.0
        %4547 = vmatpush1.msra.mxu0 0.0
        %4548 = vmatprep.subr.mxu0 0.0
        %4549 = vmatpush1.msra.mxu0 0.0
        %4550 = vmatprep.subr.mxu0 0.0
        %4551 = vmatpush1.msra.mxu0 0.0
        %4552 = vmatprep.subr.mxu0 0.0
        %4553 = vmatpush1.msra.mxu0 0.0
        %4554 = vmatprep.subr.mxu0 0.0
        %4555 = vmatpush1.msra.mxu0 0.0
        %4556 = vmatprep.subr.mxu0 0.0
        %4557 = vmatpush1.msra.mxu0 0.0
        %4558 = vmatprep.subr.mxu0 0.0
        %4559 = vmatpush1.msra.mxu0 0.0
        %4560 = vmatprep.subr.mxu0 0.0
        %4561 = vmatpush1.msra.mxu0 0.0
        %4562 = vmatprep.subr.mxu0 0.0
        %4563 = vmatpush1.msra.mxu0 0.0
        %4564 = vmatprep.subr.mxu0 0.0
        %4565 = vmatpush1.msra.mxu0 0.0
        %4566 = vmatprep.subr.mxu0 0.0
        %4567 = vmatpush1.msra.mxu0 0.0
        %4568 = vmatprep.subr.mxu0 0.0
        %4569 = vmatpush1.msra.mxu0 0.0
        %4570 = vmatprep.subr.mxu0 0.0
        %4571 = vmatpush1.msra.mxu0 0.0
        %4572 = vmatprep.subr.mxu0 0.0
        %4573 = vmatpush1.msra.mxu0 0.0
        %4574 = vmatprep.subr.mxu0 0.0
        %4575 = vmatpush1.msra.mxu0 0.0
        %4576 = vmatprep.subr.mxu0 0.0
        %4577 = vmatpush1.msra.mxu0 0.0
        %4578 = vmatprep.subr.mxu0 0.0
        %4579 = vmatpush1.msra.mxu0 0.0
        %4580 = vmatprep.mubr.f32.mxu0 0.0
        %4581 = vmatmul.mubr.f32.gmra.mrb[0].mxu0 %v4514
        %v4582 = vpop.f32.mrb[0].mxu0
        %v4583 = vadd.f32 %v4511, %v4582
        %v4584 = vpop.f32.mrb[0].mxu0
        %4585 = vdwg.mxu0
        %v4587 = vsel %vm1689, %v4499, 0
        %v4590 = vsel %vm1689, %v4504, 0
        %v4593 = vsel %vm1689, %v4583, 0
        %4595 = vmatprep.subr.mxu0 0.0
        %4596 = vmatpush1.xpose.msra.mxu0 %v4593
        %4597 = vmatprep.subr.mxu0 0.0
        %4598 = vmatpush1.xpose.msra.mxu0 0.0
        %4599 = vmatprep.subr.mxu0 0.0
        %4600 = vmatpush1.xpose.msra.mxu0 0.0
        %4601 = vmatprep.subr.mxu0 0.0
        %4602 = vmatpush1.xpose.msra.mxu0 0.0
        %4603 = vmatprep.subr.mxu0 0.0
        %4604 = vmatpush1.xpose.msra.mxu0 0.0
        %4605 = vmatprep.subr.mxu0 0.0
        %4606 = vmatpush1.xpose.msra.mxu0 0.0
        %4607 = vmatprep.subr.mxu0 0.0
        %4608 = vmatpush1.xpose.msra.mxu0 0.0
        %4609 = vmatprep.subr.mxu0 0.0
        %4610 = vmatpush1.xpose.msra.mxu0 0.0
        %4611 = vmatprep.subr.mxu0 0.0
        %4612 = vmatpush1.xpose.msra.mxu0 0.0
        %4613 = vmatprep.subr.mxu0 0.0
        %4614 = vmatpush1.xpose.msra.mxu0 0.0
        %4615 = vmatprep.subr.mxu0 0.0
        %4616 = vmatpush1.xpose.msra.mxu0 0.0
        %4617 = vmatprep.subr.mxu0 0.0
        %4618 = vmatpush1.xpose.msra.mxu0 0.0
        %4619 = vmatprep.subr.mxu0 0.0
        %4620 = vmatpush1.xpose.msra.mxu0 0.0
        %4621 = vmatprep.subr.mxu0 0.0
        %4622 = vmatpush1.xpose.msra.mxu0 0.0
        %4623 = vmatprep.subr.mxu0 0.0
        %4624 = vmatpush1.xpose.msra.mxu0 0.0
        %4625 = vmatprep.subr.mxu0 0.0
        %4626 = vmatpush1.xpose.msra.mxu0 0.0
        %4627 = vmatprep.subr.mxu0 0.0
        %4628 = vmatpush1.xpose.msra.mxu0 0.0
        %4629 = vmatprep.subr.mxu0 0.0
        %4630 = vmatpush1.xpose.msra.mxu0 0.0
        %4631 = vmatprep.subr.mxu0 0.0
        %4632 = vmatpush1.xpose.msra.mxu0 0.0
        %4633 = vmatprep.subr.mxu0 0.0
        %4634 = vmatpush1.xpose.msra.mxu0 0.0
        %4635 = vmatprep.subr.mxu0 0.0
        %4636 = vmatpush1.xpose.msra.mxu0 0.0
        %4637 = vmatprep.subr.mxu0 0.0
        %4638 = vmatpush1.xpose.msra.mxu0 0.0
        %4639 = vmatprep.subr.mxu0 0.0
        %4640 = vmatpush1.xpose.msra.mxu0 0.0
        %4641 = vmatprep.subr.mxu0 0.0
        %4642 = vmatpush1.xpose.msra.mxu0 0.0
        %4643 = vmatprep.subr.mxu0 0.0
        %4644 = vmatpush1.xpose.msra.mxu0 0.0
        %4645 = vmatprep.subr.mxu0 0.0
        %4646 = vmatpush1.xpose.msra.mxu0 0.0
        %4647 = vmatprep.subr.mxu0 0.0
        %4648 = vmatpush1.xpose.msra.mxu0 0.0
        %4649 = vmatprep.subr.mxu0 0.0
        %4650 = vmatpush1.xpose.msra.mxu0 0.0
        %4651 = vmatprep.subr.mxu0 0.0
        %4652 = vmatpush1.xpose.msra.mxu0 0.0
        %4653 = vmatprep.subr.mxu0 0.0
        %4654 = vmatpush1.xpose.msra.mxu0 0.0
        %4655 = vmatprep.subr.mxu0 0.0
        %4656 = vmatpush1.xpose.msra.mxu0 0.0
        %4657 = vmatprep.subr.mxu0 0.0
        %4658 = vmatpush1.xpose.msra.mxu0 0.0
        %4659 = vmatprep.mubr.f32.mxu0 0.0
        %4660 = vmatmul.mubr.f32.gmra.mrb[0].mxu0 %v4587
        %v4661 = vpop.f32.mrb[0].mxu0
        %v4662 = vadd.f32 0.0, %v4661
        %v4663 = vpop.f32.mrb[0].mxu0
        %4664 = vmatprep.mubr.f32.mxu0 0.0
        %4665 = vmatmul.mubr.f32.gmra.mrb[0].mxu0 %v4590
        %v4666 = vpop.f32.mrb[0].mxu0
        %v4667 = vadd.f32 0.0, %v4666
        %v4668 = vpop.f32.mrb[0].mxu0
        %4669 = vdwg.mxu0
        %v4670 = vmul.f32 %v4662, 0.35355338
        %v4671 = vmul.f32 %v4667, 0.35355338
        %v4672 = vsel %vm1779, %v4670, -inf
        %4673 = vmax.xlane.f32.xlu0 %v4672
        %v4674 = vpop.xlane.xlu0 %4673
        %v4675 = vsel %vm1779, %v4671, -inf
        %4676 = vmax.xlane.f32.xlu0 %v4675
        %v4677 = vpop.xlane.xlu0 %4676
        %v4678 = vsub.f32 %v4670, %v4674
        %v4679 = vsub.f32 %v4671, %v4677
        %v4680 = vmul.f32 %v4678, 1.442695
        %v4681 = vpow.pop %v4680
        %v4682 = vmul.f32 %v4679, 1.442695
        %v4683 = vpow.pop %v4682
        %v4684 = vsel %vm1779, %v4681, 0.0
        %4685 = vadd.xlane.f32.xlu0 %v4684
        %v4686 = vpop.xlane.xlu0 %4685
        %v4687 = vsel %vm1779, %v4683, 0.0
        %4688 = vadd.xlane.f32.xlu0 %v4687
        %v4689 = vpop.xlane.xlu0 %4688
        %v4690 = vrcp.pop %v4686
        %v4691 = vrcp.pop %v4689
        %v4692 = vmul.f32 %v4681, %v4690
        %v4693 = vmul.f32 %v4683, %v4691
        %4694 = vrot.lane.b32.xlu0 %v4583, 96
        %v4695 = vpop.permute.xlu0 %4694
        %v4697 = vsel %vm1779, %v4692, 0
        %v4700 = vsel %vm1779, %v4693, 0
        %v4702 = vsel %vm1783, %v4695, 0
        %4704 = vmatprep.subr.mxu0 0.0
        %4705 = vmatpush1.msra.mxu0 %v4702
        %4706 = vmatprep.subr.mxu0 0.0
        %4707 = vmatpush1.msra.mxu0 0.0
        %4708 = vmatprep.subr.mxu0 0.0
        %4709 = vmatpush1.msra.mxu0 0.0
        %4710 = vmatprep.subr.mxu0 0.0
        %4711 = vmatpush1.msra.mxu0 0.0
        %4712 = vmatprep.subr.mxu0 0.0
        %4713 = vmatpush1.msra.mxu0 0.0
        %4714 = vmatprep.subr.mxu0 0.0
        %4715 = vmatpush1.msra.mxu0 0.0
        %4716 = vmatprep.subr.mxu0 0.0
        %4717 = vmatpush1.msra.mxu0 0.0
        %4718 = vmatprep.subr.mxu0 0.0
        %4719 = vmatpush1.msra.mxu0 0.0
        %4720 = vmatprep.subr.mxu0 0.0
        %4721 = vmatpush1.msra.mxu0 0.0
        %4722 = vmatprep.subr.mxu0 0.0
        %4723 = vmatpush1.msra.mxu0 0.0
        %4724 = vmatprep.subr.mxu0 0.0
        %4725 = vmatpush1.msra.mxu0 0.0
        %4726 = vmatprep.subr.mxu0 0.0
        %4727 = vmatpush1.msra.mxu0 0.0
        %4728 = vmatprep.subr.mxu0 0.0
        %4729 = vmatpush1.msra.mxu0 0.0
        %4730 = vmatprep.subr.mxu0 0.0
        %4731 = vmatpush1.msra.mxu0 0.0
        %4732 = vmatprep.subr.mxu0 0.0
        %4733 = vmatpush1.msra.mxu0 0.0
        %4734 = vmatprep.subr.mxu0 0.0
        %4735 = vmatpush1.msra.mxu0 0.0
        %4736 = vmatprep.subr.mxu0 0.0
        %4737 = vmatpush1.msra.mxu0 0.0
        %4738 = vmatprep.subr.mxu0 0.0
        %4739 = vmatpush1.msra.mxu0 0.0
        %4740 = vmatprep.subr.mxu0 0.0
        %4741 = vmatpush1.msra.mxu0 0.0
        %4742 = vmatprep.subr.mxu0 0.0
        %4743 = vmatpush1.msra.mxu0 0.0
        %4744 = vmatprep.subr.mxu0 0.0
        %4745 = vmatpush1.msra.mxu0 0.0
        %4746 = vmatprep.subr.mxu0 0.0
        %4747 = vmatpush1.msra.mxu0 0.0
        %4748 = vmatprep.subr.mxu0 0.0
        %4749 = vmatpush1.msra.mxu0 0.0
        %4750 = vmatprep.subr.mxu0 0.0
        %4751 = vmatpush1.msra.mxu0 0.0
        %4752 = vmatprep.subr.mxu0 0.0
        %4753 = vmatpush1.msra.mxu0 0.0
        %4754 = vmatprep.subr.mxu0 0.0
        %4755 = vmatpush1.msra.mxu0 0.0
        %4756 = vmatprep.subr.mxu0 0.0
        %4757 = vmatpush1.msra.mxu0 0.0
        %4758 = vmatprep.subr.mxu0 0.0
        %4759 = vmatpush1.msra.mxu0 0.0
        %4760 = vmatprep.subr.mxu0 0.0
        %4761 = vmatpush1.msra.mxu0 0.0
        %4762 = vmatprep.subr.mxu0 0.0
        %4763 = vmatpush1.msra.mxu0 0.0
        %4764 = vmatprep.subr.mxu0 0.0
        %4765 = vmatpush1.msra.mxu0 0.0
        %4766 = vmatprep.subr.mxu0 0.0
        %4767 = vmatpush1.msra.mxu0 0.0
        %4768 = vmatprep.mubr.f32.mxu0 0.0
        %4769 = vmatmul.mubr.f32.gmra.mrb[0].mxu0 %v4697
        %v4770 = vpop.f32.mrb[0].mxu0
        %v4771 = vadd.f32 0.0, %v4770
        %v4772 = vpop.f32.mrb[0].mxu0
        %4773 = vmatprep.mubr.f32.mxu0 0.0
        %4774 = vmatmul.mubr.f32.gmra.mrb[0].mxu0 %v4700
        %v4775 = vpop.f32.mrb[0].mxu0
        %v4776 = vadd.f32 0.0, %v4775
        %v4777 = vpop.f32.mrb[0].mxu0
        %4778 = vdwg.mxu0
        %4779 = vrot.lane.b32.xlu0 %v4499, 120
        %v4780 = vpop.permute.xlu0 %4779
        %4781 = vrot.lane.b32.xlu0 %v4504, 120
        %v4782 = vpop.permute.xlu0 %4781
        %4783 = vrot.lane.b32.xlu0 %v4583, 120
        %v4784 = vpop.permute.xlu0 %4783
        %v4785 = vsel %vm1689, %v4780, 0
        %v4787 = vsel %vm1689, %v4782, 0
        %v4789 = vsel %vm1689, %v4784, 0
        %4791 = vmatprep.subr.mxu0 0.0
        %4792 = vmatpush1.xpose.msra.mxu0 %v4789
        %4793 = vmatprep.subr.mxu0 0.0
        %4794 = vmatpush1.xpose.msra.mxu0 0.0
        %4795 = vmatprep.subr.mxu0 0.0
        %4796 = vmatpush1.xpose.msra.mxu0 0.0
        %4797 = vmatprep.subr.mxu0 0.0
        %4798 = vmatpush1.xpose.msra.mxu0 0.0
        %4799 = vmatprep.subr.mxu0 0.0
        %4800 = vmatpush1.xpose.msra.mxu0 0.0
        %4801 = vmatprep.subr.mxu0 0.0
        %4802 = vmatpush1.xpose.msra.mxu0 0.0
        %4803 = vmatprep.subr.mxu0 0.0
        %4804 = vmatpush1.xpose.msra.mxu0 0.0
        %4805 = vmatprep.subr.mxu0 0.0
        %4806 = vmatpush1.xpose.msra.mxu0 0.0
        %4807 = vmatprep.subr.mxu0 0.0
        %4808 = vmatpush1.xpose.msra.mxu0 0.0
        %4809 = vmatprep.subr.mxu0 0.0
        %4810 = vmatpush1.xpose.msra.mxu0 0.0
        %4811 = vmatprep.subr.mxu0 0.0
        %4812 = vmatpush1.xpose.msra.mxu0 0.0
        %4813 = vmatprep.subr.mxu0 0.0
        %4814 = vmatpush1.xpose.msra.mxu0 0.0
        %4815 = vmatprep.subr.mxu0 0.0
        %4816 = vmatpush1.xpose.msra.mxu0 0.0
        %4817 = vmatprep.subr.mxu0 0.0
        %4818 = vmatpush1.xpose.msra.mxu0 0.0
        %4819 = vmatprep.subr.mxu0 0.0
        %4820 = vmatpush1.xpose.msra.mxu0 0.0
        %4821 = vmatprep.subr.mxu0 0.0
        %4822 = vmatpush1.xpose.msra.mxu0 0.0
        %4823 = vmatprep.subr.mxu0 0.0
        %4824 = vmatpush1.xpose.msra.mxu0 0.0
        %4825 = vmatprep.subr.mxu0 0.0
        %4826 = vmatpush1.xpose.msra.mxu0 0.0
        %4827 = vmatprep.subr.mxu0 0.0
        %4828 = vmatpush1.xpose.msra.mxu0 0.0
        %4829 = vmatprep.subr.mxu0 0.0
        %4830 = vmatpush1.xpose.msra.mxu0 0.0
        %4831 = vmatprep.subr.mxu0 0.0
        %4832 = vmatpush1.xpose.msra.mxu0 0.0
        %4833 = vmatprep.subr.mxu0 0.0
        %4834 = vmatpush1.xpose.msra.mxu0 0.0
        %4835 = vmatprep.subr.mxu0 0.0
        %4836 = vmatpush1.xpose.msra.mxu0 0.0
        %4837 = vmatprep.subr.mxu0 0.0
        %4838 = vmatpush1.xpose.msra.mxu0 0.0
        %4839 = vmatprep.subr.mxu0 0.0
        %4840 = vmatpush1.xpose.msra.mxu0 0.0
        %4841 = vmatprep.subr.mxu0 0.0
        %4842 = vmatpush1.xpose.msra.mxu0 0.0
        %4843 = vmatprep.subr.mxu0 0.0
        %4844 = vmatpush1.xpose.msra.mxu0 0.0
        %4845 = vmatprep.subr.mxu0 0.0
        %4846 = vmatpush1.xpose.msra.mxu0 0.0
        %4847 = vmatprep.subr.mxu0 0.0
        %4848 = vmatpush1.xpose.msra.mxu0 0.0
        %4849 = vmatprep.subr.mxu0 0.0
        %4850 = vmatpush1.xpose.msra.mxu0 0.0
        %4851 = vmatprep.subr.mxu0 0.0
        %4852 = vmatpush1.xpose.msra.mxu0 0.0
        %4853 = vmatprep.subr.mxu0 0.0
        %4854 = vmatpush1.xpose.msra.mxu0 0.0
        %4855 = vmatprep.mubr.f32.mxu0 0.0
        %4856 = vmatmul.mubr.f32.gmra.mrb[0].mxu0 %v4785
        %v4857 = vpop.f32.mrb[0].mxu0
        %v4858 = vadd.f32 0.0, %v4857
        %v4859 = vpop.f32.mrb[0].mxu0
        %4860 = vmatprep.mubr.f32.mxu0 0.0
        %4861 = vmatmul.mubr.f32.gmra.mrb[0].mxu0 %v4787
        %v4862 = vpop.f32.mrb[0].mxu0
        %v4863 = vadd.f32 0.0, %v4862
        %v4864 = vpop.f32.mrb[0].mxu0
        %4865 = vdwg.mxu0
        %v4866 = vmul.f32 %v4858, 0.35355338
        %v4867 = vmul.f32 %v4863, 0.35355338
        %v4868 = vsel %vm1779, %v4866, -inf
        %4869 = vmax.xlane.f32.xlu0 %v4868
        %v4870 = vpop.xlane.xlu0 %4869
        %v4871 = vsel %vm1779, %v4867, -inf
        %4872 = vmax.xlane.f32.xlu0 %v4871
        %v4873 = vpop.xlane.xlu0 %4872
        %v4874 = vsub.f32 %v4866, %v4870
        %v4875 = vsub.f32 %v4867, %v4873
        %v4876 = vmul.f32 %v4874, 1.442695
        %v4877 = vpow.pop %v4876
        %v4878 = vmul.f32 %v4875, 1.442695
        %v4879 = vpow.pop %v4878
        %v4880 = vsel %vm1779, %v4877, 0.0
        %4881 = vadd.xlane.f32.xlu0 %v4880
        %v4882 = vpop.xlane.xlu0 %4881
        %v4883 = vsel %vm1779, %v4879, 0.0
        %4884 = vadd.xlane.f32.xlu0 %v4883
        %v4885 = vpop.xlane.xlu0 %4884
        %v4886 = vrcp.pop %v4882
        %v4887 = vrcp.pop %v4885
        %v4888 = vmul.f32 %v4877, %v4886
        %v4889 = vmul.f32 %v4879, %v4887
        %4890 = vrot.lane.b32.xlu0 %v4583, 88
        %v4891 = vpop.permute.xlu0 %4890
        %v4893 = vsel %vm1779, %v4888, 0
        %v4896 = vsel %vm1779, %v4889, 0
        %v4898 = vsel %vm1783, %v4891, 0
        %4900 = vmatprep.subr.mxu0 0.0
        %4901 = vmatpush1.msra.mxu0 %v4898
        %4902 = vmatprep.subr.mxu0 0.0
        %4903 = vmatpush1.msra.mxu0 0.0
        %4904 = vmatprep.subr.mxu0 0.0
        %4905 = vmatpush1.msra.mxu0 0.0
        %4906 = vmatprep.subr.mxu0 0.0
        %4907 = vmatpush1.msra.mxu0 0.0
        %4908 = vmatprep.subr.mxu0 0.0
        %4909 = vmatpush1.msra.mxu0 0.0
        %4910 = vmatprep.subr.mxu0 0.0
        %4911 = vmatpush1.msra.mxu0 0.0
        %4912 = vmatprep.subr.mxu0 0.0
        %4913 = vmatpush1.msra.mxu0 0.0
        %4914 = vmatprep.subr.mxu0 0.0
        %4915 = vmatpush1.msra.mxu0 0.0
        %4916 = vmatprep.subr.mxu0 0.0
        %4917 = vmatpush1.msra.mxu0 0.0
        %4918 = vmatprep.subr.mxu0 0.0
        %4919 = vmatpush1.msra.mxu0 0.0
        %4920 = vmatprep.subr.mxu0 0.0
        %4921 = vmatpush1.msra.mxu0 0.0
        %4922 = vmatprep.subr.mxu0 0.0
        %4923 = vmatpush1.msra.mxu0 0.0
        %4924 = vmatprep.subr.mxu0 0.0
        %4925 = vmatpush1.msra.mxu0 0.0
        %4926 = vmatprep.subr.mxu0 0.0
        %4927 = vmatpush1.msra.mxu0 0.0
        %4928 = vmatprep.subr.mxu0 0.0
        %4929 = vmatpush1.msra.mxu0 0.0
        %4930 = vmatprep.subr.mxu0 0.0
        %4931 = vmatpush1.msra.mxu0 0.0
        %4932 = vmatprep.subr.mxu0 0.0
        %4933 = vmatpush1.msra.mxu0 0.0
        %4934 = vmatprep.subr.mxu0 0.0
        %4935 = vmatpush1.msra.mxu0 0.0
        %4936 = vmatprep.subr.mxu0 0.0
        %4937 = vmatpush1.msra.mxu0 0.0
        %4938 = vmatprep.subr.mxu0 0.0
        %4939 = vmatpush1.msra.mxu0 0.0
        %4940 = vmatprep.subr.mxu0 0.0
        %4941 = vmatpush1.msra.mxu0 0.0
        %4942 = vmatprep.subr.mxu0 0.0
        %4943 = vmatpush1.msra.mxu0 0.0
        %4944 = vmatprep.subr.mxu0 0.0
        %4945 = vmatpush1.msra.mxu0 0.0
        %4946 = vmatprep.subr.mxu0 0.0
        %4947 = vmatpush1.msra.mxu0 0.0
        %4948 = vmatprep.subr.mxu0 0.0
        %4949 = vmatpush1.msra.mxu0 0.0
        %4950 = vmatprep.subr.mxu0 0.0
        %4951 = vmatpush1.msra.mxu0 0.0
        %4952 = vmatprep.subr.mxu0 0.0
        %4953 = vmatpush1.msra.mxu0 0.0
        %4954 = vmatprep.subr.mxu0 0.0
        %4955 = vmatpush1.msra.mxu0 0.0
        %4956 = vmatprep.subr.mxu0 0.0
        %4957 = vmatpush1.msra.mxu0 0.0
        %4958 = vmatprep.subr.mxu0 0.0
        %4959 = vmatpush1.msra.mxu0 0.0
        %4960 = vmatprep.subr.mxu0 0.0
        %4961 = vmatpush1.msra.mxu0 0.0
        %4962 = vmatprep.subr.mxu0 0.0
        %4963 = vmatpush1.msra.mxu0 0.0
        %4964 = vmatprep.mubr.f32.mxu0 0.0
        %4965 = vmatmul.mubr.f32.gmra.mrb[0].mxu0 %v4893
        %v4966 = vpop.f32.mrb[0].mxu0
        %v4967 = vadd.f32 0.0, %v4966
        %v4968 = vpop.f32.mrb[0].mxu0
        %4969 = vmatprep.mubr.f32.mxu0 0.0
        %4970 = vmatmul.mubr.f32.gmra.mrb[0].mxu0 %v4896
        %v4971 = vpop.f32.mrb[0].mxu0
        %v4972 = vadd.f32 0.0, %v4971
        %v4973 = vpop.f32.mrb[0].mxu0
        %4974 = vdwg.mxu0
        %v4976 = vsel %vm1689, %v4967, 0
        %v4979 = vsel %vm1689, %v4972, 0
        %4981 = vmatprep.subr.mxu0 0.0
        %4982 = vmatpush1.msra.mxu0 %v3106
        %4983 = vmatprep.subr.mxu0 0.0
        %4984 = vmatpush1.msra.mxu0 0.0
        %4985 = vmatprep.subr.mxu0 0.0
        %4986 = vmatpush1.msra.mxu0 0.0
        %4987 = vmatprep.subr.mxu0 0.0
        %4988 = vmatpush1.msra.mxu0 0.0
        %4989 = vmatprep.subr.mxu0 0.0
        %4990 = vmatpush1.msra.mxu0 0.0
        %4991 = vmatprep.subr.mxu0 0.0
        %4992 = vmatpush1.msra.mxu0 0.0
        %4993 = vmatprep.subr.mxu0 0.0
        %4994 = vmatpush1.msra.mxu0 0.0
        %4995 = vmatprep.subr.mxu0 0.0
        %4996 = vmatpush1.msra.mxu0 0.0
        %4997 = vmatprep.subr.mxu0 0.0
        %4998 = vmatpush1.msra.mxu0 0.0
        %4999 = vmatprep.subr.mxu0 0.0
        %5000 = vmatpush1.msra.mxu0 0.0
        %5001 = vmatprep.subr.mxu0 0.0
        %5002 = vmatpush1.msra.mxu0 0.0
        %5003 = vmatprep.subr.mxu0 0.0
        %5004 = vmatpush1.msra.mxu0 0.0
        %5005 = vmatprep.subr.mxu0 0.0
        %5006 = vmatpush1.msra.mxu0 0.0
        %5007 = vmatprep.subr.mxu0 0.0
        %5008 = vmatpush1.msra.mxu0 0.0
        %5009 = vmatprep.subr.mxu0 0.0
        %5010 = vmatpush1.msra.mxu0 0.0
        %5011 = vmatprep.subr.mxu0 0.0
        %5012 = vmatpush1.msra.mxu0 0.0
        %5013 = vmatprep.subr.mxu0 0.0
        %5014 = vmatpush1.msra.mxu0 0.0
        %5015 = vmatprep.subr.mxu0 0.0
        %5016 = vmatpush1.msra.mxu0 0.0
        %5017 = vmatprep.subr.mxu0 0.0
        %5018 = vmatpush1.msra.mxu0 0.0
        %5019 = vmatprep.subr.mxu0 0.0
        %5020 = vmatpush1.msra.mxu0 0.0
        %5021 = vmatprep.subr.mxu0 0.0
        %5022 = vmatpush1.msra.mxu0 0.0
        %5023 = vmatprep.subr.mxu0 0.0
        %5024 = vmatpush1.msra.mxu0 0.0
        %5025 = vmatprep.subr.mxu0 0.0
        %5026 = vmatpush1.msra.mxu0 0.0
        %5027 = vmatprep.subr.mxu0 0.0
        %5028 = vmatpush1.msra.mxu0 0.0
        %5029 = vmatprep.subr.mxu0 0.0
        %5030 = vmatpush1.msra.mxu0 0.0
        %5031 = vmatprep.subr.mxu0 0.0
        %5032 = vmatpush1.msra.mxu0 0.0
        %5033 = vmatprep.subr.mxu0 0.0
        %5034 = vmatpush1.msra.mxu0 0.0
        %5035 = vmatprep.subr.mxu0 0.0
        %5036 = vmatpush1.msra.mxu0 0.0
        %5037 = vmatprep.subr.mxu0 0.0
        %5038 = vmatpush1.msra.mxu0 0.0
        %5039 = vmatprep.subr.mxu0 0.0
        %5040 = vmatpush1.msra.mxu0 0.0
        %5041 = vmatprep.subr.mxu0 0.0
        %5042 = vmatpush1.msra.mxu0 0.0
        %5043 = vmatprep.subr.mxu0 0.0
        %5044 = vmatpush1.msra.mxu0 0.0
        %5045 = vmatprep.mubr.f32.mxu0 0.0
        %5046 = vmatmul.mubr.f32.gmra.mrb[0].mxu0 %v4976
        %v5047 = vpop.f32.mrb[0].mxu0
        %v5048 = vadd.f32 0.0, %v5047
        %v5049 = vpop.f32.mrb[0].mxu0
        %5050 = vmatprep.mubr.f32.mxu0 0.0
        %5051 = vmatmul.mubr.f32.gmra.mrb[0].mxu0 %v4979
        %v5052 = vpop.f32.mrb[0].mxu0
        %v5053 = vadd.f32 0.0, %v5052
        %v5054 = vpop.f32.mrb[0].mxu0
        %5055 = vdwg.mxu0
        %v5057 = vsel %vm1689, %v4771, 0
        %v5060 = vsel %vm1689, %v4776, 0
        %5062 = vmatprep.subr.mxu0 0.0
        %5063 = vmatpush1.msra.mxu0 %v3105
        %5064 = vmatprep.subr.mxu0 0.0
        %5065 = vmatpush1.msra.mxu0 0.0
        %5066 = vmatprep.subr.mxu0 0.0
        %5067 = vmatpush1.msra.mxu0 0.0
        %5068 = vmatprep.subr.mxu0 0.0
        %5069 = vmatpush1.msra.mxu0 0.0
        %5070 = vmatprep.subr.mxu0 0.0
        %5071 = vmatpush1.msra.mxu0 0.0
        %5072 = vmatprep.subr.mxu0 0.0
        %5073 = vmatpush1.msra.mxu0 0.0
        %5074 = vmatprep.subr.mxu0 0.0
        %5075 = vmatpush1.msra.mxu0 0.0
        %5076 = vmatprep.subr.mxu0 0.0
        %5077 = vmatpush1.msra.mxu0 0.0
        %5078 = vmatprep.subr.mxu0 0.0
        %5079 = vmatpush1.msra.mxu0 0.0
        %5080 = vmatprep.subr.mxu0 0.0
        %5081 = vmatpush1.msra.mxu0 0.0
        %5082 = vmatprep.subr.mxu0 0.0
        %5083 = vmatpush1.msra.mxu0 0.0
        %5084 = vmatprep.subr.mxu0 0.0
        %5085 = vmatpush1.msra.mxu0 0.0
        %5086 = vmatprep.subr.mxu0 0.0
        %5087 = vmatpush1.msra.mxu0 0.0
        %5088 = vmatprep.subr.mxu0 0.0
        %5089 = vmatpush1.msra.mxu0 0.0
        %5090 = vmatprep.subr.mxu0 0.0
        %5091 = vmatpush1.msra.mxu0 0.0
        %5092 = vmatprep.subr.mxu0 0.0
        %5093 = vmatpush1.msra.mxu0 0.0
        %5094 = vmatprep.subr.mxu0 0.0
        %5095 = vmatpush1.msra.mxu0 0.0
        %5096 = vmatprep.subr.mxu0 0.0
        %5097 = vmatpush1.msra.mxu0 0.0
        %5098 = vmatprep.subr.mxu0 0.0
        %5099 = vmatpush1.msra.mxu0 0.0
        %5100 = vmatprep.subr.mxu0 0.0
        %5101 = vmatpush1.msra.mxu0 0.0
        %5102 = vmatprep.subr.mxu0 0.0
        %5103 = vmatpush1.msra.mxu0 0.0
        %5104 = vmatprep.subr.mxu0 0.0
        %5105 = vmatpush1.msra.mxu0 0.0
        %5106 = vmatprep.subr.mxu0 0.0
        %5107 = vmatpush1.msra.mxu0 0.0
        %5108 = vmatprep.subr.mxu0 0.0
        %5109 = vmatpush1.msra.mxu0 0.0
        %5110 = vmatprep.subr.mxu0 0.0
        %5111 = vmatpush1.msra.mxu0 0.0
        %5112 = vmatprep.subr.mxu0 0.0
        %5113 = vmatpush1.msra.mxu0 0.0
        %5114 = vmatprep.subr.mxu0 0.0
        %5115 = vmatpush1.msra.mxu0 0.0
        %5116 = vmatprep.subr.mxu0 0.0
        %5117 = vmatpush1.msra.mxu0 0.0
        %5118 = vmatprep.subr.mxu0 0.0
        %5119 = vmatpush1.msra.mxu0 0.0
        %5120 = vmatprep.subr.mxu0 0.0
        %5121 = vmatpush1.msra.mxu0 0.0
        %5122 = vmatprep.subr.mxu0 0.0
        %5123 = vmatpush1.msra.mxu0 0.0
        %5124 = vmatprep.subr.mxu0 0.0
        %5125 = vmatpush1.msra.mxu0 0.0
        %5126 = vmatprep.mubr.f32.mxu0 0.0
        %5127 = vmatmul.mubr.f32.gmra.mrb[0].mxu0 %v5057
        %v5128 = vpop.f32.mrb[0].mxu0
        %v5129 = vadd.f32 %v5048, %v5128
        %v5130 = vpop.f32.mrb[0].mxu0
        %5131 = vmatprep.mubr.f32.mxu0 0.0
        %5132 = vmatmul.mubr.f32.gmra.mrb[0].mxu0 %v5060
        %v5133 = vpop.f32.mrb[0].mxu0
        %v5134 = vadd.f32 %v5053, %v5133
        %v5135 = vpop.f32.mrb[0].mxu0
        %5136 = vdwg.mxu0
        %5137 = vrot.lane.b32.xlu0 %v4499, 112
        %v5138 = vpop.permute.xlu0 %5137
        %5139 = vrot.lane.b32.xlu0 %v4504, 112
        %v5140 = vpop.permute.xlu0 %5139
        %5141 = vrot.lane.b32.xlu0 %v4583, 112
        %v5142 = vpop.permute.xlu0 %5141
        %v5143 = vsel %vm1689, %v5138, 0
        %v5145 = vsel %vm1689, %v5140, 0
        %v5147 = vsel %vm1689, %v5142, 0
        %5149 = vmatprep.subr.mxu0 0.0
        %5150 = vmatpush1.xpose.msra.mxu0 %v5147
        %5151 = vmatprep.subr.mxu0 0.0
        %5152 = vmatpush1.xpose.msra.mxu0 0.0
        %5153 = vmatprep.subr.mxu0 0.0
        %5154 = vmatpush1.xpose.msra.mxu0 0.0
        %5155 = vmatprep.subr.mxu0 0.0
        %5156 = vmatpush1.xpose.msra.mxu0 0.0
        %5157 = vmatprep.subr.mxu0 0.0
        %5158 = vmatpush1.xpose.msra.mxu0 0.0
        %5159 = vmatprep.subr.mxu0 0.0
        %5160 = vmatpush1.xpose.msra.mxu0 0.0
        %5161 = vmatprep.subr.mxu0 0.0
        %5162 = vmatpush1.xpose.msra.mxu0 0.0
        %5163 = vmatprep.subr.mxu0 0.0
        %5164 = vmatpush1.xpose.msra.mxu0 0.0
        %5165 = vmatprep.subr.mxu0 0.0
        %5166 = vmatpush1.xpose.msra.mxu0 0.0
        %5167 = vmatprep.subr.mxu0 0.0
        %5168 = vmatpush1.xpose.msra.mxu0 0.0
        %5169 = vmatprep.subr.mxu0 0.0
        %5170 = vmatpush1.xpose.msra.mxu0 0.0
        %5171 = vmatprep.subr.mxu0 0.0
        %5172 = vmatpush1.xpose.msra.mxu0 0.0
        %5173 = vmatprep.subr.mxu0 0.0
        %5174 = vmatpush1.xpose.msra.mxu0 0.0
        %5175 = vmatprep.subr.mxu0 0.0
        %5176 = vmatpush1.xpose.msra.mxu0 0.0
        %5177 = vmatprep.subr.mxu0 0.0
        %5178 = vmatpush1.xpose.msra.mxu0 0.0
        %5179 = vmatprep.subr.mxu0 0.0
        %5180 = vmatpush1.xpose.msra.mxu0 0.0
        %5181 = vmatprep.subr.mxu0 0.0
        %5182 = vmatpush1.xpose.msra.mxu0 0.0
        %5183 = vmatprep.subr.mxu0 0.0
        %5184 = vmatpush1.xpose.msra.mxu0 0.0
        %5185 = vmatprep.subr.mxu0 0.0
        %5186 = vmatpush1.xpose.msra.mxu0 0.0
        %5187 = vmatprep.subr.mxu0 0.0
        %5188 = vmatpush1.xpose.msra.mxu0 0.0
        %5189 = vmatprep.subr.mxu0 0.0
        %5190 = vmatpush1.xpose.msra.mxu0 0.0
        %5191 = vmatprep.subr.mxu0 0.0
        %5192 = vmatpush1.xpose.msra.mxu0 0.0
        %5193 = vmatprep.subr.mxu0 0.0
        %5194 = vmatpush1.xpose.msra.mxu0 0.0
        %5195 = vmatprep.subr.mxu0 0.0
        %5196 = vmatpush1.xpose.msra.mxu0 0.0
        %5197 = vmatprep.subr.mxu0 0.0
        %5198 = vmatpush1.xpose.msra.mxu0 0.0
        %5199 = vmatprep.subr.mxu0 0.0
        %5200 = vmatpush1.xpose.msra.mxu0 0.0
        %5201 = vmatprep.subr.mxu0 0.0
        %5202 = vmatpush1.xpose.msra.mxu0 0.0
        %5203 = vmatprep.subr.mxu0 0.0
        %5204 = vmatpush1.xpose.msra.mxu0 0.0
        %5205 = vmatprep.subr.mxu0 0.0
        %5206 = vmatpush1.xpose.msra.mxu0 0.0
        %5207 = vmatprep.subr.mxu0 0.0
        %5208 = vmatpush1.xpose.msra.mxu0 0.0
        %5209 = vmatprep.subr.mxu0 0.0
        %5210 = vmatpush1.xpose.msra.mxu0 0.0
        %5211 = vmatprep.subr.mxu0 0.0
        %5212 = vmatpush1.xpose.msra.mxu0 0.0
        %5213 = vmatprep.mubr.f32.mxu0 0.0
        %5214 = vmatmul.mubr.f32.gmra.mrb[0].mxu0 %v5143
        %v5215 = vpop.f32.mrb[0].mxu0
        %v5216 = vadd.f32 0.0, %v5215
        %v5217 = vpop.f32.mrb[0].mxu0
        %5218 = vmatprep.mubr.f32.mxu0 0.0
        %5219 = vmatmul.mubr.f32.gmra.mrb[0].mxu0 %v5145
        %v5220 = vpop.f32.mrb[0].mxu0
        %v5221 = vadd.f32 0.0, %v5220
        %v5222 = vpop.f32.mrb[0].mxu0
        %5223 = vdwg.mxu0
        %v5224 = vmul.f32 %v5216, 0.35355338
        %v5225 = vmul.f32 %v5221, 0.35355338
        %v5226 = vsel %vm1779, %v5224, -inf
        %5227 = vmax.xlane.f32.xlu0 %v5226
        %v5228 = vpop.xlane.xlu0 %5227
        %v5229 = vsel %vm1779, %v5225, -inf
        %5230 = vmax.xlane.f32.xlu0 %v5229
        %v5231 = vpop.xlane.xlu0 %5230
        %v5232 = vsub.f32 %v5224, %v5228
        %v5233 = vsub.f32 %v5225, %v5231
        %v5234 = vmul.f32 %v5232, 1.442695
        %v5235 = vpow.pop %v5234
        %v5236 = vmul.f32 %v5233, 1.442695
        %v5237 = vpow.pop %v5236
        %v5238 = vsel %vm1779, %v5235, 0.0
        %5239 = vadd.xlane.f32.xlu0 %v5238
        %v5240 = vpop.xlane.xlu0 %5239
        %v5241 = vsel %vm1779, %v5237, 0.0
        %5242 = vadd.xlane.f32.xlu0 %v5241
        %v5243 = vpop.xlane.xlu0 %5242
        %v5244 = vrcp.pop %v5240
        %v5245 = vrcp.pop %v5243
        %v5246 = vmul.f32 %v5235, %v5244
        %v5247 = vmul.f32 %v5237, %v5245
        %5248 = vrot.lane.b32.xlu0 %v4583, 80
        %v5249 = vpop.permute.xlu0 %5248
        %v5251 = vsel %vm1779, %v5246, 0
        %v5254 = vsel %vm1779, %v5247, 0
        %v5256 = vsel %vm1783, %v5249, 0
        %5258 = vmatprep.subr.mxu0 0.0
        %5259 = vmatpush1.msra.mxu0 %v5256
        %5260 = vmatprep.subr.mxu0 0.0
        %5261 = vmatpush1.msra.mxu0 0.0
        %5262 = vmatprep.subr.mxu0 0.0
        %5263 = vmatpush1.msra.mxu0 0.0
        %5264 = vmatprep.subr.mxu0 0.0
        %5265 = vmatpush1.msra.mxu0 0.0
        %5266 = vmatprep.subr.mxu0 0.0
        %5267 = vmatpush1.msra.mxu0 0.0
        %5268 = vmatprep.subr.mxu0 0.0
        %5269 = vmatpush1.msra.mxu0 0.0
        %5270 = vmatprep.subr.mxu0 0.0
        %5271 = vmatpush1.msra.mxu0 0.0
        %5272 = vmatprep.subr.mxu0 0.0
        %5273 = vmatpush1.msra.mxu0 0.0
        %5274 = vmatprep.subr.mxu0 0.0
        %5275 = vmatpush1.msra.mxu0 0.0
        %5276 = vmatprep.subr.mxu0 0.0
        %5277 = vmatpush1.msra.mxu0 0.0
        %5278 = vmatprep.subr.mxu0 0.0
        %5279 = vmatpush1.msra.mxu0 0.0
        %5280 = vmatprep.subr.mxu0 0.0
        %5281 = vmatpush1.msra.mxu0 0.0
        %5282 = vmatprep.subr.mxu0 0.0
        %5283 = vmatpush1.msra.mxu0 0.0
        %5284 = vmatprep.subr.mxu0 0.0
        %5285 = vmatpush1.msra.mxu0 0.0
        %5286 = vmatprep.subr.mxu0 0.0
        %5287 = vmatpush1.msra.mxu0 0.0
        %5288 = vmatprep.subr.mxu0 0.0
        %5289 = vmatpush1.msra.mxu0 0.0
        %5290 = vmatprep.subr.mxu0 0.0
        %5291 = vmatpush1.msra.mxu0 0.0
        %5292 = vmatprep.subr.mxu0 0.0
        %5293 = vmatpush1.msra.mxu0 0.0
        %5294 = vmatprep.subr.mxu0 0.0
        %5295 = vmatpush1.msra.mxu0 0.0
        %5296 = vmatprep.subr.mxu0 0.0
        %5297 = vmatpush1.msra.mxu0 0.0
        %5298 = vmatprep.subr.mxu0 0.0
        %5299 = vmatpush1.msra.mxu0 0.0
        %5300 = vmatprep.subr.mxu0 0.0
        %5301 = vmatpush1.msra.mxu0 0.0
        %5302 = vmatprep.subr.mxu0 0.0
        %5303 = vmatpush1.msra.mxu0 0.0
        %5304 = vmatprep.subr.mxu0 0.0
        %5305 = vmatpush1.msra.mxu0 0.0
        %5306 = vmatprep.subr.mxu0 0.0
        %5307 = vmatpush1.msra.mxu0 0.0
        %5308 = vmatprep.subr.mxu0 0.0
        %5309 = vmatpush1.msra.mxu0 0.0
        %5310 = vmatprep.subr.mxu0 0.0
        %5311 = vmatpush1.msra.mxu0 0.0
        %5312 = vmatprep.subr.mxu0 0.0
        %5313 = vmatpush1.msra.mxu0 0.0
        %5314 = vmatprep.subr.mxu0 0.0
        %5315 = vmatpush1.msra.mxu0 0.0
        %5316 = vmatprep.subr.mxu0 0.0
        %5317 = vmatpush1.msra.mxu0 0.0
        %5318 = vmatprep.subr.mxu0 0.0
        %5319 = vmatpush1.msra.mxu0 0.0
        %5320 = vmatprep.subr.mxu0 0.0
        %5321 = vmatpush1.msra.mxu0 0.0
        %5322 = vmatprep.mubr.f32.mxu0 0.0
        %5323 = vmatmul.mubr.f32.gmra.mrb[0].mxu0 %v5251
        %v5324 = vpop.f32.mrb[0].mxu0
        %v5325 = vadd.f32 0.0, %v5324
        %v5326 = vpop.f32.mrb[0].mxu0
        %5327 = vmatprep.mubr.f32.mxu0 0.0
        %5328 = vmatmul.mubr.f32.gmra.mrb[0].mxu0 %v5254
        %v5329 = vpop.f32.mrb[0].mxu0
        %v5330 = vadd.f32 0.0, %v5329
        %v5331 = vpop.f32.mrb[0].mxu0
        %5332 = vdwg.mxu0
        %v5334 = vsel %vm1689, %v5325, 0
        %v5337 = vsel %vm1689, %v5330, 0
        %5339 = vmatprep.subr.mxu0 0.0
        %5340 = vmatpush1.msra.mxu0 %v3107
        %5341 = vmatprep.subr.mxu0 0.0
        %5342 = vmatpush1.msra.mxu0 0.0
        %5343 = vmatprep.subr.mxu0 0.0
        %5344 = vmatpush1.msra.mxu0 0.0
        %5345 = vmatprep.subr.mxu0 0.0
        %5346 = vmatpush1.msra.mxu0 0.0
        %5347 = vmatprep.subr.mxu0 0.0
        %5348 = vmatpush1.msra.mxu0 0.0
        %5349 = vmatprep.subr.mxu0 0.0
        %5350 = vmatpush1.msra.mxu0 0.0
        %5351 = vmatprep.subr.mxu0 0.0
        %5352 = vmatpush1.msra.mxu0 0.0
        %5353 = vmatprep.subr.mxu0 0.0
        %5354 = vmatpush1.msra.mxu0 0.0
        %5355 = vmatprep.subr.mxu0 0.0
        %5356 = vmatpush1.msra.mxu0 0.0
        %5357 = vmatprep.subr.mxu0 0.0
        %5358 = vmatpush1.msra.mxu0 0.0
        %5359 = vmatprep.subr.mxu0 0.0
        %5360 = vmatpush1.msra.mxu0 0.0
        %5361 = vmatprep.subr.mxu0 0.0
        %5362 = vmatpush1.msra.mxu0 0.0
        %5363 = vmatprep.subr.mxu0 0.0
        %5364 = vmatpush1.msra.mxu0 0.0
        %5365 = vmatprep.subr.mxu0 0.0
        %5366 = vmatpush1.msra.mxu0 0.0
        %5367 = vmatprep.subr.mxu0 0.0
        %5368 = vmatpush1.msra.mxu0 0.0
        %5369 = vmatprep.subr.mxu0 0.0
        %5370 = vmatpush1.msra.mxu0 0.0
        %5371 = vmatprep.subr.mxu0 0.0
        %5372 = vmatpush1.msra.mxu0 0.0
        %5373 = vmatprep.subr.mxu0 0.0
        %5374 = vmatpush1.msra.mxu0 0.0
        %5375 = vmatprep.subr.mxu0 0.0
        %5376 = vmatpush1.msra.mxu0 0.0
        %5377 = vmatprep.subr.mxu0 0.0
        %5378 = vmatpush1.msra.mxu0 0.0
        %5379 = vmatprep.subr.mxu0 0.0
        %5380 = vmatpush1.msra.mxu0 0.0
        %5381 = vmatprep.subr.mxu0 0.0
        %5382 = vmatpush1.msra.mxu0 0.0
        %5383 = vmatprep.subr.mxu0 0.0
        %5384 = vmatpush1.msra.mxu0 0.0
        %5385 = vmatprep.subr.mxu0 0.0
        %5386 = vmatpush1.msra.mxu0 0.0
        %5387 = vmatprep.subr.mxu0 0.0
        %5388 = vmatpush1.msra.mxu0 0.0
        %5389 = vmatprep.subr.mxu0 0.0
        %5390 = vmatpush1.msra.mxu0 0.0
        %5391 = vmatprep.subr.mxu0 0.0
        %5392 = vmatpush1.msra.mxu0 0.0
        %5393 = vmatprep.subr.mxu0 0.0
        %5394 = vmatpush1.msra.mxu0 0.0
        %5395 = vmatprep.subr.mxu0 0.0
        %5396 = vmatpush1.msra.mxu0 0.0
        %5397 = vmatprep.subr.mxu0 0.0
        %5398 = vmatpush1.msra.mxu0 0.0
        %5399 = vmatprep.subr.mxu0 0.0
        %5400 = vmatpush1.msra.mxu0 0.0
        %5401 = vmatprep.subr.mxu0 0.0
        %5402 = vmatpush1.msra.mxu0 0.0
        %5403 = vmatprep.mubr.f32.mxu0 0.0
        %5404 = vmatmul.mubr.f32.gmra.mrb[0].mxu0 %v5334
        %v5405 = vpop.f32.mrb[0].mxu0
        %v5406 = vadd.f32 0.0, %v5405
        %v5407 = vpop.f32.mrb[0].mxu0
        %5408 = vmatprep.mubr.f32.mxu0 0.0
        %5409 = vmatmul.mubr.f32.gmra.mrb[0].mxu0 %v5337
        %v5410 = vpop.f32.mrb[0].mxu0
        %v5411 = vadd.f32 0.0, %v5410
        %v5412 = vpop.f32.mrb[0].mxu0
        %5413 = vdwg.mxu0
        %v5414 = vadd.f32 %v5129, %v5406
        %v5415 = vadd.f32 %v5134, %v5411
        %5416 = vrot.lane.b32.xlu0 %v4499, 104
        %v5417 = vpop.permute.xlu0 %5416
        %5418 = vrot.lane.b32.xlu0 %v4504, 104
        %v5419 = vpop.permute.xlu0 %5418
        %5420 = vrot.lane.b32.xlu0 %v4583, 104
        %v5421 = vpop.permute.xlu0 %5420
        %v5422 = vsel %vm1689, %v5417, 0
        %v5424 = vsel %vm1689, %v5419, 0
        %v5426 = vsel %vm1689, %v5421, 0
        %5428 = vmatprep.subr.mxu0 0.0
        %5429 = vmatpush1.xpose.msra.mxu0 %v5426
        %5430 = vmatprep.subr.mxu0 0.0
        %5431 = vmatpush1.xpose.msra.mxu0 0.0
        %5432 = vmatprep.subr.mxu0 0.0
        %5433 = vmatpush1.xpose.msra.mxu0 0.0
        %5434 = vmatprep.subr.mxu0 0.0
        %5435 = vmatpush1.xpose.msra.mxu0 0.0
        %5436 = vmatprep.subr.mxu0 0.0
        %5437 = vmatpush1.xpose.msra.mxu0 0.0
        %5438 = vmatprep.subr.mxu0 0.0
        %5439 = vmatpush1.xpose.msra.mxu0 0.0
        %5440 = vmatprep.subr.mxu0 0.0
        %5441 = vmatpush1.xpose.msra.mxu0 0.0
        %5442 = vmatprep.subr.mxu0 0.0
        %5443 = vmatpush1.xpose.msra.mxu0 0.0
        %5444 = vmatprep.subr.mxu0 0.0
        %5445 = vmatpush1.xpose.msra.mxu0 0.0
        %5446 = vmatprep.subr.mxu0 0.0
        %5447 = vmatpush1.xpose.msra.mxu0 0.0
        %5448 = vmatprep.subr.mxu0 0.0
        %5449 = vmatpush1.xpose.msra.mxu0 0.0
        %5450 = vmatprep.subr.mxu0 0.0
        %5451 = vmatpush1.xpose.msra.mxu0 0.0
        %5452 = vmatprep.subr.mxu0 0.0
        %5453 = vmatpush1.xpose.msra.mxu0 0.0
        %5454 = vmatprep.subr.mxu0 0.0
        %5455 = vmatpush1.xpose.msra.mxu0 0.0
        %5456 = vmatprep.subr.mxu0 0.0
        %5457 = vmatpush1.xpose.msra.mxu0 0.0
        %5458 = vmatprep.subr.mxu0 0.0
        %5459 = vmatpush1.xpose.msra.mxu0 0.0
        %5460 = vmatprep.subr.mxu0 0.0
        %5461 = vmatpush1.xpose.msra.mxu0 0.0
        %5462 = vmatprep.subr.mxu0 0.0
        %5463 = vmatpush1.xpose.msra.mxu0 0.0
        %5464 = vmatprep.subr.mxu0 0.0
        %5465 = vmatpush1.xpose.msra.mxu0 0.0
        %5466 = vmatprep.subr.mxu0 0.0
        %5467 = vmatpush1.xpose.msra.mxu0 0.0
        %5468 = vmatprep.subr.mxu0 0.0
        %5469 = vmatpush1.xpose.msra.mxu0 0.0
        %5470 = vmatprep.subr.mxu0 0.0
        %5471 = vmatpush1.xpose.msra.mxu0 0.0
        %5472 = vmatprep.subr.mxu0 0.0
        %5473 = vmatpush1.xpose.msra.mxu0 0.0
        %5474 = vmatprep.subr.mxu0 0.0
        %5475 = vmatpush1.xpose.msra.mxu0 0.0
        %5476 = vmatprep.subr.mxu0 0.0
        %5477 = vmatpush1.xpose.msra.mxu0 0.0
        %5478 = vmatprep.subr.mxu0 0.0
        %5479 = vmatpush1.xpose.msra.mxu0 0.0
        %5480 = vmatprep.subr.mxu0 0.0
        %5481 = vmatpush1.xpose.msra.mxu0 0.0
        %5482 = vmatprep.subr.mxu0 0.0
        %5483 = vmatpush1.xpose.msra.mxu0 0.0
        %5484 = vmatprep.subr.mxu0 0.0
        %5485 = vmatpush1.xpose.msra.mxu0 0.0
        %5486 = vmatprep.subr.mxu0 0.0
        %5487 = vmatpush1.xpose.msra.mxu0 0.0
        %5488 = vmatprep.subr.mxu0 0.0
        %5489 = vmatpush1.xpose.msra.mxu0 0.0
        %5490 = vmatprep.subr.mxu0 0.0
        %5491 = vmatpush1.xpose.msra.mxu0 0.0
        %5492 = vmatprep.mubr.f32.mxu0 0.0
        %5493 = vmatmul.mubr.f32.gmra.mrb[0].mxu0 %v5422
        %v5494 = vpop.f32.mrb[0].mxu0
        %v5495 = vadd.f32 0.0, %v5494
        %v5496 = vpop.f32.mrb[0].mxu0
        %5497 = vmatprep.mubr.f32.mxu0 0.0
        %5498 = vmatmul.mubr.f32.gmra.mrb[0].mxu0 %v5424
        %v5499 = vpop.f32.mrb[0].mxu0
        %v5500 = vadd.f32 0.0, %v5499
        %v5501 = vpop.f32.mrb[0].mxu0
        %5502 = vdwg.mxu0
        %v5503 = vmul.f32 %v5495, 0.35355338
        %v5504 = vmul.f32 %v5500, 0.35355338
        %v5505 = vsel %vm1779, %v5503, -inf
        %5506 = vmax.xlane.f32.xlu0 %v5505
        %v5507 = vpop.xlane.xlu0 %5506
        %v5508 = vsel %vm1779, %v5504, -inf
        %5509 = vmax.xlane.f32.xlu0 %v5508
        %v5510 = vpop.xlane.xlu0 %5509
        %v5511 = vsub.f32 %v5503, %v5507
        %v5512 = vsub.f32 %v5504, %v5510
        %v5513 = vmul.f32 %v5511, 1.442695
        %v5514 = vpow.pop %v5513
        %v5515 = vmul.f32 %v5512, 1.442695
        %v5516 = vpow.pop %v5515
        %v5517 = vsel %vm1779, %v5514, 0.0
        %5518 = vadd.xlane.f32.xlu0 %v5517
        %v5519 = vpop.xlane.xlu0 %5518
        %v5520 = vsel %vm1779, %v5516, 0.0
        %5521 = vadd.xlane.f32.xlu0 %v5520
        %v5522 = vpop.xlane.xlu0 %5521
        %v5523 = vrcp.pop %v5519
        %v5524 = vrcp.pop %v5522
        %v5525 = vmul.f32 %v5514, %v5523
        %v5526 = vmul.f32 %v5516, %v5524
        %5527 = vrot.lane.b32.xlu0 %v4583, 72
        %v5528 = vpop.permute.xlu0 %5527
        %v5530 = vsel %vm1779, %v5525, 0
        %v5533 = vsel %vm1779, %v5526, 0
        %v5535 = vsel %vm1783, %v5528, 0
        %5537 = vmatprep.subr.mxu0 0.0
        %5538 = vmatpush1.msra.mxu0 %v5535
        %5539 = vmatprep.subr.mxu0 0.0
        %5540 = vmatpush1.msra.mxu0 0.0
        %5541 = vmatprep.subr.mxu0 0.0
        %5542 = vmatpush1.msra.mxu0 0.0
        %5543 = vmatprep.subr.mxu0 0.0
        %5544 = vmatpush1.msra.mxu0 0.0
        %5545 = vmatprep.subr.mxu0 0.0
        %5546 = vmatpush1.msra.mxu0 0.0
        %5547 = vmatprep.subr.mxu0 0.0
        %5548 = vmatpush1.msra.mxu0 0.0
        %5549 = vmatprep.subr.mxu0 0.0
        %5550 = vmatpush1.msra.mxu0 0.0
        %5551 = vmatprep.subr.mxu0 0.0
        %5552 = vmatpush1.msra.mxu0 0.0
        %5553 = vmatprep.subr.mxu0 0.0
        %5554 = vmatpush1.msra.mxu0 0.0
        %5555 = vmatprep.subr.mxu0 0.0
        %5556 = vmatpush1.msra.mxu0 0.0
        %5557 = vmatprep.subr.mxu0 0.0
        %5558 = vmatpush1.msra.mxu0 0.0
        %5559 = vmatprep.subr.mxu0 0.0
        %5560 = vmatpush1.msra.mxu0 0.0
        %5561 = vmatprep.subr.mxu0 0.0
        %5562 = vmatpush1.msra.mxu0 0.0
        %5563 = vmatprep.subr.mxu0 0.0
        %5564 = vmatpush1.msra.mxu0 0.0
        %5565 = vmatprep.subr.mxu0 0.0
        %5566 = vmatpush1.msra.mxu0 0.0
        %5567 = vmatprep.subr.mxu0 0.0
        %5568 = vmatpush1.msra.mxu0 0.0
        %5569 = vmatprep.subr.mxu0 0.0
        %5570 = vmatpush1.msra.mxu0 0.0
        %5571 = vmatprep.subr.mxu0 0.0
        %5572 = vmatpush1.msra.mxu0 0.0
        %5573 = vmatprep.subr.mxu0 0.0
        %5574 = vmatpush1.msra.mxu0 0.0
        %5575 = vmatprep.subr.mxu0 0.0
        %5576 = vmatpush1.msra.mxu0 0.0
        %5577 = vmatprep.subr.mxu0 0.0
        %5578 = vmatpush1.msra.mxu0 0.0
        %5579 = vmatprep.subr.mxu0 0.0
        %5580 = vmatpush1.msra.mxu0 0.0
        %5581 = vmatprep.subr.mxu0 0.0
        %5582 = vmatpush1.msra.mxu0 0.0
        %5583 = vmatprep.subr.mxu0 0.0
        %5584 = vmatpush1.msra.mxu0 0.0
        %5585 = vmatprep.subr.mxu0 0.0
        %5586 = vmatpush1.msra.mxu0 0.0
        %5587 = vmatprep.subr.mxu0 0.0
        %5588 = vmatpush1.msra.mxu0 0.0
        %5589 = vmatprep.subr.mxu0 0.0
        %5590 = vmatpush1.msra.mxu0 0.0
        %5591 = vmatprep.subr.mxu0 0.0
        %5592 = vmatpush1.msra.mxu0 0.0
        %5593 = vmatprep.subr.mxu0 0.0
        %5594 = vmatpush1.msra.mxu0 0.0
        %5595 = vmatprep.subr.mxu0 0.0
        %5596 = vmatpush1.msra.mxu0 0.0
        %5597 = vmatprep.subr.mxu0 0.0
        %5598 = vmatpush1.msra.mxu0 0.0
        %5599 = vmatprep.subr.mxu0 0.0
        %5600 = vmatpush1.msra.mxu0 0.0
        %5601 = vmatprep.mubr.f32.mxu0 0.0
        %5602 = vmatmul.mubr.f32.gmra.mrb[0].mxu0 %v5530
        %v5603 = vpop.f32.mrb[0].mxu0
        %v5604 = vadd.f32 0.0, %v5603
        %v5605 = vpop.f32.mrb[0].mxu0
        %5606 = vmatprep.mubr.f32.mxu0 0.0
        %5607 = vmatmul.mubr.f32.gmra.mrb[0].mxu0 %v5533
        %v5608 = vpop.f32.mrb[0].mxu0
        %v5609 = vadd.f32 0.0, %v5608
        %v5610 = vpop.f32.mrb[0].mxu0
        %5611 = vdwg.mxu0
        %v5613 = vsel %vm1689, %v5604, 0
        %v5616 = vsel %vm1689, %v5609, 0
        %5618 = vmatprep.subr.mxu0 0.0
        %5619 = vmatpush1.msra.mxu0 %v3108
        %5620 = vmatprep.subr.mxu0 0.0
        %5621 = vmatpush1.msra.mxu0 0.0
        %5622 = vmatprep.subr.mxu0 0.0
        %5623 = vmatpush1.msra.mxu0 0.0
        %5624 = vmatprep.subr.mxu0 0.0
        %5625 = vmatpush1.msra.mxu0 0.0
        %5626 = vmatprep.subr.mxu0 0.0
        %5627 = vmatpush1.msra.mxu0 0.0
        %5628 = vmatprep.subr.mxu0 0.0
        %5629 = vmatpush1.msra.mxu0 0.0
        %5630 = vmatprep.subr.mxu0 0.0
        %5631 = vmatpush1.msra.mxu0 0.0
        %5632 = vmatprep.subr.mxu0 0.0
        %5633 = vmatpush1.msra.mxu0 0.0
        %5634 = vmatprep.subr.mxu0 0.0
        %5635 = vmatpush1.msra.mxu0 0.0
        %5636 = vmatprep.subr.mxu0 0.0
        %5637 = vmatpush1.msra.mxu0 0.0
        %5638 = vmatprep.subr.mxu0 0.0
        %5639 = vmatpush1.msra.mxu0 0.0
        %5640 = vmatprep.subr.mxu0 0.0
        %5641 = vmatpush1.msra.mxu0 0.0
        %5642 = vmatprep.subr.mxu0 0.0
        %5643 = vmatpush1.msra.mxu0 0.0
        %5644 = vmatprep.subr.mxu0 0.0
        %5645 = vmatpush1.msra.mxu0 0.0
        %5646 = vmatprep.subr.mxu0 0.0
        %5647 = vmatpush1.msra.mxu0 0.0
        %5648 = vmatprep.subr.mxu0 0.0
        %5649 = vmatpush1.msra.mxu0 0.0
        %5650 = vmatprep.subr.mxu0 0.0
        %5651 = vmatpush1.msra.mxu0 0.0
        %5652 = vmatprep.subr.mxu0 0.0
        %5653 = vmatpush1.msra.mxu0 0.0
        %5654 = vmatprep.subr.mxu0 0.0
        %5655 = vmatpush1.msra.mxu0 0.0
        %5656 = vmatprep.subr.mxu0 0.0
        %5657 = vmatpush1.msra.mxu0 0.0
        %5658 = vmatprep.subr.mxu0 0.0
        %5659 = vmatpush1.msra.mxu0 0.0
        %5660 = vmatprep.subr.mxu0 0.0
        %5661 = vmatpush1.msra.mxu0 0.0
        %5662 = vmatprep.subr.mxu0 0.0
        %5663 = vmatpush1.msra.mxu0 0.0
        %5664 = vmatprep.subr.mxu0 0.0
        %5665 = vmatpush1.msra.mxu0 0.0
        %5666 = vmatprep.subr.mxu0 0.0
        %5667 = vmatpush1.msra.mxu0 0.0
        %5668 = vmatprep.subr.mxu0 0.0
        %5669 = vmatpush1.msra.mxu0 0.0
        %5670 = vmatprep.subr.mxu0 0.0
        %5671 = vmatpush1.msra.mxu0 0.0
        %5672 = vmatprep.subr.mxu0 0.0
        %5673 = vmatpush1.msra.mxu0 0.0
        %5674 = vmatprep.subr.mxu0 0.0
        %5675 = vmatpush1.msra.mxu0 0.0
        %5676 = vmatprep.subr.mxu0 0.0
        %5677 = vmatpush1.msra.mxu0 0.0
        %5678 = vmatprep.subr.mxu0 0.0
        %5679 = vmatpush1.msra.mxu0 0.0
        %5680 = vmatprep.subr.mxu0 0.0
        %5681 = vmatpush1.msra.mxu0 0.0
        %5682 = vmatprep.mubr.f32.mxu0 0.0
        %5683 = vmatmul.mubr.f32.gmra.mrb[0].mxu0 %v5613
        %v5684 = vpop.f32.mrb[0].mxu0
        %v5685 = vadd.f32 0.0, %v5684
        %v5686 = vpop.f32.mrb[0].mxu0
        %5687 = vmatprep.mubr.f32.mxu0 0.0
        %5688 = vmatmul.mubr.f32.gmra.mrb[0].mxu0 %v5616
        %v5689 = vpop.f32.mrb[0].mxu0
        %v5690 = vadd.f32 0.0, %v5689
        %v5691 = vpop.f32.mrb[0].mxu0
        %5692 = vdwg.mxu0
        %v5693 = vadd.f32 %v5414, %v5685
        %v5694 = vadd.f32 %v5415, %v5690
        %v5696 = vlaneseq
        %v5697 = vshrl.u32 %v5696, 7
        %v5698 = vsub.s32 0, %v5697
        %v5699 = vrot.slane %v3109, %v5698
        %v5701 = vadd.f32 %v5693, %v5699
        %v5702 = vadd.f32 %v5694, %v5699
        %v5703 = vadd.f32 %v4418, %v5701
        %v5704 = vadd.f32 %v4419, %v5702
        %v5705 = vsel %vm1612, %v5703, 0.0
        %5706 = vadd.xlane.f32.xlu0 %v5705
        %v5707 = vpop.xlane.xlu0 %5706
        %v5708 = vsel %vm1612, %v5704, 0.0
        %5709 = vadd.xlane.f32.xlu0 %v5708
        %v5710 = vpop.xlane.xlu0 %5709
        %v5711 = vmul.f32 %v5707, %v2663
        %v5712 = vmul.f32 %v5710, %v2663
        %v5713 = vsub.f32 %v5703, %v5711
        %v5714 = vsub.f32 %v5704, %v5712
        %v5715 = vmul.f32 %v5713, %v5713
        %v5716 = vmul.f32 %v5714, %v5714
        %v5717 = vsel %vm1612, %v5715, 0.0
        %5718 = vadd.xlane.f32.xlu0 %v5717
        %v5719 = vpop.xlane.xlu0 %5718
        %v5720 = vsel %vm1612, %v5716, 0.0
        %5721 = vadd.xlane.f32.xlu0 %v5720
        %v5722 = vpop.xlane.xlu0 %5721
        %v5723 = vmul.f32 %v5719, %v2663
        %v5724 = vmul.f32 %v5722, %v2663
        %v5725 = vadd.f32 %v5723, 1e-05
        %v5726 = vadd.f32 %v5724, 1e-05
        %v5727 = vrsqrt.pop %v5725
        %v5728 = vrsqrt.pop %v5726
        %v5729 = vmul.f32 %v5713, %v5727
        %v5730 = vmul.f32 %v5714, %v5728
        %v5732 = vlaneseq
        %v5733 = vshrl.u32 %v5732, 7
        %v5734 = vsub.s32 0, %v5733
        %v5735 = vrot.slane %v3126, %v5734
        %v5737 = vmul.f32 %v5729, %v5735
        %v5738 = vmul.f32 %v5730, %v5735
        %v5740 = vlaneseq
        %v5741 = vshrl.u32 %v5740, 7
        %v5742 = vsub.s32 0, %v5741
        %v5743 = vrot.slane %v3127, %v5742
        %v5745 = vadd.f32 %v5737, %v5743
        %v5746 = vadd.f32 %v5738, %v5743
        %v5748 = vlaneseq
        %v5749 = vshrl.u32 %v5748, 7
        %v5750 = vsub.s32 0, %v5749
        %v5751 = vrot.slane %v3114, %v5750
        %v5754 = vsel %vm1612, %v5745, 0
        %v5757 = vsel %vm1612, %v5746, 0
        %5759 = vmatprep.subr.mxu0 0.0
        %5760 = vmatpush1.msra.mxu0 %v3110
        %5761 = vmatprep.subr.mxu0 0.0
        %5762 = vmatpush1.msra.mxu0 %v3111
        %5763 = vmatprep.subr.mxu0 0.0
        %5764 = vmatpush1.msra.mxu0 %v3112
        %5765 = vmatprep.subr.mxu0 0.0
        %5766 = vmatpush1.msra.mxu0 %v3113
        %5767 = vmatprep.subr.mxu0 0.0
        %5768 = vmatpush1.msra.mxu0 0.0
        %5769 = vmatprep.subr.mxu0 0.0
        %5770 = vmatpush1.msra.mxu0 0.0
        %5771 = vmatprep.subr.mxu0 0.0
        %5772 = vmatpush1.msra.mxu0 0.0
        %5773 = vmatprep.subr.mxu0 0.0
        %5774 = vmatpush1.msra.mxu0 0.0
        %5775 = vmatprep.subr.mxu0 0.0
        %5776 = vmatpush1.msra.mxu0 0.0
        %5777 = vmatprep.subr.mxu0 0.0
        %5778 = vmatpush1.msra.mxu0 0.0
        %5779 = vmatprep.subr.mxu0 0.0
        %5780 = vmatpush1.msra.mxu0 0.0
        %5781 = vmatprep.subr.mxu0 0.0
        %5782 = vmatpush1.msra.mxu0 0.0
        %5783 = vmatprep.subr.mxu0 0.0
        %5784 = vmatpush1.msra.mxu0 0.0
        %5785 = vmatprep.subr.mxu0 0.0
        %5786 = vmatpush1.msra.mxu0 0.0
        %5787 = vmatprep.subr.mxu0 0.0
        %5788 = vmatpush1.msra.mxu0 0.0
        %5789 = vmatprep.subr.mxu0 0.0
        %5790 = vmatpush1.msra.mxu0 0.0
        %5791 = vmatprep.subr.mxu0 0.0
        %5792 = vmatpush1.msra.mxu0 0.0
        %5793 = vmatprep.subr.mxu0 0.0
        %5794 = vmatpush1.msra.mxu0 0.0
        %5795 = vmatprep.subr.mxu0 0.0
        %5796 = vmatpush1.msra.mxu0 0.0
        %5797 = vmatprep.subr.mxu0 0.0
        %5798 = vmatpush1.msra.mxu0 0.0
        %5799 = vmatprep.subr.mxu0 0.0
        %5800 = vmatpush1.msra.mxu0 0.0
        %5801 = vmatprep.subr.mxu0 0.0
        %5802 = vmatpush1.msra.mxu0 0.0
        %5803 = vmatprep.subr.mxu0 0.0
        %5804 = vmatpush1.msra.mxu0 0.0
        %5805 = vmatprep.subr.mxu0 0.0
        %5806 = vmatpush1.msra.mxu0 0.0
        %5807 = vmatprep.subr.mxu0 0.0
        %5808 = vmatpush1.msra.mxu0 0.0
        %5809 = vmatprep.subr.mxu0 0.0
        %5810 = vmatpush1.msra.mxu0 0.0
        %5811 = vmatprep.subr.mxu0 0.0
        %5812 = vmatpush1.msra.mxu0 0.0
        %5813 = vmatprep.subr.mxu0 0.0
        %5814 = vmatpush1.msra.mxu0 0.0
        %5815 = vmatprep.subr.mxu0 0.0
        %5816 = vmatpush1.msra.mxu0 0.0
        %5817 = vmatprep.subr.mxu0 0.0
        %5818 = vmatpush1.msra.mxu0 0.0
        %5819 = vmatprep.subr.mxu0 0.0
        %5820 = vmatpush1.msra.mxu0 0.0
        %5821 = vmatprep.subr.mxu0 0.0
        %5822 = vmatpush1.msra.mxu0 0.0
        %5823 = vmatprep.mubr.f32.mxu0 0.0
        %5824 = vmatmul.mubr.f32.gmra.mrb[0].mxu0 %v5754
        %v5825 = vpop.f32.mrb[0].mxu0
        %v5826 = vadd.f32 %v5751, %v5825
        %v5827 = vpop.f32.mrb[0].mxu0
        %5828 = vmatprep.mubr.f32.mxu0 0.0
        %5829 = vmatmul.mubr.f32.gmra.mrb[0].mxu0 %v5757
        %v5830 = vpop.f32.mrb[0].mxu0
        %v5831 = vadd.f32 %v5751, %v5830
        %v5832 = vpop.f32.mrb[0].mxu0
        %5833 = vdwg.mxu0
        %v5834 = vmax.f32 %v5826, 0.0
        %v5835 = vmax.f32 %v5831, 0.0
        %v5837 = vlaneseq
        %v5838 = vshrl.u32 %v5837, 7
        %v5839 = vsub.s32 0, %v5838
        %v5840 = vrot.slane %v3123, %v5839
        %v5843 = vsel %vm2774, %v5834, 0
        %v5846 = vsel %vm2774, %v5835, 0
        %5848 = vmatprep.subr.mxu0 0.0
        %5849 = vmatpush1.msra.mxu0 %v3115
        %5850 = vmatprep.subr.mxu0 0.0
        %5851 = vmatpush1.msra.mxu0 %v3116
        %5852 = vmatprep.subr.mxu0 0.0
        %5853 = vmatpush1.msra.mxu0 %v3117
        %5854 = vmatprep.subr.mxu0 0.0
        %5855 = vmatpush1.msra.mxu0 %v3118
        %5856 = vmatprep.subr.mxu0 0.0
        %5857 = vmatpush1.msra.mxu0 %v3119
        %5858 = vmatprep.subr.mxu0 0.0
        %5859 = vmatpush1.msra.mxu0 %v3120
        %5860 = vmatprep.subr.mxu0 0.0
        %5861 = vmatpush1.msra.mxu0 %v3121
        %5862 = vmatprep.subr.mxu0 0.0
        %5863 = vmatpush1.msra.mxu0 %v3122
        %5864 = vmatprep.subr.mxu0 0.0
        %5865 = vmatpush1.msra.mxu0 0.0
        %5866 = vmatprep.subr.mxu0 0.0
        %5867 = vmatpush1.msra.mxu0 0.0
        %5868 = vmatprep.subr.mxu0 0.0
        %5869 = vmatpush1.msra.mxu0 0.0
        %5870 = vmatprep.subr.mxu0 0.0
        %5871 = vmatpush1.msra.mxu0 0.0
        %5872 = vmatprep.subr.mxu0 0.0
        %5873 = vmatpush1.msra.mxu0 0.0
        %5874 = vmatprep.subr.mxu0 0.0
        %5875 = vmatpush1.msra.mxu0 0.0
        %5876 = vmatprep.subr.mxu0 0.0
        %5877 = vmatpush1.msra.mxu0 0.0
        %5878 = vmatprep.subr.mxu0 0.0
        %5879 = vmatpush1.msra.mxu0 0.0
        %5880 = vmatprep.subr.mxu0 0.0
        %5881 = vmatpush1.msra.mxu0 0.0
        %5882 = vmatprep.subr.mxu0 0.0
        %5883 = vmatpush1.msra.mxu0 0.0
        %5884 = vmatprep.subr.mxu0 0.0
        %5885 = vmatpush1.msra.mxu0 0.0
        %5886 = vmatprep.subr.mxu0 0.0
        %5887 = vmatpush1.msra.mxu0 0.0
        %5888 = vmatprep.subr.mxu0 0.0
        %5889 = vmatpush1.msra.mxu0 0.0
        %5890 = vmatprep.subr.mxu0 0.0
        %5891 = vmatpush1.msra.mxu0 0.0
        %5892 = vmatprep.subr.mxu0 0.0
        %5893 = vmatpush1.msra.mxu0 0.0
        %5894 = vmatprep.subr.mxu0 0.0
        %5895 = vmatpush1.msra.mxu0 0.0
        %5896 = vmatprep.subr.mxu0 0.0
        %5897 = vmatpush1.msra.mxu0 0.0
        %5898 = vmatprep.subr.mxu0 0.0
        %5899 = vmatpush1.msra.mxu0 0.0
        %5900 = vmatprep.subr.mxu0 0.0
        %5901 = vmatpush1.msra.mxu0 0.0
        %5902 = vmatprep.subr.mxu0 0.0
        %5903 = vmatpush1.msra.mxu0 0.0
        %5904 = vmatprep.subr.mxu0 0.0
        %5905 = vmatpush1.msra.mxu0 0.0
        %5906 = vmatprep.subr.mxu0 0.0
        %5907 = vmatpush1.msra.mxu0 0.0
        %5908 = vmatprep.subr.mxu0 0.0
        %5909 = vmatpush1.msra.mxu0 0.0
        %5910 = vmatprep.subr.mxu0 0.0
        %5911 = vmatpush1.msra.mxu0 0.0
        %5912 = vmatprep.mubr.f32.mxu0 0.0
        %5913 = vmatmul.mubr.f32.gmra.mrb[0].mxu0 %v5843
        %v5914 = vpop.f32.mrb[0].mxu0
        %v5915 = vadd.f32 %v5840, %v5914
        %v5916 = vpop.f32.mrb[0].mxu0
        %5917 = vmatprep.mubr.f32.mxu0 0.0
        %5918 = vmatmul.mubr.f32.gmra.mrb[0].mxu0 %v5846
        %v5919 = vpop.f32.mrb[0].mxu0
        %v5920 = vadd.f32 %v5840, %v5919
        %v5921 = vpop.f32.mrb[0].mxu0
        %5922 = vdwg.mxu0
        %v5923 = vadd.f32 %v5745, %v5915
        %v5924 = vadd.f32 %v5746, %v5920
        %v5925 = vsel %vm1612, %v5923, 0.0
        %5926 = vadd.xlane.f32.xlu0 %v5925
        %v5927 = vpop.xlane.xlu0 %5926
        %v5928 = vsel %vm1612, %v5924, 0.0
        %5929 = vadd.xlane.f32.xlu0 %v5928
        %v5930 = vpop.xlane.xlu0 %5929
        %v5931 = vmul.f32 %v5927, %v2663
        %v5932 = vmul.f32 %v5930, %v2663
        %v5933 = vsub.f32 %v5923, %v5931
        %v5934 = vsub.f32 %v5924, %v5932
        %v5935 = vmul.f32 %v5933, %v5933
        %v5936 = vmul.f32 %v5934, %v5934
        %v5937 = vsel %vm1612, %v5935, 0.0
        %5938 = vadd.xlane.f32.xlu0 %v5937
        %v5939 = vpop.xlane.xlu0 %5938
        %v5940 = vsel %vm1612, %v5936, 0.0
        %5941 = vadd.xlane.f32.xlu0 %v5940
        %v5942 = vpop.xlane.xlu0 %5941
        %v5943 = vmul.f32 %v5939, %v2663
        %v5944 = vmul.f32 %v5942, %v2663
        %v5945 = vadd.f32 %v5943, 1e-05
        %v5946 = vadd.f32 %v5944, 1e-05
        %v5947 = vrsqrt.pop %v5945
        %v5948 = vrsqrt.pop %v5946
        %v5949 = vmul.f32 %v5933, %v5947
        %v5950 = vmul.f32 %v5934, %v5948
        %v5952 = vlaneseq
        %v5953 = vshrl.u32 %v5952, 7
        %v5954 = vsub.s32 0, %v5953
        %v5955 = vrot.slane %v3128, %v5954
        %v5957 = vmul.f32 %v5949, %v5955
        %v5958 = vmul.f32 %v5950, %v5955
        %v5960 = vlaneseq
        %v5961 = vshrl.u32 %v5960, 7
        %v5962 = vsub.s32 0, %v5961
        %v5963 = vrot.slane %v3129, %v5962
        %v5965 = vadd.f32 %v5957, %v5963
        %v5966 = vadd.f32 %v5958, %v5963
        %v5967 = vld [vmem:[#allocation2] sm:$0x1]
        %v5968 = vld [vmem:[#allocation4] sm:$0x1]
        %v5969 = vsel %vm1612, %v5965, 0.0
        %5970 = vadd.xlane.f32.xlu0 %v5969
        %v5971 = vpop.xlane.xlu0 %5970
        %v5972 = vsel %vm1612, %v5966, 0.0
        %5973 = vadd.xlane.f32.xlu0 %v5972
        %v5974 = vpop.xlane.xlu0 %5973
        %v5975 = vmul.f32 %v5971, %v2663
        %v5976 = vmul.f32 %v5974, %v2663
        %v5977 = vsub.f32 %v5965, %v5975
        %v5978 = vsub.f32 %v5966, %v5976
        %v5979 = vmul.f32 %v5977, %v5977
        %v5980 = vmul.f32 %v5978, %v5978
        %v5981 = vsel %vm1612, %v5979, 0.0
        %5982 = vadd.xlane.f32.xlu0 %v5981
        %v5983 = vpop.xlane.xlu0 %5982
        %v5984 = vsel %vm1612, %v5980, 0.0
        %5985 = vadd.xlane.f32.xlu0 %v5984
        %v5986 = vpop.xlane.xlu0 %5985
        %v5987 = vmul.f32 %v5983, %v2663
        %v5988 = vmul.f32 %v5986, %v2663
        %v5989 = vadd.f32 %v5987, 1e-05
        %v5990 = vadd.f32 %v5988, 1e-05
        %v5991 = vrsqrt.pop %v5989
        %v5992 = vrsqrt.pop %v5990
        %v5993 = vmul.f32 %v5977, %v5991
        %v5994 = vmul.f32 %v5978, %v5992
        %v5996 = vlaneseq
        %v5997 = vshrl.u32 %v5996, 7
        %v5998 = vsub.s32 0, %v5997
        %v5999 = vrot.slane %v5967, %v5998
        %v6001 = vmul.f32 %v5993, %v5999
        %v6002 = vmul.f32 %v5994, %v5999
        %v6004 = vlaneseq
        %v6005 = vshrl.u32 %v6004, 7
        %v6006 = vsub.s32 0, %v6005
        %v6007 = vrot.slane %v5968, %v6006
        %v6009 = vadd.f32 %v6001, %v6007
        %v6010 = vadd.f32 %v6002, %v6007
        %v6011 = vld [vmem:[%s91] sm:$0xff]
        %v6012 = vld [vmem:[%s91 + $0x8] sm:$0xff]
        %v6013 = vld [vmem:[%s91 + $0x10] sm:$0xff]
        %v6014 = vld [vmem:[%s91 + $0x18] sm:$0xff]
        %v6015 = vld [vmem:[#allocation6] sm:$0x1]
        %v6017 = vlaneseq
        %v6018 = vshrl.u32 %v6017, 7
        %v6019 = vsub.s32 0, %v6018
        %v6020 = vrot.slane %v6015, %v6019
        %v6023 = vsel %vm1612, %v6009, 0
        %v6026 = vsel %vm1612, %v6010, 0
        %6028 = vmatprep.subr.mxu0 0.0
        %6029 = vmatpush1.msra.mxu0 %v6011
        %6030 = vmatprep.subr.mxu0 0.0
        %6031 = vmatpush1.msra.mxu0 %v6012
        %6032 = vmatprep.subr.mxu0 0.0
        %6033 = vmatpush1.msra.mxu0 %v6013
        %6034 = vmatprep.subr.mxu0 0.0
        %6035 = vmatpush1.msra.mxu0 %v6014
        %6036 = vmatprep.subr.mxu0 0.0
        %6037 = vmatpush1.msra.mxu0 0.0
        %6038 = vmatprep.subr.mxu0 0.0
        %6039 = vmatpush1.msra.mxu0 0.0
        %6040 = vmatprep.subr.mxu0 0.0
        %6041 = vmatpush1.msra.mxu0 0.0
        %6042 = vmatprep.subr.mxu0 0.0
        %6043 = vmatpush1.msra.mxu0 0.0
        %6044 = vmatprep.subr.mxu0 0.0
        %6045 = vmatpush1.msra.mxu0 0.0
        %6046 = vmatprep.subr.mxu0 0.0
        %6047 = vmatpush1.msra.mxu0 0.0
        %6048 = vmatprep.subr.mxu0 0.0
        %6049 = vmatpush1.msra.mxu0 0.0
        %6050 = vmatprep.subr.mxu0 0.0
        %6051 = vmatpush1.msra.mxu0 0.0
        %6052 = vmatprep.subr.mxu0 0.0
        %6053 = vmatpush1.msra.mxu0 0.0
        %6054 = vmatprep.subr.mxu0 0.0
        %6055 = vmatpush1.msra.mxu0 0.0
        %6056 = vmatprep.subr.mxu0 0.0
        %6057 = vmatpush1.msra.mxu0 0.0
        %6058 = vmatprep.subr.mxu0 0.0
        %6059 = vmatpush1.msra.mxu0 0.0
        %6060 = vmatprep.subr.mxu0 0.0
        %6061 = vmatpush1.msra.mxu0 0.0
        %6062 = vmatprep.subr.mxu0 0.0
        %6063 = vmatpush1.msra.mxu0 0.0
        %6064 = vmatprep.subr.mxu0 0.0
        %6065 = vmatpush1.msra.mxu0 0.0
        %6066 = vmatprep.subr.mxu0 0.0
        %6067 = vmatpush1.msra.mxu0 0.0
        %6068 = vmatprep.subr.mxu0 0.0
        %6069 = vmatpush1.msra.mxu0 0.0
        %6070 = vmatprep.subr.mxu0 0.0
        %6071 = vmatpush1.msra.mxu0 0.0
        %6072 = vmatprep.subr.mxu0 0.0
        %6073 = vmatpush1.msra.mxu0 0.0
        %6074 = vmatprep.subr.mxu0 0.0
        %6075 = vmatpush1.msra.mxu0 0.0
        %6076 = vmatprep.subr.mxu0 0.0
        %6077 = vmatpush1.msra.mxu0 0.0
        %6078 = vmatprep.subr.mxu0 0.0
        %6079 = vmatpush1.msra.mxu0 0.0
        %6080 = vmatprep.subr.mxu0 0.0
        %6081 = vmatpush1.msra.mxu0 0.0
        %6082 = vmatprep.subr.mxu0 0.0
        %6083 = vmatpush1.msra.mxu0 0.0
        %6084 = vmatprep.subr.mxu0 0.0
        %6085 = vmatpush1.msra.mxu0 0.0
        %6086 = vmatprep.subr.mxu0 0.0
        %6087 = vmatpush1.msra.mxu0 0.0
        %6088 = vmatprep.subr.mxu0 0.0
        %6089 = vmatpush1.msra.mxu0 0.0
        %6090 = vmatprep.subr.mxu0 0.0
        %6091 = vmatpush1.msra.mxu0 0.0
        %6092 = vmatprep.mubr.f32.mxu0 0.0
        %6093 = vmatmul.mubr.f32.gmra.mrb[0].mxu0 %v6023
        %v6094 = vpop.f32.mrb[0].mxu0
        %v6095 = vpop.f32.mrb[0].mxu0
        %6096 = vmatprep.mubr.f32.mxu0 0.0
        %6097 = vmatmul.mubr.f32.gmra.mrb[0].mxu0 %v6026
        %v6098 = vpop.f32.mrb[0].mxu0
        %v6099 = vadd.f32 %v6020, %v6098
        %v6100 = vpop.f32.mrb[0].mxu0
        %6101 = vdwg.mxu0
        %v6102 = vld [vmem:[%s1479] sm:$0x1]
        %v6104 = vlaneseq
        %v6105 = vshrl.u32 %v6104, 7
        %v6106 = vsub.s32 0, %v6105
        %v6107 = vrot.slane %v6102, %v6106
        %6108 = vset.pattern.permute.xlu0 0
        %6109 = vperm.xlu0 %6108, %v6107
        %v6110 = vpop.permute.xlu0 %6109
        %v6112 = vadd.f32 %v6099, %v6110
        %6113 = vst.msk [vmem:[%s1493] sm:$0xff] %vm1779, %v6112
        %p6114 = scmp.lt.s32.totalorder %s108, 1
        %s6115 = scalar_select %p6114, %s108, 1
        %s6116 = smul.addr %s6115, 8
        %s6117 = scalar_lea.vmem %s95, %s6116
        // Predicated region
        $region221: #{forward.1} parent=207 // pred_check
          %p6118 = pneg %p1133
        $region222: #{forward.1} parent=207 // pred_check_branch
          %6120 = sbr.rel (%p6118) target = $region224
        $region223: #{forward.1} parent=207 // pred_region
          _
        $region224: #{forward.1} parent=207 // pred_fallthru
          _
      $region208: #{forward.1} parent=5 // pred_fallthru
        _
      %p6121 = scmp.le.s32.totalorder 2, %s103
      // Predicated region
      $region225: #{forward.1} parent=5 // pred_check
        %p6122 = pneg %p6121
      $region226: #{forward.1} parent=5 // pred_check_branch
        %6124 = sbr.rel (%p6122) target = $region228
      $region227: #{forward.1} parent=5 // pred_region
        %s6125 = ssub.s32 %s103, 2
        // Predicated region
        $region229: #{forward.1} parent=227 // pred_check
          %p6126 = pneg %p1139
        $region230: #{forward.1} parent=227 // pred_check_branch
          %6128 = sbr.rel (%p6126) target = $region232
        $region231: #{forward.1} parent=227 // pred_region
          %p6129 = scmp.lt.s32.totalorder %s109, 1
          %s6130 = scalar_select %p6129, %s109, 1
          %s6131 = smul.addr %s6130, 8
          %s6132 = scalar_lea.vmem %s95, %s6131
        $region232: #{forward.1} parent=227 // pred_fallthru
          _
      $region228: #{forward.1} parent=5 // pred_fallthru
        _
    $region6: #{forward.1} parent=1 // loop_footer
      %s107 = sadd.s32 1, %s103
    $region7: #{forward.1} parent=1 // loop_footer_branch
      %102 = sbr.rel target = $region3
    $region8: #{forward.1} parent=1 // loop_exit
      _
    %6133 = vsyncpa [#allocation3], 1
    %s6134 = scalar_lea.sflag [#allocation3], 1
    %6135 = vsyncpa %s6134, 1
    %6136 = vsyncpa [#allocation5], 1

</llo_original>
